<compile_context>
chip_gen: v7x
topology: tpu7x:2x2x1
jax: 0.10.0
libtpu: 0.0.40
codegen_flags: <defaults>
</compile_context>

<pallas_src>
import math
import functools

import jax
import jax.numpy as jnp
from jax.experimental import pallas as pl
from jax.experimental.pallas import tpu as pltpu

NEG_INF = -1e30
LN_EPS = 1e-5
MXU_DTYPE = jnp.bfloat16      # matmul operand dtype (f32 accumulation everywhere)

# Ordering of the stacked per-layer weight arrays passed to the fused kernel.
ENC_KEYS = ("wqkv", "bqkv", "wo", "bo", "ln1_g", "ln1_b",
            "w1", "b1", "w2", "b2", "ln2_g", "ln2_b")
DEC_KEYS = ("wqkv", "bqkv", "wo1", "bo1", "ln1_g", "ln1_b",
            "wq", "bq", "wkv", "bkv", "wo2", "bo2", "ln2_g", "ln2_b",
            "w1", "b1", "w2", "b2", "ln3_g", "ln3_b")


# ------------------------------------------------------------------ in-kernel math helpers

def _ln(x, g, b):
    """LayerNorm over last axis. x:[S,E] f32; g,b:[1,E] f32. PyTorch eps, biased variance."""
    mu = jnp.mean(x, axis=-1, keepdims=True)
    xc = x - mu
    var = jnp.mean(xc * xc, axis=-1, keepdims=True)
    return xc * jax.lax.rsqrt(var + LN_EPS) * g + b


def _mha(q, k, v, bias, wo, bo, *, n_heads, scale):
    """Multi-head attention + output projection.

    q:[Sq,E], k,v:[Sk,E] (bf16); bias: f32 additive mask broadcastable to [Sq,Sk] or None;
    wo: bf16 [E,E]; bo: f32 [1,E].  Returns f32 [Sq,E].
    """
    Sq, E = q.shape
    Dh = E // n_heads
    # Split heads via lane slices + leading-dim concat (no reshape of the lane dim).
    qh = jnp.concatenate([q[None, :, h * Dh:(h + 1) * Dh] for h in range(n_heads)], axis=0)
    kh = jnp.concatenate([k[None, :, h * Dh:(h + 1) * Dh] for h in range(n_heads)], axis=0)
    vh = jnp.concatenate([v[None, :, h * Dh:(h + 1) * Dh] for h in range(n_heads)], axis=0)
    # Batched scores over heads: one MXU issue group instead of H tiny matmuls.
    s = jnp.einsum("hqd,hkd->hqk", qh, kh, preferred_element_type=jnp.float32) * scale
    if bias is not None:
        s = s + bias[None]                       # additive mask (0 / -1e30)
    s = s - jnp.max(s, axis=-1, keepdims=True)
    p = jnp.exp(s)
    p = p * pl.reciprocal(jnp.sum(p, axis=-1, keepdims=True), approx=True)
    oh = jnp.einsum("hqk,hkd->hqd", p.astype(MXU_DTYPE), vh,
                    preferred_element_type=jnp.float32)            # [H,Sq,Dh] f32
    # Merge heads lane-wise -> single K=E output projection.
    o = jnp.concatenate([oh[h] for h in range(n_heads)], axis=-1)  # [Sq,E] f32
    return jnp.dot(o.astype(MXU_DTYPE), wo, preferred_element_type=jnp.float32) + bo


def _self_attn_ln(x, bias, wqkv, bqkv, wo, bo, g, bln, *, n_heads, scale):
    """LayerNorm(x + SelfAttn(x)).  Fused QKV projection, cast to bf16 once."""
    E = x.shape[-1]
    qkv = (jnp.dot(x.astype(MXU_DTYPE), wqkv, preferred_element_type=jnp.float32)
           + bqkv).astype(MXU_DTYPE)                               # [S,3E]
    attn = _mha(qkv[:, :E], qkv[:, E:2 * E], qkv[:, 2 * E:], bias, wo, bo,
                n_heads=n_heads, scale=scale)
    return _ln(x + attn, g, bln)


def _cross_attn_ln(x, mem_bf, wq, bq, wkv, bkv, wo, bo, g, bln, *, n_heads, scale):
    """LayerNorm(x + CrossAttn(x, memory)).  No memory mask (matches the PyTorch module)."""
    E = x.shape[-1]
    q = (jnp.dot(x.astype(MXU_DTYPE), wq, preferred_element_type=jnp.float32)
         + bq).astype(MXU_DTYPE)
    kv = (jnp.dot(mem_bf, wkv, preferred_element_type=jnp.float32)
          + bkv).astype(MXU_DTYPE)
    attn = _mha(q, kv[:, :E], kv[:, E:], None, wo, bo, n_heads=n_heads, scale=scale)
    return _ln(x + attn, g, bln)


def _ffn_ln(x, w1, b1, w2, b2, g, bln):
    """LayerNorm(x + W2 relu(W1 x)).  Hidden activations never leave VMEM."""
    h = jnp.maximum(jnp.dot(x.astype(MXU_DTYPE), w1,
                            preferred_element_type=jnp.float32) + b1, 0.0)
    y = jnp.dot(h.astype(MXU_DTYPE), w2, preferred_element_type=jnp.float32) + b2
    return _ln(x + y, g, bln)


# ------------------------------------------------------------------ fused forward kernel

def _fused_forward_kernel(*refs, n_layers, n_heads, scale):
    n_e, n_d = len(ENC_KEYS), len(DEC_KEYS)
    src_ref, tgt_ref, sbias_ref, tbias_ref = refs[:4]
    enc = dict(zip(ENC_KEYS, refs[4:4 + n_e]))
    dec = dict(zip(DEC_KEYS, refs[4 + n_e:4 + n_e + n_d]))
    (encn_g, encn_b, decn_g, decn_b, w_out, b_out, o_ref) = refs[4 + n_e + n_d:]

    x = src_ref[0]                       # [Ss, E] f32
    y = tgt_ref[0]                       # [St, E] f32
    sbias = sbias_ref[0]                 # [1, Ss]  additive pad mask
    tbias = tbias_ref[0]                 # [St, St] additive causal+pad mask

    # ---------------- encoder stack (post-norm) ----------------
    for li in range(n_layers):           # static unroll (n_layers small)
        x = _self_attn_ln(x, sbias, enc["wqkv"][li], enc["bqkv"][li],
                          enc["wo"][li], enc["bo"][li],
                          enc["ln1_g"][li], enc["ln1_b"][li],
                          n_heads=n_heads, scale=scale)
        x = _ffn_ln(x, enc["w1"][li], enc["b1"][li], enc["w2"][li], enc["b2"][li],
                    enc["ln2_g"][li], enc["ln2_b"][li])
    memory = _ln(x, encn_g[...], encn_b[...])        # final encoder LayerNorm
    mem_bf = memory.astype(MXU_DTYPE)                # cast once, reused by every dec layer

    # ---------------- decoder stack (post-norm) ----------------
    for li in range(n_layers):
        y = _self_attn_ln(y, tbias, dec["wqkv"][li], dec["bqkv"][li],
                          dec["wo1"][li], dec["bo1"][li],
                          dec["ln1_g"][li], dec["ln1_b"][li],
                          n_heads=n_heads, scale=scale)
        y = _cross_attn_ln(y, mem_bf, dec["wq"][li], dec["bq"][li],
                           dec["wkv"][li], dec["bkv"][li],
                           dec["wo2"][li], dec["bo2"][li],
                           dec["ln2_g"][li], dec["ln2_b"][li],
                           n_heads=n_heads, scale=scale)
        y = _ffn_ln(y, dec["w1"][li], dec["b1"][li], dec["w2"][li], dec["b2"][li],
                    dec["ln3_g"][li], dec["ln3_b"][li])

    # ---------------- final decoder LN + lane-dense vocab head ----------------
    y = _ln(y, decn_g[...], decn_b[...])
    o_ref[0] = (jnp.dot(y.astype(MXU_DTYPE), w_out[...],
                        preferred_element_type=jnp.float32) + b_out[...])


# ------------------------------------------------------------------ non-kernel pieces

def positional_encoding(x):
    """Sinusoidal PE (same formula as the PyTorch PositionalEncoding module)."""
    B, S, E = x.shape
    pos = jnp.arange(S, dtype=jnp.float32)[:, None]
    div = jnp.exp(jnp.arange(0, E, 2, dtype=jnp.float32) * (-math.log(10000.0) / E))
    pe = jnp.zeros((S, E), jnp.float32)
    pe = pe.at[:, 0::2].set(jnp.sin(pos * div))
    pe = pe.at[:, 1::2].set(jnp.cos(pos * div))
    return x + pe[None]


# ------------------------------------------------------------------ parameters

def _init_linear(key, fan_in, fan_out):
    kw, kb = jax.random.split(key)
    w = (jax.random.normal(kw, (fan_in, fan_out), jnp.float32) * 0.02).astype(MXU_DTYPE)
    b = jax.random.normal(kb, (1, fan_out), jnp.float32) * 0.02
    return w, b


def _init_enc_layer(key, E, H):
    k = jax.random.split(key, 4)
    wqkv, bqkv = _init_linear(k[0], E, 3 * E)          # fused in_proj
    wo, bo = _init_linear(k[1], E, E)
    w1, b1 = _init_linear(k[2], E, H)
    w2, b2 = _init_linear(k[3], H, E)
    g = jnp.ones((1, E), jnp.float32)
    z = jnp.zeros((1, E), jnp.float32)
    return dict(wqkv=wqkv, bqkv=bqkv, wo=wo, bo=bo, ln1_g=g, ln1_b=z,
                w1=w1, b1=b1, w2=w2, b2=b2, ln2_g=g, ln2_b=z)


def _init_dec_layer(key, E, H):
    k = jax.random.split(key, 7)
    wqkv, bqkv = _init_linear(k[0], E, 3 * E)          # self-attn fused in_proj
    wo1, bo1 = _init_linear(k[1], E, E)
    wq, bq = _init_linear(k[2], E, E)                  # cross-attn query proj
    wkv, bkv = _init_linear(k[3], E, 2 * E)            # cross-attn fused K|V proj
    wo2, bo2 = _init_linear(k[4], E, E)
    w1, b1 = _init_linear(k[5], E, H)
    w2, b2 = _init_linear(k[6], H, E)
    g = jnp.ones((1, E), jnp.float32)
    z = jnp.zeros((1, E), jnp.float32)
    return dict(wqkv=wqkv, bqkv=bqkv, wo1=wo1, bo1=bo1, ln1_g=g, ln1_b=z,
                wq=wq, bq=bq, wkv=wkv, bkv=bkv, wo2=wo2, bo2=bo2, ln2_g=g, ln2_b=z,
                w1=w1, b1=b1, w2=w2, b2=b2, ln3_g=g, ln3_b=z)


def _stack(layer_dicts):
    return {k: jnp.stack([d[k] for d in layer_dicts], axis=0) for k in layer_dicts[0]}


def init_params(key, n_tokens_src, n_tokens_tgt, E, H, n_layers):
    keys = jax.random.split(key, 3 + 2 * n_layers)
    params = {}
    params["src_emb"] = jax.random.normal(keys[0], (n_tokens_src, E), jnp.float32) * 0.02
    params["tgt_emb"] = jax.random.normal(keys[1], (n_tokens_tgt, E), jnp.float32) * 0.02
    params["enc"] = _stack([_init_enc_layer(keys[2 + i], E, H) for i in range(n_layers)])
    params["dec"] = _stack([_init_dec_layer(keys[2 + n_layers + i], E, H)
                            for i in range(n_layers)])
    params["enc_norm_g"] = jnp.ones((1, E), jnp.float32)
    params["enc_norm_b"] = jnp.zeros((1, E), jnp.float32)
    params["dec_norm_g"] = jnp.ones((1, E), jnp.float32)
    params["dec_norm_b"] = jnp.zeros((1, E), jnp.float32)
    # Vocab head padded once at init to a lane-dense multiple of 128 columns.
    w_out, b_out = _init_linear(keys[2 + 2 * n_layers], E, n_tokens_tgt)
    Vp = pl.cdiv(n_tokens_tgt, 128) * 128
    params["w_out"] = jnp.pad(w_out, ((0, 0), (0, Vp - n_tokens_tgt)))
    params["b_out"] = jnp.pad(b_out, ((0, 0), (0, Vp - n_tokens_tgt)))
    return params


# ------------------------------------------------------------------ full forward

def translation_transformer_forward(params, source, target, n_heads, n_tokens_tgt,
                                    src_pad_idx, tgt_pad_idx):
    """source:[B,Ss] int32, target:[B,St] int32 -> logits [B, St, n_tokens_tgt] f32."""
    B, Ss = source.shape
    _, St = target.shape
    E = params["src_emb"].shape[1]
    n_layers = params["enc"]["wqkv"].shape[0]
    Vp = params["w_out"].shape[1]
    scale = 1.0 / math.sqrt(E // n_heads)

    # token embedding (XLA gather) + sinusoidal positional encoding
    src = positional_encoding(params["src_emb"][source])
    tgt = positional_encoding(params["tgt_emb"][target])

    # additive attention biases, built once and passed to the fused kernel
    src_bias = jnp.where((source == src_pad_idx)[:, None, :],
                         NEG_INF, 0.0).astype(jnp.float32)             # [B,1,Ss]
    causal = jnp.triu(jnp.ones((St, St), dtype=bool), k=1)
    tgt_bias = jnp.where(causal[None] | (target == tgt_pad_idx)[:, None, :],
                         NEG_INF, 0.0).astype(jnp.float32)             # [B,St,St]

    def batch_spec(arr):
        nd = arr.ndim
        return pl.BlockSpec((1,) + arr.shape[1:],
                            lambda b, _nd=nd: (b,) + (0,) * (_nd - 1))

    def weight_spec(arr):
        nd = arr.ndim
        return pl.BlockSpec(arr.shape, lambda b, _nd=nd: (0,) * _nd)

    act_inputs = [src, tgt, src_bias, tgt_bias]
    w_inputs = ([params["enc"][k] for k in ENC_KEYS]
                + [params["dec"][k] for k in DEC_KEYS]
                + [params["enc_norm_g"], params["enc_norm_b"],
                   params["dec_norm_g"], params["dec_norm_b"],
                   params["w_out"], params["b_out"]])
    in_specs = [batch_spec(a) for a in act_inputs] + [weight_spec(w) for w in w_inputs]

    logits_padded = pl.pallas_call(
        functools.partial(_fused_forward_kernel, n_layers=int(n_layers),
                          n_heads=n_heads, scale=scale),
        out_shape=jax.ShapeDtypeStruct((B, St, Vp), jnp.float32),
        grid=(B,),
        in_specs=in_specs,
        out_specs=pl.BlockSpec((1, St, Vp), lambda b: (b, 0, 0)),
        compiler_params=pltpu.CompilerParams(dimension_semantics=("parallel",)),
    )(*act_inputs, *w_inputs)

    return logits_padded[:, :, :n_tokens_tgt]


# ------------------------------------------------------------------ main

if __name__ == "__main__":
    key = jax.random.PRNGKey(0)

    n_tokens_src, n_tokens_tgt = 53, 47
    n_heads, dim_embedding, dim_hidden, n_layers = 4, 32, 64, 2
    src_pad_idx, tgt_pad_idx = 0, 0
    B, Ss, St = 2, 8, 8

    kp, ks, kt = jax.random.split(key, 3)
    params = init_params(kp, n_tokens_src, n_tokens_tgt,
                         dim_embedding, dim_hidden, n_layers)

    source = jax.random.randint(ks, (B, Ss), 1, n_tokens_src, dtype=jnp.int32)
    target = jax.random.randint(kt, (B, St), 1, n_tokens_tgt, dtype=jnp.int32)
    # padding only at the end of each sequence (position 0 never padded, so no
    # attention row is fully masked)
    source = source.at[:, -1].set(src_pad_idx)
    target = target.at[:, -1].set(tgt_pad_idx)

    logits = translation_transformer_forward(params, source, target, n_heads,
                                              n_tokens_tgt, src_pad_idx, tgt_pad_idx)
    logits = jax.block_until_ready(logits)

    assert logits.shape == (B, St, n_tokens_tgt), logits.shape
    assert bool(jnp.all(jnp.isfinite(logits)))
    print("KERNEL_OK")
</pallas_src>

<mosaic_0001>
module attributes {stable_mosaic.version = 11 : i64} {
  func.func @_fused_forward_kernel(%arg0: i32, %arg1: memref<1x8x32xf32, #tpu.memory_space<vmem>>, %arg2: memref<1x8x32xf32, #tpu.memory_space<vmem>>, %arg3: memref<1x1x8xf32, #tpu.memory_space<vmem>>, %arg4: memref<1x8x8xf32, #tpu.memory_space<vmem>>, %arg5: memref<2x32x96xbf16, #tpu.memory_space<vmem>>, %arg6: memref<2x1x96xf32, #tpu.memory_space<vmem>>, %arg7: memref<2x32x32xbf16, #tpu.memory_space<vmem>>, %arg8: memref<2x1x32xf32, #tpu.memory_space<vmem>>, %arg9: memref<2x1x32xf32, #tpu.memory_space<vmem>>, %arg10: memref<2x1x32xf32, #tpu.memory_space<vmem>>, %arg11: memref<2x32x64xbf16, #tpu.memory_space<vmem>>, %arg12: memref<2x1x64xf32, #tpu.memory_space<vmem>>, %arg13: memref<2x64x32xbf16, #tpu.memory_space<vmem>>, %arg14: memref<2x1x32xf32, #tpu.memory_space<vmem>>, %arg15: memref<2x1x32xf32, #tpu.memory_space<vmem>>, %arg16: memref<2x1x32xf32, #tpu.memory_space<vmem>>, %arg17: memref<2x32x96xbf16, #tpu.memory_space<vmem>>, %arg18: memref<2x1x96xf32, #tpu.memory_space<vmem>>, %arg19: memref<2x32x32xbf16, #tpu.memory_space<vmem>>, %arg20: memref<2x1x32xf32, #tpu.memory_space<vmem>>, %arg21: memref<2x1x32xf32, #tpu.memory_space<vmem>>, %arg22: memref<2x1x32xf32, #tpu.memory_space<vmem>>, %arg23: memref<2x32x32xbf16, #tpu.memory_space<vmem>>, %arg24: memref<2x1x32xf32, #tpu.memory_space<vmem>>, %arg25: memref<2x32x64xbf16, #tpu.memory_space<vmem>>, %arg26: memref<2x1x64xf32, #tpu.memory_space<vmem>>, %arg27: memref<2x32x32xbf16, #tpu.memory_space<vmem>>, %arg28: memref<2x1x32xf32, #tpu.memory_space<vmem>>, %arg29: memref<2x1x32xf32, #tpu.memory_space<vmem>>, %arg30: memref<2x1x32xf32, #tpu.memory_space<vmem>>, %arg31: memref<2x32x64xbf16, #tpu.memory_space<vmem>>, %arg32: memref<2x1x64xf32, #tpu.memory_space<vmem>>, %arg33: memref<2x64x32xbf16, #tpu.memory_space<vmem>>, %arg34: memref<2x1x32xf32, #tpu.memory_space<vmem>>, %arg35: memref<2x1x32xf32, #tpu.memory_space<vmem>>, %arg36: memref<2x1x32xf32, #tpu.memory_space<vmem>>, %arg37: memref<1x32xf32, #tpu.memory_space<vmem>>, %arg38: memref<1x32xf32, #tpu.memory_space<vmem>>, %arg39: memref<1x32xf32, #tpu.memory_space<vmem>>, %arg40: memref<1x32xf32, #tpu.memory_space<vmem>>, %arg41: memref<32x128xbf16, #tpu.memory_space<vmem>>, %arg42: memref<1x128xf32, #tpu.memory_space<vmem>>, %arg43: memref<1x8x128xf32, #tpu.memory_space<vmem>>) attributes {dimension_semantics = [#tpu.dimension_semantics<parallel>], iteration_bounds = array<i64: 2>, scalar_prefetch = 0 : i64, scratch_operands = 0 : i64, tpu.core_type = #tpu.core_type<tc>, window_params = [{transform_indices = @transform_0, window_bounds = array<i64: 1, 8, 32>}, {transform_indices = @transform_1, window_bounds = array<i64: 1, 8, 32>}, {transform_indices = @transform_2, window_bounds = array<i64: 1, 1, 8>}, {transform_indices = @transform_3, window_bounds = array<i64: 1, 8, 8>}, {pipeline_mode = #tpu.pipeline_mode<synchronous>, transform_indices = @transform_4, window_bounds = array<i64: 2, 32, 96>}, {pipeline_mode = #tpu.pipeline_mode<synchronous>, transform_indices = @transform_5, window_bounds = array<i64: 2, 1, 96>}, {pipeline_mode = #tpu.pipeline_mode<synchronous>, transform_indices = @transform_6, window_bounds = array<i64: 2, 32, 32>}, {pipeline_mode = #tpu.pipeline_mode<synchronous>, transform_indices = @transform_7, window_bounds = array<i64: 2, 1, 32>}, {pipeline_mode = #tpu.pipeline_mode<synchronous>, transform_indices = @transform_8, window_bounds = array<i64: 2, 1, 32>}, {pipeline_mode = #tpu.pipeline_mode<synchronous>, transform_indices = @transform_9, window_bounds = array<i64: 2, 1, 32>}, {pipeline_mode = #tpu.pipeline_mode<synchronous>, transform_indices = @transform_10, window_bounds = array<i64: 2, 32, 64>}, {pipeline_mode = #tpu.pipeline_mode<synchronous>, transform_indices = @transform_11, window_bounds = array<i64: 2, 1, 64>}, {pipeline_mode = #tpu.pipeline_mode<synchronous>, transform_indices = @transform_12, window_bounds = array<i64: 2, 64, 32>}, {pipeline_mode = #tpu.pipeline_mode<synchronous>, transform_indices = @transform_13, window_bounds = array<i64: 2, 1, 32>}, {pipeline_mode = #tpu.pipeline_mode<synchronous>, transform_indices = @transform_14, window_bounds = array<i64: 2, 1, 32>}, {pipeline_mode = #tpu.pipeline_mode<synchronous>, transform_indices = @transform_15, window_bounds = array<i64: 2, 1, 32>}, {pipeline_mode = #tpu.pipeline_mode<synchronous>, transform_indices = @transform_16, window_bounds = array<i64: 2, 32, 96>}, {pipeline_mode = #tpu.pipeline_mode<synchronous>, transform_indices = @transform_17, window_bounds = array<i64: 2, 1, 96>}, {pipeline_mode = #tpu.pipeline_mode<synchronous>, transform_indices = @transform_18, window_bounds = array<i64: 2, 32, 32>}, {pipeline_mode = #tpu.pipeline_mode<synchronous>, transform_indices = @transform_19, window_bounds = array<i64: 2, 1, 32>}, {pipeline_mode = #tpu.pipeline_mode<synchronous>, transform_indices = @transform_20, window_bounds = array<i64: 2, 1, 32>}, {pipeline_mode = #tpu.pipeline_mode<synchronous>, transform_indices = @transform_21, window_bounds = array<i64: 2, 1, 32>}, {pipeline_mode = #tpu.pipeline_mode<synchronous>, transform_indices = @transform_22, window_bounds = array<i64: 2, 32, 32>}, {pipeline_mode = #tpu.pipeline_mode<synchronous>, transform_indices = @transform_23, window_bounds = array<i64: 2, 1, 32>}, {pipeline_mode = #tpu.pipeline_mode<synchronous>, transform_indices = @transform_24, window_bounds = array<i64: 2, 32, 64>}, {pipeline_mode = #tpu.pipeline_mode<synchronous>, transform_indices = @transform_25, window_bounds = array<i64: 2, 1, 64>}, {pipeline_mode = #tpu.pipeline_mode<synchronous>, transform_indices = @transform_26, window_bounds = array<i64: 2, 32, 32>}, {pipeline_mode = #tpu.pipeline_mode<synchronous>, transform_indices = @transform_27, window_bounds = array<i64: 2, 1, 32>}, {pipeline_mode = #tpu.pipeline_mode<synchronous>, transform_indices = @transform_28, window_bounds = array<i64: 2, 1, 32>}, {pipeline_mode = #tpu.pipeline_mode<synchronous>, transform_indices = @transform_29, window_bounds = array<i64: 2, 1, 32>}, {pipeline_mode = #tpu.pipeline_mode<synchronous>, transform_indices = @transform_30, window_bounds = array<i64: 2, 32, 64>}, {pipeline_mode = #tpu.pipeline_mode<synchronous>, transform_indices = @transform_31, window_bounds = array<i64: 2, 1, 64>}, {pipeline_mode = #tpu.pipeline_mode<synchronous>, transform_indices = @transform_32, window_bounds = array<i64: 2, 64, 32>}, {pipeline_mode = #tpu.pipeline_mode<synchronous>, transform_indices = @transform_33, window_bounds = array<i64: 2, 1, 32>}, {pipeline_mode = #tpu.pipeline_mode<synchronous>, transform_indices = @transform_34, window_bounds = array<i64: 2, 1, 32>}, {pipeline_mode = #tpu.pipeline_mode<synchronous>, transform_indices = @transform_35, window_bounds = array<i64: 2, 1, 32>}, {pipeline_mode = #tpu.pipeline_mode<synchronous>, transform_indices = @transform_36, window_bounds = array<i64: 1, 32>}, {pipeline_mode = #tpu.pipeline_mode<synchronous>, transform_indices = @transform_37, window_bounds = array<i64: 1, 32>}, {pipeline_mode = #tpu.pipeline_mode<synchronous>, transform_indices = @transform_38, window_bounds = array<i64: 1, 32>}, {pipeline_mode = #tpu.pipeline_mode<synchronous>, transform_indices = @transform_39, window_bounds = array<i64: 1, 32>}, {pipeline_mode = #tpu.pipeline_mode<synchronous>, transform_indices = @transform_40, window_bounds = array<i64: 32, 128>}, {pipeline_mode = #tpu.pipeline_mode<synchronous>, transform_indices = @transform_41, window_bounds = array<i64: 1, 128>}, {transform_indices = @transform_42, window_bounds = array<i64: 1, 8, 128>}]} {
    %c0 = arith.constant 0 : index
    %c0_0 = arith.constant 0 : index
    %c0_1 = arith.constant 0 : index
    %0 = vector.load %arg1[%c0, %c0_0, %c0_1] : memref<1x8x32xf32, #tpu.memory_space<vmem>>, vector<1x8x32xf32>
    %1 = vector.shape_cast %0 : vector<1x8x32xf32> to vector<8x32xf32>
    %c0_2 = arith.constant 0 : index
    %c0_3 = arith.constant 0 : index
    %c0_4 = arith.constant 0 : index
    %2 = vector.load %arg2[%c0_2, %c0_3, %c0_4] : memref<1x8x32xf32, #tpu.memory_space<vmem>>, vector<1x8x32xf32>
    %3 = vector.shape_cast %2 : vector<1x8x32xf32> to vector<8x32xf32>
    %c0_5 = arith.constant 0 : index
    %c0_6 = arith.constant 0 : index
    %c0_7 = arith.constant 0 : index
    %4 = vector.load %arg3[%c0_5, %c0_6, %c0_7] : memref<1x1x8xf32, #tpu.memory_space<vmem>>, vector<1x1x8xf32>
    %5 = vector.shape_cast %4 : vector<1x1x8xf32> to vector<1x8xf32>
    %c0_8 = arith.constant 0 : index
    %c0_9 = arith.constant 0 : index
    %c0_10 = arith.constant 0 : index
    %6 = vector.load %arg4[%c0_8, %c0_9, %c0_10] : memref<1x8x8xf32, #tpu.memory_space<vmem>>, vector<1x8x8xf32>
    %7 = vector.shape_cast %6 : vector<1x8x8xf32> to vector<8x8xf32>
    %c0_11 = arith.constant 0 : index
    %c0_12 = arith.constant 0 : index
    %c0_13 = arith.constant 0 : index
    %8 = vector.load %arg5[%c0_11, %c0_12, %c0_13] : memref<2x32x96xbf16, #tpu.memory_space<vmem>>, vector<1x32x96xbf16>
    %9 = vector.shape_cast %8 : vector<1x32x96xbf16> to vector<32x96xbf16>
    %c0_14 = arith.constant 0 : index
    %c0_15 = arith.constant 0 : index
    %c0_16 = arith.constant 0 : index
    %10 = vector.load %arg6[%c0_14, %c0_15, %c0_16] : memref<2x1x96xf32, #tpu.memory_space<vmem>>, vector<1x1x96xf32>
    %11 = vector.shape_cast %10 : vector<1x1x96xf32> to vector<1x96xf32>
    %c0_17 = arith.constant 0 : index
    %c0_18 = arith.constant 0 : index
    %c0_19 = arith.constant 0 : index
    %12 = vector.load %arg7[%c0_17, %c0_18, %c0_19] : memref<2x32x32xbf16, #tpu.memory_space<vmem>>, vector<1x32x32xbf16>
    %13 = vector.shape_cast %12 : vector<1x32x32xbf16> to vector<32x32xbf16>
    %c0_20 = arith.constant 0 : index
    %c0_21 = arith.constant 0 : index
    %c0_22 = arith.constant 0 : index
    %14 = vector.load %arg8[%c0_20, %c0_21, %c0_22] : memref<2x1x32xf32, #tpu.memory_space<vmem>>, vector<1x1x32xf32>
    %15 = vector.shape_cast %14 : vector<1x1x32xf32> to vector<1x32xf32>
    %c0_23 = arith.constant 0 : index
    %c0_24 = arith.constant 0 : index
    %c0_25 = arith.constant 0 : index
    %16 = vector.load %arg9[%c0_23, %c0_24, %c0_25] : memref<2x1x32xf32, #tpu.memory_space<vmem>>, vector<1x1x32xf32>
    %17 = vector.shape_cast %16 : vector<1x1x32xf32> to vector<1x32xf32>
    %c0_26 = arith.constant 0 : index
    %c0_27 = arith.constant 0 : index
    %c0_28 = arith.constant 0 : index
    %18 = vector.load %arg10[%c0_26, %c0_27, %c0_28] : memref<2x1x32xf32, #tpu.memory_space<vmem>>, vector<1x1x32xf32>
    %19 = vector.shape_cast %18 : vector<1x1x32xf32> to vector<1x32xf32>
    %20 = arith.truncf %1 : vector<8x32xf32> to vector<8x32xbf16>
    %cst = arith.constant dense<0.000000e+00> : vector<8x96xf32>
    %21 = tpu.matmul %20, %9, %cst {dimension_numbers = #tpu.dot_dimension_numbers<[1], [0], [0], [1], [0, 0, 1, 1], [], []>} : vector<8x32xbf16>, vector<32x96xbf16>, vector<8x96xf32> -> vector<8x96xf32>
    %22 = vector.broadcast %11 : vector<1x96xf32> to vector<8x96xf32>
    %23 = arith.addf %21, %22 : vector<8x96xf32>
    %24 = arith.truncf %23 : vector<8x96xf32> to vector<8x96xbf16>
    %25 = vector.extract_strided_slice %24 {offsets = [0, 0], sizes = [8, 32], strides = [1, 1]} : vector<8x96xbf16> to vector<8x32xbf16>
    %26 = vector.extract_strided_slice %24 {offsets = [0, 32], sizes = [8, 32], strides = [1, 1]} : vector<8x96xbf16> to vector<8x32xbf16>
    %27 = vector.extract_strided_slice %24 {offsets = [0, 64], sizes = [8, 32], strides = [1, 1]} : vector<8x96xbf16> to vector<8x32xbf16>
    %28 = vector.extract_strided_slice %25 {offsets = [0, 0], sizes = [8, 8], strides = [1, 1]} : vector<8x32xbf16> to vector<8x8xbf16>
    %29 = vector.shape_cast %28 : vector<8x8xbf16> to vector<1x8x8xbf16>
    %30 = vector.extract_strided_slice %25 {offsets = [0, 8], sizes = [8, 8], strides = [1, 1]} : vector<8x32xbf16> to vector<8x8xbf16>
    %31 = vector.shape_cast %30 : vector<8x8xbf16> to vector<1x8x8xbf16>
    %32 = vector.extract_strided_slice %25 {offsets = [0, 16], sizes = [8, 8], strides = [1, 1]} : vector<8x32xbf16> to vector<8x8xbf16>
    %33 = vector.shape_cast %32 : vector<8x8xbf16> to vector<1x8x8xbf16>
    %34 = vector.extract_strided_slice %25 {offsets = [0, 24], sizes = [8, 8], strides = [1, 1]} : vector<8x32xbf16> to vector<8x8xbf16>
    %35 = vector.shape_cast %34 : vector<8x8xbf16> to vector<1x8x8xbf16>
    %36 = tpu.concatenate %29, %31, %33, %35 in 0 : vector<1x8x8xbf16>, vector<1x8x8xbf16>, vector<1x8x8xbf16>, vector<1x8x8xbf16> -> vector<4x8x8xbf16>
    %37 = vector.extract_strided_slice %26 {offsets = [0, 0], sizes = [8, 8], strides = [1, 1]} : vector<8x32xbf16> to vector<8x8xbf16>
    %38 = vector.shape_cast %37 : vector<8x8xbf16> to vector<1x8x8xbf16>
    %39 = vector.extract_strided_slice %26 {offsets = [0, 8], sizes = [8, 8], strides = [1, 1]} : vector<8x32xbf16> to vector<8x8xbf16>
    %40 = vector.shape_cast %39 : vector<8x8xbf16> to vector<1x8x8xbf16>
    %41 = vector.extract_strided_slice %26 {offsets = [0, 16], sizes = [8, 8], strides = [1, 1]} : vector<8x32xbf16> to vector<8x8xbf16>
    %42 = vector.shape_cast %41 : vector<8x8xbf16> to vector<1x8x8xbf16>
    %43 = vector.extract_strided_slice %26 {offsets = [0, 24], sizes = [8, 8], strides = [1, 1]} : vector<8x32xbf16> to vector<8x8xbf16>
    %44 = vector.shape_cast %43 : vector<8x8xbf16> to vector<1x8x8xbf16>
    %45 = tpu.concatenate %38, %40, %42, %44 in 0 : vector<1x8x8xbf16>, vector<1x8x8xbf16>, vector<1x8x8xbf16>, vector<1x8x8xbf16> -> vector<4x8x8xbf16>
    %46 = vector.extract_strided_slice %27 {offsets = [0, 0], sizes = [8, 8], strides = [1, 1]} : vector<8x32xbf16> to vector<8x8xbf16>
    %47 = vector.shape_cast %46 : vector<8x8xbf16> to vector<1x8x8xbf16>
    %48 = vector.extract_strided_slice %27 {offsets = [0, 8], sizes = [8, 8], strides = [1, 1]} : vector<8x32xbf16> to vector<8x8xbf16>
    %49 = vector.shape_cast %48 : vector<8x8xbf16> to vector<1x8x8xbf16>
    %50 = vector.extract_strided_slice %27 {offsets = [0, 16], sizes = [8, 8], strides = [1, 1]} : vector<8x32xbf16> to vector<8x8xbf16>
    %51 = vector.shape_cast %50 : vector<8x8xbf16> to vector<1x8x8xbf16>
    %52 = vector.extract_strided_slice %27 {offsets = [0, 24], sizes = [8, 8], strides = [1, 1]} : vector<8x32xbf16> to vector<8x8xbf16>
    %53 = vector.shape_cast %52 : vector<8x8xbf16> to vector<1x8x8xbf16>
    %54 = tpu.concatenate %47, %49, %51, %53 in 0 : vector<1x8x8xbf16>, vector<1x8x8xbf16>, vector<1x8x8xbf16>, vector<1x8x8xbf16> -> vector<4x8x8xbf16>
    "tpu.trace_start"() <{level = 10 : i32, message = "hqd,hkd->hqk"}> : () -> ()
    %cst_29 = arith.constant dense<0.000000e+00> : vector<4x8x8xf32>
    %55 = tpu.matmul %36, %45, %cst_29 {dimension_numbers = #tpu.dot_dimension_numbers<[2], [2], [1], [1], [0, 0, 0, 1, 1, 1], [0], [0]>} : vector<4x8x8xbf16>, vector<4x8x8xbf16>, vector<4x8x8xf32> -> vector<4x8x8xf32>
    "tpu.trace_stop"() : () -> ()
    %cst_30 = arith.constant 0.353553385 : f32
    %56 = vector.broadcast %cst_30 : f32 to vector<4x8x8xf32>
    %57 = arith.mulf %55, %56 : vector<4x8x8xf32>
    %58 = vector.shape_cast %5 : vector<1x8xf32> to vector<1x1x8xf32>
    %59 = vector.broadcast %58 : vector<1x1x8xf32> to vector<4x8x8xf32>
    %60 = arith.addf %57, %59 : vector<4x8x8xf32>
    %cst_31 = arith.constant dense<0xFF800000> : vector<4x8xf32>
    %61 = vector.multi_reduction <maximumf>, %60, %cst_31 [2] : vector<4x8x8xf32> to vector<4x8xf32>
    %62 = vector.shape_cast %61 : vector<4x8xf32> to vector<4x8x1xf32>
    %63 = vector.broadcast %62 : vector<4x8x1xf32> to vector<4x8x8xf32>
    %64 = arith.subf %60, %63 : vector<4x8x8xf32>
    %65 = math.exp %64 : vector<4x8x8xf32>
    %cst_32 = arith.constant dense<0.000000e+00> : vector<4x8xf32>
    %66 = vector.multi_reduction <add>, %65, %cst_32 [2] : vector<4x8x8xf32> to vector<4x8xf32>
    %67 = vector.shape_cast %66 : vector<4x8xf32> to vector<4x8x1xf32>
    %68 = tpu.reciprocal %67 {approx = true} : vector<4x8x1xf32> -> vector<4x8x1xf32>
    %69 = vector.broadcast %68 : vector<4x8x1xf32> to vector<4x8x8xf32>
    %70 = arith.mulf %65, %69 : vector<4x8x8xf32>
    %71 = arith.truncf %70 : vector<4x8x8xf32> to vector<4x8x8xbf16>
    "tpu.trace_start"() <{level = 10 : i32, message = "hqk,hkd->hqd"}> : () -> ()
    %cst_33 = arith.constant dense<0.000000e+00> : vector<4x8x8xf32>
    %72 = tpu.matmul %71, %54, %cst_33 {dimension_numbers = #tpu.dot_dimension_numbers<[2], [1], [1], [2], [0, 0, 0, 1, 1, 2], [0], [0]>} : vector<4x8x8xbf16>, vector<4x8x8xbf16>, vector<4x8x8xf32> -> vector<4x8x8xf32>
    "tpu.trace_stop"() : () -> ()
    %73 = vector.extract_strided_slice %72 {offsets = [0, 0, 0], sizes = [1, 8, 8], strides = [1, 1, 1]} : vector<4x8x8xf32> to vector<1x8x8xf32>
    %74 = vector.shape_cast %73 : vector<1x8x8xf32> to vector<8x8xf32>
    %75 = vector.extract_strided_slice %72 {offsets = [1, 0, 0], sizes = [1, 8, 8], strides = [1, 1, 1]} : vector<4x8x8xf32> to vector<1x8x8xf32>
    %76 = vector.shape_cast %75 : vector<1x8x8xf32> to vector<8x8xf32>
    %77 = vector.extract_strided_slice %72 {offsets = [2, 0, 0], sizes = [1, 8, 8], strides = [1, 1, 1]} : vector<4x8x8xf32> to vector<1x8x8xf32>
    %78 = vector.shape_cast %77 : vector<1x8x8xf32> to vector<8x8xf32>
    %79 = vector.extract_strided_slice %72 {offsets = [3, 0, 0], sizes = [1, 8, 8], strides = [1, 1, 1]} : vector<4x8x8xf32> to vector<1x8x8xf32>
    %80 = vector.shape_cast %79 : vector<1x8x8xf32> to vector<8x8xf32>
    %81 = tpu.concatenate %74, %76, %78, %80 in 1 : vector<8x8xf32>, vector<8x8xf32>, vector<8x8xf32>, vector<8x8xf32> -> vector<8x32xf32>
    %82 = arith.truncf %81 : vector<8x32xf32> to vector<8x32xbf16>
    %cst_34 = arith.constant dense<0.000000e+00> : vector<8x32xf32>
    %83 = tpu.matmul %82, %13, %cst_34 {dimension_numbers = #tpu.dot_dimension_numbers<[1], [0], [0], [1], [0, 0, 1, 1], [], []>} : vector<8x32xbf16>, vector<32x32xbf16>, vector<8x32xf32> -> vector<8x32xf32>
    %84 = vector.broadcast %15 : vector<1x32xf32> to vector<8x32xf32>
    %85 = arith.addf %83, %84 : vector<8x32xf32>
    %86 = arith.addf %1, %85 : vector<8x32xf32>
    %cst_35 = arith.constant dense<0.000000e+00> : vector<8xf32>
    %87 = vector.multi_reduction <add>, %86, %cst_35 [1] : vector<8x32xf32> to vector<8xf32>
    %88 = vector.shape_cast %87 : vector<8xf32> to vector<8x1xf32>
    %cst_36 = arith.constant 3.200000e+01 : f32
    %89 = vector.broadcast %cst_36 : f32 to vector<8x1xf32>
    %90 = arith.divf %88, %89 : vector<8x1xf32>
    %91 = vector.broadcast %90 : vector<8x1xf32> to vector<8x32xf32>
    %92 = arith.subf %86, %91 : vector<8x32xf32>
    %93 = arith.mulf %92, %92 : vector<8x32xf32>
    %cst_37 = arith.constant dense<0.000000e+00> : vector<8xf32>
    %94 = vector.multi_reduction <add>, %93, %cst_37 [1] : vector<8x32xf32> to vector<8xf32>
    %95 = vector.shape_cast %94 : vector<8xf32> to vector<8x1xf32>
    %cst_38 = arith.constant 3.200000e+01 : f32
    %96 = vector.broadcast %cst_38 : f32 to vector<8x1xf32>
    %97 = arith.divf %95, %96 : vector<8x1xf32>
    %cst_39 = arith.constant 9.99999974E-6 : f32
    %98 = vector.broadcast %cst_39 : f32 to vector<8x1xf32>
    %99 = arith.addf %97, %98 : vector<8x1xf32>
    %100 = math.rsqrt %99 : vector<8x1xf32>
    %101 = vector.broadcast %100 : vector<8x1xf32> to vector<8x32xf32>
    %102 = arith.mulf %92, %101 : vector<8x32xf32>
    %103 = vector.broadcast %17 : vector<1x32xf32> to vector<8x32xf32>
    %104 = arith.mulf %102, %103 : vector<8x32xf32>
    %105 = vector.broadcast %19 : vector<1x32xf32> to vector<8x32xf32>
    %106 = arith.addf %104, %105 : vector<8x32xf32>
    %c0_40 = arith.constant 0 : index
    %c0_41 = arith.constant 0 : index
    %c0_42 = arith.constant 0 : index
    %107 = vector.load %arg11[%c0_40, %c0_41, %c0_42] : memref<2x32x64xbf16, #tpu.memory_space<vmem>>, vector<1x32x64xbf16>
    %108 = vector.shape_cast %107 : vector<1x32x64xbf16> to vector<32x64xbf16>
    %c0_43 = arith.constant 0 : index
    %c0_44 = arith.constant 0 : index
    %c0_45 = arith.constant 0 : index
    %109 = vector.load %arg12[%c0_43, %c0_44, %c0_45] : memref<2x1x64xf32, #tpu.memory_space<vmem>>, vector<1x1x64xf32>
    %110 = vector.shape_cast %109 : vector<1x1x64xf32> to vector<1x64xf32>
    %c0_46 = arith.constant 0 : index
    %c0_47 = arith.constant 0 : index
    %c0_48 = arith.constant 0 : index
    %111 = vector.load %arg13[%c0_46, %c0_47, %c0_48] : memref<2x64x32xbf16, #tpu.memory_space<vmem>>, vector<1x64x32xbf16>
    %112 = vector.shape_cast %111 : vector<1x64x32xbf16> to vector<64x32xbf16>
    %c0_49 = arith.constant 0 : index
    %c0_50 = arith.constant 0 : index
    %c0_51 = arith.constant 0 : index
    %113 = vector.load %arg14[%c0_49, %c0_50, %c0_51] : memref<2x1x32xf32, #tpu.memory_space<vmem>>, vector<1x1x32xf32>
    %114 = vector.shape_cast %113 : vector<1x1x32xf32> to vector<1x32xf32>
    %c0_52 = arith.constant 0 : index
    %c0_53 = arith.constant 0 : index
    %c0_54 = arith.constant 0 : index
    %115 = vector.load %arg15[%c0_52, %c0_53, %c0_54] : memref<2x1x32xf32, #tpu.memory_space<vmem>>, vector<1x1x32xf32>
    %116 = vector.shape_cast %115 : vector<1x1x32xf32> to vector<1x32xf32>
    %c0_55 = arith.constant 0 : index
    %c0_56 = arith.constant 0 : index
    %c0_57 = arith.constant 0 : index
    %117 = vector.load %arg16[%c0_55, %c0_56, %c0_57] : memref<2x1x32xf32, #tpu.memory_space<vmem>>, vector<1x1x32xf32>
    %118 = vector.shape_cast %117 : vector<1x1x32xf32> to vector<1x32xf32>
    %119 = arith.truncf %106 : vector<8x32xf32> to vector<8x32xbf16>
    %cst_58 = arith.constant dense<0.000000e+00> : vector<8x64xf32>
    %120 = tpu.matmul %119, %108, %cst_58 {dimension_numbers = #tpu.dot_dimension_numbers<[1], [0], [0], [1], [0, 0, 1, 1], [], []>} : vector<8x32xbf16>, vector<32x64xbf16>, vector<8x64xf32> -> vector<8x64xf32>
    %121 = vector.broadcast %110 : vector<1x64xf32> to vector<8x64xf32>
    %122 = arith.addf %120, %121 : vector<8x64xf32>
    %cst_59 = arith.constant 0.000000e+00 : f32
    %123 = vector.broadcast %cst_59 : f32 to vector<8x64xf32>
    %124 = arith.maximumf %122, %123 : vector<8x64xf32>
    %125 = arith.truncf %124 : vector<8x64xf32> to vector<8x64xbf16>
    %cst_60 = arith.constant dense<0.000000e+00> : vector<8x32xf32>
    %126 = tpu.matmul %125, %112, %cst_60 {dimension_numbers = #tpu.dot_dimension_numbers<[1], [0], [0], [1], [0, 0, 1, 1], [], []>} : vector<8x64xbf16>, vector<64x32xbf16>, vector<8x32xf32> -> vector<8x32xf32>
    %127 = vector.broadcast %114 : vector<1x32xf32> to vector<8x32xf32>
    %128 = arith.addf %126, %127 : vector<8x32xf32>
    %129 = arith.addf %106, %128 : vector<8x32xf32>
    %cst_61 = arith.constant dense<0.000000e+00> : vector<8xf32>
    %130 = vector.multi_reduction <add>, %129, %cst_61 [1] : vector<8x32xf32> to vector<8xf32>
    %131 = vector.shape_cast %130 : vector<8xf32> to vector<8x1xf32>
    %cst_62 = arith.constant 3.200000e+01 : f32
    %132 = vector.broadcast %cst_62 : f32 to vector<8x1xf32>
    %133 = arith.divf %131, %132 : vector<8x1xf32>
    %134 = vector.broadcast %133 : vector<8x1xf32> to vector<8x32xf32>
    %135 = arith.subf %129, %134 : vector<8x32xf32>
    %136 = arith.mulf %135, %135 : vector<8x32xf32>
    %cst_63 = arith.constant dense<0.000000e+00> : vector<8xf32>
    %137 = vector.multi_reduction <add>, %136, %cst_63 [1] : vector<8x32xf32> to vector<8xf32>
    %138 = vector.shape_cast %137 : vector<8xf32> to vector<8x1xf32>
    %cst_64 = arith.constant 3.200000e+01 : f32
    %139 = vector.broadcast %cst_64 : f32 to vector<8x1xf32>
    %140 = arith.divf %138, %139 : vector<8x1xf32>
    %cst_65 = arith.constant 9.99999974E-6 : f32
    %141 = vector.broadcast %cst_65 : f32 to vector<8x1xf32>
    %142 = arith.addf %140, %141 : vector<8x1xf32>
    %143 = math.rsqrt %142 : vector<8x1xf32>
    %144 = vector.broadcast %143 : vector<8x1xf32> to vector<8x32xf32>
    %145 = arith.mulf %135, %144 : vector<8x32xf32>
    %146 = vector.broadcast %116 : vector<1x32xf32> to vector<8x32xf32>
    %147 = arith.mulf %145, %146 : vector<8x32xf32>
    %148 = vector.broadcast %118 : vector<1x32xf32> to vector<8x32xf32>
    %149 = arith.addf %147, %148 : vector<8x32xf32>
    %c1 = arith.constant 1 : index
    %c0_66 = arith.constant 0 : index
    %c0_67 = arith.constant 0 : index
    %150 = vector.load %arg5[%c1, %c0_66, %c0_67] : memref<2x32x96xbf16, #tpu.memory_space<vmem>>, vector<1x32x96xbf16>
    %151 = vector.shape_cast %150 : vector<1x32x96xbf16> to vector<32x96xbf16>
    %c1_68 = arith.constant 1 : index
    %c0_69 = arith.constant 0 : index
    %c0_70 = arith.constant 0 : index
    %152 = vector.load %arg6[%c1_68, %c0_69, %c0_70] : memref<2x1x96xf32, #tpu.memory_space<vmem>>, vector<1x1x96xf32>
    %153 = vector.shape_cast %152 : vector<1x1x96xf32> to vector<1x96xf32>
    %c1_71 = arith.constant 1 : index
    %c0_72 = arith.constant 0 : index
    %c0_73 = arith.constant 0 : index
    %154 = vector.load %arg7[%c1_71, %c0_72, %c0_73] : memref<2x32x32xbf16, #tpu.memory_space<vmem>>, vector<1x32x32xbf16>
    %155 = vector.shape_cast %154 : vector<1x32x32xbf16> to vector<32x32xbf16>
    %c1_74 = arith.constant 1 : index
    %c0_75 = arith.constant 0 : index
    %c0_76 = arith.constant 0 : index
    %156 = vector.load %arg8[%c1_74, %c0_75, %c0_76] : memref<2x1x32xf32, #tpu.memory_space<vmem>>, vector<1x1x32xf32>
    %157 = vector.shape_cast %156 : vector<1x1x32xf32> to vector<1x32xf32>
    %c1_77 = arith.constant 1 : index
    %c0_78 = arith.constant 0 : index
    %c0_79 = arith.constant 0 : index
    %158 = vector.load %arg9[%c1_77, %c0_78, %c0_79] : memref<2x1x32xf32, #tpu.memory_space<vmem>>, vector<1x1x32xf32>
    %159 = vector.shape_cast %158 : vector<1x1x32xf32> to vector<1x32xf32>
    %c1_80 = arith.constant 1 : index
    %c0_81 = arith.constant 0 : index
    %c0_82 = arith.constant 0 : index
    %160 = vector.load %arg10[%c1_80, %c0_81, %c0_82] : memref<2x1x32xf32, #tpu.memory_space<vmem>>, vector<1x1x32xf32>
    %161 = vector.shape_cast %160 : vector<1x1x32xf32> to vector<1x32xf32>
    %162 = arith.truncf %149 : vector<8x32xf32> to vector<8x32xbf16>
    %cst_83 = arith.constant dense<0.000000e+00> : vector<8x96xf32>
    %163 = tpu.matmul %162, %151, %cst_83 {dimension_numbers = #tpu.dot_dimension_numbers<[1], [0], [0], [1], [0, 0, 1, 1], [], []>} : vector<8x32xbf16>, vector<32x96xbf16>, vector<8x96xf32> -> vector<8x96xf32>
    %164 = vector.broadcast %153 : vector<1x96xf32> to vector<8x96xf32>
    %165 = arith.addf %163, %164 : vector<8x96xf32>
    %166 = arith.truncf %165 : vector<8x96xf32> to vector<8x96xbf16>
    %167 = vector.extract_strided_slice %166 {offsets = [0, 0], sizes = [8, 32], strides = [1, 1]} : vector<8x96xbf16> to vector<8x32xbf16>
    %168 = vector.extract_strided_slice %166 {offsets = [0, 32], sizes = [8, 32], strides = [1, 1]} : vector<8x96xbf16> to vector<8x32xbf16>
    %169 = vector.extract_strided_slice %166 {offsets = [0, 64], sizes = [8, 32], strides = [1, 1]} : vector<8x96xbf16> to vector<8x32xbf16>
    %170 = vector.extract_strided_slice %167 {offsets = [0, 0], sizes = [8, 8], strides = [1, 1]} : vector<8x32xbf16> to vector<8x8xbf16>
    %171 = vector.shape_cast %170 : vector<8x8xbf16> to vector<1x8x8xbf16>
    %172 = vector.extract_strided_slice %167 {offsets = [0, 8], sizes = [8, 8], strides = [1, 1]} : vector<8x32xbf16> to vector<8x8xbf16>
    %173 = vector.shape_cast %172 : vector<8x8xbf16> to vector<1x8x8xbf16>
    %174 = vector.extract_strided_slice %167 {offsets = [0, 16], sizes = [8, 8], strides = [1, 1]} : vector<8x32xbf16> to vector<8x8xbf16>
    %175 = vector.shape_cast %174 : vector<8x8xbf16> to vector<1x8x8xbf16>
    %176 = vector.extract_strided_slice %167 {offsets = [0, 24], sizes = [8, 8], strides = [1, 1]} : vector<8x32xbf16> to vector<8x8xbf16>
    %177 = vector.shape_cast %176 : vector<8x8xbf16> to vector<1x8x8xbf16>
    %178 = tpu.concatenate %171, %173, %175, %177 in 0 : vector<1x8x8xbf16>, vector<1x8x8xbf16>, vector<1x8x8xbf16>, vector<1x8x8xbf16> -> vector<4x8x8xbf16>
    %179 = vector.extract_strided_slice %168 {offsets = [0, 0], sizes = [8, 8], strides = [1, 1]} : vector<8x32xbf16> to vector<8x8xbf16>
    %180 = vector.shape_cast %179 : vector<8x8xbf16> to vector<1x8x8xbf16>
    %181 = vector.extract_strided_slice %168 {offsets = [0, 8], sizes = [8, 8], strides = [1, 1]} : vector<8x32xbf16> to vector<8x8xbf16>
    %182 = vector.shape_cast %181 : vector<8x8xbf16> to vector<1x8x8xbf16>
    %183 = vector.extract_strided_slice %168 {offsets = [0, 16], sizes = [8, 8], strides = [1, 1]} : vector<8x32xbf16> to vector<8x8xbf16>
    %184 = vector.shape_cast %183 : vector<8x8xbf16> to vector<1x8x8xbf16>
    %185 = vector.extract_strided_slice %168 {offsets = [0, 24], sizes = [8, 8], strides = [1, 1]} : vector<8x32xbf16> to vector<8x8xbf16>
    %186 = vector.shape_cast %185 : vector<8x8xbf16> to vector<1x8x8xbf16>
    %187 = tpu.concatenate %180, %182, %184, %186 in 0 : vector<1x8x8xbf16>, vector<1x8x8xbf16>, vector<1x8x8xbf16>, vector<1x8x8xbf16> -> vector<4x8x8xbf16>
    %188 = vector.extract_strided_slice %169 {offsets = [0, 0], sizes = [8, 8], strides = [1, 1]} : vector<8x32xbf16> to vector<8x8xbf16>
    %189 = vector.shape_cast %188 : vector<8x8xbf16> to vector<1x8x8xbf16>
    %190 = vector.extract_strided_slice %169 {offsets = [0, 8], sizes = [8, 8], strides = [1, 1]} : vector<8x32xbf16> to vector<8x8xbf16>
    %191 = vector.shape_cast %190 : vector<8x8xbf16> to vector<1x8x8xbf16>
    %192 = vector.extract_strided_slice %169 {offsets = [0, 16], sizes = [8, 8], strides = [1, 1]} : vector<8x32xbf16> to vector<8x8xbf16>
    %193 = vector.shape_cast %192 : vector<8x8xbf16> to vector<1x8x8xbf16>
    %194 = vector.extract_strided_slice %169 {offsets = [0, 24], sizes = [8, 8], strides = [1, 1]} : vector<8x32xbf16> to vector<8x8xbf16>
    %195 = vector.shape_cast %194 : vector<8x8xbf16> to vector<1x8x8xbf16>
    %196 = tpu.concatenate %189, %191, %193, %195 in 0 : vector<1x8x8xbf16>, vector<1x8x8xbf16>, vector<1x8x8xbf16>, vector<1x8x8xbf16> -> vector<4x8x8xbf16>
    "tpu.trace_start"() <{level = 10 : i32, message = "hqd,hkd->hqk"}> : () -> ()
    %cst_84 = arith.constant dense<0.000000e+00> : vector<4x8x8xf32>
    %197 = tpu.matmul %178, %187, %cst_84 {dimension_numbers = #tpu.dot_dimension_numbers<[2], [2], [1], [1], [0, 0, 0, 1, 1, 1], [0], [0]>} : vector<4x8x8xbf16>, vector<4x8x8xbf16>, vector<4x8x8xf32> -> vector<4x8x8xf32>
    "tpu.trace_stop"() : () -> ()
    %cst_85 = arith.constant 0.353553385 : f32
    %198 = vector.broadcast %cst_85 : f32 to vector<4x8x8xf32>
    %199 = arith.mulf %197, %198 : vector<4x8x8xf32>
    %200 = vector.shape_cast %5 : vector<1x8xf32> to vector<1x1x8xf32>
    %201 = vector.broadcast %200 : vector<1x1x8xf32> to vector<4x8x8xf32>
    %202 = arith.addf %199, %201 : vector<4x8x8xf32>
    %cst_86 = arith.constant dense<0xFF800000> : vector<4x8xf32>
    %203 = vector.multi_reduction <maximumf>, %202, %cst_86 [2] : vector<4x8x8xf32> to vector<4x8xf32>
    %204 = vector.shape_cast %203 : vector<4x8xf32> to vector<4x8x1xf32>
    %205 = vector.broadcast %204 : vector<4x8x1xf32> to vector<4x8x8xf32>
    %206 = arith.subf %202, %205 : vector<4x8x8xf32>
    %207 = math.exp %206 : vector<4x8x8xf32>
    %cst_87 = arith.constant dense<0.000000e+00> : vector<4x8xf32>
    %208 = vector.multi_reduction <add>, %207, %cst_87 [2] : vector<4x8x8xf32> to vector<4x8xf32>
    %209 = vector.shape_cast %208 : vector<4x8xf32> to vector<4x8x1xf32>
    %210 = tpu.reciprocal %209 {approx = true} : vector<4x8x1xf32> -> vector<4x8x1xf32>
    %211 = vector.broadcast %210 : vector<4x8x1xf32> to vector<4x8x8xf32>
    %212 = arith.mulf %207, %211 : vector<4x8x8xf32>
    %213 = arith.truncf %212 : vector<4x8x8xf32> to vector<4x8x8xbf16>
    "tpu.trace_start"() <{level = 10 : i32, message = "hqk,hkd->hqd"}> : () -> ()
    %cst_88 = arith.constant dense<0.000000e+00> : vector<4x8x8xf32>
    %214 = tpu.matmul %213, %196, %cst_88 {dimension_numbers = #tpu.dot_dimension_numbers<[2], [1], [1], [2], [0, 0, 0, 1, 1, 2], [0], [0]>} : vector<4x8x8xbf16>, vector<4x8x8xbf16>, vector<4x8x8xf32> -> vector<4x8x8xf32>
    "tpu.trace_stop"() : () -> ()
    %215 = vector.extract_strided_slice %214 {offsets = [0, 0, 0], sizes = [1, 8, 8], strides = [1, 1, 1]} : vector<4x8x8xf32> to vector<1x8x8xf32>
    %216 = vector.shape_cast %215 : vector<1x8x8xf32> to vector<8x8xf32>
    %217 = vector.extract_strided_slice %214 {offsets = [1, 0, 0], sizes = [1, 8, 8], strides = [1, 1, 1]} : vector<4x8x8xf32> to vector<1x8x8xf32>
    %218 = vector.shape_cast %217 : vector<1x8x8xf32> to vector<8x8xf32>
    %219 = vector.extract_strided_slice %214 {offsets = [2, 0, 0], sizes = [1, 8, 8], strides = [1, 1, 1]} : vector<4x8x8xf32> to vector<1x8x8xf32>
    %220 = vector.shape_cast %219 : vector<1x8x8xf32> to vector<8x8xf32>
    %221 = vector.extract_strided_slice %214 {offsets = [3, 0, 0], sizes = [1, 8, 8], strides = [1, 1, 1]} : vector<4x8x8xf32> to vector<1x8x8xf32>
    %222 = vector.shape_cast %221 : vector<1x8x8xf32> to vector<8x8xf32>
    %223 = tpu.concatenate %216, %218, %220, %222 in 1 : vector<8x8xf32>, vector<8x8xf32>, vector<8x8xf32>, vector<8x8xf32> -> vector<8x32xf32>
    %224 = arith.truncf %223 : vector<8x32xf32> to vector<8x32xbf16>
    %cst_89 = arith.constant dense<0.000000e+00> : vector<8x32xf32>
    %225 = tpu.matmul %224, %155, %cst_89 {dimension_numbers = #tpu.dot_dimension_numbers<[1], [0], [0], [1], [0, 0, 1, 1], [], []>} : vector<8x32xbf16>, vector<32x32xbf16>, vector<8x32xf32> -> vector<8x32xf32>
    %226 = vector.broadcast %157 : vector<1x32xf32> to vector<8x32xf32>
    %227 = arith.addf %225, %226 : vector<8x32xf32>
    %228 = arith.addf %149, %227 : vector<8x32xf32>
    %cst_90 = arith.constant dense<0.000000e+00> : vector<8xf32>
    %229 = vector.multi_reduction <add>, %228, %cst_90 [1] : vector<8x32xf32> to vector<8xf32>
    %230 = vector.shape_cast %229 : vector<8xf32> to vector<8x1xf32>
    %cst_91 = arith.constant 3.200000e+01 : f32
    %231 = vector.broadcast %cst_91 : f32 to vector<8x1xf32>
    %232 = arith.divf %230, %231 : vector<8x1xf32>
    %233 = vector.broadcast %232 : vector<8x1xf32> to vector<8x32xf32>
    %234 = arith.subf %228, %233 : vector<8x32xf32>
    %235 = arith.mulf %234, %234 : vector<8x32xf32>
    %cst_92 = arith.constant dense<0.000000e+00> : vector<8xf32>
    %236 = vector.multi_reduction <add>, %235, %cst_92 [1] : vector<8x32xf32> to vector<8xf32>
    %237 = vector.shape_cast %236 : vector<8xf32> to vector<8x1xf32>
    %cst_93 = arith.constant 3.200000e+01 : f32
    %238 = vector.broadcast %cst_93 : f32 to vector<8x1xf32>
    %239 = arith.divf %237, %238 : vector<8x1xf32>
    %cst_94 = arith.constant 9.99999974E-6 : f32
    %240 = vector.broadcast %cst_94 : f32 to vector<8x1xf32>
    %241 = arith.addf %239, %240 : vector<8x1xf32>
    %242 = math.rsqrt %241 : vector<8x1xf32>
    %243 = vector.broadcast %242 : vector<8x1xf32> to vector<8x32xf32>
    %244 = arith.mulf %234, %243 : vector<8x32xf32>
    %245 = vector.broadcast %159 : vector<1x32xf32> to vector<8x32xf32>
    %246 = arith.mulf %244, %245 : vector<8x32xf32>
    %247 = vector.broadcast %161 : vector<1x32xf32> to vector<8x32xf32>
    %248 = arith.addf %246, %247 : vector<8x32xf32>
    %c1_95 = arith.constant 1 : index
    %c0_96 = arith.constant 0 : index
    %c0_97 = arith.constant 0 : index
    %249 = vector.load %arg11[%c1_95, %c0_96, %c0_97] : memref<2x32x64xbf16, #tpu.memory_space<vmem>>, vector<1x32x64xbf16>
    %250 = vector.shape_cast %249 : vector<1x32x64xbf16> to vector<32x64xbf16>
    %c1_98 = arith.constant 1 : index
    %c0_99 = arith.constant 0 : index
    %c0_100 = arith.constant 0 : index
    %251 = vector.load %arg12[%c1_98, %c0_99, %c0_100] : memref<2x1x64xf32, #tpu.memory_space<vmem>>, vector<1x1x64xf32>
    %252 = vector.shape_cast %251 : vector<1x1x64xf32> to vector<1x64xf32>
    %c1_101 = arith.constant 1 : index
    %c0_102 = arith.constant 0 : index
    %c0_103 = arith.constant 0 : index
    %253 = vector.load %arg13[%c1_101, %c0_102, %c0_103] : memref<2x64x32xbf16, #tpu.memory_space<vmem>>, vector<1x64x32xbf16>
    %254 = vector.shape_cast %253 : vector<1x64x32xbf16> to vector<64x32xbf16>
    %c1_104 = arith.constant 1 : index
    %c0_105 = arith.constant 0 : index
    %c0_106 = arith.constant 0 : index
    %255 = vector.load %arg14[%c1_104, %c0_105, %c0_106] : memref<2x1x32xf32, #tpu.memory_space<vmem>>, vector<1x1x32xf32>
    %256 = vector.shape_cast %255 : vector<1x1x32xf32> to vector<1x32xf32>
    %c1_107 = arith.constant 1 : index
    %c0_108 = arith.constant 0 : index
    %c0_109 = arith.constant 0 : index
    %257 = vector.load %arg15[%c1_107, %c0_108, %c0_109] : memref<2x1x32xf32, #tpu.memory_space<vmem>>, vector<1x1x32xf32>
    %258 = vector.shape_cast %257 : vector<1x1x32xf32> to vector<1x32xf32>
    %c1_110 = arith.constant 1 : index
    %c0_111 = arith.constant 0 : index
    %c0_112 = arith.constant 0 : index
    %259 = vector.load %arg16[%c1_110, %c0_111, %c0_112] : memref<2x1x32xf32, #tpu.memory_space<vmem>>, vector<1x1x32xf32>
    %260 = vector.shape_cast %259 : vector<1x1x32xf32> to vector<1x32xf32>
    %261 = arith.truncf %248 : vector<8x32xf32> to vector<8x32xbf16>
    %cst_113 = arith.constant dense<0.000000e+00> : vector<8x64xf32>
    %262 = tpu.matmul %261, %250, %cst_113 {dimension_numbers = #tpu.dot_dimension_numbers<[1], [0], [0], [1], [0, 0, 1, 1], [], []>} : vector<8x32xbf16>, vector<32x64xbf16>, vector<8x64xf32> -> vector<8x64xf32>
    %263 = vector.broadcast %252 : vector<1x64xf32> to vector<8x64xf32>
    %264 = arith.addf %262, %263 : vector<8x64xf32>
    %cst_114 = arith.constant 0.000000e+00 : f32
    %265 = vector.broadcast %cst_114 : f32 to vector<8x64xf32>
    %266 = arith.maximumf %264, %265 : vector<8x64xf32>
    %267 = arith.truncf %266 : vector<8x64xf32> to vector<8x64xbf16>
    %cst_115 = arith.constant dense<0.000000e+00> : vector<8x32xf32>
    %268 = tpu.matmul %267, %254, %cst_115 {dimension_numbers = #tpu.dot_dimension_numbers<[1], [0], [0], [1], [0, 0, 1, 1], [], []>} : vector<8x64xbf16>, vector<64x32xbf16>, vector<8x32xf32> -> vector<8x32xf32>
    %269 = vector.broadcast %256 : vector<1x32xf32> to vector<8x32xf32>
    %270 = arith.addf %268, %269 : vector<8x32xf32>
    %271 = arith.addf %248, %270 : vector<8x32xf32>
    %cst_116 = arith.constant dense<0.000000e+00> : vector<8xf32>
    %272 = vector.multi_reduction <add>, %271, %cst_116 [1] : vector<8x32xf32> to vector<8xf32>
    %273 = vector.shape_cast %272 : vector<8xf32> to vector<8x1xf32>
    %cst_117 = arith.constant 3.200000e+01 : f32
    %274 = vector.broadcast %cst_117 : f32 to vector<8x1xf32>
    %275 = arith.divf %273, %274 : vector<8x1xf32>
    %276 = vector.broadcast %275 : vector<8x1xf32> to vector<8x32xf32>
    %277 = arith.subf %271, %276 : vector<8x32xf32>
    %278 = arith.mulf %277, %277 : vector<8x32xf32>
    %cst_118 = arith.constant dense<0.000000e+00> : vector<8xf32>
    %279 = vector.multi_reduction <add>, %278, %cst_118 [1] : vector<8x32xf32> to vector<8xf32>
    %280 = vector.shape_cast %279 : vector<8xf32> to vector<8x1xf32>
    %cst_119 = arith.constant 3.200000e+01 : f32
    %281 = vector.broadcast %cst_119 : f32 to vector<8x1xf32>
    %282 = arith.divf %280, %281 : vector<8x1xf32>
    %cst_120 = arith.constant 9.99999974E-6 : f32
    %283 = vector.broadcast %cst_120 : f32 to vector<8x1xf32>
    %284 = arith.addf %282, %283 : vector<8x1xf32>
    %285 = math.rsqrt %284 : vector<8x1xf32>
    %286 = vector.broadcast %285 : vector<8x1xf32> to vector<8x32xf32>
    %287 = arith.mulf %277, %286 : vector<8x32xf32>
    %288 = vector.broadcast %258 : vector<1x32xf32> to vector<8x32xf32>
    %289 = arith.mulf %287, %288 : vector<8x32xf32>
    %290 = vector.broadcast %260 : vector<1x32xf32> to vector<8x32xf32>
    %291 = arith.addf %289, %290 : vector<8x32xf32>
    %c0_121 = arith.constant 0 : index
    %c0_122 = arith.constant 0 : index
    %292 = vector.load %arg37[%c0_121, %c0_122] : memref<1x32xf32, #tpu.memory_space<vmem>>, vector<1x32xf32>
    %c0_123 = arith.constant 0 : index
    %c0_124 = arith.constant 0 : index
    %293 = vector.load %arg38[%c0_123, %c0_124] : memref<1x32xf32, #tpu.memory_space<vmem>>, vector<1x32xf32>
    %cst_125 = arith.constant dense<0.000000e+00> : vector<8xf32>
    %294 = vector.multi_reduction <add>, %291, %cst_125 [1] : vector<8x32xf32> to vector<8xf32>
    %295 = vector.shape_cast %294 : vector<8xf32> to vector<8x1xf32>
    %cst_126 = arith.constant 3.200000e+01 : f32
    %296 = vector.broadcast %cst_126 : f32 to vector<8x1xf32>
    %297 = arith.divf %295, %296 : vector<8x1xf32>
    %298 = vector.broadcast %297 : vector<8x1xf32> to vector<8x32xf32>
    %299 = arith.subf %291, %298 : vector<8x32xf32>
    %300 = arith.mulf %299, %299 : vector<8x32xf32>
    %cst_127 = arith.constant dense<0.000000e+00> : vector<8xf32>
    %301 = vector.multi_reduction <add>, %300, %cst_127 [1] : vector<8x32xf32> to vector<8xf32>
    %302 = vector.shape_cast %301 : vector<8xf32> to vector<8x1xf32>
    %cst_128 = arith.constant 3.200000e+01 : f32
    %303 = vector.broadcast %cst_128 : f32 to vector<8x1xf32>
    %304 = arith.divf %302, %303 : vector<8x1xf32>
    %cst_129 = arith.constant 9.99999974E-6 : f32
    %305 = vector.broadcast %cst_129 : f32 to vector<8x1xf32>
    %306 = arith.addf %304, %305 : vector<8x1xf32>
    %307 = math.rsqrt %306 : vector<8x1xf32>
    %308 = vector.broadcast %307 : vector<8x1xf32> to vector<8x32xf32>
    %309 = arith.mulf %299, %308 : vector<8x32xf32>
    %310 = vector.broadcast %292 : vector<1x32xf32> to vector<8x32xf32>
    %311 = arith.mulf %309, %310 : vector<8x32xf32>
    %312 = vector.broadcast %293 : vector<1x32xf32> to vector<8x32xf32>
    %313 = arith.addf %311, %312 : vector<8x32xf32>
    %314 = arith.truncf %313 : vector<8x32xf32> to vector<8x32xbf16>
    %c0_130 = arith.constant 0 : index
    %c0_131 = arith.constant 0 : index
    %c0_132 = arith.constant 0 : index
    %315 = vector.load %arg17[%c0_130, %c0_131, %c0_132] : memref<2x32x96xbf16, #tpu.memory_space<vmem>>, vector<1x32x96xbf16>
    %316 = vector.shape_cast %315 : vector<1x32x96xbf16> to vector<32x96xbf16>
    %c0_133 = arith.constant 0 : index
    %c0_134 = arith.constant 0 : index
    %c0_135 = arith.constant 0 : index
    %317 = vector.load %arg18[%c0_133, %c0_134, %c0_135] : memref<2x1x96xf32, #tpu.memory_space<vmem>>, vector<1x1x96xf32>
    %318 = vector.shape_cast %317 : vector<1x1x96xf32> to vector<1x96xf32>
    %c0_136 = arith.constant 0 : index
    %c0_137 = arith.constant 0 : index
    %c0_138 = arith.constant 0 : index
    %319 = vector.load %arg19[%c0_136, %c0_137, %c0_138] : memref<2x32x32xbf16, #tpu.memory_space<vmem>>, vector<1x32x32xbf16>
    %320 = vector.shape_cast %319 : vector<1x32x32xbf16> to vector<32x32xbf16>
    %c0_139 = arith.constant 0 : index
    %c0_140 = arith.constant 0 : index
    %c0_141 = arith.constant 0 : index
    %321 = vector.load %arg20[%c0_139, %c0_140, %c0_141] : memref<2x1x32xf32, #tpu.memory_space<vmem>>, vector<1x1x32xf32>
    %322 = vector.shape_cast %321 : vector<1x1x32xf32> to vector<1x32xf32>
    %c0_142 = arith.constant 0 : index
    %c0_143 = arith.constant 0 : index
    %c0_144 = arith.constant 0 : index
    %323 = vector.load %arg21[%c0_142, %c0_143, %c0_144] : memref<2x1x32xf32, #tpu.memory_space<vmem>>, vector<1x1x32xf32>
    %324 = vector.shape_cast %323 : vector<1x1x32xf32> to vector<1x32xf32>
    %c0_145 = arith.constant 0 : index
    %c0_146 = arith.constant 0 : index
    %c0_147 = arith.constant 0 : index
    %325 = vector.load %arg22[%c0_145, %c0_146, %c0_147] : memref<2x1x32xf32, #tpu.memory_space<vmem>>, vector<1x1x32xf32>
    %326 = vector.shape_cast %325 : vector<1x1x32xf32> to vector<1x32xf32>
    %327 = arith.truncf %3 : vector<8x32xf32> to vector<8x32xbf16>
    %cst_148 = arith.constant dense<0.000000e+00> : vector<8x96xf32>
    %328 = tpu.matmul %327, %316, %cst_148 {dimension_numbers = #tpu.dot_dimension_numbers<[1], [0], [0], [1], [0, 0, 1, 1], [], []>} : vector<8x32xbf16>, vector<32x96xbf16>, vector<8x96xf32> -> vector<8x96xf32>
    %329 = vector.broadcast %318 : vector<1x96xf32> to vector<8x96xf32>
    %330 = arith.addf %328, %329 : vector<8x96xf32>
    %331 = arith.truncf %330 : vector<8x96xf32> to vector<8x96xbf16>
    %332 = vector.extract_strided_slice %331 {offsets = [0, 0], sizes = [8, 32], strides = [1, 1]} : vector<8x96xbf16> to vector<8x32xbf16>
    %333 = vector.extract_strided_slice %331 {offsets = [0, 32], sizes = [8, 32], strides = [1, 1]} : vector<8x96xbf16> to vector<8x32xbf16>
    %334 = vector.extract_strided_slice %331 {offsets = [0, 64], sizes = [8, 32], strides = [1, 1]} : vector<8x96xbf16> to vector<8x32xbf16>
    %335 = vector.extract_strided_slice %332 {offsets = [0, 0], sizes = [8, 8], strides = [1, 1]} : vector<8x32xbf16> to vector<8x8xbf16>
    %336 = vector.shape_cast %335 : vector<8x8xbf16> to vector<1x8x8xbf16>
    %337 = vector.extract_strided_slice %332 {offsets = [0, 8], sizes = [8, 8], strides = [1, 1]} : vector<8x32xbf16> to vector<8x8xbf16>
    %338 = vector.shape_cast %337 : vector<8x8xbf16> to vector<1x8x8xbf16>
    %339 = vector.extract_strided_slice %332 {offsets = [0, 16], sizes = [8, 8], strides = [1, 1]} : vector<8x32xbf16> to vector<8x8xbf16>
    %340 = vector.shape_cast %339 : vector<8x8xbf16> to vector<1x8x8xbf16>
    %341 = vector.extract_strided_slice %332 {offsets = [0, 24], sizes = [8, 8], strides = [1, 1]} : vector<8x32xbf16> to vector<8x8xbf16>
    %342 = vector.shape_cast %341 : vector<8x8xbf16> to vector<1x8x8xbf16>
    %343 = tpu.concatenate %336, %338, %340, %342 in 0 : vector<1x8x8xbf16>, vector<1x8x8xbf16>, vector<1x8x8xbf16>, vector<1x8x8xbf16> -> vector<4x8x8xbf16>
    %344 = vector.extract_strided_slice %333 {offsets = [0, 0], sizes = [8, 8], strides = [1, 1]} : vector<8x32xbf16> to vector<8x8xbf16>
    %345 = vector.shape_cast %344 : vector<8x8xbf16> to vector<1x8x8xbf16>
    %346 = vector.extract_strided_slice %333 {offsets = [0, 8], sizes = [8, 8], strides = [1, 1]} : vector<8x32xbf16> to vector<8x8xbf16>
    %347 = vector.shape_cast %346 : vector<8x8xbf16> to vector<1x8x8xbf16>
    %348 = vector.extract_strided_slice %333 {offsets = [0, 16], sizes = [8, 8], strides = [1, 1]} : vector<8x32xbf16> to vector<8x8xbf16>
    %349 = vector.shape_cast %348 : vector<8x8xbf16> to vector<1x8x8xbf16>
    %350 = vector.extract_strided_slice %333 {offsets = [0, 24], sizes = [8, 8], strides = [1, 1]} : vector<8x32xbf16> to vector<8x8xbf16>
    %351 = vector.shape_cast %350 : vector<8x8xbf16> to vector<1x8x8xbf16>
    %352 = tpu.concatenate %345, %347, %349, %351 in 0 : vector<1x8x8xbf16>, vector<1x8x8xbf16>, vector<1x8x8xbf16>, vector<1x8x8xbf16> -> vector<4x8x8xbf16>
    %353 = vector.extract_strided_slice %334 {offsets = [0, 0], sizes = [8, 8], strides = [1, 1]} : vector<8x32xbf16> to vector<8x8xbf16>
    %354 = vector.shape_cast %353 : vector<8x8xbf16> to vector<1x8x8xbf16>
    %355 = vector.extract_strided_slice %334 {offsets = [0, 8], sizes = [8, 8], strides = [1, 1]} : vector<8x32xbf16> to vector<8x8xbf16>
    %356 = vector.shape_cast %355 : vector<8x8xbf16> to vector<1x8x8xbf16>
    %357 = vector.extract_strided_slice %334 {offsets = [0, 16], sizes = [8, 8], strides = [1, 1]} : vector<8x32xbf16> to vector<8x8xbf16>
    %358 = vector.shape_cast %357 : vector<8x8xbf16> to vector<1x8x8xbf16>
    %359 = vector.extract_strided_slice %334 {offsets = [0, 24], sizes = [8, 8], strides = [1, 1]} : vector<8x32xbf16> to vector<8x8xbf16>
    %360 = vector.shape_cast %359 : vector<8x8xbf16> to vector<1x8x8xbf16>
    %361 = tpu.concatenate %354, %356, %358, %360 in 0 : vector<1x8x8xbf16>, vector<1x8x8xbf16>, vector<1x8x8xbf16>, vector<1x8x8xbf16> -> vector<4x8x8xbf16>
    "tpu.trace_start"() <{level = 10 : i32, message = "hqd,hkd->hqk"}> : () -> ()
    %cst_149 = arith.constant dense<0.000000e+00> : vector<4x8x8xf32>
    %362 = tpu.matmul %343, %352, %cst_149 {dimension_numbers = #tpu.dot_dimension_numbers<[2], [2], [1], [1], [0, 0, 0, 1, 1, 1], [0], [0]>} : vector<4x8x8xbf16>, vector<4x8x8xbf16>, vector<4x8x8xf32> -> vector<4x8x8xf32>
    "tpu.trace_stop"() : () -> ()
    %cst_150 = arith.constant 0.353553385 : f32
    %363 = vector.broadcast %cst_150 : f32 to vector<4x8x8xf32>
    %364 = arith.mulf %362, %363 : vector<4x8x8xf32>
    %365 = vector.shape_cast %7 : vector<8x8xf32> to vector<1x8x8xf32>
    %366 = vector.broadcast %365 : vector<1x8x8xf32> to vector<4x8x8xf32>
    %367 = arith.addf %364, %366 : vector<4x8x8xf32>
    %cst_151 = arith.constant dense<0xFF800000> : vector<4x8xf32>
    %368 = vector.multi_reduction <maximumf>, %367, %cst_151 [2] : vector<4x8x8xf32> to vector<4x8xf32>
    %369 = vector.shape_cast %368 : vector<4x8xf32> to vector<4x8x1xf32>
    %370 = vector.broadcast %369 : vector<4x8x1xf32> to vector<4x8x8xf32>
    %371 = arith.subf %367, %370 : vector<4x8x8xf32>
    %372 = math.exp %371 : vector<4x8x8xf32>
    %cst_152 = arith.constant dense<0.000000e+00> : vector<4x8xf32>
    %373 = vector.multi_reduction <add>, %372, %cst_152 [2] : vector<4x8x8xf32> to vector<4x8xf32>
    %374 = vector.shape_cast %373 : vector<4x8xf32> to vector<4x8x1xf32>
    %375 = tpu.reciprocal %374 {approx = true} : vector<4x8x1xf32> -> vector<4x8x1xf32>
    %376 = vector.broadcast %375 : vector<4x8x1xf32> to vector<4x8x8xf32>
    %377 = arith.mulf %372, %376 : vector<4x8x8xf32>
    %378 = arith.truncf %377 : vector<4x8x8xf32> to vector<4x8x8xbf16>
    "tpu.trace_start"() <{level = 10 : i32, message = "hqk,hkd->hqd"}> : () -> ()
    %cst_153 = arith.constant dense<0.000000e+00> : vector<4x8x8xf32>
    %379 = tpu.matmul %378, %361, %cst_153 {dimension_numbers = #tpu.dot_dimension_numbers<[2], [1], [1], [2], [0, 0, 0, 1, 1, 2], [0], [0]>} : vector<4x8x8xbf16>, vector<4x8x8xbf16>, vector<4x8x8xf32> -> vector<4x8x8xf32>
    "tpu.trace_stop"() : () -> ()
    %380 = vector.extract_strided_slice %379 {offsets = [0, 0, 0], sizes = [1, 8, 8], strides = [1, 1, 1]} : vector<4x8x8xf32> to vector<1x8x8xf32>
    %381 = vector.shape_cast %380 : vector<1x8x8xf32> to vector<8x8xf32>
    %382 = vector.extract_strided_slice %379 {offsets = [1, 0, 0], sizes = [1, 8, 8], strides = [1, 1, 1]} : vector<4x8x8xf32> to vector<1x8x8xf32>
    %383 = vector.shape_cast %382 : vector<1x8x8xf32> to vector<8x8xf32>
    %384 = vector.extract_strided_slice %379 {offsets = [2, 0, 0], sizes = [1, 8, 8], strides = [1, 1, 1]} : vector<4x8x8xf32> to vector<1x8x8xf32>
    %385 = vector.shape_cast %384 : vector<1x8x8xf32> to vector<8x8xf32>
    %386 = vector.extract_strided_slice %379 {offsets = [3, 0, 0], sizes = [1, 8, 8], strides = [1, 1, 1]} : vector<4x8x8xf32> to vector<1x8x8xf32>
    %387 = vector.shape_cast %386 : vector<1x8x8xf32> to vector<8x8xf32>
    %388 = tpu.concatenate %381, %383, %385, %387 in 1 : vector<8x8xf32>, vector<8x8xf32>, vector<8x8xf32>, vector<8x8xf32> -> vector<8x32xf32>
    %389 = arith.truncf %388 : vector<8x32xf32> to vector<8x32xbf16>
    %cst_154 = arith.constant dense<0.000000e+00> : vector<8x32xf32>
    %390 = tpu.matmul %389, %320, %cst_154 {dimension_numbers = #tpu.dot_dimension_numbers<[1], [0], [0], [1], [0, 0, 1, 1], [], []>} : vector<8x32xbf16>, vector<32x32xbf16>, vector<8x32xf32> -> vector<8x32xf32>
    %391 = vector.broadcast %322 : vector<1x32xf32> to vector<8x32xf32>
    %392 = arith.addf %390, %391 : vector<8x32xf32>
    %393 = arith.addf %3, %392 : vector<8x32xf32>
    %cst_155 = arith.constant dense<0.000000e+00> : vector<8xf32>
    %394 = vector.multi_reduction <add>, %393, %cst_155 [1] : vector<8x32xf32> to vector<8xf32>
    %395 = vector.shape_cast %394 : vector<8xf32> to vector<8x1xf32>
    %cst_156 = arith.constant 3.200000e+01 : f32
    %396 = vector.broadcast %cst_156 : f32 to vector<8x1xf32>
    %397 = arith.divf %395, %396 : vector<8x1xf32>
    %398 = vector.broadcast %397 : vector<8x1xf32> to vector<8x32xf32>
    %399 = arith.subf %393, %398 : vector<8x32xf32>
    %400 = arith.mulf %399, %399 : vector<8x32xf32>
    %cst_157 = arith.constant dense<0.000000e+00> : vector<8xf32>
    %401 = vector.multi_reduction <add>, %400, %cst_157 [1] : vector<8x32xf32> to vector<8xf32>
    %402 = vector.shape_cast %401 : vector<8xf32> to vector<8x1xf32>
    %cst_158 = arith.constant 3.200000e+01 : f32
    %403 = vector.broadcast %cst_158 : f32 to vector<8x1xf32>
    %404 = arith.divf %402, %403 : vector<8x1xf32>
    %cst_159 = arith.constant 9.99999974E-6 : f32
    %405 = vector.broadcast %cst_159 : f32 to vector<8x1xf32>
    %406 = arith.addf %404, %405 : vector<8x1xf32>
    %407 = math.rsqrt %406 : vector<8x1xf32>
    %408 = vector.broadcast %407 : vector<8x1xf32> to vector<8x32xf32>
    %409 = arith.mulf %399, %408 : vector<8x32xf32>
    %410 = vector.broadcast %324 : vector<1x32xf32> to vector<8x32xf32>
    %411 = arith.mulf %409, %410 : vector<8x32xf32>
    %412 = vector.broadcast %326 : vector<1x32xf32> to vector<8x32xf32>
    %413 = arith.addf %411, %412 : vector<8x32xf32>
    %c0_160 = arith.constant 0 : index
    %c0_161 = arith.constant 0 : index
    %c0_162 = arith.constant 0 : index
    %414 = vector.load %arg23[%c0_160, %c0_161, %c0_162] : memref<2x32x32xbf16, #tpu.memory_space<vmem>>, vector<1x32x32xbf16>
    %415 = vector.shape_cast %414 : vector<1x32x32xbf16> to vector<32x32xbf16>
    %c0_163 = arith.constant 0 : index
    %c0_164 = arith.constant 0 : index
    %c0_165 = arith.constant 0 : index
    %416 = vector.load %arg24[%c0_163, %c0_164, %c0_165] : memref<2x1x32xf32, #tpu.memory_space<vmem>>, vector<1x1x32xf32>
    %417 = vector.shape_cast %416 : vector<1x1x32xf32> to vector<1x32xf32>
    %c0_166 = arith.constant 0 : index
    %c0_167 = arith.constant 0 : index
    %c0_168 = arith.constant 0 : index
    %418 = vector.load %arg25[%c0_166, %c0_167, %c0_168] : memref<2x32x64xbf16, #tpu.memory_space<vmem>>, vector<1x32x64xbf16>
    %419 = vector.shape_cast %418 : vector<1x32x64xbf16> to vector<32x64xbf16>
    %c0_169 = arith.constant 0 : index
    %c0_170 = arith.constant 0 : index
    %c0_171 = arith.constant 0 : index
    %420 = vector.load %arg26[%c0_169, %c0_170, %c0_171] : memref<2x1x64xf32, #tpu.memory_space<vmem>>, vector<1x1x64xf32>
    %421 = vector.shape_cast %420 : vector<1x1x64xf32> to vector<1x64xf32>
    %c0_172 = arith.constant 0 : index
    %c0_173 = arith.constant 0 : index
    %c0_174 = arith.constant 0 : index
    %422 = vector.load %arg27[%c0_172, %c0_173, %c0_174] : memref<2x32x32xbf16, #tpu.memory_space<vmem>>, vector<1x32x32xbf16>
    %423 = vector.shape_cast %422 : vector<1x32x32xbf16> to vector<32x32xbf16>
    %c0_175 = arith.constant 0 : index
    %c0_176 = arith.constant 0 : index
    %c0_177 = arith.constant 0 : index
    %424 = vector.load %arg28[%c0_175, %c0_176, %c0_177] : memref<2x1x32xf32, #tpu.memory_space<vmem>>, vector<1x1x32xf32>
    %425 = vector.shape_cast %424 : vector<1x1x32xf32> to vector<1x32xf32>
    %c0_178 = arith.constant 0 : index
    %c0_179 = arith.constant 0 : index
    %c0_180 = arith.constant 0 : index
    %426 = vector.load %arg29[%c0_178, %c0_179, %c0_180] : memref<2x1x32xf32, #tpu.memory_space<vmem>>, vector<1x1x32xf32>
    %427 = vector.shape_cast %426 : vector<1x1x32xf32> to vector<1x32xf32>
    %c0_181 = arith.constant 0 : index
    %c0_182 = arith.constant 0 : index
    %c0_183 = arith.constant 0 : index
    %428 = vector.load %arg30[%c0_181, %c0_182, %c0_183] : memref<2x1x32xf32, #tpu.memory_space<vmem>>, vector<1x1x32xf32>
    %429 = vector.shape_cast %428 : vector<1x1x32xf32> to vector<1x32xf32>
    %430 = arith.truncf %413 : vector<8x32xf32> to vector<8x32xbf16>
    %cst_184 = arith.constant dense<0.000000e+00> : vector<8x32xf32>
    %431 = tpu.matmul %430, %415, %cst_184 {dimension_numbers = #tpu.dot_dimension_numbers<[1], [0], [0], [1], [0, 0, 1, 1], [], []>} : vector<8x32xbf16>, vector<32x32xbf16>, vector<8x32xf32> -> vector<8x32xf32>
    %432 = vector.broadcast %417 : vector<1x32xf32> to vector<8x32xf32>
    %433 = arith.addf %431, %432 : vector<8x32xf32>
    %434 = arith.truncf %433 : vector<8x32xf32> to vector<8x32xbf16>
    %cst_185 = arith.constant dense<0.000000e+00> : vector<8x64xf32>
    %435 = tpu.matmul %314, %419, %cst_185 {dimension_numbers = #tpu.dot_dimension_numbers<[1], [0], [0], [1], [0, 0, 1, 1], [], []>} : vector<8x32xbf16>, vector<32x64xbf16>, vector<8x64xf32> -> vector<8x64xf32>
    %436 = vector.broadcast %421 : vector<1x64xf32> to vector<8x64xf32>
    %437 = arith.addf %435, %436 : vector<8x64xf32>
    %438 = arith.truncf %437 : vector<8x64xf32> to vector<8x64xbf16>
    %439 = vector.extract_strided_slice %438 {offsets = [0, 0], sizes = [8, 32], strides = [1, 1]} : vector<8x64xbf16> to vector<8x32xbf16>
    %440 = vector.extract_strided_slice %438 {offsets = [0, 32], sizes = [8, 32], strides = [1, 1]} : vector<8x64xbf16> to vector<8x32xbf16>
    %441 = vector.extract_strided_slice %434 {offsets = [0, 0], sizes = [8, 8], strides = [1, 1]} : vector<8x32xbf16> to vector<8x8xbf16>
    %442 = vector.shape_cast %441 : vector<8x8xbf16> to vector<1x8x8xbf16>
    %443 = vector.extract_strided_slice %434 {offsets = [0, 8], sizes = [8, 8], strides = [1, 1]} : vector<8x32xbf16> to vector<8x8xbf16>
    %444 = vector.shape_cast %443 : vector<8x8xbf16> to vector<1x8x8xbf16>
    %445 = vector.extract_strided_slice %434 {offsets = [0, 16], sizes = [8, 8], strides = [1, 1]} : vector<8x32xbf16> to vector<8x8xbf16>
    %446 = vector.shape_cast %445 : vector<8x8xbf16> to vector<1x8x8xbf16>
    %447 = vector.extract_strided_slice %434 {offsets = [0, 24], sizes = [8, 8], strides = [1, 1]} : vector<8x32xbf16> to vector<8x8xbf16>
    %448 = vector.shape_cast %447 : vector<8x8xbf16> to vector<1x8x8xbf16>
    %449 = tpu.concatenate %442, %444, %446, %448 in 0 : vector<1x8x8xbf16>, vector<1x8x8xbf16>, vector<1x8x8xbf16>, vector<1x8x8xbf16> -> vector<4x8x8xbf16>
    %450 = vector.extract_strided_slice %439 {offsets = [0, 0], sizes = [8, 8], strides = [1, 1]} : vector<8x32xbf16> to vector<8x8xbf16>
    %451 = vector.shape_cast %450 : vector<8x8xbf16> to vector<1x8x8xbf16>
    %452 = vector.extract_strided_slice %439 {offsets = [0, 8], sizes = [8, 8], strides = [1, 1]} : vector<8x32xbf16> to vector<8x8xbf16>
    %453 = vector.shape_cast %452 : vector<8x8xbf16> to vector<1x8x8xbf16>
    %454 = vector.extract_strided_slice %439 {offsets = [0, 16], sizes = [8, 8], strides = [1, 1]} : vector<8x32xbf16> to vector<8x8xbf16>
    %455 = vector.shape_cast %454 : vector<8x8xbf16> to vector<1x8x8xbf16>
    %456 = vector.extract_strided_slice %439 {offsets = [0, 24], sizes = [8, 8], strides = [1, 1]} : vector<8x32xbf16> to vector<8x8xbf16>
    %457 = vector.shape_cast %456 : vector<8x8xbf16> to vector<1x8x8xbf16>
    %458 = tpu.concatenate %451, %453, %455, %457 in 0 : vector<1x8x8xbf16>, vector<1x8x8xbf16>, vector<1x8x8xbf16>, vector<1x8x8xbf16> -> vector<4x8x8xbf16>
    %459 = vector.extract_strided_slice %440 {offsets = [0, 0], sizes = [8, 8], strides = [1, 1]} : vector<8x32xbf16> to vector<8x8xbf16>
    %460 = vector.shape_cast %459 : vector<8x8xbf16> to vector<1x8x8xbf16>
    %461 = vector.extract_strided_slice %440 {offsets = [0, 8], sizes = [8, 8], strides = [1, 1]} : vector<8x32xbf16> to vector<8x8xbf16>
    %462 = vector.shape_cast %461 : vector<8x8xbf16> to vector<1x8x8xbf16>
    %463 = vector.extract_strided_slice %440 {offsets = [0, 16], sizes = [8, 8], strides = [1, 1]} : vector<8x32xbf16> to vector<8x8xbf16>
    %464 = vector.shape_cast %463 : vector<8x8xbf16> to vector<1x8x8xbf16>
    %465 = vector.extract_strided_slice %440 {offsets = [0, 24], sizes = [8, 8], strides = [1, 1]} : vector<8x32xbf16> to vector<8x8xbf16>
    %466 = vector.shape_cast %465 : vector<8x8xbf16> to vector<1x8x8xbf16>
    %467 = tpu.concatenate %460, %462, %464, %466 in 0 : vector<1x8x8xbf16>, vector<1x8x8xbf16>, vector<1x8x8xbf16>, vector<1x8x8xbf16> -> vector<4x8x8xbf16>
    "tpu.trace_start"() <{level = 10 : i32, message = "hqd,hkd->hqk"}> : () -> ()
    %cst_186 = arith.constant dense<0.000000e+00> : vector<4x8x8xf32>
    %468 = tpu.matmul %449, %458, %cst_186 {dimension_numbers = #tpu.dot_dimension_numbers<[2], [2], [1], [1], [0, 0, 0, 1, 1, 1], [0], [0]>} : vector<4x8x8xbf16>, vector<4x8x8xbf16>, vector<4x8x8xf32> -> vector<4x8x8xf32>
    "tpu.trace_stop"() : () -> ()
    %cst_187 = arith.constant 0.353553385 : f32
    %469 = vector.broadcast %cst_187 : f32 to vector<4x8x8xf32>
    %470 = arith.mulf %468, %469 : vector<4x8x8xf32>
    %cst_188 = arith.constant dense<0xFF800000> : vector<4x8xf32>
    %471 = vector.multi_reduction <maximumf>, %470, %cst_188 [2] : vector<4x8x8xf32> to vector<4x8xf32>
    %472 = vector.shape_cast %471 : vector<4x8xf32> to vector<4x8x1xf32>
    %473 = vector.broadcast %472 : vector<4x8x1xf32> to vector<4x8x8xf32>
    %474 = arith.subf %470, %473 : vector<4x8x8xf32>
    %475 = math.exp %474 : vector<4x8x8xf32>
    %cst_189 = arith.constant dense<0.000000e+00> : vector<4x8xf32>
    %476 = vector.multi_reduction <add>, %475, %cst_189 [2] : vector<4x8x8xf32> to vector<4x8xf32>
    %477 = vector.shape_cast %476 : vector<4x8xf32> to vector<4x8x1xf32>
    %478 = tpu.reciprocal %477 {approx = true} : vector<4x8x1xf32> -> vector<4x8x1xf32>
    %479 = vector.broadcast %478 : vector<4x8x1xf32> to vector<4x8x8xf32>
    %480 = arith.mulf %475, %479 : vector<4x8x8xf32>
    %481 = arith.truncf %480 : vector<4x8x8xf32> to vector<4x8x8xbf16>
    "tpu.trace_start"() <{level = 10 : i32, message = "hqk,hkd->hqd"}> : () -> ()
    %cst_190 = arith.constant dense<0.000000e+00> : vector<4x8x8xf32>
    %482 = tpu.matmul %481, %467, %cst_190 {dimension_numbers = #tpu.dot_dimension_numbers<[2], [1], [1], [2], [0, 0, 0, 1, 1, 2], [0], [0]>} : vector<4x8x8xbf16>, vector<4x8x8xbf16>, vector<4x8x8xf32> -> vector<4x8x8xf32>
    "tpu.trace_stop"() : () -> ()
    %483 = vector.extract_strided_slice %482 {offsets = [0, 0, 0], sizes = [1, 8, 8], strides = [1, 1, 1]} : vector<4x8x8xf32> to vector<1x8x8xf32>
    %484 = vector.shape_cast %483 : vector<1x8x8xf32> to vector<8x8xf32>
    %485 = vector.extract_strided_slice %482 {offsets = [1, 0, 0], sizes = [1, 8, 8], strides = [1, 1, 1]} : vector<4x8x8xf32> to vector<1x8x8xf32>
    %486 = vector.shape_cast %485 : vector<1x8x8xf32> to vector<8x8xf32>
    %487 = vector.extract_strided_slice %482 {offsets = [2, 0, 0], sizes = [1, 8, 8], strides = [1, 1, 1]} : vector<4x8x8xf32> to vector<1x8x8xf32>
    %488 = vector.shape_cast %487 : vector<1x8x8xf32> to vector<8x8xf32>
    %489 = vector.extract_strided_slice %482 {offsets = [3, 0, 0], sizes = [1, 8, 8], strides = [1, 1, 1]} : vector<4x8x8xf32> to vector<1x8x8xf32>
    %490 = vector.shape_cast %489 : vector<1x8x8xf32> to vector<8x8xf32>
    %491 = tpu.concatenate %484, %486, %488, %490 in 1 : vector<8x8xf32>, vector<8x8xf32>, vector<8x8xf32>, vector<8x8xf32> -> vector<8x32xf32>
    %492 = arith.truncf %491 : vector<8x32xf32> to vector<8x32xbf16>
    %cst_191 = arith.constant dense<0.000000e+00> : vector<8x32xf32>
    %493 = tpu.matmul %492, %423, %cst_191 {dimension_numbers = #tpu.dot_dimension_numbers<[1], [0], [0], [1], [0, 0, 1, 1], [], []>} : vector<8x32xbf16>, vector<32x32xbf16>, vector<8x32xf32> -> vector<8x32xf32>
    %494 = vector.broadcast %425 : vector<1x32xf32> to vector<8x32xf32>
    %495 = arith.addf %493, %494 : vector<8x32xf32>
    %496 = arith.addf %413, %495 : vector<8x32xf32>
    %cst_192 = arith.constant dense<0.000000e+00> : vector<8xf32>
    %497 = vector.multi_reduction <add>, %496, %cst_192 [1] : vector<8x32xf32> to vector<8xf32>
    %498 = vector.shape_cast %497 : vector<8xf32> to vector<8x1xf32>
    %cst_193 = arith.constant 3.200000e+01 : f32
    %499 = vector.broadcast %cst_193 : f32 to vector<8x1xf32>
    %500 = arith.divf %498, %499 : vector<8x1xf32>
    %501 = vector.broadcast %500 : vector<8x1xf32> to vector<8x32xf32>
    %502 = arith.subf %496, %501 : vector<8x32xf32>
    %503 = arith.mulf %502, %502 : vector<8x32xf32>
    %cst_194 = arith.constant dense<0.000000e+00> : vector<8xf32>
    %504 = vector.multi_reduction <add>, %503, %cst_194 [1] : vector<8x32xf32> to vector<8xf32>
    %505 = vector.shape_cast %504 : vector<8xf32> to vector<8x1xf32>
    %cst_195 = arith.constant 3.200000e+01 : f32
    %506 = vector.broadcast %cst_195 : f32 to vector<8x1xf32>
    %507 = arith.divf %505, %506 : vector<8x1xf32>
    %cst_196 = arith.constant 9.99999974E-6 : f32
    %508 = vector.broadcast %cst_196 : f32 to vector<8x1xf32>
    %509 = arith.addf %507, %508 : vector<8x1xf32>
    %510 = math.rsqrt %509 : vector<8x1xf32>
    %511 = vector.broadcast %510 : vector<8x1xf32> to vector<8x32xf32>
    %512 = arith.mulf %502, %511 : vector<8x32xf32>
    %513 = vector.broadcast %427 : vector<1x32xf32> to vector<8x32xf32>
    %514 = arith.mulf %512, %513 : vector<8x32xf32>
    %515 = vector.broadcast %429 : vector<1x32xf32> to vector<8x32xf32>
    %516 = arith.addf %514, %515 : vector<8x32xf32>
    %c0_197 = arith.constant 0 : index
    %c0_198 = arith.constant 0 : index
    %c0_199 = arith.constant 0 : index
    %517 = vector.load %arg31[%c0_197, %c0_198, %c0_199] : memref<2x32x64xbf16, #tpu.memory_space<vmem>>, vector<1x32x64xbf16>
    %518 = vector.shape_cast %517 : vector<1x32x64xbf16> to vector<32x64xbf16>
    %c0_200 = arith.constant 0 : index
    %c0_201 = arith.constant 0 : index
    %c0_202 = arith.constant 0 : index
    %519 = vector.load %arg32[%c0_200, %c0_201, %c0_202] : memref<2x1x64xf32, #tpu.memory_space<vmem>>, vector<1x1x64xf32>
    %520 = vector.shape_cast %519 : vector<1x1x64xf32> to vector<1x64xf32>
    %c0_203 = arith.constant 0 : index
    %c0_204 = arith.constant 0 : index
    %c0_205 = arith.constant 0 : index
    %521 = vector.load %arg33[%c0_203, %c0_204, %c0_205] : memref<2x64x32xbf16, #tpu.memory_space<vmem>>, vector<1x64x32xbf16>
    %522 = vector.shape_cast %521 : vector<1x64x32xbf16> to vector<64x32xbf16>
    %c0_206 = arith.constant 0 : index
    %c0_207 = arith.constant 0 : index
    %c0_208 = arith.constant 0 : index
    %523 = vector.load %arg34[%c0_206, %c0_207, %c0_208] : memref<2x1x32xf32, #tpu.memory_space<vmem>>, vector<1x1x32xf32>
    %524 = vector.shape_cast %523 : vector<1x1x32xf32> to vector<1x32xf32>
    %c0_209 = arith.constant 0 : index
    %c0_210 = arith.constant 0 : index
    %c0_211 = arith.constant 0 : index
    %525 = vector.load %arg35[%c0_209, %c0_210, %c0_211] : memref<2x1x32xf32, #tpu.memory_space<vmem>>, vector<1x1x32xf32>
    %526 = vector.shape_cast %525 : vector<1x1x32xf32> to vector<1x32xf32>
    %c0_212 = arith.constant 0 : index
    %c0_213 = arith.constant 0 : index
    %c0_214 = arith.constant 0 : index
    %527 = vector.load %arg36[%c0_212, %c0_213, %c0_214] : memref<2x1x32xf32, #tpu.memory_space<vmem>>, vector<1x1x32xf32>
    %528 = vector.shape_cast %527 : vector<1x1x32xf32> to vector<1x32xf32>
    %529 = arith.truncf %516 : vector<8x32xf32> to vector<8x32xbf16>
    %cst_215 = arith.constant dense<0.000000e+00> : vector<8x64xf32>
    %530 = tpu.matmul %529, %518, %cst_215 {dimension_numbers = #tpu.dot_dimension_numbers<[1], [0], [0], [1], [0, 0, 1, 1], [], []>} : vector<8x32xbf16>, vector<32x64xbf16>, vector<8x64xf32> -> vector<8x64xf32>
    %531 = vector.broadcast %520 : vector<1x64xf32> to vector<8x64xf32>
    %532 = arith.addf %530, %531 : vector<8x64xf32>
    %cst_216 = arith.constant 0.000000e+00 : f32
    %533 = vector.broadcast %cst_216 : f32 to vector<8x64xf32>
    %534 = arith.maximumf %532, %533 : vector<8x64xf32>
    %535 = arith.truncf %534 : vector<8x64xf32> to vector<8x64xbf16>
    %cst_217 = arith.constant dense<0.000000e+00> : vector<8x32xf32>
    %536 = tpu.matmul %535, %522, %cst_217 {dimension_numbers = #tpu.dot_dimension_numbers<[1], [0], [0], [1], [0, 0, 1, 1], [], []>} : vector<8x64xbf16>, vector<64x32xbf16>, vector<8x32xf32> -> vector<8x32xf32>
    %537 = vector.broadcast %524 : vector<1x32xf32> to vector<8x32xf32>
    %538 = arith.addf %536, %537 : vector<8x32xf32>
    %539 = arith.addf %516, %538 : vector<8x32xf32>
    %cst_218 = arith.constant dense<0.000000e+00> : vector<8xf32>
    %540 = vector.multi_reduction <add>, %539, %cst_218 [1] : vector<8x32xf32> to vector<8xf32>
    %541 = vector.shape_cast %540 : vector<8xf32> to vector<8x1xf32>
    %cst_219 = arith.constant 3.200000e+01 : f32
    %542 = vector.broadcast %cst_219 : f32 to vector<8x1xf32>
    %543 = arith.divf %541, %542 : vector<8x1xf32>
    %544 = vector.broadcast %543 : vector<8x1xf32> to vector<8x32xf32>
    %545 = arith.subf %539, %544 : vector<8x32xf32>
    %546 = arith.mulf %545, %545 : vector<8x32xf32>
    %cst_220 = arith.constant dense<0.000000e+00> : vector<8xf32>
    %547 = vector.multi_reduction <add>, %546, %cst_220 [1] : vector<8x32xf32> to vector<8xf32>
    %548 = vector.shape_cast %547 : vector<8xf32> to vector<8x1xf32>
    %cst_221 = arith.constant 3.200000e+01 : f32
    %549 = vector.broadcast %cst_221 : f32 to vector<8x1xf32>
    %550 = arith.divf %548, %549 : vector<8x1xf32>
    %cst_222 = arith.constant 9.99999974E-6 : f32
    %551 = vector.broadcast %cst_222 : f32 to vector<8x1xf32>
    %552 = arith.addf %550, %551 : vector<8x1xf32>
    %553 = math.rsqrt %552 : vector<8x1xf32>
    %554 = vector.broadcast %553 : vector<8x1xf32> to vector<8x32xf32>
    %555 = arith.mulf %545, %554 : vector<8x32xf32>
    %556 = vector.broadcast %526 : vector<1x32xf32> to vector<8x32xf32>
    %557 = arith.mulf %555, %556 : vector<8x32xf32>
    %558 = vector.broadcast %528 : vector<1x32xf32> to vector<8x32xf32>
    %559 = arith.addf %557, %558 : vector<8x32xf32>
    %c1_223 = arith.constant 1 : index
    %c0_224 = arith.constant 0 : index
    %c0_225 = arith.constant 0 : index
    %560 = vector.load %arg17[%c1_223, %c0_224, %c0_225] : memref<2x32x96xbf16, #tpu.memory_space<vmem>>, vector<1x32x96xbf16>
    %561 = vector.shape_cast %560 : vector<1x32x96xbf16> to vector<32x96xbf16>
    %c1_226 = arith.constant 1 : index
    %c0_227 = arith.constant 0 : index
    %c0_228 = arith.constant 0 : index
    %562 = vector.load %arg18[%c1_226, %c0_227, %c0_228] : memref<2x1x96xf32, #tpu.memory_space<vmem>>, vector<1x1x96xf32>
    %563 = vector.shape_cast %562 : vector<1x1x96xf32> to vector<1x96xf32>
    %c1_229 = arith.constant 1 : index
    %c0_230 = arith.constant 0 : index
    %c0_231 = arith.constant 0 : index
    %564 = vector.load %arg19[%c1_229, %c0_230, %c0_231] : memref<2x32x32xbf16, #tpu.memory_space<vmem>>, vector<1x32x32xbf16>
    %565 = vector.shape_cast %564 : vector<1x32x32xbf16> to vector<32x32xbf16>
    %c1_232 = arith.constant 1 : index
    %c0_233 = arith.constant 0 : index
    %c0_234 = arith.constant 0 : index
    %566 = vector.load %arg20[%c1_232, %c0_233, %c0_234] : memref<2x1x32xf32, #tpu.memory_space<vmem>>, vector<1x1x32xf32>
    %567 = vector.shape_cast %566 : vector<1x1x32xf32> to vector<1x32xf32>
    %c1_235 = arith.constant 1 : index
    %c0_236 = arith.constant 0 : index
    %c0_237 = arith.constant 0 : index
    %568 = vector.load %arg21[%c1_235, %c0_236, %c0_237] : memref<2x1x32xf32, #tpu.memory_space<vmem>>, vector<1x1x32xf32>
    %569 = vector.shape_cast %568 : vector<1x1x32xf32> to vector<1x32xf32>
    %c1_238 = arith.constant 1 : index
    %c0_239 = arith.constant 0 : index
    %c0_240 = arith.constant 0 : index
    %570 = vector.load %arg22[%c1_238, %c0_239, %c0_240] : memref<2x1x32xf32, #tpu.memory_space<vmem>>, vector<1x1x32xf32>
    %571 = vector.shape_cast %570 : vector<1x1x32xf32> to vector<1x32xf32>
    %572 = arith.truncf %559 : vector<8x32xf32> to vector<8x32xbf16>
    %cst_241 = arith.constant dense<0.000000e+00> : vector<8x96xf32>
    %573 = tpu.matmul %572, %561, %cst_241 {dimension_numbers = #tpu.dot_dimension_numbers<[1], [0], [0], [1], [0, 0, 1, 1], [], []>} : vector<8x32xbf16>, vector<32x96xbf16>, vector<8x96xf32> -> vector<8x96xf32>
    %574 = vector.broadcast %563 : vector<1x96xf32> to vector<8x96xf32>
    %575 = arith.addf %573, %574 : vector<8x96xf32>
    %576 = arith.truncf %575 : vector<8x96xf32> to vector<8x96xbf16>
    %577 = vector.extract_strided_slice %576 {offsets = [0, 0], sizes = [8, 32], strides = [1, 1]} : vector<8x96xbf16> to vector<8x32xbf16>
    %578 = vector.extract_strided_slice %576 {offsets = [0, 32], sizes = [8, 32], strides = [1, 1]} : vector<8x96xbf16> to vector<8x32xbf16>
    %579 = vector.extract_strided_slice %576 {offsets = [0, 64], sizes = [8, 32], strides = [1, 1]} : vector<8x96xbf16> to vector<8x32xbf16>
    %580 = vector.extract_strided_slice %577 {offsets = [0, 0], sizes = [8, 8], strides = [1, 1]} : vector<8x32xbf16> to vector<8x8xbf16>
    %581 = vector.shape_cast %580 : vector<8x8xbf16> to vector<1x8x8xbf16>
    %582 = vector.extract_strided_slice %577 {offsets = [0, 8], sizes = [8, 8], strides = [1, 1]} : vector<8x32xbf16> to vector<8x8xbf16>
    %583 = vector.shape_cast %582 : vector<8x8xbf16> to vector<1x8x8xbf16>
    %584 = vector.extract_strided_slice %577 {offsets = [0, 16], sizes = [8, 8], strides = [1, 1]} : vector<8x32xbf16> to vector<8x8xbf16>
    %585 = vector.shape_cast %584 : vector<8x8xbf16> to vector<1x8x8xbf16>
    %586 = vector.extract_strided_slice %577 {offsets = [0, 24], sizes = [8, 8], strides = [1, 1]} : vector<8x32xbf16> to vector<8x8xbf16>
    %587 = vector.shape_cast %586 : vector<8x8xbf16> to vector<1x8x8xbf16>
    %588 = tpu.concatenate %581, %583, %585, %587 in 0 : vector<1x8x8xbf16>, vector<1x8x8xbf16>, vector<1x8x8xbf16>, vector<1x8x8xbf16> -> vector<4x8x8xbf16>
    %589 = vector.extract_strided_slice %578 {offsets = [0, 0], sizes = [8, 8], strides = [1, 1]} : vector<8x32xbf16> to vector<8x8xbf16>
    %590 = vector.shape_cast %589 : vector<8x8xbf16> to vector<1x8x8xbf16>
    %591 = vector.extract_strided_slice %578 {offsets = [0, 8], sizes = [8, 8], strides = [1, 1]} : vector<8x32xbf16> to vector<8x8xbf16>
    %592 = vector.shape_cast %591 : vector<8x8xbf16> to vector<1x8x8xbf16>
    %593 = vector.extract_strided_slice %578 {offsets = [0, 16], sizes = [8, 8], strides = [1, 1]} : vector<8x32xbf16> to vector<8x8xbf16>
    %594 = vector.shape_cast %593 : vector<8x8xbf16> to vector<1x8x8xbf16>
    %595 = vector.extract_strided_slice %578 {offsets = [0, 24], sizes = [8, 8], strides = [1, 1]} : vector<8x32xbf16> to vector<8x8xbf16>
    %596 = vector.shape_cast %595 : vector<8x8xbf16> to vector<1x8x8xbf16>
    %597 = tpu.concatenate %590, %592, %594, %596 in 0 : vector<1x8x8xbf16>, vector<1x8x8xbf16>, vector<1x8x8xbf16>, vector<1x8x8xbf16> -> vector<4x8x8xbf16>
    %598 = vector.extract_strided_slice %579 {offsets = [0, 0], sizes = [8, 8], strides = [1, 1]} : vector<8x32xbf16> to vector<8x8xbf16>
    %599 = vector.shape_cast %598 : vector<8x8xbf16> to vector<1x8x8xbf16>
    %600 = vector.extract_strided_slice %579 {offsets = [0, 8], sizes = [8, 8], strides = [1, 1]} : vector<8x32xbf16> to vector<8x8xbf16>
    %601 = vector.shape_cast %600 : vector<8x8xbf16> to vector<1x8x8xbf16>
    %602 = vector.extract_strided_slice %579 {offsets = [0, 16], sizes = [8, 8], strides = [1, 1]} : vector<8x32xbf16> to vector<8x8xbf16>
    %603 = vector.shape_cast %602 : vector<8x8xbf16> to vector<1x8x8xbf16>
    %604 = vector.extract_strided_slice %579 {offsets = [0, 24], sizes = [8, 8], strides = [1, 1]} : vector<8x32xbf16> to vector<8x8xbf16>
    %605 = vector.shape_cast %604 : vector<8x8xbf16> to vector<1x8x8xbf16>
    %606 = tpu.concatenate %599, %601, %603, %605 in 0 : vector<1x8x8xbf16>, vector<1x8x8xbf16>, vector<1x8x8xbf16>, vector<1x8x8xbf16> -> vector<4x8x8xbf16>
    "tpu.trace_start"() <{level = 10 : i32, message = "hqd,hkd->hqk"}> : () -> ()
    %cst_242 = arith.constant dense<0.000000e+00> : vector<4x8x8xf32>
    %607 = tpu.matmul %588, %597, %cst_242 {dimension_numbers = #tpu.dot_dimension_numbers<[2], [2], [1], [1], [0, 0, 0, 1, 1, 1], [0], [0]>} : vector<4x8x8xbf16>, vector<4x8x8xbf16>, vector<4x8x8xf32> -> vector<4x8x8xf32>
    "tpu.trace_stop"() : () -> ()
    %cst_243 = arith.constant 0.353553385 : f32
    %608 = vector.broadcast %cst_243 : f32 to vector<4x8x8xf32>
    %609 = arith.mulf %607, %608 : vector<4x8x8xf32>
    %610 = vector.shape_cast %7 : vector<8x8xf32> to vector<1x8x8xf32>
    %611 = vector.broadcast %610 : vector<1x8x8xf32> to vector<4x8x8xf32>
    %612 = arith.addf %609, %611 : vector<4x8x8xf32>
    %cst_244 = arith.constant dense<0xFF800000> : vector<4x8xf32>
    %613 = vector.multi_reduction <maximumf>, %612, %cst_244 [2] : vector<4x8x8xf32> to vector<4x8xf32>
    %614 = vector.shape_cast %613 : vector<4x8xf32> to vector<4x8x1xf32>
    %615 = vector.broadcast %614 : vector<4x8x1xf32> to vector<4x8x8xf32>
    %616 = arith.subf %612, %615 : vector<4x8x8xf32>
    %617 = math.exp %616 : vector<4x8x8xf32>
    %cst_245 = arith.constant dense<0.000000e+00> : vector<4x8xf32>
    %618 = vector.multi_reduction <add>, %617, %cst_245 [2] : vector<4x8x8xf32> to vector<4x8xf32>
    %619 = vector.shape_cast %618 : vector<4x8xf32> to vector<4x8x1xf32>
    %620 = tpu.reciprocal %619 {approx = true} : vector<4x8x1xf32> -> vector<4x8x1xf32>
    %621 = vector.broadcast %620 : vector<4x8x1xf32> to vector<4x8x8xf32>
    %622 = arith.mulf %617, %621 : vector<4x8x8xf32>
    %623 = arith.truncf %622 : vector<4x8x8xf32> to vector<4x8x8xbf16>
    "tpu.trace_start"() <{level = 10 : i32, message = "hqk,hkd->hqd"}> : () -> ()
    %cst_246 = arith.constant dense<0.000000e+00> : vector<4x8x8xf32>
    %624 = tpu.matmul %623, %606, %cst_246 {dimension_numbers = #tpu.dot_dimension_numbers<[2], [1], [1], [2], [0, 0, 0, 1, 1, 2], [0], [0]>} : vector<4x8x8xbf16>, vector<4x8x8xbf16>, vector<4x8x8xf32> -> vector<4x8x8xf32>
    "tpu.trace_stop"() : () -> ()
    %625 = vector.extract_strided_slice %624 {offsets = [0, 0, 0], sizes = [1, 8, 8], strides = [1, 1, 1]} : vector<4x8x8xf32> to vector<1x8x8xf32>
    %626 = vector.shape_cast %625 : vector<1x8x8xf32> to vector<8x8xf32>
    %627 = vector.extract_strided_slice %624 {offsets = [1, 0, 0], sizes = [1, 8, 8], strides = [1, 1, 1]} : vector<4x8x8xf32> to vector<1x8x8xf32>
    %628 = vector.shape_cast %627 : vector<1x8x8xf32> to vector<8x8xf32>
    %629 = vector.extract_strided_slice %624 {offsets = [2, 0, 0], sizes = [1, 8, 8], strides = [1, 1, 1]} : vector<4x8x8xf32> to vector<1x8x8xf32>
    %630 = vector.shape_cast %629 : vector<1x8x8xf32> to vector<8x8xf32>
    %631 = vector.extract_strided_slice %624 {offsets = [3, 0, 0], sizes = [1, 8, 8], strides = [1, 1, 1]} : vector<4x8x8xf32> to vector<1x8x8xf32>
    %632 = vector.shape_cast %631 : vector<1x8x8xf32> to vector<8x8xf32>
    %633 = tpu.concatenate %626, %628, %630, %632 in 1 : vector<8x8xf32>, vector<8x8xf32>, vector<8x8xf32>, vector<8x8xf32> -> vector<8x32xf32>
    %634 = arith.truncf %633 : vector<8x32xf32> to vector<8x32xbf16>
    %cst_247 = arith.constant dense<0.000000e+00> : vector<8x32xf32>
    %635 = tpu.matmul %634, %565, %cst_247 {dimension_numbers = #tpu.dot_dimension_numbers<[1], [0], [0], [1], [0, 0, 1, 1], [], []>} : vector<8x32xbf16>, vector<32x32xbf16>, vector<8x32xf32> -> vector<8x32xf32>
    %636 = vector.broadcast %567 : vector<1x32xf32> to vector<8x32xf32>
    %637 = arith.addf %635, %636 : vector<8x32xf32>
    %638 = arith.addf %559, %637 : vector<8x32xf32>
    %cst_248 = arith.constant dense<0.000000e+00> : vector<8xf32>
    %639 = vector.multi_reduction <add>, %638, %cst_248 [1] : vector<8x32xf32> to vector<8xf32>
    %640 = vector.shape_cast %639 : vector<8xf32> to vector<8x1xf32>
    %cst_249 = arith.constant 3.200000e+01 : f32
    %641 = vector.broadcast %cst_249 : f32 to vector<8x1xf32>
    %642 = arith.divf %640, %641 : vector<8x1xf32>
    %643 = vector.broadcast %642 : vector<8x1xf32> to vector<8x32xf32>
    %644 = arith.subf %638, %643 : vector<8x32xf32>
    %645 = arith.mulf %644, %644 : vector<8x32xf32>
    %cst_250 = arith.constant dense<0.000000e+00> : vector<8xf32>
    %646 = vector.multi_reduction <add>, %645, %cst_250 [1] : vector<8x32xf32> to vector<8xf32>
    %647 = vector.shape_cast %646 : vector<8xf32> to vector<8x1xf32>
    %cst_251 = arith.constant 3.200000e+01 : f32
    %648 = vector.broadcast %cst_251 : f32 to vector<8x1xf32>
    %649 = arith.divf %647, %648 : vector<8x1xf32>
    %cst_252 = arith.constant 9.99999974E-6 : f32
    %650 = vector.broadcast %cst_252 : f32 to vector<8x1xf32>
    %651 = arith.addf %649, %650 : vector<8x1xf32>
    %652 = math.rsqrt %651 : vector<8x1xf32>
    %653 = vector.broadcast %652 : vector<8x1xf32> to vector<8x32xf32>
    %654 = arith.mulf %644, %653 : vector<8x32xf32>
    %655 = vector.broadcast %569 : vector<1x32xf32> to vector<8x32xf32>
    %656 = arith.mulf %654, %655 : vector<8x32xf32>
    %657 = vector.broadcast %571 : vector<1x32xf32> to vector<8x32xf32>
    %658 = arith.addf %656, %657 : vector<8x32xf32>
    %c1_253 = arith.constant 1 : index
    %c0_254 = arith.constant 0 : index
    %c0_255 = arith.constant 0 : index
    %659 = vector.load %arg23[%c1_253, %c0_254, %c0_255] : memref<2x32x32xbf16, #tpu.memory_space<vmem>>, vector<1x32x32xbf16>
    %660 = vector.shape_cast %659 : vector<1x32x32xbf16> to vector<32x32xbf16>
    %c1_256 = arith.constant 1 : index
    %c0_257 = arith.constant 0 : index
    %c0_258 = arith.constant 0 : index
    %661 = vector.load %arg24[%c1_256, %c0_257, %c0_258] : memref<2x1x32xf32, #tpu.memory_space<vmem>>, vector<1x1x32xf32>
    %662 = vector.shape_cast %661 : vector<1x1x32xf32> to vector<1x32xf32>
    %c1_259 = arith.constant 1 : index
    %c0_260 = arith.constant 0 : index
    %c0_261 = arith.constant 0 : index
    %663 = vector.load %arg25[%c1_259, %c0_260, %c0_261] : memref<2x32x64xbf16, #tpu.memory_space<vmem>>, vector<1x32x64xbf16>
    %664 = vector.shape_cast %663 : vector<1x32x64xbf16> to vector<32x64xbf16>
    %c1_262 = arith.constant 1 : index
    %c0_263 = arith.constant 0 : index
    %c0_264 = arith.constant 0 : index
    %665 = vector.load %arg26[%c1_262, %c0_263, %c0_264] : memref<2x1x64xf32, #tpu.memory_space<vmem>>, vector<1x1x64xf32>
    %666 = vector.shape_cast %665 : vector<1x1x64xf32> to vector<1x64xf32>
    %c1_265 = arith.constant 1 : index
    %c0_266 = arith.constant 0 : index
    %c0_267 = arith.constant 0 : index
    %667 = vector.load %arg27[%c1_265, %c0_266, %c0_267] : memref<2x32x32xbf16, #tpu.memory_space<vmem>>, vector<1x32x32xbf16>
    %668 = vector.shape_cast %667 : vector<1x32x32xbf16> to vector<32x32xbf16>
    %c1_268 = arith.constant 1 : index
    %c0_269 = arith.constant 0 : index
    %c0_270 = arith.constant 0 : index
    %669 = vector.load %arg28[%c1_268, %c0_269, %c0_270] : memref<2x1x32xf32, #tpu.memory_space<vmem>>, vector<1x1x32xf32>
    %670 = vector.shape_cast %669 : vector<1x1x32xf32> to vector<1x32xf32>
    %c1_271 = arith.constant 1 : index
    %c0_272 = arith.constant 0 : index
    %c0_273 = arith.constant 0 : index
    %671 = vector.load %arg29[%c1_271, %c0_272, %c0_273] : memref<2x1x32xf32, #tpu.memory_space<vmem>>, vector<1x1x32xf32>
    %672 = vector.shape_cast %671 : vector<1x1x32xf32> to vector<1x32xf32>
    %c1_274 = arith.constant 1 : index
    %c0_275 = arith.constant 0 : index
    %c0_276 = arith.constant 0 : index
    %673 = vector.load %arg30[%c1_274, %c0_275, %c0_276] : memref<2x1x32xf32, #tpu.memory_space<vmem>>, vector<1x1x32xf32>
    %674 = vector.shape_cast %673 : vector<1x1x32xf32> to vector<1x32xf32>
    %675 = arith.truncf %658 : vector<8x32xf32> to vector<8x32xbf16>
    %cst_277 = arith.constant dense<0.000000e+00> : vector<8x32xf32>
    %676 = tpu.matmul %675, %660, %cst_277 {dimension_numbers = #tpu.dot_dimension_numbers<[1], [0], [0], [1], [0, 0, 1, 1], [], []>} : vector<8x32xbf16>, vector<32x32xbf16>, vector<8x32xf32> -> vector<8x32xf32>
    %677 = vector.broadcast %662 : vector<1x32xf32> to vector<8x32xf32>
    %678 = arith.addf %676, %677 : vector<8x32xf32>
    %679 = arith.truncf %678 : vector<8x32xf32> to vector<8x32xbf16>
    %cst_278 = arith.constant dense<0.000000e+00> : vector<8x64xf32>
    %680 = tpu.matmul %314, %664, %cst_278 {dimension_numbers = #tpu.dot_dimension_numbers<[1], [0], [0], [1], [0, 0, 1, 1], [], []>} : vector<8x32xbf16>, vector<32x64xbf16>, vector<8x64xf32> -> vector<8x64xf32>
    %681 = vector.broadcast %666 : vector<1x64xf32> to vector<8x64xf32>
    %682 = arith.addf %680, %681 : vector<8x64xf32>
    %683 = arith.truncf %682 : vector<8x64xf32> to vector<8x64xbf16>
    %684 = vector.extract_strided_slice %683 {offsets = [0, 0], sizes = [8, 32], strides = [1, 1]} : vector<8x64xbf16> to vector<8x32xbf16>
    %685 = vector.extract_strided_slice %683 {offsets = [0, 32], sizes = [8, 32], strides = [1, 1]} : vector<8x64xbf16> to vector<8x32xbf16>
    %686 = vector.extract_strided_slice %679 {offsets = [0, 0], sizes = [8, 8], strides = [1, 1]} : vector<8x32xbf16> to vector<8x8xbf16>
    %687 = vector.shape_cast %686 : vector<8x8xbf16> to vector<1x8x8xbf16>
    %688 = vector.extract_strided_slice %679 {offsets = [0, 8], sizes = [8, 8], strides = [1, 1]} : vector<8x32xbf16> to vector<8x8xbf16>
    %689 = vector.shape_cast %688 : vector<8x8xbf16> to vector<1x8x8xbf16>
    %690 = vector.extract_strided_slice %679 {offsets = [0, 16], sizes = [8, 8], strides = [1, 1]} : vector<8x32xbf16> to vector<8x8xbf16>
    %691 = vector.shape_cast %690 : vector<8x8xbf16> to vector<1x8x8xbf16>
    %692 = vector.extract_strided_slice %679 {offsets = [0, 24], sizes = [8, 8], strides = [1, 1]} : vector<8x32xbf16> to vector<8x8xbf16>
    %693 = vector.shape_cast %692 : vector<8x8xbf16> to vector<1x8x8xbf16>
    %694 = tpu.concatenate %687, %689, %691, %693 in 0 : vector<1x8x8xbf16>, vector<1x8x8xbf16>, vector<1x8x8xbf16>, vector<1x8x8xbf16> -> vector<4x8x8xbf16>
    %695 = vector.extract_strided_slice %684 {offsets = [0, 0], sizes = [8, 8], strides = [1, 1]} : vector<8x32xbf16> to vector<8x8xbf16>
    %696 = vector.shape_cast %695 : vector<8x8xbf16> to vector<1x8x8xbf16>
    %697 = vector.extract_strided_slice %684 {offsets = [0, 8], sizes = [8, 8], strides = [1, 1]} : vector<8x32xbf16> to vector<8x8xbf16>
    %698 = vector.shape_cast %697 : vector<8x8xbf16> to vector<1x8x8xbf16>
    %699 = vector.extract_strided_slice %684 {offsets = [0, 16], sizes = [8, 8], strides = [1, 1]} : vector<8x32xbf16> to vector<8x8xbf16>
    %700 = vector.shape_cast %699 : vector<8x8xbf16> to vector<1x8x8xbf16>
    %701 = vector.extract_strided_slice %684 {offsets = [0, 24], sizes = [8, 8], strides = [1, 1]} : vector<8x32xbf16> to vector<8x8xbf16>
    %702 = vector.shape_cast %701 : vector<8x8xbf16> to vector<1x8x8xbf16>
    %703 = tpu.concatenate %696, %698, %700, %702 in 0 : vector<1x8x8xbf16>, vector<1x8x8xbf16>, vector<1x8x8xbf16>, vector<1x8x8xbf16> -> vector<4x8x8xbf16>
    %704 = vector.extract_strided_slice %685 {offsets = [0, 0], sizes = [8, 8], strides = [1, 1]} : vector<8x32xbf16> to vector<8x8xbf16>
    %705 = vector.shape_cast %704 : vector<8x8xbf16> to vector<1x8x8xbf16>
    %706 = vector.extract_strided_slice %685 {offsets = [0, 8], sizes = [8, 8], strides = [1, 1]} : vector<8x32xbf16> to vector<8x8xbf16>
    %707 = vector.shape_cast %706 : vector<8x8xbf16> to vector<1x8x8xbf16>
    %708 = vector.extract_strided_slice %685 {offsets = [0, 16], sizes = [8, 8], strides = [1, 1]} : vector<8x32xbf16> to vector<8x8xbf16>
    %709 = vector.shape_cast %708 : vector<8x8xbf16> to vector<1x8x8xbf16>
    %710 = vector.extract_strided_slice %685 {offsets = [0, 24], sizes = [8, 8], strides = [1, 1]} : vector<8x32xbf16> to vector<8x8xbf16>
    %711 = vector.shape_cast %710 : vector<8x8xbf16> to vector<1x8x8xbf16>
    %712 = tpu.concatenate %705, %707, %709, %711 in 0 : vector<1x8x8xbf16>, vector<1x8x8xbf16>, vector<1x8x8xbf16>, vector<1x8x8xbf16> -> vector<4x8x8xbf16>
    "tpu.trace_start"() <{level = 10 : i32, message = "hqd,hkd->hqk"}> : () -> ()
    %cst_279 = arith.constant dense<0.000000e+00> : vector<4x8x8xf32>
    %713 = tpu.matmul %694, %703, %cst_279 {dimension_numbers = #tpu.dot_dimension_numbers<[2], [2], [1], [1], [0, 0, 0, 1, 1, 1], [0], [0]>} : vector<4x8x8xbf16>, vector<4x8x8xbf16>, vector<4x8x8xf32> -> vector<4x8x8xf32>
    "tpu.trace_stop"() : () -> ()
    %cst_280 = arith.constant 0.353553385 : f32
    %714 = vector.broadcast %cst_280 : f32 to vector<4x8x8xf32>
    %715 = arith.mulf %713, %714 : vector<4x8x8xf32>
    %cst_281 = arith.constant dense<0xFF800000> : vector<4x8xf32>
    %716 = vector.multi_reduction <maximumf>, %715, %cst_281 [2] : vector<4x8x8xf32> to vector<4x8xf32>
    %717 = vector.shape_cast %716 : vector<4x8xf32> to vector<4x8x1xf32>
    %718 = vector.broadcast %717 : vector<4x8x1xf32> to vector<4x8x8xf32>
    %719 = arith.subf %715, %718 : vector<4x8x8xf32>
    %720 = math.exp %719 : vector<4x8x8xf32>
    %cst_282 = arith.constant dense<0.000000e+00> : vector<4x8xf32>
    %721 = vector.multi_reduction <add>, %720, %cst_282 [2] : vector<4x8x8xf32> to vector<4x8xf32>
    %722 = vector.shape_cast %721 : vector<4x8xf32> to vector<4x8x1xf32>
    %723 = tpu.reciprocal %722 {approx = true} : vector<4x8x1xf32> -> vector<4x8x1xf32>
    %724 = vector.broadcast %723 : vector<4x8x1xf32> to vector<4x8x8xf32>
    %725 = arith.mulf %720, %724 : vector<4x8x8xf32>
    %726 = arith.truncf %725 : vector<4x8x8xf32> to vector<4x8x8xbf16>
    "tpu.trace_start"() <{level = 10 : i32, message = "hqk,hkd->hqd"}> : () -> ()
    %cst_283 = arith.constant dense<0.000000e+00> : vector<4x8x8xf32>
    %727 = tpu.matmul %726, %712, %cst_283 {dimension_numbers = #tpu.dot_dimension_numbers<[2], [1], [1], [2], [0, 0, 0, 1, 1, 2], [0], [0]>} : vector<4x8x8xbf16>, vector<4x8x8xbf16>, vector<4x8x8xf32> -> vector<4x8x8xf32>
    "tpu.trace_stop"() : () -> ()
    %728 = vector.extract_strided_slice %727 {offsets = [0, 0, 0], sizes = [1, 8, 8], strides = [1, 1, 1]} : vector<4x8x8xf32> to vector<1x8x8xf32>
    %729 = vector.shape_cast %728 : vector<1x8x8xf32> to vector<8x8xf32>
    %730 = vector.extract_strided_slice %727 {offsets = [1, 0, 0], sizes = [1, 8, 8], strides = [1, 1, 1]} : vector<4x8x8xf32> to vector<1x8x8xf32>
    %731 = vector.shape_cast %730 : vector<1x8x8xf32> to vector<8x8xf32>
    %732 = vector.extract_strided_slice %727 {offsets = [2, 0, 0], sizes = [1, 8, 8], strides = [1, 1, 1]} : vector<4x8x8xf32> to vector<1x8x8xf32>
    %733 = vector.shape_cast %732 : vector<1x8x8xf32> to vector<8x8xf32>
    %734 = vector.extract_strided_slice %727 {offsets = [3, 0, 0], sizes = [1, 8, 8], strides = [1, 1, 1]} : vector<4x8x8xf32> to vector<1x8x8xf32>
    %735 = vector.shape_cast %734 : vector<1x8x8xf32> to vector<8x8xf32>
    %736 = tpu.concatenate %729, %731, %733, %735 in 1 : vector<8x8xf32>, vector<8x8xf32>, vector<8x8xf32>, vector<8x8xf32> -> vector<8x32xf32>
    %737 = arith.truncf %736 : vector<8x32xf32> to vector<8x32xbf16>
    %cst_284 = arith.constant dense<0.000000e+00> : vector<8x32xf32>
    %738 = tpu.matmul %737, %668, %cst_284 {dimension_numbers = #tpu.dot_dimension_numbers<[1], [0], [0], [1], [0, 0, 1, 1], [], []>} : vector<8x32xbf16>, vector<32x32xbf16>, vector<8x32xf32> -> vector<8x32xf32>
    %739 = vector.broadcast %670 : vector<1x32xf32> to vector<8x32xf32>
    %740 = arith.addf %738, %739 : vector<8x32xf32>
    %741 = arith.addf %658, %740 : vector<8x32xf32>
    %cst_285 = arith.constant dense<0.000000e+00> : vector<8xf32>
    %742 = vector.multi_reduction <add>, %741, %cst_285 [1] : vector<8x32xf32> to vector<8xf32>
    %743 = vector.shape_cast %742 : vector<8xf32> to vector<8x1xf32>
    %cst_286 = arith.constant 3.200000e+01 : f32
    %744 = vector.broadcast %cst_286 : f32 to vector<8x1xf32>
    %745 = arith.divf %743, %744 : vector<8x1xf32>
    %746 = vector.broadcast %745 : vector<8x1xf32> to vector<8x32xf32>
    %747 = arith.subf %741, %746 : vector<8x32xf32>
    %748 = arith.mulf %747, %747 : vector<8x32xf32>
    %cst_287 = arith.constant dense<0.000000e+00> : vector<8xf32>
    %749 = vector.multi_reduction <add>, %748, %cst_287 [1] : vector<8x32xf32> to vector<8xf32>
    %750 = vector.shape_cast %749 : vector<8xf32> to vector<8x1xf32>
    %cst_288 = arith.constant 3.200000e+01 : f32
    %751 = vector.broadcast %cst_288 : f32 to vector<8x1xf32>
    %752 = arith.divf %750, %751 : vector<8x1xf32>
    %cst_289 = arith.constant 9.99999974E-6 : f32
    %753 = vector.broadcast %cst_289 : f32 to vector<8x1xf32>
    %754 = arith.addf %752, %753 : vector<8x1xf32>
    %755 = math.rsqrt %754 : vector<8x1xf32>
    %756 = vector.broadcast %755 : vector<8x1xf32> to vector<8x32xf32>
    %757 = arith.mulf %747, %756 : vector<8x32xf32>
    %758 = vector.broadcast %672 : vector<1x32xf32> to vector<8x32xf32>
    %759 = arith.mulf %757, %758 : vector<8x32xf32>
    %760 = vector.broadcast %674 : vector<1x32xf32> to vector<8x32xf32>
    %761 = arith.addf %759, %760 : vector<8x32xf32>
    %c1_290 = arith.constant 1 : index
    %c0_291 = arith.constant 0 : index
    %c0_292 = arith.constant 0 : index
    %762 = vector.load %arg31[%c1_290, %c0_291, %c0_292] : memref<2x32x64xbf16, #tpu.memory_space<vmem>>, vector<1x32x64xbf16>
    %763 = vector.shape_cast %762 : vector<1x32x64xbf16> to vector<32x64xbf16>
    %c1_293 = arith.constant 1 : index
    %c0_294 = arith.constant 0 : index
    %c0_295 = arith.constant 0 : index
    %764 = vector.load %arg32[%c1_293, %c0_294, %c0_295] : memref<2x1x64xf32, #tpu.memory_space<vmem>>, vector<1x1x64xf32>
    %765 = vector.shape_cast %764 : vector<1x1x64xf32> to vector<1x64xf32>
    %c1_296 = arith.constant 1 : index
    %c0_297 = arith.constant 0 : index
    %c0_298 = arith.constant 0 : index
    %766 = vector.load %arg33[%c1_296, %c0_297, %c0_298] : memref<2x64x32xbf16, #tpu.memory_space<vmem>>, vector<1x64x32xbf16>
    %767 = vector.shape_cast %766 : vector<1x64x32xbf16> to vector<64x32xbf16>
    %c1_299 = arith.constant 1 : index
    %c0_300 = arith.constant 0 : index
    %c0_301 = arith.constant 0 : index
    %768 = vector.load %arg34[%c1_299, %c0_300, %c0_301] : memref<2x1x32xf32, #tpu.memory_space<vmem>>, vector<1x1x32xf32>
    %769 = vector.shape_cast %768 : vector<1x1x32xf32> to vector<1x32xf32>
    %c1_302 = arith.constant 1 : index
    %c0_303 = arith.constant 0 : index
    %c0_304 = arith.constant 0 : index
    %770 = vector.load %arg35[%c1_302, %c0_303, %c0_304] : memref<2x1x32xf32, #tpu.memory_space<vmem>>, vector<1x1x32xf32>
    %771 = vector.shape_cast %770 : vector<1x1x32xf32> to vector<1x32xf32>
    %c1_305 = arith.constant 1 : index
    %c0_306 = arith.constant 0 : index
    %c0_307 = arith.constant 0 : index
    %772 = vector.load %arg36[%c1_305, %c0_306, %c0_307] : memref<2x1x32xf32, #tpu.memory_space<vmem>>, vector<1x1x32xf32>
    %773 = vector.shape_cast %772 : vector<1x1x32xf32> to vector<1x32xf32>
    %774 = arith.truncf %761 : vector<8x32xf32> to vector<8x32xbf16>
    %cst_308 = arith.constant dense<0.000000e+00> : vector<8x64xf32>
    %775 = tpu.matmul %774, %763, %cst_308 {dimension_numbers = #tpu.dot_dimension_numbers<[1], [0], [0], [1], [0, 0, 1, 1], [], []>} : vector<8x32xbf16>, vector<32x64xbf16>, vector<8x64xf32> -> vector<8x64xf32>
    %776 = vector.broadcast %765 : vector<1x64xf32> to vector<8x64xf32>
    %777 = arith.addf %775, %776 : vector<8x64xf32>
    %cst_309 = arith.constant 0.000000e+00 : f32
    %778 = vector.broadcast %cst_309 : f32 to vector<8x64xf32>
    %779 = arith.maximumf %777, %778 : vector<8x64xf32>
    %780 = arith.truncf %779 : vector<8x64xf32> to vector<8x64xbf16>
    %cst_310 = arith.constant dense<0.000000e+00> : vector<8x32xf32>
    %781 = tpu.matmul %780, %767, %cst_310 {dimension_numbers = #tpu.dot_dimension_numbers<[1], [0], [0], [1], [0, 0, 1, 1], [], []>} : vector<8x64xbf16>, vector<64x32xbf16>, vector<8x32xf32> -> vector<8x32xf32>
    %782 = vector.broadcast %769 : vector<1x32xf32> to vector<8x32xf32>
    %783 = arith.addf %781, %782 : vector<8x32xf32>
    %784 = arith.addf %761, %783 : vector<8x32xf32>
    %cst_311 = arith.constant dense<0.000000e+00> : vector<8xf32>
    %785 = vector.multi_reduction <add>, %784, %cst_311 [1] : vector<8x32xf32> to vector<8xf32>
    %786 = vector.shape_cast %785 : vector<8xf32> to vector<8x1xf32>
    %cst_312 = arith.constant 3.200000e+01 : f32
    %787 = vector.broadcast %cst_312 : f32 to vector<8x1xf32>
    %788 = arith.divf %786, %787 : vector<8x1xf32>
    %789 = vector.broadcast %788 : vector<8x1xf32> to vector<8x32xf32>
    %790 = arith.subf %784, %789 : vector<8x32xf32>
    %791 = arith.mulf %790, %790 : vector<8x32xf32>
    %cst_313 = arith.constant dense<0.000000e+00> : vector<8xf32>
    %792 = vector.multi_reduction <add>, %791, %cst_313 [1] : vector<8x32xf32> to vector<8xf32>
    %793 = vector.shape_cast %792 : vector<8xf32> to vector<8x1xf32>
    %cst_314 = arith.constant 3.200000e+01 : f32
    %794 = vector.broadcast %cst_314 : f32 to vector<8x1xf32>
    %795 = arith.divf %793, %794 : vector<8x1xf32>
    %cst_315 = arith.constant 9.99999974E-6 : f32
    %796 = vector.broadcast %cst_315 : f32 to vector<8x1xf32>
    %797 = arith.addf %795, %796 : vector<8x1xf32>
    %798 = math.rsqrt %797 : vector<8x1xf32>
    %799 = vector.broadcast %798 : vector<8x1xf32> to vector<8x32xf32>
    %800 = arith.mulf %790, %799 : vector<8x32xf32>
    %801 = vector.broadcast %771 : vector<1x32xf32> to vector<8x32xf32>
    %802 = arith.mulf %800, %801 : vector<8x32xf32>
    %803 = vector.broadcast %773 : vector<1x32xf32> to vector<8x32xf32>
    %804 = arith.addf %802, %803 : vector<8x32xf32>
    %c0_316 = arith.constant 0 : index
    %c0_317 = arith.constant 0 : index
    %805 = vector.load %arg39[%c0_316, %c0_317] : memref<1x32xf32, #tpu.memory_space<vmem>>, vector<1x32xf32>
    %c0_318 = arith.constant 0 : index
    %c0_319 = arith.constant 0 : index
    %806 = vector.load %arg40[%c0_318, %c0_319] : memref<1x32xf32, #tpu.memory_space<vmem>>, vector<1x32xf32>
    %cst_320 = arith.constant dense<0.000000e+00> : vector<8xf32>
    %807 = vector.multi_reduction <add>, %804, %cst_320 [1] : vector<8x32xf32> to vector<8xf32>
    %808 = vector.shape_cast %807 : vector<8xf32> to vector<8x1xf32>
    %cst_321 = arith.constant 3.200000e+01 : f32
    %809 = vector.broadcast %cst_321 : f32 to vector<8x1xf32>
    %810 = arith.divf %808, %809 : vector<8x1xf32>
    %811 = vector.broadcast %810 : vector<8x1xf32> to vector<8x32xf32>
    %812 = arith.subf %804, %811 : vector<8x32xf32>
    %813 = arith.mulf %812, %812 : vector<8x32xf32>
    %cst_322 = arith.constant dense<0.000000e+00> : vector<8xf32>
    %814 = vector.multi_reduction <add>, %813, %cst_322 [1] : vector<8x32xf32> to vector<8xf32>
    %815 = vector.shape_cast %814 : vector<8xf32> to vector<8x1xf32>
    %cst_323 = arith.constant 3.200000e+01 : f32
    %816 = vector.broadcast %cst_323 : f32 to vector<8x1xf32>
    %817 = arith.divf %815, %816 : vector<8x1xf32>
    %cst_324 = arith.constant 9.99999974E-6 : f32
    %818 = vector.broadcast %cst_324 : f32 to vector<8x1xf32>
    %819 = arith.addf %817, %818 : vector<8x1xf32>
    %820 = math.rsqrt %819 : vector<8x1xf32>
    %821 = vector.broadcast %820 : vector<8x1xf32> to vector<8x32xf32>
    %822 = arith.mulf %812, %821 : vector<8x32xf32>
    %823 = vector.broadcast %805 : vector<1x32xf32> to vector<8x32xf32>
    %824 = arith.mulf %822, %823 : vector<8x32xf32>
    %825 = vector.broadcast %806 : vector<1x32xf32> to vector<8x32xf32>
    %826 = arith.addf %824, %825 : vector<8x32xf32>
    %827 = arith.truncf %826 : vector<8x32xf32> to vector<8x32xbf16>
    %c0_325 = arith.constant 0 : index
    %c0_326 = arith.constant 0 : index
    %828 = vector.load %arg41[%c0_325, %c0_326] : memref<32x128xbf16, #tpu.memory_space<vmem>>, vector<32x128xbf16>
    %cst_327 = arith.constant dense<0.000000e+00> : vector<8x128xf32>
    %829 = tpu.matmul %827, %828, %cst_327 {dimension_numbers = #tpu.dot_dimension_numbers<[1], [0], [0], [1], [0, 0, 1, 1], [], []>} : vector<8x32xbf16>, vector<32x128xbf16>, vector<8x128xf32> -> vector<8x128xf32>
    %c0_328 = arith.constant 0 : index
    %c0_329 = arith.constant 0 : index
    %830 = vector.load %arg42[%c0_328, %c0_329] : memref<1x128xf32, #tpu.memory_space<vmem>>, vector<1x128xf32>
    %831 = vector.broadcast %830 : vector<1x128xf32> to vector<8x128xf32>
    %832 = arith.addf %829, %831 : vector<8x128xf32>
    %c0_330 = arith.constant 0 : index
    %c0_331 = arith.constant 0 : index
    %c0_332 = arith.constant 0 : index
    %833 = vector.load %arg43[%c0_330, %c0_331, %c0_332] : memref<1x8x128xf32, #tpu.memory_space<vmem>>, vector<1x8x128xf32>
    %834 = vector.shape_cast %833 : vector<1x8x128xf32> to vector<8x128xf32>
    %835 = vector.shape_cast %832 : vector<8x128xf32> to vector<1x8x128xf32>
    tpu.vector_store %arg43[%c0_330, %c0_331, %c0_332], %835 {strides = array<i32>} : memref<1x8x128xf32, #tpu.memory_space<vmem>>, vector<1x8x128xf32>,
    return
  }
  func.func @transform_0(%arg0: i32) -> (i32, i32, i32) {
    %c0_i32 = arith.constant 0 : i32
    %c0_i32_0 = arith.constant 0 : i32
    %c0_i32_1 = arith.constant 0 : i32
    return %arg0, %c0_i32, %c0_i32_0 : i32, i32, i32
  }
  func.func @transform_1(%arg0: i32) -> (i32, i32, i32) {
    %c0_i32 = arith.constant 0 : i32
    %c0_i32_0 = arith.constant 0 : i32
    %c0_i32_1 = arith.constant 0 : i32
    return %arg0, %c0_i32, %c0_i32_0 : i32, i32, i32
  }
  func.func @transform_2(%arg0: i32) -> (i32, i32, i32) {
    %c0_i32 = arith.constant 0 : i32
    %c0_i32_0 = arith.constant 0 : i32
    %c0_i32_1 = arith.constant 0 : i32
    return %arg0, %c0_i32, %c0_i32_0 : i32, i32, i32
  }
  func.func @transform_3(%arg0: i32) -> (i32, i32, i32) {
    %c0_i32 = arith.constant 0 : i32
    %c0_i32_0 = arith.constant 0 : i32
    %c0_i32_1 = arith.constant 0 : i32
    return %arg0, %c0_i32, %c0_i32_0 : i32, i32, i32
  }
  func.func @transform_4(%arg0: i32) -> (i32, i32, i32) {
    %c0_i32 = arith.constant 0 : i32
    %c0_i32_0 = arith.constant 0 : i32
    %c0_i32_1 = arith.constant 0 : i32
    %c0_i32_2 = arith.constant 0 : i32
    return %c0_i32, %c0_i32_0, %c0_i32_1 : i32, i32, i32
  }
  func.func @transform_5(%arg0: i32) -> (i32, i32, i32) {
    %c0_i32 = arith.constant 0 : i32
    %c0_i32_0 = arith.constant 0 : i32
    %c0_i32_1 = arith.constant 0 : i32
    %c0_i32_2 = arith.constant 0 : i32
    return %c0_i32, %c0_i32_0, %c0_i32_1 : i32, i32, i32
  }
  func.func @transform_6(%arg0: i32) -> (i32, i32, i32) {
    %c0_i32 = arith.constant 0 : i32
    %c0_i32_0 = arith.constant 0 : i32
    %c0_i32_1 = arith.constant 0 : i32
    %c0_i32_2 = arith.constant 0 : i32
    return %c0_i32, %c0_i32_0, %c0_i32_1 : i32, i32, i32
  }
  func.func @transform_7(%arg0: i32) -> (i32, i32, i32) {
    %c0_i32 = arith.constant 0 : i32
    %c0_i32_0 = arith.constant 0 : i32
    %c0_i32_1 = arith.constant 0 : i32
    %c0_i32_2 = arith.constant 0 : i32
    return %c0_i32, %c0_i32_0, %c0_i32_1 : i32, i32, i32
  }
  func.func @transform_8(%arg0: i32) -> (i32, i32, i32) {
    %c0_i32 = arith.constant 0 : i32
    %c0_i32_0 = arith.constant 0 : i32
    %c0_i32_1 = arith.constant 0 : i32
    %c0_i32_2 = arith.constant 0 : i32
    return %c0_i32, %c0_i32_0, %c0_i32_1 : i32, i32, i32
  }
  func.func @transform_9(%arg0: i32) -> (i32, i32, i32) {
    %c0_i32 = arith.constant 0 : i32
    %c0_i32_0 = arith.constant 0 : i32
    %c0_i32_1 = arith.constant 0 : i32
    %c0_i32_2 = arith.constant 0 : i32
    return %c0_i32, %c0_i32_0, %c0_i32_1 : i32, i32, i32
  }
  func.func @transform_10(%arg0: i32) -> (i32, i32, i32) {
    %c0_i32 = arith.constant 0 : i32
    %c0_i32_0 = arith.constant 0 : i32
    %c0_i32_1 = arith.constant 0 : i32
    %c0_i32_2 = arith.constant 0 : i32
    return %c0_i32, %c0_i32_0, %c0_i32_1 : i32, i32, i32
  }
  func.func @transform_11(%arg0: i32) -> (i32, i32, i32) {
    %c0_i32 = arith.constant 0 : i32
    %c0_i32_0 = arith.constant 0 : i32
    %c0_i32_1 = arith.constant 0 : i32
    %c0_i32_2 = arith.constant 0 : i32
    return %c0_i32, %c0_i32_0, %c0_i32_1 : i32, i32, i32
  }
  func.func @transform_12(%arg0: i32) -> (i32, i32, i32) {
    %c0_i32 = arith.constant 0 : i32
    %c0_i32_0 = arith.constant 0 : i32
    %c0_i32_1 = arith.constant 0 : i32
    %c0_i32_2 = arith.constant 0 : i32
    return %c0_i32, %c0_i32_0, %c0_i32_1 : i32, i32, i32
  }
  func.func @transform_13(%arg0: i32) -> (i32, i32, i32) {
    %c0_i32 = arith.constant 0 : i32
    %c0_i32_0 = arith.constant 0 : i32
    %c0_i32_1 = arith.constant 0 : i32
    %c0_i32_2 = arith.constant 0 : i32
    return %c0_i32, %c0_i32_0, %c0_i32_1 : i32, i32, i32
  }
  func.func @transform_14(%arg0: i32) -> (i32, i32, i32) {
    %c0_i32 = arith.constant 0 : i32
    %c0_i32_0 = arith.constant 0 : i32
    %c0_i32_1 = arith.constant 0 : i32
    %c0_i32_2 = arith.constant 0 : i32
    return %c0_i32, %c0_i32_0, %c0_i32_1 : i32, i32, i32
  }
  func.func @transform_15(%arg0: i32) -> (i32, i32, i32) {
    %c0_i32 = arith.constant 0 : i32
    %c0_i32_0 = arith.constant 0 : i32
    %c0_i32_1 = arith.constant 0 : i32
    %c0_i32_2 = arith.constant 0 : i32
    return %c0_i32, %c0_i32_0, %c0_i32_1 : i32, i32, i32
  }
  func.func @transform_16(%arg0: i32) -> (i32, i32, i32) {
    %c0_i32 = arith.constant 0 : i32
    %c0_i32_0 = arith.constant 0 : i32
    %c0_i32_1 = arith.constant 0 : i32
    %c0_i32_2 = arith.constant 0 : i32
    return %c0_i32, %c0_i32_0, %c0_i32_1 : i32, i32, i32
  }
  func.func @transform_17(%arg0: i32) -> (i32, i32, i32) {
    %c0_i32 = arith.constant 0 : i32
    %c0_i32_0 = arith.constant 0 : i32
    %c0_i32_1 = arith.constant 0 : i32
    %c0_i32_2 = arith.constant 0 : i32
    return %c0_i32, %c0_i32_0, %c0_i32_1 : i32, i32, i32
  }
  func.func @transform_18(%arg0: i32) -> (i32, i32, i32) {
    %c0_i32 = arith.constant 0 : i32
    %c0_i32_0 = arith.constant 0 : i32
    %c0_i32_1 = arith.constant 0 : i32
    %c0_i32_2 = arith.constant 0 : i32
    return %c0_i32, %c0_i32_0, %c0_i32_1 : i32, i32, i32
  }
  func.func @transform_19(%arg0: i32) -> (i32, i32, i32) {
    %c0_i32 = arith.constant 0 : i32
    %c0_i32_0 = arith.constant 0 : i32
    %c0_i32_1 = arith.constant 0 : i32
    %c0_i32_2 = arith.constant 0 : i32
    return %c0_i32, %c0_i32_0, %c0_i32_1 : i32, i32, i32
  }
  func.func @transform_20(%arg0: i32) -> (i32, i32, i32) {
    %c0_i32 = arith.constant 0 : i32
    %c0_i32_0 = arith.constant 0 : i32
    %c0_i32_1 = arith.constant 0 : i32
    %c0_i32_2 = arith.constant 0 : i32
    return %c0_i32, %c0_i32_0, %c0_i32_1 : i32, i32, i32
  }
  func.func @transform_21(%arg0: i32) -> (i32, i32, i32) {
    %c0_i32 = arith.constant 0 : i32
    %c0_i32_0 = arith.constant 0 : i32
    %c0_i32_1 = arith.constant 0 : i32
    %c0_i32_2 = arith.constant 0 : i32
    return %c0_i32, %c0_i32_0, %c0_i32_1 : i32, i32, i32
  }
  func.func @transform_22(%arg0: i32) -> (i32, i32, i32) {
    %c0_i32 = arith.constant 0 : i32
    %c0_i32_0 = arith.constant 0 : i32
    %c0_i32_1 = arith.constant 0 : i32
    %c0_i32_2 = arith.constant 0 : i32
    return %c0_i32, %c0_i32_0, %c0_i32_1 : i32, i32, i32
  }
  func.func @transform_23(%arg0: i32) -> (i32, i32, i32) {
    %c0_i32 = arith.constant 0 : i32
    %c0_i32_0 = arith.constant 0 : i32
    %c0_i32_1 = arith.constant 0 : i32
    %c0_i32_2 = arith.constant 0 : i32
    return %c0_i32, %c0_i32_0, %c0_i32_1 : i32, i32, i32
  }
  func.func @transform_24(%arg0: i32) -> (i32, i32, i32) {
    %c0_i32 = arith.constant 0 : i32
    %c0_i32_0 = arith.constant 0 : i32
    %c0_i32_1 = arith.constant 0 : i32
    %c0_i32_2 = arith.constant 0 : i32
    return %c0_i32, %c0_i32_0, %c0_i32_1 : i32, i32, i32
  }
  func.func @transform_25(%arg0: i32) -> (i32, i32, i32) {
    %c0_i32 = arith.constant 0 : i32
    %c0_i32_0 = arith.constant 0 : i32
    %c0_i32_1 = arith.constant 0 : i32
    %c0_i32_2 = arith.constant 0 : i32
    return %c0_i32, %c0_i32_0, %c0_i32_1 : i32, i32, i32
  }
  func.func @transform_26(%arg0: i32) -> (i32, i32, i32) {
    %c0_i32 = arith.constant 0 : i32
    %c0_i32_0 = arith.constant 0 : i32
    %c0_i32_1 = arith.constant 0 : i32
    %c0_i32_2 = arith.constant 0 : i32
    return %c0_i32, %c0_i32_0, %c0_i32_1 : i32, i32, i32
  }
  func.func @transform_27(%arg0: i32) -> (i32, i32, i32) {
    %c0_i32 = arith.constant 0 : i32
    %c0_i32_0 = arith.constant 0 : i32
    %c0_i32_1 = arith.constant 0 : i32
    %c0_i32_2 = arith.constant 0 : i32
    return %c0_i32, %c0_i32_0, %c0_i32_1 : i32, i32, i32
  }
  func.func @transform_28(%arg0: i32) -> (i32, i32, i32) {
    %c0_i32 = arith.constant 0 : i32
    %c0_i32_0 = arith.constant 0 : i32
    %c0_i32_1 = arith.constant 0 : i32
    %c0_i32_2 = arith.constant 0 : i32
    return %c0_i32, %c0_i32_0, %c0_i32_1 : i32, i32, i32
  }
  func.func @transform_29(%arg0: i32) -> (i32, i32, i32) {
    %c0_i32 = arith.constant 0 : i32
    %c0_i32_0 = arith.constant 0 : i32
    %c0_i32_1 = arith.constant 0 : i32
    %c0_i32_2 = arith.constant 0 : i32
    return %c0_i32, %c0_i32_0, %c0_i32_1 : i32, i32, i32
  }
  func.func @transform_30(%arg0: i32) -> (i32, i32, i32) {
    %c0_i32 = arith.constant 0 : i32
    %c0_i32_0 = arith.constant 0 : i32
    %c0_i32_1 = arith.constant 0 : i32
    %c0_i32_2 = arith.constant 0 : i32
    return %c0_i32, %c0_i32_0, %c0_i32_1 : i32, i32, i32
  }
  func.func @transform_31(%arg0: i32) -> (i32, i32, i32) {
    %c0_i32 = arith.constant 0 : i32
    %c0_i32_0 = arith.constant 0 : i32
    %c0_i32_1 = arith.constant 0 : i32
    %c0_i32_2 = arith.constant 0 : i32
    return %c0_i32, %c0_i32_0, %c0_i32_1 : i32, i32, i32
  }
  func.func @transform_32(%arg0: i32) -> (i32, i32, i32) {
    %c0_i32 = arith.constant 0 : i32
    %c0_i32_0 = arith.constant 0 : i32
    %c0_i32_1 = arith.constant 0 : i32
    %c0_i32_2 = arith.constant 0 : i32
    return %c0_i32, %c0_i32_0, %c0_i32_1 : i32, i32, i32
  }
  func.func @transform_33(%arg0: i32) -> (i32, i32, i32) {
    %c0_i32 = arith.constant 0 : i32
    %c0_i32_0 = arith.constant 0 : i32
    %c0_i32_1 = arith.constant 0 : i32
    %c0_i32_2 = arith.constant 0 : i32
    return %c0_i32, %c0_i32_0, %c0_i32_1 : i32, i32, i32
  }
  func.func @transform_34(%arg0: i32) -> (i32, i32, i32) {
    %c0_i32 = arith.constant 0 : i32
    %c0_i32_0 = arith.constant 0 : i32
    %c0_i32_1 = arith.constant 0 : i32
    %c0_i32_2 = arith.constant 0 : i32
    return %c0_i32, %c0_i32_0, %c0_i32_1 : i32, i32, i32
  }
  func.func @transform_35(%arg0: i32) -> (i32, i32, i32) {
    %c0_i32 = arith.constant 0 : i32
    %c0_i32_0 = arith.constant 0 : i32
    %c0_i32_1 = arith.constant 0 : i32
    %c0_i32_2 = arith.constant 0 : i32
    return %c0_i32, %c0_i32_0, %c0_i32_1 : i32, i32, i32
  }
  func.func @transform_36(%arg0: i32) -> (i32, i32) {
    %c0_i32 = arith.constant 0 : i32
    %c0_i32_0 = arith.constant 0 : i32
    %c0_i32_1 = arith.constant 0 : i32
    return %c0_i32, %c0_i32_0 : i32, i32
  }
  func.func @transform_37(%arg0: i32) -> (i32, i32) {
    %c0_i32 = arith.constant 0 : i32
    %c0_i32_0 = arith.constant 0 : i32
    %c0_i32_1 = arith.constant 0 : i32
    return %c0_i32, %c0_i32_0 : i32, i32
  }
  func.func @transform_38(%arg0: i32) -> (i32, i32) {
    %c0_i32 = arith.constant 0 : i32
    %c0_i32_0 = arith.constant 0 : i32
    %c0_i32_1 = arith.constant 0 : i32
    return %c0_i32, %c0_i32_0 : i32, i32
  }
  func.func @transform_39(%arg0: i32) -> (i32, i32) {
    %c0_i32 = arith.constant 0 : i32
    %c0_i32_0 = arith.constant 0 : i32
    %c0_i32_1 = arith.constant 0 : i32
    return %c0_i32, %c0_i32_0 : i32, i32
  }
  func.func @transform_40(%arg0: i32) -> (i32, i32) {
    %c0_i32 = arith.constant 0 : i32
    %c0_i32_0 = arith.constant 0 : i32
    %c0_i32_1 = arith.constant 0 : i32
    return %c0_i32, %c0_i32_0 : i32, i32
  }
  func.func @transform_41(%arg0: i32) -> (i32, i32) {
    %c0_i32 = arith.constant 0 : i32
    %c0_i32_0 = arith.constant 0 : i32
    %c0_i32_1 = arith.constant 0 : i32
    return %c0_i32, %c0_i32_0 : i32, i32
  }
  func.func @transform_42(%arg0: i32) -> (i32, i32, i32) {
    %c0_i32 = arith.constant 0 : i32
    %c0_i32_0 = arith.constant 0 : i32
    %c0_i32_1 = arith.constant 0 : i32
    return %arg0, %c0_i32, %c0_i32_0 : i32, i32, i32
  }
}

</mosaic_0001>

<llo_original>
// kernel: tpu_custom_call.1
$region0: #{tpu_custom_call.1}
  #allocation0 [shape = 'u32[]', space=smem, size = 0x4, offset = 0x4, fixed_abs, tag = 'smem constant byte address 0x4 - core index']
  #allocation1 [shape = 'u32[144,128]{1,0:T(1,128)}', space=vmem, size = 0x12000, scoped, tag = 'internal scratch']
  %s0 = inlined_call_operand.smem [shape: u32[43], index: -1, kind: input, shape index: {}]
  %s1 = sld [smem:[%s0]]
  %s2 = scalar_lea.smem %s0, 1
  %s3 = sld [smem:[%s2]]
  %s4 = scalar_lea.smem %s0, 2
  %s5 = sld [smem:[%s4]]
  %s6 = scalar_lea.smem %s0, 3
  %s7 = sld [smem:[%s6]]
  %s8 = scalar_lea.smem %s0, 4
  %s9 = sld [smem:[%s8]]
  %s10 = scalar_lea.smem %s0, 5
  %s11 = sld [smem:[%s10]]
  %s12 = scalar_lea.smem %s0, 6
  %s13 = sld [smem:[%s12]]
  %s14 = scalar_lea.smem %s0, 7
  %s15 = sld [smem:[%s14]]
  %s16 = scalar_lea.smem %s0, 8
  %s17 = sld [smem:[%s16]]
  %s18 = scalar_lea.smem %s0, 9
  %s19 = sld [smem:[%s18]]
  %s20 = scalar_lea.smem %s0, 10
  %s21 = sld [smem:[%s20]]
  %s22 = scalar_lea.smem %s0, 11
  %s23 = sld [smem:[%s22]]
  %s24 = scalar_lea.smem %s0, 12
  %s25 = sld [smem:[%s24]]
  %s26 = scalar_lea.smem %s0, 13
  %s27 = sld [smem:[%s26]]
  %s28 = scalar_lea.smem %s0, 14
  %s29 = sld [smem:[%s28]]
  %s30 = scalar_lea.smem %s0, 15
  %s31 = sld [smem:[%s30]]
  %s32 = scalar_lea.smem %s0, 16
  %s33 = sld [smem:[%s32]]
  %s34 = scalar_lea.smem %s0, 17
  %s35 = sld [smem:[%s34]]
  %s36 = scalar_lea.smem %s0, 18
  %s37 = sld [smem:[%s36]]
  %s38 = scalar_lea.smem %s0, 19
  %s39 = sld [smem:[%s38]]
  %s40 = scalar_lea.smem %s0, 20
  %s41 = sld [smem:[%s40]]
  %s42 = scalar_lea.smem %s0, 21
  %s43 = sld [smem:[%s42]]
  %s44 = scalar_lea.smem %s0, 22
  %s45 = sld [smem:[%s44]]
  %s46 = scalar_lea.smem %s0, 23
  %s47 = sld [smem:[%s46]]
  %s48 = scalar_lea.smem %s0, 24
  %s49 = sld [smem:[%s48]]
  %s50 = scalar_lea.smem %s0, 25
  %s51 = sld [smem:[%s50]]
  %s52 = scalar_lea.smem %s0, 26
  %s53 = sld [smem:[%s52]]
  %s54 = scalar_lea.smem %s0, 27
  %s55 = sld [smem:[%s54]]
  %s56 = scalar_lea.smem %s0, 28
  %s57 = sld [smem:[%s56]]
  %s58 = scalar_lea.smem %s0, 29
  %s59 = sld [smem:[%s58]]
  %s60 = scalar_lea.smem %s0, 30
  %s61 = sld [smem:[%s60]]
  %s62 = scalar_lea.smem %s0, 31
  %s63 = sld [smem:[%s62]]
  %s64 = scalar_lea.smem %s0, 32
  %s65 = sld [smem:[%s64]]
  %s66 = scalar_lea.smem %s0, 33
  %s67 = sld [smem:[%s66]]
  %s68 = scalar_lea.smem %s0, 34
  %s69 = sld [smem:[%s68]]
  %s70 = scalar_lea.smem %s0, 35
  %s71 = sld [smem:[%s70]]
  %s72 = scalar_lea.smem %s0, 36
  %s73 = sld [smem:[%s72]]
  %s74 = scalar_lea.smem %s0, 37
  %s75 = sld [smem:[%s74]]
  %s76 = scalar_lea.smem %s0, 38
  %s77 = sld [smem:[%s76]]
  %s78 = scalar_lea.smem %s0, 39
  %s79 = sld [smem:[%s78]]
  %s80 = scalar_lea.smem %s0, 40
  %s81 = sld [smem:[%s80]]
  %s82 = scalar_lea.smem %s0, 41
  %s83 = sld [smem:[%s82]]
  %s84 = scalar_lea.smem %s0, 42
  %s85 = sld [smem:[%s84]]
  %s86 = sld [smem:[#allocation0]]
  $region293: #{tpu_custom_call.1} parent=0
    _
  %s88 = ssub.s32 1, %s86
  %s89 = scalar_select 0, %s88, %s86
  $region1: #{tpu_custom_call.1} parent=0
    #allocation2 [shape = 'u8[8192]{0}', space=vmem, size = 0x2000, scoped, tag = 'input window, operand 0']
    #allocation3 [shape = 's32[2]{0}', space=sflag, size = 0x8, scoped, tag = 'scoped memory for tpu_custom_call.1']
    #allocation4 [shape = 's32[2]{0}', space=sflag, size = 0x8, scoped, tag = 'scoped memory for tpu_custom_call.1']
    #allocation5 [shape = 'u8[8192]{0}', space=vmem, size = 0x2000, scoped, tag = 'input window, operand 1']
    #allocation6 [shape = 's32[2]{0}', space=sflag, size = 0x8, scoped, tag = 'scoped memory for tpu_custom_call.1']
    #allocation7 [shape = 'u8[1024]{0}', space=vmem, size = 0x400, scoped, tag = 'input window, operand 2']
    #allocation8 [shape = 'u8[8192]{0}', space=vmem, size = 0x2000, scoped, tag = 'input window, operand 3']
    #allocation9 [shape = 's32[2]{0}', space=sflag, size = 0x8, scoped, tag = 'scoped memory for tpu_custom_call.1']
    #allocation10 [shape = 'u8[1024]{0}', space=vmem, size = 0x400, scoped, tag = 'input window, operand 5, single buffered']
    #allocation11 [shape = 'u8[1024]{0}', space=vmem, size = 0x400, scoped, tag = 'input window, operand 7, single buffered']
    #allocation12 [shape = 's32[1]{0}', space=sflag, size = 0x4, scoped, tag = 'scoped memory for tpu_custom_call.1']
    #allocation13 [shape = 'u8[1024]{0}', space=vmem, size = 0x400, scoped, tag = 'input window, operand 8, single buffered']
    #allocation14 [shape = 'u8[1024]{0}', space=vmem, size = 0x400, scoped, tag = 'input window, operand 9, single buffered']
    #allocation15 [shape = 's32[1]{0}', space=sflag, size = 0x4, scoped, tag = 'scoped memory for tpu_custom_call.1']
    #allocation16 [shape = 'u8[1024]{0}', space=vmem, size = 0x400, scoped, tag = 'input window, operand 11, single buffered']
    #allocation17 [shape = 'u8[1024]{0}', space=vmem, size = 0x400, scoped, tag = 'input window, operand 13, single buffered']
    #allocation18 [shape = 's32[1]{0}', space=sflag, size = 0x4, scoped, tag = 'scoped memory for tpu_custom_call.1']
    #allocation19 [shape = 'u8[1024]{0}', space=vmem, size = 0x400, scoped, tag = 'input window, operand 14, single buffered']
    #allocation20 [shape = 'u8[1024]{0}', space=vmem, size = 0x400, scoped, tag = 'input window, operand 15, single buffered']
    #allocation21 [shape = 's32[1]{0}', space=sflag, size = 0x4, scoped, tag = 'scoped memory for tpu_custom_call.1']
    #allocation22 [shape = 'u8[1024]{0}', space=vmem, size = 0x400, scoped, tag = 'input window, operand 17, single buffered']
    #allocation23 [shape = 'u8[1024]{0}', space=vmem, size = 0x400, scoped, tag = 'input window, operand 19, single buffered']
    #allocation24 [shape = 's32[1]{0}', space=sflag, size = 0x4, scoped, tag = 'scoped memory for tpu_custom_call.1']
    #allocation25 [shape = 'u8[1024]{0}', space=vmem, size = 0x400, scoped, tag = 'input window, operand 20, single buffered']
    #allocation26 [shape = 'u8[1024]{0}', space=vmem, size = 0x400, scoped, tag = 'input window, operand 21, single buffered']
    #allocation27 [shape = 's32[1]{0}', space=sflag, size = 0x4, scoped, tag = 'scoped memory for tpu_custom_call.1']
    #allocation28 [shape = 'u8[1024]{0}', space=vmem, size = 0x400, scoped, tag = 'input window, operand 23, single buffered']
    #allocation29 [shape = 'u8[16384]{0}', space=vmem, size = 0x4000, scoped, tag = 'input window, operand 24, single buffered']
    #allocation30 [shape = 's32[1]{0}', space=sflag, size = 0x4, scoped, tag = 'scoped memory for tpu_custom_call.1']
    #allocation31 [shape = 'u8[1024]{0}', space=vmem, size = 0x400, scoped, tag = 'input window, operand 25, single buffered']
    #allocation32 [shape = 'u8[1024]{0}', space=vmem, size = 0x400, scoped, tag = 'input window, operand 27, single buffered']
    #allocation33 [shape = 's32[1]{0}', space=sflag, size = 0x4, scoped, tag = 'scoped memory for tpu_custom_call.1']
    #allocation34 [shape = 'u8[1024]{0}', space=vmem, size = 0x400, scoped, tag = 'input window, operand 28, single buffered']
    #allocation35 [shape = 'u8[1024]{0}', space=vmem, size = 0x400, scoped, tag = 'input window, operand 29, single buffered']
    #allocation36 [shape = 's32[1]{0}', space=sflag, size = 0x4, scoped, tag = 'scoped memory for tpu_custom_call.1']
    #allocation37 [shape = 'u8[16384]{0}', space=vmem, size = 0x4000, scoped, tag = 'input window, operand 30, single buffered']
    #allocation38 [shape = 'u8[8192]{0}', space=vmem, size = 0x2000, scoped, tag = 'output window, operand 0']
    %90 = vsyncpa [#allocation3], 0
    %s91 = scalar_lea.sflag [#allocation3], 1
    %92 = vsyncpa %s91, 0
    %93 = vsyncpa [#allocation6], 0
    %s94 = scalar_lea.sflag [#allocation6], 1
    %95 = vsyncpa %s94, 0
    %96 = vsyncpa [#allocation9], 0
    %s97 = scalar_lea.sflag [#allocation9], 1
    %98 = vsyncpa %s97, 0
    %99 = vsyncpa [#allocation12], 0
    %100 = vsyncpa [#allocation15], 0
    %101 = vsyncpa [#allocation18], 0
    %102 = vsyncpa [#allocation21], 0
    %103 = vsyncpa [#allocation24], 0
    %104 = vsyncpa [#allocation27], 0
    %105 = vsyncpa [#allocation30], 0
    %106 = vsyncpa [#allocation33], 0
    %107 = vsyncpa [#allocation36], 0
    %108 = vsyncpa [#allocation4], 0
    %s109 = scalar_lea.sflag [#allocation4], 1
    %110 = vsyncpa %s109, 0
    loop: start=0, step=1, limit=4
    $region2: #{tpu_custom_call.1} parent=1 // loop_pre_header
      _
    $region3: #{tpu_custom_call.1} parent=1 // loop_header
      %s112 = sphi 0, %s116
      %p113 = scmp.ge.s32.totalorder %s112, 4
      %s122 = sphi 0, %s124
      %s125 = sphi 0, %s122
      %s126 = sphi 0, %s125
      %s142 = sphi 0, %s126
      %s148 = sphi 0, %s150
      %s151 = sphi 0, %s148
      %s152 = sphi 0, %s151
      %s168 = sphi 0, %s152
      %s174 = sphi 0, %s176
      %s177 = sphi 0, %s174
      %s178 = sphi 0, %s177
      %s194 = sphi 0, %s178
      %s200 = sphi 0, %s202
      %s203 = sphi 0, %s200
      %s204 = sphi 0, %s203
      %s220 = sphi 0, %s204
      %s224 = sphi 0, %s224
      %s226 = sphi 0, %s224
      %s227 = sphi 0, %s226
      %s241 = sphi 0, %s227
      %s245 = sphi 0, %s245
      %s247 = sphi 0, %s245
      %s248 = sphi 0, %s247
      %s262 = sphi 0, %s248
      %s266 = sphi 0, %s266
      %s268 = sphi 0, %s266
      %s269 = sphi 0, %s268
      %s283 = sphi 0, %s269
      %s287 = sphi 0, %s287
      %s289 = sphi 0, %s287
      %s290 = sphi 0, %s289
      %s304 = sphi 0, %s290
      %s308 = sphi 0, %s308
      %s310 = sphi 0, %s308
      %s311 = sphi 0, %s310
      %s325 = sphi 0, %s311
      %s329 = sphi 0, %s329
      %s331 = sphi 0, %s329
      %s332 = sphi 0, %s331
      %s346 = sphi 0, %s332
      %s350 = sphi 0, %s350
      %s352 = sphi 0, %s350
      %s353 = sphi 0, %s352
      %s367 = sphi 0, %s353
      %s371 = sphi 0, %s371
      %s373 = sphi 0, %s371
      %s374 = sphi 0, %s373
      %s388 = sphi 0, %s374
      %s392 = sphi 0, %s392
      %s394 = sphi 0, %s392
      %s395 = sphi 0, %s394
      %s409 = sphi 0, %s395
      %s413 = sphi 0, %s413
      %s415 = sphi 0, %s413
      %s416 = sphi 0, %s415
      %s430 = sphi 0, %s416
      %s434 = sphi 0, %s434
      %s436 = sphi 0, %s434
      %s437 = sphi 0, %s436
      %s451 = sphi 0, %s437
      %s455 = sphi 0, %s455
      %s457 = sphi 0, %s455
      %s458 = sphi 0, %s457
      %s472 = sphi 0, %s458
      %s476 = sphi 0, %s476
      %s478 = sphi 0, %s476
      %s479 = sphi 0, %s478
      %s493 = sphi 0, %s479
      %s497 = sphi 0, %s497
      %s499 = sphi 0, %s497
      %s500 = sphi 0, %s499
      %s514 = sphi 0, %s500
      %s518 = sphi 0, %s518
      %s520 = sphi 0, %s518
      %s521 = sphi 0, %s520
      %s535 = sphi 0, %s521
      %s539 = sphi 0, %s539
      %s541 = sphi 0, %s539
      %s542 = sphi 0, %s541
      %s556 = sphi 0, %s542
      %s560 = sphi 0, %s560
      %s562 = sphi 0, %s560
      %s563 = sphi 0, %s562
      %s577 = sphi 0, %s563
      %s581 = sphi 0, %s581
      %s583 = sphi 0, %s581
      %s584 = sphi 0, %s583
      %s598 = sphi 0, %s584
      %s602 = sphi 0, %s602
      %s604 = sphi 0, %s602
      %s605 = sphi 0, %s604
      %s619 = sphi 0, %s605
      %s623 = sphi 0, %s623
      %s625 = sphi 0, %s623
      %s626 = sphi 0, %s625
      %s640 = sphi 0, %s626
      %s644 = sphi 0, %s644
      %s646 = sphi 0, %s644
      %s647 = sphi 0, %s646
      %s661 = sphi 0, %s647
      %s665 = sphi 0, %s665
      %s667 = sphi 0, %s665
      %s668 = sphi 0, %s667
      %s682 = sphi 0, %s668
      %s686 = sphi 0, %s686
      %s688 = sphi 0, %s686
      %s689 = sphi 0, %s688
      %s703 = sphi 0, %s689
      %s707 = sphi 0, %s707
      %s709 = sphi 0, %s707
      %s710 = sphi 0, %s709
      %s724 = sphi 0, %s710
      %s728 = sphi 0, %s728
      %s730 = sphi 0, %s728
      %s731 = sphi 0, %s730
      %s745 = sphi 0, %s731
      %s749 = sphi 0, %s749
      %s751 = sphi 0, %s749
      %s752 = sphi 0, %s751
      %s766 = sphi 0, %s752
      %s770 = sphi 0, %s770
      %s772 = sphi 0, %s770
      %s773 = sphi 0, %s772
      %s787 = sphi 0, %s773
      %s791 = sphi 0, %s791
      %s793 = sphi 0, %s791
      %s794 = sphi 0, %s793
      %s808 = sphi 0, %s794
      %s812 = sphi 0, %s812
      %s814 = sphi 0, %s812
      %s815 = sphi 0, %s814
      %s829 = sphi 0, %s815
      %s833 = sphi 0, %s833
      %s835 = sphi 0, %s833
      %s836 = sphi 0, %s835
      %s850 = sphi 0, %s836
      %s854 = sphi 0, %s854
      %s856 = sphi 0, %s854
      %s857 = sphi 0, %s856
      %s871 = sphi 0, %s857
      %s875 = sphi 0, %s875
      %s877 = sphi 0, %s875
      %s878 = sphi 0, %s877
      %s892 = sphi 0, %s878
      %s896 = sphi 0, %s896
      %s898 = sphi 0, %s896
      %s899 = sphi 0, %s898
      %s913 = sphi 0, %s899
      %s917 = sphi 0, %s917
      %s919 = sphi 0, %s917
      %s920 = sphi 0, %s919
      %s934 = sphi 0, %s920
      %s938 = sphi 0, %s938
      %s940 = sphi 0, %s938
      %s941 = sphi 0, %s940
      %s955 = sphi 0, %s941
      %s959 = sphi 0, %s959
      %s961 = sphi 0, %s959
      %s962 = sphi 0, %s961
      %s976 = sphi 0, %s962
      %s980 = sphi 0, %s980
      %s982 = sphi 0, %s980
      %s983 = sphi 0, %s982
      %s997 = sphi 0, %s983
      %s1001 = sphi 0, %s1001
      %s1003 = sphi 0, %s1001
      %s1004 = sphi 0, %s1003
      %s1018 = sphi 0, %s1004
      %s1024 = sphi 0, %s1026
      %s1027 = sphi 0, %s1024
      %s1028 = sphi 0, %s1027
      %s1044 = sphi 0, %s1028
    $region4: #{tpu_custom_call.1} parent=1 // loop_header_branch
      %115 = sbr.rel (%p113) target = $region8
    $region5: #{tpu_custom_call.1} parent=1 // loop_body
      %s117 = ssub.s32 %s112, 1
      %s118 = ssub.s32 %s112, 2
      %s119 = sadd.s32 %s112, 1
      %s120 = ssub.s32 %s112, %s119
      %p121 = scmp.eq.s32.totalorder %s120, 0
      %s123 = sadd.s32 %s122, 1
      %s124 = scalar_select %p121, %s122, %s123
      %p127 = pneg %p121
      %p128 = scmp.eq.s32.totalorder %s112, 1
      %p129 = por %p127, %p128
      %p130 = scmp.ne.s32.totalorder %s122, %s125
      %p131 = scmp.eq.s32.totalorder %s112, 0
      %p132 = por %p130, %p131
      %p133 = scmp.ne.s32.totalorder %s122, %s125
      %p134 = scmp.eq.s32.totalorder %s117, 1
      %p135 = por %p133, %p134
      %p136 = scmp.ne.s32.totalorder %s125, %s126
      %p137 = scmp.eq.s32.totalorder %s117, 0
      %p138 = por %p136, %p137
      %p139 = scmp.ne.s32.totalorder %s125, %s126
      %p140 = scmp.eq.s32.totalorder %s118, 1
      %p141 = por %p139, %p140
      %p143 = scmp.ne.s32.totalorder %s126, %s142
      %p144 = scmp.eq.s32.totalorder %s118, 0
      %p145 = por %p143, %p144
      %s146 = ssub.s32 %s112, %s119
      %p147 = scmp.eq.s32.totalorder %s146, 0
      %s149 = sadd.s32 %s148, 1
      %s150 = scalar_select %p147, %s148, %s149
      %p153 = pneg %p147
      %p154 = scmp.eq.s32.totalorder %s112, 1
      %p155 = por %p153, %p154
      %p156 = scmp.ne.s32.totalorder %s148, %s151
      %p157 = scmp.eq.s32.totalorder %s112, 0
      %p158 = por %p156, %p157
      %p159 = scmp.ne.s32.totalorder %s148, %s151
      %p160 = scmp.eq.s32.totalorder %s117, 1
      %p161 = por %p159, %p160
      %p162 = scmp.ne.s32.totalorder %s151, %s152
      %p163 = scmp.eq.s32.totalorder %s117, 0
      %p164 = por %p162, %p163
      %p165 = scmp.ne.s32.totalorder %s151, %s152
      %p166 = scmp.eq.s32.totalorder %s118, 1
      %p167 = por %p165, %p166
      %p169 = scmp.ne.s32.totalorder %s152, %s168
      %p170 = scmp.eq.s32.totalorder %s118, 0
      %p171 = por %p169, %p170
      %s172 = ssub.s32 %s112, %s119
      %p173 = scmp.eq.s32.totalorder %s172, 0
      %s175 = sadd.s32 %s174, 1
      %s176 = scalar_select %p173, %s174, %s175
      %p179 = pneg %p173
      %p180 = scmp.eq.s32.totalorder %s112, 1
      %p181 = por %p179, %p180
      %p182 = scmp.ne.s32.totalorder %s174, %s177
      %p183 = scmp.eq.s32.totalorder %s112, 0
      %p184 = por %p182, %p183
      %p185 = scmp.ne.s32.totalorder %s174, %s177
      %p186 = scmp.eq.s32.totalorder %s117, 1
      %p187 = por %p185, %p186
      %p188 = scmp.ne.s32.totalorder %s177, %s178
      %p189 = scmp.eq.s32.totalorder %s117, 0
      %p190 = por %p188, %p189
      %p191 = scmp.ne.s32.totalorder %s177, %s178
      %p192 = scmp.eq.s32.totalorder %s118, 1
      %p193 = por %p191, %p192
      %p195 = scmp.ne.s32.totalorder %s178, %s194
      %p196 = scmp.eq.s32.totalorder %s118, 0
      %p197 = por %p195, %p196
      %s198 = ssub.s32 %s112, %s119
      %p199 = scmp.eq.s32.totalorder %s198, 0
      %s201 = sadd.s32 %s200, 1
      %s202 = scalar_select %p199, %s200, %s201
      %p205 = pneg %p199
      %p206 = scmp.eq.s32.totalorder %s112, 1
      %p207 = por %p205, %p206
      %p208 = scmp.ne.s32.totalorder %s200, %s203
      %p209 = scmp.eq.s32.totalorder %s112, 0
      %p210 = por %p208, %p209
      %p211 = scmp.ne.s32.totalorder %s200, %s203
      %p212 = scmp.eq.s32.totalorder %s117, 1
      %p213 = por %p211, %p212
      %p214 = scmp.ne.s32.totalorder %s203, %s204
      %p215 = scmp.eq.s32.totalorder %s117, 0
      %p216 = por %p214, %p215
      %p217 = scmp.ne.s32.totalorder %s203, %s204
      %p218 = scmp.eq.s32.totalorder %s118, 1
      %p219 = por %p217, %p218
      %p221 = scmp.ne.s32.totalorder %s204, %s220
      %p222 = scmp.eq.s32.totalorder %s118, 0
      %p223 = por %p221, %p222
      %s225 = sadd.s32 %s224, 1
      %p228 = scmp.eq.s32.totalorder %s112, 1
      %p229 = scmp.ne.s32.totalorder %s224, %s226
      %p230 = scmp.eq.s32.totalorder %s112, 0
      %p231 = por %p229, %p230
      %p232 = scmp.ne.s32.totalorder %s224, %s226
      %p233 = scmp.eq.s32.totalorder %s117, 1
      %p234 = por %p232, %p233
      %p235 = scmp.ne.s32.totalorder %s226, %s227
      %p236 = scmp.eq.s32.totalorder %s117, 0
      %p237 = por %p235, %p236
      %p238 = scmp.ne.s32.totalorder %s226, %s227
      %p239 = scmp.eq.s32.totalorder %s118, 1
      %p240 = por %p238, %p239
      %p242 = scmp.ne.s32.totalorder %s227, %s241
      %p243 = scmp.eq.s32.totalorder %s118, 0
      %p244 = por %p242, %p243
      %s246 = sadd.s32 %s245, 1
      %p249 = scmp.eq.s32.totalorder %s112, 1
      %p250 = scmp.ne.s32.totalorder %s245, %s247
      %p251 = scmp.eq.s32.totalorder %s112, 0
      %p252 = por %p250, %p251
      %p253 = scmp.ne.s32.totalorder %s245, %s247
      %p254 = scmp.eq.s32.totalorder %s117, 1
      %p255 = por %p253, %p254
      %p256 = scmp.ne.s32.totalorder %s247, %s248
      %p257 = scmp.eq.s32.totalorder %s117, 0
      %p258 = por %p256, %p257
      %p259 = scmp.ne.s32.totalorder %s247, %s248
      %p260 = scmp.eq.s32.totalorder %s118, 1
      %p261 = por %p259, %p260
      %p263 = scmp.ne.s32.totalorder %s248, %s262
      %p264 = scmp.eq.s32.totalorder %s118, 0
      %p265 = por %p263, %p264
      %s267 = sadd.s32 %s266, 1
      %p270 = scmp.eq.s32.totalorder %s112, 1
      %p271 = scmp.ne.s32.totalorder %s266, %s268
      %p272 = scmp.eq.s32.totalorder %s112, 0
      %p273 = por %p271, %p272
      %p274 = scmp.ne.s32.totalorder %s266, %s268
      %p275 = scmp.eq.s32.totalorder %s117, 1
      %p276 = por %p274, %p275
      %p277 = scmp.ne.s32.totalorder %s268, %s269
      %p278 = scmp.eq.s32.totalorder %s117, 0
      %p279 = por %p277, %p278
      %p280 = scmp.ne.s32.totalorder %s268, %s269
      %p281 = scmp.eq.s32.totalorder %s118, 1
      %p282 = por %p280, %p281
      %p284 = scmp.ne.s32.totalorder %s269, %s283
      %p285 = scmp.eq.s32.totalorder %s118, 0
      %p286 = por %p284, %p285
      %s288 = sadd.s32 %s287, 1
      %p291 = scmp.eq.s32.totalorder %s112, 1
      %p292 = scmp.ne.s32.totalorder %s287, %s289
      %p293 = scmp.eq.s32.totalorder %s112, 0
      %p294 = por %p292, %p293
      %p295 = scmp.ne.s32.totalorder %s287, %s289
      %p296 = scmp.eq.s32.totalorder %s117, 1
      %p297 = por %p295, %p296
      %p298 = scmp.ne.s32.totalorder %s289, %s290
      %p299 = scmp.eq.s32.totalorder %s117, 0
      %p300 = por %p298, %p299
      %p301 = scmp.ne.s32.totalorder %s289, %s290
      %p302 = scmp.eq.s32.totalorder %s118, 1
      %p303 = por %p301, %p302
      %p305 = scmp.ne.s32.totalorder %s290, %s304
      %p306 = scmp.eq.s32.totalorder %s118, 0
      %p307 = por %p305, %p306
      %s309 = sadd.s32 %s308, 1
      %p312 = scmp.eq.s32.totalorder %s112, 1
      %p313 = scmp.ne.s32.totalorder %s308, %s310
      %p314 = scmp.eq.s32.totalorder %s112, 0
      %p315 = por %p313, %p314
      %p316 = scmp.ne.s32.totalorder %s308, %s310
      %p317 = scmp.eq.s32.totalorder %s117, 1
      %p318 = por %p316, %p317
      %p319 = scmp.ne.s32.totalorder %s310, %s311
      %p320 = scmp.eq.s32.totalorder %s117, 0
      %p321 = por %p319, %p320
      %p322 = scmp.ne.s32.totalorder %s310, %s311
      %p323 = scmp.eq.s32.totalorder %s118, 1
      %p324 = por %p322, %p323
      %p326 = scmp.ne.s32.totalorder %s311, %s325
      %p327 = scmp.eq.s32.totalorder %s118, 0
      %p328 = por %p326, %p327
      %s330 = sadd.s32 %s329, 1
      %p333 = scmp.eq.s32.totalorder %s112, 1
      %p334 = scmp.ne.s32.totalorder %s329, %s331
      %p335 = scmp.eq.s32.totalorder %s112, 0
      %p336 = por %p334, %p335
      %p337 = scmp.ne.s32.totalorder %s329, %s331
      %p338 = scmp.eq.s32.totalorder %s117, 1
      %p339 = por %p337, %p338
      %p340 = scmp.ne.s32.totalorder %s331, %s332
      %p341 = scmp.eq.s32.totalorder %s117, 0
      %p342 = por %p340, %p341
      %p343 = scmp.ne.s32.totalorder %s331, %s332
      %p344 = scmp.eq.s32.totalorder %s118, 1
      %p345 = por %p343, %p344
      %p347 = scmp.ne.s32.totalorder %s332, %s346
      %p348 = scmp.eq.s32.totalorder %s118, 0
      %p349 = por %p347, %p348
      %s351 = sadd.s32 %s350, 1
      %p354 = scmp.eq.s32.totalorder %s112, 1
      %p355 = scmp.ne.s32.totalorder %s350, %s352
      %p356 = scmp.eq.s32.totalorder %s112, 0
      %p357 = por %p355, %p356
      %p358 = scmp.ne.s32.totalorder %s350, %s352
      %p359 = scmp.eq.s32.totalorder %s117, 1
      %p360 = por %p358, %p359
      %p361 = scmp.ne.s32.totalorder %s352, %s353
      %p362 = scmp.eq.s32.totalorder %s117, 0
      %p363 = por %p361, %p362
      %p364 = scmp.ne.s32.totalorder %s352, %s353
      %p365 = scmp.eq.s32.totalorder %s118, 1
      %p366 = por %p364, %p365
      %p368 = scmp.ne.s32.totalorder %s353, %s367
      %p369 = scmp.eq.s32.totalorder %s118, 0
      %p370 = por %p368, %p369
      %s372 = sadd.s32 %s371, 1
      %p375 = scmp.eq.s32.totalorder %s112, 1
      %p376 = scmp.ne.s32.totalorder %s371, %s373
      %p377 = scmp.eq.s32.totalorder %s112, 0
      %p378 = por %p376, %p377
      %p379 = scmp.ne.s32.totalorder %s371, %s373
      %p380 = scmp.eq.s32.totalorder %s117, 1
      %p381 = por %p379, %p380
      %p382 = scmp.ne.s32.totalorder %s373, %s374
      %p383 = scmp.eq.s32.totalorder %s117, 0
      %p384 = por %p382, %p383
      %p385 = scmp.ne.s32.totalorder %s373, %s374
      %p386 = scmp.eq.s32.totalorder %s118, 1
      %p387 = por %p385, %p386
      %p389 = scmp.ne.s32.totalorder %s374, %s388
      %p390 = scmp.eq.s32.totalorder %s118, 0
      %p391 = por %p389, %p390
      %s393 = sadd.s32 %s392, 1
      %p396 = scmp.eq.s32.totalorder %s112, 1
      %p397 = scmp.ne.s32.totalorder %s392, %s394
      %p398 = scmp.eq.s32.totalorder %s112, 0
      %p399 = por %p397, %p398
      %p400 = scmp.ne.s32.totalorder %s392, %s394
      %p401 = scmp.eq.s32.totalorder %s117, 1
      %p402 = por %p400, %p401
      %p403 = scmp.ne.s32.totalorder %s394, %s395
      %p404 = scmp.eq.s32.totalorder %s117, 0
      %p405 = por %p403, %p404
      %p406 = scmp.ne.s32.totalorder %s394, %s395
      %p407 = scmp.eq.s32.totalorder %s118, 1
      %p408 = por %p406, %p407
      %p410 = scmp.ne.s32.totalorder %s395, %s409
      %p411 = scmp.eq.s32.totalorder %s118, 0
      %p412 = por %p410, %p411
      %s414 = sadd.s32 %s413, 1
      %p417 = scmp.eq.s32.totalorder %s112, 1
      %p418 = scmp.ne.s32.totalorder %s413, %s415
      %p419 = scmp.eq.s32.totalorder %s112, 0
      %p420 = por %p418, %p419
      %p421 = scmp.ne.s32.totalorder %s413, %s415
      %p422 = scmp.eq.s32.totalorder %s117, 1
      %p423 = por %p421, %p422
      %p424 = scmp.ne.s32.totalorder %s415, %s416
      %p425 = scmp.eq.s32.totalorder %s117, 0
      %p426 = por %p424, %p425
      %p427 = scmp.ne.s32.totalorder %s415, %s416
      %p428 = scmp.eq.s32.totalorder %s118, 1
      %p429 = por %p427, %p428
      %p431 = scmp.ne.s32.totalorder %s416, %s430
      %p432 = scmp.eq.s32.totalorder %s118, 0
      %p433 = por %p431, %p432
      %s435 = sadd.s32 %s434, 1
      %p438 = scmp.eq.s32.totalorder %s112, 1
      %p439 = scmp.ne.s32.totalorder %s434, %s436
      %p440 = scmp.eq.s32.totalorder %s112, 0
      %p441 = por %p439, %p440
      %p442 = scmp.ne.s32.totalorder %s434, %s436
      %p443 = scmp.eq.s32.totalorder %s117, 1
      %p444 = por %p442, %p443
      %p445 = scmp.ne.s32.totalorder %s436, %s437
      %p446 = scmp.eq.s32.totalorder %s117, 0
      %p447 = por %p445, %p446
      %p448 = scmp.ne.s32.totalorder %s436, %s437
      %p449 = scmp.eq.s32.totalorder %s118, 1
      %p450 = por %p448, %p449
      %p452 = scmp.ne.s32.totalorder %s437, %s451
      %p453 = scmp.eq.s32.totalorder %s118, 0
      %p454 = por %p452, %p453
      %s456 = sadd.s32 %s455, 1
      %p459 = scmp.eq.s32.totalorder %s112, 1
      %p460 = scmp.ne.s32.totalorder %s455, %s457
      %p461 = scmp.eq.s32.totalorder %s112, 0
      %p462 = por %p460, %p461
      %p463 = scmp.ne.s32.totalorder %s455, %s457
      %p464 = scmp.eq.s32.totalorder %s117, 1
      %p465 = por %p463, %p464
      %p466 = scmp.ne.s32.totalorder %s457, %s458
      %p467 = scmp.eq.s32.totalorder %s117, 0
      %p468 = por %p466, %p467
      %p469 = scmp.ne.s32.totalorder %s457, %s458
      %p470 = scmp.eq.s32.totalorder %s118, 1
      %p471 = por %p469, %p470
      %p473 = scmp.ne.s32.totalorder %s458, %s472
      %p474 = scmp.eq.s32.totalorder %s118, 0
      %p475 = por %p473, %p474
      %s477 = sadd.s32 %s476, 1
      %p480 = scmp.eq.s32.totalorder %s112, 1
      %p481 = scmp.ne.s32.totalorder %s476, %s478
      %p482 = scmp.eq.s32.totalorder %s112, 0
      %p483 = por %p481, %p482
      %p484 = scmp.ne.s32.totalorder %s476, %s478
      %p485 = scmp.eq.s32.totalorder %s117, 1
      %p486 = por %p484, %p485
      %p487 = scmp.ne.s32.totalorder %s478, %s479
      %p488 = scmp.eq.s32.totalorder %s117, 0
      %p489 = por %p487, %p488
      %p490 = scmp.ne.s32.totalorder %s478, %s479
      %p491 = scmp.eq.s32.totalorder %s118, 1
      %p492 = por %p490, %p491
      %p494 = scmp.ne.s32.totalorder %s479, %s493
      %p495 = scmp.eq.s32.totalorder %s118, 0
      %p496 = por %p494, %p495
      %s498 = sadd.s32 %s497, 1
      %p501 = scmp.eq.s32.totalorder %s112, 1
      %p502 = scmp.ne.s32.totalorder %s497, %s499
      %p503 = scmp.eq.s32.totalorder %s112, 0
      %p504 = por %p502, %p503
      %p505 = scmp.ne.s32.totalorder %s497, %s499
      %p506 = scmp.eq.s32.totalorder %s117, 1
      %p507 = por %p505, %p506
      %p508 = scmp.ne.s32.totalorder %s499, %s500
      %p509 = scmp.eq.s32.totalorder %s117, 0
      %p510 = por %p508, %p509
      %p511 = scmp.ne.s32.totalorder %s499, %s500
      %p512 = scmp.eq.s32.totalorder %s118, 1
      %p513 = por %p511, %p512
      %p515 = scmp.ne.s32.totalorder %s500, %s514
      %p516 = scmp.eq.s32.totalorder %s118, 0
      %p517 = por %p515, %p516
      %s519 = sadd.s32 %s518, 1
      %p522 = scmp.eq.s32.totalorder %s112, 1
      %p523 = scmp.ne.s32.totalorder %s518, %s520
      %p524 = scmp.eq.s32.totalorder %s112, 0
      %p525 = por %p523, %p524
      %p526 = scmp.ne.s32.totalorder %s518, %s520
      %p527 = scmp.eq.s32.totalorder %s117, 1
      %p528 = por %p526, %p527
      %p529 = scmp.ne.s32.totalorder %s520, %s521
      %p530 = scmp.eq.s32.totalorder %s117, 0
      %p531 = por %p529, %p530
      %p532 = scmp.ne.s32.totalorder %s520, %s521
      %p533 = scmp.eq.s32.totalorder %s118, 1
      %p534 = por %p532, %p533
      %p536 = scmp.ne.s32.totalorder %s521, %s535
      %p537 = scmp.eq.s32.totalorder %s118, 0
      %p538 = por %p536, %p537
      %s540 = sadd.s32 %s539, 1
      %p543 = scmp.eq.s32.totalorder %s112, 1
      %p544 = scmp.ne.s32.totalorder %s539, %s541
      %p545 = scmp.eq.s32.totalorder %s112, 0
      %p546 = por %p544, %p545
      %p547 = scmp.ne.s32.totalorder %s539, %s541
      %p548 = scmp.eq.s32.totalorder %s117, 1
      %p549 = por %p547, %p548
      %p550 = scmp.ne.s32.totalorder %s541, %s542
      %p551 = scmp.eq.s32.totalorder %s117, 0
      %p552 = por %p550, %p551
      %p553 = scmp.ne.s32.totalorder %s541, %s542
      %p554 = scmp.eq.s32.totalorder %s118, 1
      %p555 = por %p553, %p554
      %p557 = scmp.ne.s32.totalorder %s542, %s556
      %p558 = scmp.eq.s32.totalorder %s118, 0
      %p559 = por %p557, %p558
      %s561 = sadd.s32 %s560, 1
      %p564 = scmp.eq.s32.totalorder %s112, 1
      %p565 = scmp.ne.s32.totalorder %s560, %s562
      %p566 = scmp.eq.s32.totalorder %s112, 0
      %p567 = por %p565, %p566
      %p568 = scmp.ne.s32.totalorder %s560, %s562
      %p569 = scmp.eq.s32.totalorder %s117, 1
      %p570 = por %p568, %p569
      %p571 = scmp.ne.s32.totalorder %s562, %s563
      %p572 = scmp.eq.s32.totalorder %s117, 0
      %p573 = por %p571, %p572
      %p574 = scmp.ne.s32.totalorder %s562, %s563
      %p575 = scmp.eq.s32.totalorder %s118, 1
      %p576 = por %p574, %p575
      %p578 = scmp.ne.s32.totalorder %s563, %s577
      %p579 = scmp.eq.s32.totalorder %s118, 0
      %p580 = por %p578, %p579
      %s582 = sadd.s32 %s581, 1
      %p585 = scmp.eq.s32.totalorder %s112, 1
      %p586 = scmp.ne.s32.totalorder %s581, %s583
      %p587 = scmp.eq.s32.totalorder %s112, 0
      %p588 = por %p586, %p587
      %p589 = scmp.ne.s32.totalorder %s581, %s583
      %p590 = scmp.eq.s32.totalorder %s117, 1
      %p591 = por %p589, %p590
      %p592 = scmp.ne.s32.totalorder %s583, %s584
      %p593 = scmp.eq.s32.totalorder %s117, 0
      %p594 = por %p592, %p593
      %p595 = scmp.ne.s32.totalorder %s583, %s584
      %p596 = scmp.eq.s32.totalorder %s118, 1
      %p597 = por %p595, %p596
      %p599 = scmp.ne.s32.totalorder %s584, %s598
      %p600 = scmp.eq.s32.totalorder %s118, 0
      %p601 = por %p599, %p600
      %s603 = sadd.s32 %s602, 1
      %p606 = scmp.eq.s32.totalorder %s112, 1
      %p607 = scmp.ne.s32.totalorder %s602, %s604
      %p608 = scmp.eq.s32.totalorder %s112, 0
      %p609 = por %p607, %p608
      %p610 = scmp.ne.s32.totalorder %s602, %s604
      %p611 = scmp.eq.s32.totalorder %s117, 1
      %p612 = por %p610, %p611
      %p613 = scmp.ne.s32.totalorder %s604, %s605
      %p614 = scmp.eq.s32.totalorder %s117, 0
      %p615 = por %p613, %p614
      %p616 = scmp.ne.s32.totalorder %s604, %s605
      %p617 = scmp.eq.s32.totalorder %s118, 1
      %p618 = por %p616, %p617
      %p620 = scmp.ne.s32.totalorder %s605, %s619
      %p621 = scmp.eq.s32.totalorder %s118, 0
      %p622 = por %p620, %p621
      %s624 = sadd.s32 %s623, 1
      %p627 = scmp.eq.s32.totalorder %s112, 1
      %p628 = scmp.ne.s32.totalorder %s623, %s625
      %p629 = scmp.eq.s32.totalorder %s112, 0
      %p630 = por %p628, %p629
      %p631 = scmp.ne.s32.totalorder %s623, %s625
      %p632 = scmp.eq.s32.totalorder %s117, 1
      %p633 = por %p631, %p632
      %p634 = scmp.ne.s32.totalorder %s625, %s626
      %p635 = scmp.eq.s32.totalorder %s117, 0
      %p636 = por %p634, %p635
      %p637 = scmp.ne.s32.totalorder %s625, %s626
      %p638 = scmp.eq.s32.totalorder %s118, 1
      %p639 = por %p637, %p638
      %p641 = scmp.ne.s32.totalorder %s626, %s640
      %p642 = scmp.eq.s32.totalorder %s118, 0
      %p643 = por %p641, %p642
      %s645 = sadd.s32 %s644, 1
      %p648 = scmp.eq.s32.totalorder %s112, 1
      %p649 = scmp.ne.s32.totalorder %s644, %s646
      %p650 = scmp.eq.s32.totalorder %s112, 0
      %p651 = por %p649, %p650
      %p652 = scmp.ne.s32.totalorder %s644, %s646
      %p653 = scmp.eq.s32.totalorder %s117, 1
      %p654 = por %p652, %p653
      %p655 = scmp.ne.s32.totalorder %s646, %s647
      %p656 = scmp.eq.s32.totalorder %s117, 0
      %p657 = por %p655, %p656
      %p658 = scmp.ne.s32.totalorder %s646, %s647
      %p659 = scmp.eq.s32.totalorder %s118, 1
      %p660 = por %p658, %p659
      %p662 = scmp.ne.s32.totalorder %s647, %s661
      %p663 = scmp.eq.s32.totalorder %s118, 0
      %p664 = por %p662, %p663
      %s666 = sadd.s32 %s665, 1
      %p669 = scmp.eq.s32.totalorder %s112, 1
      %p670 = scmp.ne.s32.totalorder %s665, %s667
      %p671 = scmp.eq.s32.totalorder %s112, 0
      %p672 = por %p670, %p671
      %p673 = scmp.ne.s32.totalorder %s665, %s667
      %p674 = scmp.eq.s32.totalorder %s117, 1
      %p675 = por %p673, %p674
      %p676 = scmp.ne.s32.totalorder %s667, %s668
      %p677 = scmp.eq.s32.totalorder %s117, 0
      %p678 = por %p676, %p677
      %p679 = scmp.ne.s32.totalorder %s667, %s668
      %p680 = scmp.eq.s32.totalorder %s118, 1
      %p681 = por %p679, %p680
      %p683 = scmp.ne.s32.totalorder %s668, %s682
      %p684 = scmp.eq.s32.totalorder %s118, 0
      %p685 = por %p683, %p684
      %s687 = sadd.s32 %s686, 1
      %p690 = scmp.eq.s32.totalorder %s112, 1
      %p691 = scmp.ne.s32.totalorder %s686, %s688
      %p692 = scmp.eq.s32.totalorder %s112, 0
      %p693 = por %p691, %p692
      %p694 = scmp.ne.s32.totalorder %s686, %s688
      %p695 = scmp.eq.s32.totalorder %s117, 1
      %p696 = por %p694, %p695
      %p697 = scmp.ne.s32.totalorder %s688, %s689
      %p698 = scmp.eq.s32.totalorder %s117, 0
      %p699 = por %p697, %p698
      %p700 = scmp.ne.s32.totalorder %s688, %s689
      %p701 = scmp.eq.s32.totalorder %s118, 1
      %p702 = por %p700, %p701
      %p704 = scmp.ne.s32.totalorder %s689, %s703
      %p705 = scmp.eq.s32.totalorder %s118, 0
      %p706 = por %p704, %p705
      %s708 = sadd.s32 %s707, 1
      %p711 = scmp.eq.s32.totalorder %s112, 1
      %p712 = scmp.ne.s32.totalorder %s707, %s709
      %p713 = scmp.eq.s32.totalorder %s112, 0
      %p714 = por %p712, %p713
      %p715 = scmp.ne.s32.totalorder %s707, %s709
      %p716 = scmp.eq.s32.totalorder %s117, 1
      %p717 = por %p715, %p716
      %p718 = scmp.ne.s32.totalorder %s709, %s710
      %p719 = scmp.eq.s32.totalorder %s117, 0
      %p720 = por %p718, %p719
      %p721 = scmp.ne.s32.totalorder %s709, %s710
      %p722 = scmp.eq.s32.totalorder %s118, 1
      %p723 = por %p721, %p722
      %p725 = scmp.ne.s32.totalorder %s710, %s724
      %p726 = scmp.eq.s32.totalorder %s118, 0
      %p727 = por %p725, %p726
      %s729 = sadd.s32 %s728, 1
      %p732 = scmp.eq.s32.totalorder %s112, 1
      %p733 = scmp.ne.s32.totalorder %s728, %s730
      %p734 = scmp.eq.s32.totalorder %s112, 0
      %p735 = por %p733, %p734
      %p736 = scmp.ne.s32.totalorder %s728, %s730
      %p737 = scmp.eq.s32.totalorder %s117, 1
      %p738 = por %p736, %p737
      %p739 = scmp.ne.s32.totalorder %s730, %s731
      %p740 = scmp.eq.s32.totalorder %s117, 0
      %p741 = por %p739, %p740
      %p742 = scmp.ne.s32.totalorder %s730, %s731
      %p743 = scmp.eq.s32.totalorder %s118, 1
      %p744 = por %p742, %p743
      %p746 = scmp.ne.s32.totalorder %s731, %s745
      %p747 = scmp.eq.s32.totalorder %s118, 0
      %p748 = por %p746, %p747
      %s750 = sadd.s32 %s749, 1
      %p753 = scmp.eq.s32.totalorder %s112, 1
      %p754 = scmp.ne.s32.totalorder %s749, %s751
      %p755 = scmp.eq.s32.totalorder %s112, 0
      %p756 = por %p754, %p755
      %p757 = scmp.ne.s32.totalorder %s749, %s751
      %p758 = scmp.eq.s32.totalorder %s117, 1
      %p759 = por %p757, %p758
      %p760 = scmp.ne.s32.totalorder %s751, %s752
      %p761 = scmp.eq.s32.totalorder %s117, 0
      %p762 = por %p760, %p761
      %p763 = scmp.ne.s32.totalorder %s751, %s752
      %p764 = scmp.eq.s32.totalorder %s118, 1
      %p765 = por %p763, %p764
      %p767 = scmp.ne.s32.totalorder %s752, %s766
      %p768 = scmp.eq.s32.totalorder %s118, 0
      %p769 = por %p767, %p768
      %s771 = sadd.s32 %s770, 1
      %p774 = scmp.eq.s32.totalorder %s112, 1
      %p775 = scmp.ne.s32.totalorder %s770, %s772
      %p776 = scmp.eq.s32.totalorder %s112, 0
      %p777 = por %p775, %p776
      %p778 = scmp.ne.s32.totalorder %s770, %s772
      %p779 = scmp.eq.s32.totalorder %s117, 1
      %p780 = por %p778, %p779
      %p781 = scmp.ne.s32.totalorder %s772, %s773
      %p782 = scmp.eq.s32.totalorder %s117, 0
      %p783 = por %p781, %p782
      %p784 = scmp.ne.s32.totalorder %s772, %s773
      %p785 = scmp.eq.s32.totalorder %s118, 1
      %p786 = por %p784, %p785
      %p788 = scmp.ne.s32.totalorder %s773, %s787
      %p789 = scmp.eq.s32.totalorder %s118, 0
      %p790 = por %p788, %p789
      %s792 = sadd.s32 %s791, 1
      %p795 = scmp.eq.s32.totalorder %s112, 1
      %p796 = scmp.ne.s32.totalorder %s791, %s793
      %p797 = scmp.eq.s32.totalorder %s112, 0
      %p798 = por %p796, %p797
      %p799 = scmp.ne.s32.totalorder %s791, %s793
      %p800 = scmp.eq.s32.totalorder %s117, 1
      %p801 = por %p799, %p800
      %p802 = scmp.ne.s32.totalorder %s793, %s794
      %p803 = scmp.eq.s32.totalorder %s117, 0
      %p804 = por %p802, %p803
      %p805 = scmp.ne.s32.totalorder %s793, %s794
      %p806 = scmp.eq.s32.totalorder %s118, 1
      %p807 = por %p805, %p806
      %p809 = scmp.ne.s32.totalorder %s794, %s808
      %p810 = scmp.eq.s32.totalorder %s118, 0
      %p811 = por %p809, %p810
      %s813 = sadd.s32 %s812, 1
      %p816 = scmp.eq.s32.totalorder %s112, 1
      %p817 = scmp.ne.s32.totalorder %s812, %s814
      %p818 = scmp.eq.s32.totalorder %s112, 0
      %p819 = por %p817, %p818
      %p820 = scmp.ne.s32.totalorder %s812, %s814
      %p821 = scmp.eq.s32.totalorder %s117, 1
      %p822 = por %p820, %p821
      %p823 = scmp.ne.s32.totalorder %s814, %s815
      %p824 = scmp.eq.s32.totalorder %s117, 0
      %p825 = por %p823, %p824
      %p826 = scmp.ne.s32.totalorder %s814, %s815
      %p827 = scmp.eq.s32.totalorder %s118, 1
      %p828 = por %p826, %p827
      %p830 = scmp.ne.s32.totalorder %s815, %s829
      %p831 = scmp.eq.s32.totalorder %s118, 0
      %p832 = por %p830, %p831
      %s834 = sadd.s32 %s833, 1
      %p837 = scmp.eq.s32.totalorder %s112, 1
      %p838 = scmp.ne.s32.totalorder %s833, %s835
      %p839 = scmp.eq.s32.totalorder %s112, 0
      %p840 = por %p838, %p839
      %p841 = scmp.ne.s32.totalorder %s833, %s835
      %p842 = scmp.eq.s32.totalorder %s117, 1
      %p843 = por %p841, %p842
      %p844 = scmp.ne.s32.totalorder %s835, %s836
      %p845 = scmp.eq.s32.totalorder %s117, 0
      %p846 = por %p844, %p845
      %p847 = scmp.ne.s32.totalorder %s835, %s836
      %p848 = scmp.eq.s32.totalorder %s118, 1
      %p849 = por %p847, %p848
      %p851 = scmp.ne.s32.totalorder %s836, %s850
      %p852 = scmp.eq.s32.totalorder %s118, 0
      %p853 = por %p851, %p852
      %s855 = sadd.s32 %s854, 1
      %p858 = scmp.eq.s32.totalorder %s112, 1
      %p859 = scmp.ne.s32.totalorder %s854, %s856
      %p860 = scmp.eq.s32.totalorder %s112, 0
      %p861 = por %p859, %p860
      %p862 = scmp.ne.s32.totalorder %s854, %s856
      %p863 = scmp.eq.s32.totalorder %s117, 1
      %p864 = por %p862, %p863
      %p865 = scmp.ne.s32.totalorder %s856, %s857
      %p866 = scmp.eq.s32.totalorder %s117, 0
      %p867 = por %p865, %p866
      %p868 = scmp.ne.s32.totalorder %s856, %s857
      %p869 = scmp.eq.s32.totalorder %s118, 1
      %p870 = por %p868, %p869
      %p872 = scmp.ne.s32.totalorder %s857, %s871
      %p873 = scmp.eq.s32.totalorder %s118, 0
      %p874 = por %p872, %p873
      %s876 = sadd.s32 %s875, 1
      %p879 = scmp.eq.s32.totalorder %s112, 1
      %p880 = scmp.ne.s32.totalorder %s875, %s877
      %p881 = scmp.eq.s32.totalorder %s112, 0
      %p882 = por %p880, %p881
      %p883 = scmp.ne.s32.totalorder %s875, %s877
      %p884 = scmp.eq.s32.totalorder %s117, 1
      %p885 = por %p883, %p884
      %p886 = scmp.ne.s32.totalorder %s877, %s878
      %p887 = scmp.eq.s32.totalorder %s117, 0
      %p888 = por %p886, %p887
      %p889 = scmp.ne.s32.totalorder %s877, %s878
      %p890 = scmp.eq.s32.totalorder %s118, 1
      %p891 = por %p889, %p890
      %p893 = scmp.ne.s32.totalorder %s878, %s892
      %p894 = scmp.eq.s32.totalorder %s118, 0
      %p895 = por %p893, %p894
      %s897 = sadd.s32 %s896, 1
      %p900 = scmp.eq.s32.totalorder %s112, 1
      %p901 = scmp.ne.s32.totalorder %s896, %s898
      %p902 = scmp.eq.s32.totalorder %s112, 0
      %p903 = por %p901, %p902
      %p904 = scmp.ne.s32.totalorder %s896, %s898
      %p905 = scmp.eq.s32.totalorder %s117, 1
      %p906 = por %p904, %p905
      %p907 = scmp.ne.s32.totalorder %s898, %s899
      %p908 = scmp.eq.s32.totalorder %s117, 0
      %p909 = por %p907, %p908
      %p910 = scmp.ne.s32.totalorder %s898, %s899
      %p911 = scmp.eq.s32.totalorder %s118, 1
      %p912 = por %p910, %p911
      %p914 = scmp.ne.s32.totalorder %s899, %s913
      %p915 = scmp.eq.s32.totalorder %s118, 0
      %p916 = por %p914, %p915
      %s918 = sadd.s32 %s917, 1
      %p921 = scmp.eq.s32.totalorder %s112, 1
      %p922 = scmp.ne.s32.totalorder %s917, %s919
      %p923 = scmp.eq.s32.totalorder %s112, 0
      %p924 = por %p922, %p923
      %p925 = scmp.ne.s32.totalorder %s917, %s919
      %p926 = scmp.eq.s32.totalorder %s117, 1
      %p927 = por %p925, %p926
      %p928 = scmp.ne.s32.totalorder %s919, %s920
      %p929 = scmp.eq.s32.totalorder %s117, 0
      %p930 = por %p928, %p929
      %p931 = scmp.ne.s32.totalorder %s919, %s920
      %p932 = scmp.eq.s32.totalorder %s118, 1
      %p933 = por %p931, %p932
      %p935 = scmp.ne.s32.totalorder %s920, %s934
      %p936 = scmp.eq.s32.totalorder %s118, 0
      %p937 = por %p935, %p936
      %s939 = sadd.s32 %s938, 1
      %p942 = scmp.eq.s32.totalorder %s112, 1
      %p943 = scmp.ne.s32.totalorder %s938, %s940
      %p944 = scmp.eq.s32.totalorder %s112, 0
      %p945 = por %p943, %p944
      %p946 = scmp.ne.s32.totalorder %s938, %s940
      %p947 = scmp.eq.s32.totalorder %s117, 1
      %p948 = por %p946, %p947
      %p949 = scmp.ne.s32.totalorder %s940, %s941
      %p950 = scmp.eq.s32.totalorder %s117, 0
      %p951 = por %p949, %p950
      %p952 = scmp.ne.s32.totalorder %s940, %s941
      %p953 = scmp.eq.s32.totalorder %s118, 1
      %p954 = por %p952, %p953
      %p956 = scmp.ne.s32.totalorder %s941, %s955
      %p957 = scmp.eq.s32.totalorder %s118, 0
      %p958 = por %p956, %p957
      %s960 = sadd.s32 %s959, 1
      %p963 = scmp.eq.s32.totalorder %s112, 1
      %p964 = scmp.ne.s32.totalorder %s959, %s961
      %p965 = scmp.eq.s32.totalorder %s112, 0
      %p966 = por %p964, %p965
      %p967 = scmp.ne.s32.totalorder %s959, %s961
      %p968 = scmp.eq.s32.totalorder %s117, 1
      %p969 = por %p967, %p968
      %p970 = scmp.ne.s32.totalorder %s961, %s962
      %p971 = scmp.eq.s32.totalorder %s117, 0
      %p972 = por %p970, %p971
      %p973 = scmp.ne.s32.totalorder %s961, %s962
      %p974 = scmp.eq.s32.totalorder %s118, 1
      %p975 = por %p973, %p974
      %p977 = scmp.ne.s32.totalorder %s962, %s976
      %p978 = scmp.eq.s32.totalorder %s118, 0
      %p979 = por %p977, %p978
      %s981 = sadd.s32 %s980, 1
      %p984 = scmp.eq.s32.totalorder %s112, 1
      %p985 = scmp.ne.s32.totalorder %s980, %s982
      %p986 = scmp.eq.s32.totalorder %s112, 0
      %p987 = por %p985, %p986
      %p988 = scmp.ne.s32.totalorder %s980, %s982
      %p989 = scmp.eq.s32.totalorder %s117, 1
      %p990 = por %p988, %p989
      %p991 = scmp.ne.s32.totalorder %s982, %s983
      %p992 = scmp.eq.s32.totalorder %s117, 0
      %p993 = por %p991, %p992
      %p994 = scmp.ne.s32.totalorder %s982, %s983
      %p995 = scmp.eq.s32.totalorder %s118, 1
      %p996 = por %p994, %p995
      %p998 = scmp.ne.s32.totalorder %s983, %s997
      %p999 = scmp.eq.s32.totalorder %s118, 0
      %p1000 = por %p998, %p999
      %s1002 = sadd.s32 %s1001, 1
      %p1005 = scmp.eq.s32.totalorder %s112, 1
      %p1006 = scmp.ne.s32.totalorder %s1001, %s1003
      %p1007 = scmp.eq.s32.totalorder %s112, 0
      %p1008 = por %p1006, %p1007
      %p1009 = scmp.ne.s32.totalorder %s1001, %s1003
      %p1010 = scmp.eq.s32.totalorder %s117, 1
      %p1011 = por %p1009, %p1010
      %p1012 = scmp.ne.s32.totalorder %s1003, %s1004
      %p1013 = scmp.eq.s32.totalorder %s117, 0
      %p1014 = por %p1012, %p1013
      %p1015 = scmp.ne.s32.totalorder %s1003, %s1004
      %p1016 = scmp.eq.s32.totalorder %s118, 1
      %p1017 = por %p1015, %p1016
      %p1019 = scmp.ne.s32.totalorder %s1004, %s1018
      %p1020 = scmp.eq.s32.totalorder %s118, 0
      %p1021 = por %p1019, %p1020
      %s1022 = ssub.s32 %s112, %s119
      %p1023 = scmp.eq.s32.totalorder %s1022, 0
      %s1025 = sadd.s32 %s1024, 1
      %s1026 = scalar_select %p1023, %s1024, %s1025
      %p1029 = pneg %p1023
      %p1030 = scmp.eq.s32.totalorder %s112, 1
      %p1031 = por %p1029, %p1030
      %p1032 = scmp.ne.s32.totalorder %s1024, %s1027
      %p1033 = scmp.eq.s32.totalorder %s112, 0
      %p1034 = por %p1032, %p1033
      %p1035 = scmp.ne.s32.totalorder %s1024, %s1027
      %p1036 = scmp.eq.s32.totalorder %s117, 1
      %p1037 = por %p1035, %p1036
      %p1038 = scmp.ne.s32.totalorder %s1027, %s1028
      %p1039 = scmp.eq.s32.totalorder %s117, 0
      %p1040 = por %p1038, %p1039
      %p1041 = scmp.ne.s32.totalorder %s1027, %s1028
      %p1042 = scmp.eq.s32.totalorder %s118, 1
      %p1043 = por %p1041, %p1042
      %p1045 = scmp.ne.s32.totalorder %s1028, %s1044
      %p1046 = scmp.eq.s32.totalorder %s118, 0
      %p1047 = por %p1045, %p1046
      %p1048 = scmp.le.s32.totalorder 1, %s112
      %p1049 = scmp.lt.s32.totalorder %s112, 3
      %p1050 = pnand %p1048, %p1049
      %p1051 = pneg %p1050
      // Predicated region
      $region9: #{tpu_custom_call.1} parent=5 // pred_check
        _
      $region10: #{tpu_custom_call.1} parent=5 // pred_check_branch
        %1053 = sbr.rel (%p1050) target = $region12
      $region11: #{tpu_custom_call.1} parent=5 // pred_region
        %s1054 = ssub.s32 %s112, 1
        // Predicated region
        $region13: #{tpu_custom_call.1} parent=11 // pred_check
          %p1055 = pneg %p237
        $region14: #{tpu_custom_call.1} parent=11 // pred_check_branch
          %1057 = sbr.rel (%p1055) target = $region16
        $region15: #{tpu_custom_call.1} parent=11 // pred_region
          _
        $region16: #{tpu_custom_call.1} parent=11 // pred_fallthru
          _
        // Predicated region
        $region17: #{tpu_custom_call.1} parent=11 // pred_check
          %p1058 = pneg %p258
        $region18: #{tpu_custom_call.1} parent=11 // pred_check_branch
          %1060 = sbr.rel (%p1058) target = $region20
        $region19: #{tpu_custom_call.1} parent=11 // pred_region
          %s1062 = ssub.s32 32, 32
          %1063 = vsyncadd [#allocation9], %s1062
          %s1064 = sshll.u32 [#allocation10], 4
          %s1065 = int_to_ptr.vmem [resolvable:$true] %s1064
          %1070 = dma.hbm_to_vmem [thread:$0]  %s11, 32, %s1065, [#allocation9], 16, 16, 1
        $region20: #{tpu_custom_call.1} parent=11 // pred_fallthru
          _
        // Predicated region
        $region21: #{tpu_custom_call.1} parent=11 // pred_check
          %p1071 = pneg %p279
        $region22: #{tpu_custom_call.1} parent=11 // pred_check_branch
          %1073 = sbr.rel (%p1071) target = $region24
        $region23: #{tpu_custom_call.1} parent=11 // pred_region
          _
        $region24: #{tpu_custom_call.1} parent=11 // pred_fallthru
          _
        // Predicated region
        $region25: #{tpu_custom_call.1} parent=11 // pred_check
          %p1074 = pneg %p300
        $region26: #{tpu_custom_call.1} parent=11 // pred_check_branch
          %1076 = sbr.rel (%p1074) target = $region28
        $region27: #{tpu_custom_call.1} parent=11 // pred_region
          %s1078 = ssub.s32 32, 32
          %1079 = vsyncadd [#allocation12], %s1078
          %s1080 = sshll.u32 [#allocation11], 4
          %s1081 = int_to_ptr.vmem [resolvable:$true] %s1080
          %1086 = dma.hbm_to_vmem [thread:$0]  %s15, 32, %s1081, [#allocation12], 16, 16, 1
        $region28: #{tpu_custom_call.1} parent=11 // pred_fallthru
          _
        // Predicated region
        $region29: #{tpu_custom_call.1} parent=11 // pred_check
          %p1087 = pneg %p321
        $region30: #{tpu_custom_call.1} parent=11 // pred_check_branch
          %1089 = sbr.rel (%p1087) target = $region32
        $region31: #{tpu_custom_call.1} parent=11 // pred_region
          %s1091 = ssub.s32 32, 32
          %1092 = vsyncadd [#allocation12], %s1091
          %s1093 = sshll.u32 [#allocation13], 4
          %s1094 = int_to_ptr.vmem [resolvable:$true] %s1093
          %1099 = dma.hbm_to_vmem [thread:$0]  %s17, 32, %s1094, [#allocation12], 16, 16, 1
        $region32: #{tpu_custom_call.1} parent=11 // pred_fallthru
          _
        // Predicated region
        $region33: #{tpu_custom_call.1} parent=11 // pred_check
          %p1100 = pneg %p342
        $region34: #{tpu_custom_call.1} parent=11 // pred_check_branch
          %1102 = sbr.rel (%p1100) target = $region36
        $region35: #{tpu_custom_call.1} parent=11 // pred_region
          %s1104 = ssub.s32 32, 32
          %1105 = vsyncadd [#allocation15], %s1104
          %s1106 = sshll.u32 [#allocation14], 4
          %s1107 = int_to_ptr.vmem [resolvable:$true] %s1106
          %1112 = dma.hbm_to_vmem [thread:$0]  %s19, 32, %s1107, [#allocation15], 16, 16, 1
        $region36: #{tpu_custom_call.1} parent=11 // pred_fallthru
          _
        // Predicated region
        $region37: #{tpu_custom_call.1} parent=11 // pred_check
          %p1113 = pneg %p363
        $region38: #{tpu_custom_call.1} parent=11 // pred_check_branch
          %1115 = sbr.rel (%p1113) target = $region40
        $region39: #{tpu_custom_call.1} parent=11 // pred_region
          _
        $region40: #{tpu_custom_call.1} parent=11 // pred_fallthru
          _
        // Predicated region
        $region41: #{tpu_custom_call.1} parent=11 // pred_check
          %p1116 = pneg %p384
        $region42: #{tpu_custom_call.1} parent=11 // pred_check_branch
          %1118 = sbr.rel (%p1116) target = $region44
        $region43: #{tpu_custom_call.1} parent=11 // pred_region
          %s1120 = ssub.s32 32, 32
          %1121 = vsyncadd [#allocation15], %s1120
          %s1122 = sshll.u32 [#allocation16], 4
          %s1123 = int_to_ptr.vmem [resolvable:$true] %s1122
          %1128 = dma.hbm_to_vmem [thread:$0]  %s23, 32, %s1123, [#allocation15], 16, 16, 1
        $region44: #{tpu_custom_call.1} parent=11 // pred_fallthru
          _
        // Predicated region
        $region45: #{tpu_custom_call.1} parent=11 // pred_check
          %p1129 = pneg %p405
        $region46: #{tpu_custom_call.1} parent=11 // pred_check_branch
          %1131 = sbr.rel (%p1129) target = $region48
        $region47: #{tpu_custom_call.1} parent=11 // pred_region
          _
        $region48: #{tpu_custom_call.1} parent=11 // pred_fallthru
          _
        // Predicated region
        $region49: #{tpu_custom_call.1} parent=11 // pred_check
          %p1132 = pneg %p426
        $region50: #{tpu_custom_call.1} parent=11 // pred_check_branch
          %1134 = sbr.rel (%p1132) target = $region52
        $region51: #{tpu_custom_call.1} parent=11 // pred_region
          %s1136 = ssub.s32 32, 32
          %1137 = vsyncadd [#allocation18], %s1136
          %s1138 = sshll.u32 [#allocation17], 4
          %s1139 = int_to_ptr.vmem [resolvable:$true] %s1138
          %1144 = dma.hbm_to_vmem [thread:$0]  %s27, 32, %s1139, [#allocation18], 16, 16, 1
        $region52: #{tpu_custom_call.1} parent=11 // pred_fallthru
          _
        // Predicated region
        $region53: #{tpu_custom_call.1} parent=11 // pred_check
          %p1145 = pneg %p447
        $region54: #{tpu_custom_call.1} parent=11 // pred_check_branch
          %1147 = sbr.rel (%p1145) target = $region56
        $region55: #{tpu_custom_call.1} parent=11 // pred_region
          %s1149 = ssub.s32 32, 32
          %1150 = vsyncadd [#allocation18], %s1149
          %s1151 = sshll.u32 [#allocation19], 4
          %s1152 = int_to_ptr.vmem [resolvable:$true] %s1151
          %1157 = dma.hbm_to_vmem [thread:$0]  %s29, 32, %s1152, [#allocation18], 16, 16, 1
        $region56: #{tpu_custom_call.1} parent=11 // pred_fallthru
          _
        // Predicated region
        $region57: #{tpu_custom_call.1} parent=11 // pred_check
          %p1158 = pneg %p468
        $region58: #{tpu_custom_call.1} parent=11 // pred_check_branch
          %1160 = sbr.rel (%p1158) target = $region60
        $region59: #{tpu_custom_call.1} parent=11 // pred_region
          %s1162 = ssub.s32 32, 32
          %1163 = vsyncadd [#allocation21], %s1162
          %s1164 = sshll.u32 [#allocation20], 4
          %s1165 = int_to_ptr.vmem [resolvable:$true] %s1164
          %1170 = dma.hbm_to_vmem [thread:$0]  %s31, 32, %s1165, [#allocation21], 16, 16, 1
        $region60: #{tpu_custom_call.1} parent=11 // pred_fallthru
          _
        // Predicated region
        $region61: #{tpu_custom_call.1} parent=11 // pred_check
          %p1171 = pneg %p489
        $region62: #{tpu_custom_call.1} parent=11 // pred_check_branch
          %1173 = sbr.rel (%p1171) target = $region64
        $region63: #{tpu_custom_call.1} parent=11 // pred_region
          _
        $region64: #{tpu_custom_call.1} parent=11 // pred_fallthru
          _
        // Predicated region
        $region65: #{tpu_custom_call.1} parent=11 // pred_check
          %p1174 = pneg %p510
        $region66: #{tpu_custom_call.1} parent=11 // pred_check_branch
          %1176 = sbr.rel (%p1174) target = $region68
        $region67: #{tpu_custom_call.1} parent=11 // pred_region
          %s1178 = ssub.s32 32, 32
          %1179 = vsyncadd [#allocation21], %s1178
          %s1180 = sshll.u32 [#allocation22], 4
          %s1181 = int_to_ptr.vmem [resolvable:$true] %s1180
          %1186 = dma.hbm_to_vmem [thread:$0]  %s35, 32, %s1181, [#allocation21], 16, 16, 1
        $region68: #{tpu_custom_call.1} parent=11 // pred_fallthru
          _
        // Predicated region
        $region69: #{tpu_custom_call.1} parent=11 // pred_check
          %p1187 = pneg %p531
        $region70: #{tpu_custom_call.1} parent=11 // pred_check_branch
          %1189 = sbr.rel (%p1187) target = $region72
        $region71: #{tpu_custom_call.1} parent=11 // pred_region
          _
        $region72: #{tpu_custom_call.1} parent=11 // pred_fallthru
          _
        // Predicated region
        $region73: #{tpu_custom_call.1} parent=11 // pred_check
          %p1190 = pneg %p552
        $region74: #{tpu_custom_call.1} parent=11 // pred_check_branch
          %1192 = sbr.rel (%p1190) target = $region76
        $region75: #{tpu_custom_call.1} parent=11 // pred_region
          %s1194 = ssub.s32 32, 32
          %1195 = vsyncadd [#allocation24], %s1194
          %s1196 = sshll.u32 [#allocation23], 4
          %s1197 = int_to_ptr.vmem [resolvable:$true] %s1196
          %1202 = dma.hbm_to_vmem [thread:$0]  %s39, 32, %s1197, [#allocation24], 16, 16, 1
        $region76: #{tpu_custom_call.1} parent=11 // pred_fallthru
          _
        // Predicated region
        $region77: #{tpu_custom_call.1} parent=11 // pred_check
          %p1203 = pneg %p573
        $region78: #{tpu_custom_call.1} parent=11 // pred_check_branch
          %1205 = sbr.rel (%p1203) target = $region80
        $region79: #{tpu_custom_call.1} parent=11 // pred_region
          %s1207 = ssub.s32 32, 32
          %1208 = vsyncadd [#allocation24], %s1207
          %s1209 = sshll.u32 [#allocation25], 4
          %s1210 = int_to_ptr.vmem [resolvable:$true] %s1209
          %1215 = dma.hbm_to_vmem [thread:$0]  %s41, 32, %s1210, [#allocation24], 16, 16, 1
        $region80: #{tpu_custom_call.1} parent=11 // pred_fallthru
          _
        // Predicated region
        $region81: #{tpu_custom_call.1} parent=11 // pred_check
          %p1216 = pneg %p594
        $region82: #{tpu_custom_call.1} parent=11 // pred_check_branch
          %1218 = sbr.rel (%p1216) target = $region84
        $region83: #{tpu_custom_call.1} parent=11 // pred_region
          %s1220 = ssub.s32 32, 32
          %1221 = vsyncadd [#allocation27], %s1220
          %s1222 = sshll.u32 [#allocation26], 4
          %s1223 = int_to_ptr.vmem [resolvable:$true] %s1222
          %1228 = dma.hbm_to_vmem [thread:$0]  %s43, 32, %s1223, [#allocation27], 16, 16, 1
        $region84: #{tpu_custom_call.1} parent=11 // pred_fallthru
          _
        // Predicated region
        $region85: #{tpu_custom_call.1} parent=11 // pred_check
          %p1229 = pneg %p615
        $region86: #{tpu_custom_call.1} parent=11 // pred_check_branch
          %1231 = sbr.rel (%p1229) target = $region88
        $region87: #{tpu_custom_call.1} parent=11 // pred_region
          _
        $region88: #{tpu_custom_call.1} parent=11 // pred_fallthru
          _
        // Predicated region
        $region89: #{tpu_custom_call.1} parent=11 // pred_check
          %p1232 = pneg %p636
        $region90: #{tpu_custom_call.1} parent=11 // pred_check_branch
          %1234 = sbr.rel (%p1232) target = $region92
        $region91: #{tpu_custom_call.1} parent=11 // pred_region
          %s1236 = ssub.s32 32, 32
          %1237 = vsyncadd [#allocation27], %s1236
          %s1238 = sshll.u32 [#allocation28], 4
          %s1239 = int_to_ptr.vmem [resolvable:$true] %s1238
          %1244 = dma.hbm_to_vmem [thread:$0]  %s47, 32, %s1239, [#allocation27], 16, 16, 1
        $region92: #{tpu_custom_call.1} parent=11 // pred_fallthru
          _
        // Predicated region
        $region93: #{tpu_custom_call.1} parent=11 // pred_check
          %p1245 = pneg %p657
        $region94: #{tpu_custom_call.1} parent=11 // pred_check_branch
          %1247 = sbr.rel (%p1245) target = $region96
        $region95: #{tpu_custom_call.1} parent=11 // pred_region
          %s1249 = ssub.s32 512, 512
          %1250 = vsyncadd [#allocation30], %s1249
          %s1251 = sshll.u32 [#allocation29], 4
          %s1252 = int_to_ptr.vmem [resolvable:$true] %s1251
          %1257 = dma.hbm_to_vmem [thread:$0]  %s49, 512, %s1252, [#allocation30], 64, 64, 4
        $region96: #{tpu_custom_call.1} parent=11 // pred_fallthru
          _
        // Predicated region
        $region97: #{tpu_custom_call.1} parent=11 // pred_check
          %p1258 = pneg %p678
        $region98: #{tpu_custom_call.1} parent=11 // pred_check_branch
          %1260 = sbr.rel (%p1258) target = $region100
        $region99: #{tpu_custom_call.1} parent=11 // pred_region
          %s1262 = ssub.s32 32, 32
          %1263 = vsyncadd [#allocation30], %s1262
          %s1264 = sshll.u32 [#allocation31], 4
          %s1265 = int_to_ptr.vmem [resolvable:$true] %s1264
          %1270 = dma.hbm_to_vmem [thread:$0]  %s51, 32, %s1265, [#allocation30], 16, 16, 1
        $region100: #{tpu_custom_call.1} parent=11 // pred_fallthru
          _
        // Predicated region
        $region101: #{tpu_custom_call.1} parent=11 // pred_check
          %p1271 = pneg %p699
        $region102: #{tpu_custom_call.1} parent=11 // pred_check_branch
          %1273 = sbr.rel (%p1271) target = $region104
        $region103: #{tpu_custom_call.1} parent=11 // pred_region
          _
        $region104: #{tpu_custom_call.1} parent=11 // pred_fallthru
          _
        // Predicated region
        $region105: #{tpu_custom_call.1} parent=11 // pred_check
          %p1274 = pneg %p720
        $region106: #{tpu_custom_call.1} parent=11 // pred_check_branch
          %1276 = sbr.rel (%p1274) target = $region108
        $region107: #{tpu_custom_call.1} parent=11 // pred_region
          %s1278 = ssub.s32 32, 32
          %1279 = vsyncadd [#allocation33], %s1278
          %s1280 = sshll.u32 [#allocation32], 4
          %s1281 = int_to_ptr.vmem [resolvable:$true] %s1280
          %1286 = dma.hbm_to_vmem [thread:$0]  %s55, 32, %s1281, [#allocation33], 16, 16, 1
        $region108: #{tpu_custom_call.1} parent=11 // pred_fallthru
          _
        // Predicated region
        $region109: #{tpu_custom_call.1} parent=11 // pred_check
          %p1287 = pneg %p741
        $region110: #{tpu_custom_call.1} parent=11 // pred_check_branch
          %1289 = sbr.rel (%p1287) target = $region112
        $region111: #{tpu_custom_call.1} parent=11 // pred_region
          %s1291 = ssub.s32 32, 32
          %1292 = vsyncadd [#allocation33], %s1291
          %s1293 = sshll.u32 [#allocation34], 4
          %s1294 = int_to_ptr.vmem [resolvable:$true] %s1293
          %1299 = dma.hbm_to_vmem [thread:$0]  %s57, 32, %s1294, [#allocation33], 16, 16, 1
        $region112: #{tpu_custom_call.1} parent=11 // pred_fallthru
          _
        // Predicated region
        $region113: #{tpu_custom_call.1} parent=11 // pred_check
          %p1300 = pneg %p762
        $region114: #{tpu_custom_call.1} parent=11 // pred_check_branch
          %1302 = sbr.rel (%p1300) target = $region116
        $region115: #{tpu_custom_call.1} parent=11 // pred_region
          %s1304 = ssub.s32 32, 32
          %1305 = vsyncadd [#allocation36], %s1304
          %s1306 = sshll.u32 [#allocation35], 4
          %s1307 = int_to_ptr.vmem [resolvable:$true] %s1306
          %1312 = dma.hbm_to_vmem [thread:$0]  %s59, 32, %s1307, [#allocation36], 16, 16, 1
        $region116: #{tpu_custom_call.1} parent=11 // pred_fallthru
          _
        // Predicated region
        $region117: #{tpu_custom_call.1} parent=11 // pred_check
          %p1313 = pneg %p783
        $region118: #{tpu_custom_call.1} parent=11 // pred_check_branch
          %1315 = sbr.rel (%p1313) target = $region120
        $region119: #{tpu_custom_call.1} parent=11 // pred_region
          %s1317 = ssub.s32 512, 512
          %1318 = vsyncadd [#allocation36], %s1317
          %s1319 = sshll.u32 [#allocation37], 4
          %s1320 = int_to_ptr.vmem [resolvable:$true] %s1319
          %1325 = dma.hbm_to_vmem [thread:$0]  %s61, 512, %s1320, [#allocation36], 64, 64, 4
        $region120: #{tpu_custom_call.1} parent=11 // pred_fallthru
          _
        // Predicated region
        $region121: #{tpu_custom_call.1} parent=11 // pred_check
          %p1326 = pneg %p804
        $region122: #{tpu_custom_call.1} parent=11 // pred_check_branch
          %1328 = sbr.rel (%p1326) target = $region124
        $region123: #{tpu_custom_call.1} parent=11 // pred_region
          _
        $region124: #{tpu_custom_call.1} parent=11 // pred_fallthru
          _
        // Predicated region
        $region125: #{tpu_custom_call.1} parent=11 // pred_check
          %p1329 = pneg %p825
        $region126: #{tpu_custom_call.1} parent=11 // pred_check_branch
          %1331 = sbr.rel (%p1329) target = $region128
        $region127: #{tpu_custom_call.1} parent=11 // pred_region
          _
        $region128: #{tpu_custom_call.1} parent=11 // pred_fallthru
          _
        // Predicated region
        $region129: #{tpu_custom_call.1} parent=11 // pred_check
          %p1332 = pneg %p846
        $region130: #{tpu_custom_call.1} parent=11 // pred_check_branch
          %1334 = sbr.rel (%p1332) target = $region132
        $region131: #{tpu_custom_call.1} parent=11 // pred_region
          _
        $region132: #{tpu_custom_call.1} parent=11 // pred_fallthru
          _
        // Predicated region
        $region133: #{tpu_custom_call.1} parent=11 // pred_check
          %p1335 = pneg %p867
        $region134: #{tpu_custom_call.1} parent=11 // pred_check_branch
          %1337 = sbr.rel (%p1335) target = $region136
        $region135: #{tpu_custom_call.1} parent=11 // pred_region
          _
        $region136: #{tpu_custom_call.1} parent=11 // pred_fallthru
          _
        // Predicated region
        $region137: #{tpu_custom_call.1} parent=11 // pred_check
          %p1338 = pneg %p888
        $region138: #{tpu_custom_call.1} parent=11 // pred_check_branch
          %1340 = sbr.rel (%p1338) target = $region140
        $region139: #{tpu_custom_call.1} parent=11 // pred_region
          _
        $region140: #{tpu_custom_call.1} parent=11 // pred_fallthru
          _
        // Predicated region
        $region141: #{tpu_custom_call.1} parent=11 // pred_check
          %p1341 = pneg %p909
        $region142: #{tpu_custom_call.1} parent=11 // pred_check_branch
          %1343 = sbr.rel (%p1341) target = $region144
        $region143: #{tpu_custom_call.1} parent=11 // pred_region
          _
        $region144: #{tpu_custom_call.1} parent=11 // pred_fallthru
          _
        // Predicated region
        $region145: #{tpu_custom_call.1} parent=11 // pred_check
          %p1344 = pneg %p930
        $region146: #{tpu_custom_call.1} parent=11 // pred_check_branch
          %1346 = sbr.rel (%p1344) target = $region148
        $region147: #{tpu_custom_call.1} parent=11 // pred_region
          _
        $region148: #{tpu_custom_call.1} parent=11 // pred_fallthru
          _
        // Predicated region
        $region149: #{tpu_custom_call.1} parent=11 // pred_check
          %p1347 = pneg %p951
        $region150: #{tpu_custom_call.1} parent=11 // pred_check_branch
          %1349 = sbr.rel (%p1347) target = $region152
        $region151: #{tpu_custom_call.1} parent=11 // pred_region
          _
        $region152: #{tpu_custom_call.1} parent=11 // pred_fallthru
          _
        // Predicated region
        $region153: #{tpu_custom_call.1} parent=11 // pred_check
          %p1350 = pneg %p972
        $region154: #{tpu_custom_call.1} parent=11 // pred_check_branch
          %1352 = sbr.rel (%p1350) target = $region156
        $region155: #{tpu_custom_call.1} parent=11 // pred_region
          _
        $region156: #{tpu_custom_call.1} parent=11 // pred_fallthru
          _
        // Predicated region
        $region157: #{tpu_custom_call.1} parent=11 // pred_check
          %p1353 = pneg %p993
        $region158: #{tpu_custom_call.1} parent=11 // pred_check_branch
          %1355 = sbr.rel (%p1353) target = $region160
        $region159: #{tpu_custom_call.1} parent=11 // pred_region
          _
        $region160: #{tpu_custom_call.1} parent=11 // pred_fallthru
          _
        // Predicated region
        $region161: #{tpu_custom_call.1} parent=11 // pred_check
          %p1356 = pneg %p1014
        $region162: #{tpu_custom_call.1} parent=11 // pred_check_branch
          %1358 = sbr.rel (%p1356) target = $region164
        $region163: #{tpu_custom_call.1} parent=11 // pred_region
          _
        $region164: #{tpu_custom_call.1} parent=11 // pred_fallthru
          _
      $region12: #{tpu_custom_call.1} parent=5 // pred_fallthru
        _
      %p1359 = scmp.lt.s32.totalorder %s112, 2
      // Predicated region
      $region165: #{tpu_custom_call.1} parent=5 // pred_check
        %p1360 = pneg %p1359
      $region166: #{tpu_custom_call.1} parent=5 // pred_check_branch
        %1362 = sbr.rel (%p1360) target = $region168
      $region167: #{tpu_custom_call.1} parent=5 // pred_region
        // Predicated region
        $region169: #{tpu_custom_call.1} parent=167 // pred_check
          %p1363 = pneg %p132
        $region170: #{tpu_custom_call.1} parent=167 // pred_check_branch
          %1365 = sbr.rel (%p1363) target = $region172
        $region171: #{tpu_custom_call.1} parent=167 // pred_region
          %s1366 = sand.u32 %s122, 1
          %s1367 = scalar_lea.sflag [#allocation3], %s1366
          %s1368 = sand.u32 %s122, 1
          %s1369 = smul.addr %s1368, 8
          %s1370 = scalar_lea.vmem [#allocation2], %s1369
          %s1372 = ssub.s32 128, 128
          %1373 = vsyncadd %s1367, %s1372
          %s1374 = smul.addr %s112, 128
          %s1375 = scalar_lea.hbm %s1, %s1374
          %s1377 = sshll.u32 %s1370, 4
          %s1378 = int_to_ptr.vmem [resolvable:$true] %s1377
          %1380 = dma.hbm_to_vmem [thread:$0]  %s1375, 128, %s1378, %s1367
        $region172: #{tpu_custom_call.1} parent=167 // pred_fallthru
          _
        // Predicated region
        $region173: #{tpu_custom_call.1} parent=167 // pred_check
          %p1381 = pneg %p158
        $region174: #{tpu_custom_call.1} parent=167 // pred_check_branch
          %1383 = sbr.rel (%p1381) target = $region176
        $region175: #{tpu_custom_call.1} parent=167 // pred_region
          %s1384 = sand.u32 %s112, 1
          %s1385 = scalar_lea.sflag [#allocation6], %s1384
          %s1386 = sand.u32 %s148, 1
          %s1387 = smul.addr %s1386, 8
          %s1388 = scalar_lea.vmem [#allocation5], %s1387
          %s1390 = ssub.s32 128, 128
          %1391 = vsyncadd %s1385, %s1390
          %s1392 = smul.addr %s112, 128
          %s1393 = scalar_lea.hbm %s3, %s1392
          %s1395 = sshll.u32 %s1388, 4
          %s1396 = int_to_ptr.vmem [resolvable:$true] %s1395
          %1398 = dma.hbm_to_vmem [thread:$0]  %s1393, 128, %s1396, %s1385
        $region176: #{tpu_custom_call.1} parent=167 // pred_fallthru
          _
        // Predicated region
        $region177: #{tpu_custom_call.1} parent=167 // pred_check
          %p1399 = pneg %p184
        $region178: #{tpu_custom_call.1} parent=167 // pred_check_branch
          %1401 = sbr.rel (%p1399) target = $region180
        $region179: #{tpu_custom_call.1} parent=167 // pred_region
          %s1402 = sand.u32 %s112, 1
          %s1403 = scalar_lea.sflag [#allocation6], %s1402
          %s1404 = sand.u32 %s174, 1
          %s1405 = scalar_lea.vmem [#allocation7], %s1404
          %s1407 = ssub.s32 16, 16
          %1408 = vsyncadd %s1403, %s1407
          %s1409 = smul.addr %s112, 16
          %s1410 = scalar_lea.hbm %s5, %s1409
          %s1412 = sshll.u32 %s1405, 4
          %s1413 = int_to_ptr.vmem [resolvable:$true] %s1412
          %1415 = dma.hbm_to_vmem [thread:$0]  %s1410, 16, %s1413, %s1403
        $region180: #{tpu_custom_call.1} parent=167 // pred_fallthru
          _
        // Predicated region
        $region181: #{tpu_custom_call.1} parent=167 // pred_check
          %p1416 = pneg %p210
        $region182: #{tpu_custom_call.1} parent=167 // pred_check_branch
          %1418 = sbr.rel (%p1416) target = $region184
        $region183: #{tpu_custom_call.1} parent=167 // pred_region
          %s1419 = sand.u32 %s112, 1
          %s1420 = scalar_lea.sflag [#allocation9], %s1419
          %s1421 = sand.u32 %s200, 1
          %s1422 = smul.addr %s1421, 8
          %s1423 = scalar_lea.vmem [#allocation8], %s1422
          %s1425 = ssub.s32 128, 128
          %1426 = vsyncadd %s1420, %s1425
          %s1427 = smul.addr %s112, 128
          %s1428 = scalar_lea.hbm %s7, %s1427
          %s1430 = sshll.u32 %s1423, 4
          %s1431 = int_to_ptr.vmem [resolvable:$true] %s1430
          %1433 = dma.hbm_to_vmem [thread:$0]  %s1428, 128, %s1431, %s1420
        $region184: #{tpu_custom_call.1} parent=167 // pred_fallthru
          _
      $region168: #{tpu_custom_call.1} parent=5 // pred_fallthru
        _
      %p1434 = scmp.le.s32.totalorder 1, %s112
      %p1435 = scmp.lt.s32.totalorder %s112, 3
      %p1436 = pnand %p1434, %p1435
      %p1437 = pneg %p1436
      // Predicated region
      $region185: #{tpu_custom_call.1} parent=5 // pred_check
        _
      $region186: #{tpu_custom_call.1} parent=5 // pred_check_branch
        %1439 = sbr.rel (%p1436) target = $region188
      $region187: #{tpu_custom_call.1} parent=5 // pred_region
        %s1440 = ssub.s32 %s112, 1
        %s1441 = sand.u32 %s125, 1
        %s1442 = scalar_lea.sflag [#allocation3], %s1441
        %s1443 = sand.u32 %s125, 1
        %s1444 = smul.addr %s1443, 8
        %s1445 = scalar_lea.vmem [#allocation2], %s1444
        // Predicated region
        $region189: #{tpu_custom_call.1} parent=187 // pred_check
          %p1446 = pneg %p138
        $region190: #{tpu_custom_call.1} parent=187 // pred_check_branch
          %1448 = sbr.rel (%p1446) target = $region192
        $region191: #{tpu_custom_call.1} parent=187 // pred_region
          %1449 = dma.done %s1442, 128
        $region192: #{tpu_custom_call.1} parent=187 // pred_fallthru
          _
        %s1450 = sand.u32 %s117, 1
        %s1451 = scalar_lea.sflag [#allocation6], %s1450
        %s1452 = sand.u32 %s151, 1
        %s1453 = smul.addr %s1452, 8
        %s1454 = scalar_lea.vmem [#allocation5], %s1453
        // Predicated region
        $region193: #{tpu_custom_call.1} parent=187 // pred_check
          %p1455 = pneg %p164
        $region194: #{tpu_custom_call.1} parent=187 // pred_check_branch
          %1457 = sbr.rel (%p1455) target = $region196
        $region195: #{tpu_custom_call.1} parent=187 // pred_region
          %1458 = dma.done %s1451, 128
        $region196: #{tpu_custom_call.1} parent=187 // pred_fallthru
          _
        %s1459 = sand.u32 %s117, 1
        %s1460 = scalar_lea.sflag [#allocation6], %s1459
        %s1461 = sand.u32 %s177, 1
        %s1462 = scalar_lea.vmem [#allocation7], %s1461
        // Predicated region
        $region197: #{tpu_custom_call.1} parent=187 // pred_check
          %p1463 = pneg %p190
        $region198: #{tpu_custom_call.1} parent=187 // pred_check_branch
          %1465 = sbr.rel (%p1463) target = $region200
        $region199: #{tpu_custom_call.1} parent=187 // pred_region
          %1466 = dma.done %s1460, 16
        $region200: #{tpu_custom_call.1} parent=187 // pred_fallthru
          _
        %s1467 = sand.u32 %s117, 1
        %s1468 = scalar_lea.sflag [#allocation9], %s1467
        %s1469 = sand.u32 %s203, 1
        %s1470 = smul.addr %s1469, 8
        %s1471 = scalar_lea.vmem [#allocation8], %s1470
        // Predicated region
        $region201: #{tpu_custom_call.1} parent=187 // pred_check
          %p1472 = pneg %p216
        $region202: #{tpu_custom_call.1} parent=187 // pred_check_branch
          %1474 = sbr.rel (%p1472) target = $region204
        $region203: #{tpu_custom_call.1} parent=187 // pred_region
          %1475 = dma.done %s1468, 128
        $region204: #{tpu_custom_call.1} parent=187 // pred_fallthru
          _
        // Predicated region
        $region205: #{tpu_custom_call.1} parent=187 // pred_check
          %p1476 = pneg %p258
        $region206: #{tpu_custom_call.1} parent=187 // pred_check_branch
          %1478 = sbr.rel (%p1476) target = $region208
        $region207: #{tpu_custom_call.1} parent=187 // pred_region
          %1479 = dma.done [#allocation9], 32
        $region208: #{tpu_custom_call.1} parent=187 // pred_fallthru
          _
        // Predicated region
        $region209: #{tpu_custom_call.1} parent=187 // pred_check
          %p1480 = pneg %p300
        $region210: #{tpu_custom_call.1} parent=187 // pred_check_branch
          %1482 = sbr.rel (%p1480) target = $region212
        $region211: #{tpu_custom_call.1} parent=187 // pred_region
          %1483 = dma.done [#allocation12], 32
        $region212: #{tpu_custom_call.1} parent=187 // pred_fallthru
          _
        // Predicated region
        $region213: #{tpu_custom_call.1} parent=187 // pred_check
          %p1484 = pneg %p321
        $region214: #{tpu_custom_call.1} parent=187 // pred_check_branch
          %1486 = sbr.rel (%p1484) target = $region216
        $region215: #{tpu_custom_call.1} parent=187 // pred_region
          %1487 = dma.done [#allocation12], 32
        $region216: #{tpu_custom_call.1} parent=187 // pred_fallthru
          _
        // Predicated region
        $region217: #{tpu_custom_call.1} parent=187 // pred_check
          %p1488 = pneg %p342
        $region218: #{tpu_custom_call.1} parent=187 // pred_check_branch
          %1490 = sbr.rel (%p1488) target = $region220
        $region219: #{tpu_custom_call.1} parent=187 // pred_region
          %1491 = dma.done [#allocation15], 32
        $region220: #{tpu_custom_call.1} parent=187 // pred_fallthru
          _
        // Predicated region
        $region221: #{tpu_custom_call.1} parent=187 // pred_check
          %p1492 = pneg %p384
        $region222: #{tpu_custom_call.1} parent=187 // pred_check_branch
          %1494 = sbr.rel (%p1492) target = $region224
        $region223: #{tpu_custom_call.1} parent=187 // pred_region
          %1495 = dma.done [#allocation15], 32
        $region224: #{tpu_custom_call.1} parent=187 // pred_fallthru
          _
        // Predicated region
        $region225: #{tpu_custom_call.1} parent=187 // pred_check
          %p1496 = pneg %p426
        $region226: #{tpu_custom_call.1} parent=187 // pred_check_branch
          %1498 = sbr.rel (%p1496) target = $region228
        $region227: #{tpu_custom_call.1} parent=187 // pred_region
          %1499 = dma.done [#allocation18], 32
        $region228: #{tpu_custom_call.1} parent=187 // pred_fallthru
          _
        // Predicated region
        $region229: #{tpu_custom_call.1} parent=187 // pred_check
          %p1500 = pneg %p447
        $region230: #{tpu_custom_call.1} parent=187 // pred_check_branch
          %1502 = sbr.rel (%p1500) target = $region232
        $region231: #{tpu_custom_call.1} parent=187 // pred_region
          %1503 = dma.done [#allocation18], 32
        $region232: #{tpu_custom_call.1} parent=187 // pred_fallthru
          _
        // Predicated region
        $region233: #{tpu_custom_call.1} parent=187 // pred_check
          %p1504 = pneg %p468
        $region234: #{tpu_custom_call.1} parent=187 // pred_check_branch
          %1506 = sbr.rel (%p1504) target = $region236
        $region235: #{tpu_custom_call.1} parent=187 // pred_region
          %1507 = dma.done [#allocation21], 32
        $region236: #{tpu_custom_call.1} parent=187 // pred_fallthru
          _
        // Predicated region
        $region237: #{tpu_custom_call.1} parent=187 // pred_check
          %p1508 = pneg %p510
        $region238: #{tpu_custom_call.1} parent=187 // pred_check_branch
          %1510 = sbr.rel (%p1508) target = $region240
        $region239: #{tpu_custom_call.1} parent=187 // pred_region
          %1511 = dma.done [#allocation21], 32
        $region240: #{tpu_custom_call.1} parent=187 // pred_fallthru
          _
        // Predicated region
        $region241: #{tpu_custom_call.1} parent=187 // pred_check
          %p1512 = pneg %p552
        $region242: #{tpu_custom_call.1} parent=187 // pred_check_branch
          %1514 = sbr.rel (%p1512) target = $region244
        $region243: #{tpu_custom_call.1} parent=187 // pred_region
          %1515 = dma.done [#allocation24], 32
        $region244: #{tpu_custom_call.1} parent=187 // pred_fallthru
          _
        // Predicated region
        $region245: #{tpu_custom_call.1} parent=187 // pred_check
          %p1516 = pneg %p573
        $region246: #{tpu_custom_call.1} parent=187 // pred_check_branch
          %1518 = sbr.rel (%p1516) target = $region248
        $region247: #{tpu_custom_call.1} parent=187 // pred_region
          %1519 = dma.done [#allocation24], 32
        $region248: #{tpu_custom_call.1} parent=187 // pred_fallthru
          _
        // Predicated region
        $region249: #{tpu_custom_call.1} parent=187 // pred_check
          %p1520 = pneg %p594
        $region250: #{tpu_custom_call.1} parent=187 // pred_check_branch
          %1522 = sbr.rel (%p1520) target = $region252
        $region251: #{tpu_custom_call.1} parent=187 // pred_region
          %1523 = dma.done [#allocation27], 32
        $region252: #{tpu_custom_call.1} parent=187 // pred_fallthru
          _
        // Predicated region
        $region253: #{tpu_custom_call.1} parent=187 // pred_check
          %p1524 = pneg %p636
        $region254: #{tpu_custom_call.1} parent=187 // pred_check_branch
          %1526 = sbr.rel (%p1524) target = $region256
        $region255: #{tpu_custom_call.1} parent=187 // pred_region
          %1527 = dma.done [#allocation27], 32
        $region256: #{tpu_custom_call.1} parent=187 // pred_fallthru
          _
        // Predicated region
        $region257: #{tpu_custom_call.1} parent=187 // pred_check
          %p1528 = pneg %p657
        $region258: #{tpu_custom_call.1} parent=187 // pred_check_branch
          %1530 = sbr.rel (%p1528) target = $region260
        $region259: #{tpu_custom_call.1} parent=187 // pred_region
          %1531 = dma.done [#allocation30], 512
        $region260: #{tpu_custom_call.1} parent=187 // pred_fallthru
          _
        // Predicated region
        $region261: #{tpu_custom_call.1} parent=187 // pred_check
          %p1532 = pneg %p678
        $region262: #{tpu_custom_call.1} parent=187 // pred_check_branch
          %1534 = sbr.rel (%p1532) target = $region264
        $region263: #{tpu_custom_call.1} parent=187 // pred_region
          %1535 = dma.done [#allocation30], 32
        $region264: #{tpu_custom_call.1} parent=187 // pred_fallthru
          _
        // Predicated region
        $region265: #{tpu_custom_call.1} parent=187 // pred_check
          %p1536 = pneg %p720
        $region266: #{tpu_custom_call.1} parent=187 // pred_check_branch
          %1538 = sbr.rel (%p1536) target = $region268
        $region267: #{tpu_custom_call.1} parent=187 // pred_region
          %1539 = dma.done [#allocation33], 32
        $region268: #{tpu_custom_call.1} parent=187 // pred_fallthru
          _
        // Predicated region
        $region269: #{tpu_custom_call.1} parent=187 // pred_check
          %p1540 = pneg %p741
        $region270: #{tpu_custom_call.1} parent=187 // pred_check_branch
          %1542 = sbr.rel (%p1540) target = $region272
        $region271: #{tpu_custom_call.1} parent=187 // pred_region
          %1543 = dma.done [#allocation33], 32
        $region272: #{tpu_custom_call.1} parent=187 // pred_fallthru
          _
        // Predicated region
        $region273: #{tpu_custom_call.1} parent=187 // pred_check
          %p1544 = pneg %p762
        $region274: #{tpu_custom_call.1} parent=187 // pred_check_branch
          %1546 = sbr.rel (%p1544) target = $region276
        $region275: #{tpu_custom_call.1} parent=187 // pred_region
          %1547 = dma.done [#allocation36], 32
        $region276: #{tpu_custom_call.1} parent=187 // pred_fallthru
          _
        // Predicated region
        $region277: #{tpu_custom_call.1} parent=187 // pred_check
          %p1548 = pneg %p783
        $region278: #{tpu_custom_call.1} parent=187 // pred_check_branch
          %1550 = sbr.rel (%p1548) target = $region280
        $region279: #{tpu_custom_call.1} parent=187 // pred_region
          %1551 = dma.done [#allocation36], 512
        $region280: #{tpu_custom_call.1} parent=187 // pred_fallthru
          _
        %s1552 = sand.u32 %s125, 1
        %s1553 = scalar_lea.sflag [#allocation3], %s1552
        %s1554 = sand.u32 %s125, 1
        %s1555 = smul.addr %s1554, 8
        %s1556 = scalar_lea.vmem [#allocation2], %s1555
        %p1557 = pneg %p138
        %p1558 = pneg %p135
        %s1559 = sand.u32 %s117, 1
        %s1560 = scalar_lea.sflag [#allocation6], %s1559
        %s1561 = sand.u32 %s151, 1
        %s1562 = smul.addr %s1561, 8
        %s1563 = scalar_lea.vmem [#allocation5], %s1562
        %p1564 = pneg %p164
        %p1565 = pneg %p161
        %s1566 = sand.u32 %s117, 1
        %s1567 = scalar_lea.sflag [#allocation6], %s1566
        %s1568 = sand.u32 %s177, 1
        %s1569 = scalar_lea.vmem [#allocation7], %s1568
        %p1570 = pneg %p190
        %p1571 = pneg %p187
        %s1572 = sand.u32 %s117, 1
        %s1573 = scalar_lea.sflag [#allocation9], %s1572
        %s1574 = sand.u32 %s203, 1
        %s1575 = smul.addr %s1574, 8
        %s1576 = scalar_lea.vmem [#allocation8], %s1575
        %p1577 = pneg %p216
        %p1578 = pneg %p213
        %p1579 = pneg %p237
        %p1580 = pneg %p234
        %p1581 = pneg %p258
        %p1582 = pneg %p255
        %p1583 = pneg %p279
        %p1584 = pneg %p276
        %p1585 = pneg %p300
        %p1586 = pneg %p297
        %p1587 = pneg %p321
        %p1588 = pneg %p318
        %p1589 = pneg %p342
        %p1590 = pneg %p339
        %p1591 = pneg %p363
        %p1592 = pneg %p360
        %p1593 = pneg %p384
        %p1594 = pneg %p381
        %p1595 = pneg %p405
        %p1596 = pneg %p402
        %p1597 = pneg %p426
        %p1598 = pneg %p423
        %p1599 = pneg %p447
        %p1600 = pneg %p444
        %p1601 = pneg %p468
        %p1602 = pneg %p465
        %p1603 = pneg %p489
        %p1604 = pneg %p486
        %p1605 = pneg %p510
        %p1606 = pneg %p507
        %p1607 = pneg %p531
        %p1608 = pneg %p528
        %p1609 = pneg %p552
        %p1610 = pneg %p549
        %p1611 = pneg %p573
        %p1612 = pneg %p570
        %p1613 = pneg %p594
        %p1614 = pneg %p591
        %p1615 = pneg %p615
        %p1616 = pneg %p612
        %p1617 = pneg %p636
        %p1618 = pneg %p633
        %p1619 = pneg %p657
        %p1620 = pneg %p654
        %p1621 = pneg %p678
        %p1622 = pneg %p675
        %p1623 = pneg %p699
        %p1624 = pneg %p696
        %p1625 = pneg %p720
        %p1626 = pneg %p717
        %p1627 = pneg %p741
        %p1628 = pneg %p738
        %p1629 = pneg %p762
        %p1630 = pneg %p759
        %p1631 = pneg %p783
        %p1632 = pneg %p780
        %p1633 = pneg %p804
        %p1634 = pneg %p801
        %p1635 = pneg %p825
        %p1636 = pneg %p822
        %p1637 = pneg %p846
        %p1638 = pneg %p843
        %p1639 = pneg %p867
        %p1640 = pneg %p864
        %p1641 = pneg %p888
        %p1642 = pneg %p885
        %p1643 = pneg %p909
        %p1644 = pneg %p906
        %p1645 = pneg %p930
        %p1646 = pneg %p927
        %p1647 = pneg %p951
        %p1648 = pneg %p948
        %p1649 = pneg %p972
        %p1650 = pneg %p969
        %p1651 = pneg %p993
        %p1652 = pneg %p990
        %p1653 = pneg %p1014
        %p1654 = pneg %p1011
        %p1655 = pneg %p1040
        %p1656 = pneg %p1037
        %s1657 = sand.u32 %s1027, 1
        %s1658 = scalar_lea.sflag [#allocation4], %s1657
        %s1659 = sand.u32 %s1027, 1
        %s1660 = smul.addr %s1659, 8
        %s1661 = scalar_lea.vmem [#allocation38], %s1660
        %v1663 = vld [vmem:[%s1445] sm:$0xff]
        %v1664 = vld [vmem:[%s1454] sm:$0xff]
        %v1665 = vld [vmem:[%s1462] sm:$0x1]
        %v1666 = vld [vmem:[%s1471] sm:$0xff]
        %v1667 = vld [vmem:[%s9] sm:$0xf]
        %v1668 = vld [vmem:[%s9 + $0x4] sm:$0xf]
        %v1669 = vld [vmem:[%s9 + $0x8] sm:$0xf]
        %v1670 = vld [vmem:[%s9 + $0xc] sm:$0xf]
        %v1671 = vld [vmem:[#allocation10] sm:$0x1]
        %v1672 = vld [vmem:[%s13] sm:$0xf]
        %v1673 = vld [vmem:[%s13 + $0x4] sm:$0xf]
        %v1674 = vld [vmem:[%s13 + $0x8] sm:$0xf]
        %v1675 = vld [vmem:[%s13 + $0xc] sm:$0xf]
        %v1676 = vld [vmem:[#allocation11] sm:$0x1]
        %v1677 = vld [vmem:[#allocation13] sm:$0x1]
        %v1678 = vld [vmem:[#allocation14] sm:$0x1]
        %v1679 = vpack.c.bf16 %v1663, %v1663
        %v1681 = vlaneseq
        %v1682 = vshrl.u32 %v1681, 7
        %v1683 = vsub.s32 0, %v1682
        %v1684 = vrot.slane %v1671, %v1683
        %v1690 = vunpack.c.l.b16 %v1667
        %v1691 = vunpack.c.l.b16 %v1668
        %v1692 = vunpack.c.l.b16 %v1669
        %v1693 = vunpack.c.l.b16 %v1670
        %v1694 = vpack.c.b16 %v1691, %v1690
        %v1695 = vpack.c.b16 %v1693, %v1692
        %vm1698 = vcmask 261120
        %v1700 = vsel %vm1698, %v1679, 0
        %1702 = vmatprep.subr.bf16.mxu0 0
        %1703 = vmatpush1.bf16.msra.mxu0 %v1694
        %1704 = vmatprep.subr.bf16.mxu0 0
        %1705 = vmatpush1.bf16.msra.mxu0 %v1695
        %1706 = vmatprep.subr.bf16.mxu0 0
        %1707 = vmatpush1.bf16.msra.mxu0 0
        %1708 = vmatprep.subr.bf16.mxu0 0
        %1709 = vmatpush1.bf16.msra.mxu0 0
        %1710 = vmatprep.subr.bf16.mxu0 0
        %1711 = vmatpush1.bf16.msra.mxu0 0
        %1712 = vmatprep.subr.bf16.mxu0 0
        %1713 = vmatpush1.bf16.msra.mxu0 0
        %1714 = vmatprep.subr.bf16.mxu0 0
        %1715 = vmatpush1.bf16.msra.mxu0 0
        %1716 = vmatprep.subr.bf16.mxu0 0
        %1717 = vmatpush1.bf16.msra.mxu0 0
        %1718 = vmatprep.subr.bf16.mxu0 0
        %1719 = vmatpush1.bf16.msra.mxu0 0
        %1720 = vmatprep.subr.bf16.mxu0 0
        %1721 = vmatpush1.bf16.msra.mxu0 0
        %1722 = vmatprep.subr.bf16.mxu0 0
        %1723 = vmatpush1.bf16.msra.mxu0 0
        %1724 = vmatprep.subr.bf16.mxu0 0
        %1725 = vmatpush1.bf16.msra.mxu0 0
        %1726 = vmatprep.subr.bf16.mxu0 0
        %1727 = vmatpush1.bf16.msra.mxu0 0
        %1728 = vmatprep.subr.bf16.mxu0 0
        %1729 = vmatpush1.bf16.msra.mxu0 0
        %1730 = vmatprep.subr.bf16.mxu0 0
        %1731 = vmatpush1.bf16.msra.mxu0 0
        %1732 = vmatprep.subr.bf16.mxu0 0
        %1733 = vmatpush1.bf16.msra.mxu0 0
        %1734 = vmatprep.mubr.bf16.mxu0 0
        %1735 = vmatmul.mubr.bf16.gmra.mrb[0].mxu0 %v1700
        %v1736 = vpop.f32.mrb[0].mxu0
        %v1737 = vadd.f32 %v1684, %v1736
        %v1738 = vpop.f32.mrb[0].mxu0
        %v1739 = vpop.f32.mrb[0].mxu0
        %v1740 = vpop.f32.mrb[0].mxu0
        %1741 = vdwg.mxu0
        %v1742 = vpack.c.bf16 %v1737, %v1737
        %1744 = vrot.lane.b32.xlu0 %v1742, 120
        %v1745 = vpop.permute.xlu0 %1744
        %1746 = vrot.lane.b32.xlu0 %v1742, 112
        %v1747 = vpop.permute.xlu0 %1746
        %1748 = vrot.lane.b32.xlu0 %v1742, 104
        %v1749 = vpop.permute.xlu0 %1748
        %1750 = vrot.lane.b32.xlu0 %v1742, 96
        %v1751 = vpop.permute.xlu0 %1750
        %vm1752 = vcmask 64512
        %v1754 = vsel %vm1752, %v1742, 0
        %v1757 = vsel %vm1752, %v1751, 0
        %1759 = vmatprep.subr.bf16.mxu0 0
        %1760 = vmatpush1.bf16.xpose.msra.mxu0 %v1757
        %1761 = vmatprep.subr.bf16.mxu0 0
        %1762 = vmatpush1.bf16.xpose.msra.mxu0 0
        %1763 = vmatprep.subr.bf16.mxu0 0
        %1764 = vmatpush1.bf16.xpose.msra.mxu0 0
        %1765 = vmatprep.subr.bf16.mxu0 0
        %1766 = vmatpush1.bf16.xpose.msra.mxu0 0
        %1767 = vmatprep.subr.bf16.mxu0 0
        %1768 = vmatpush1.bf16.xpose.msra.mxu0 0
        %1769 = vmatprep.subr.bf16.mxu0 0
        %1770 = vmatpush1.bf16.xpose.msra.mxu0 0
        %1771 = vmatprep.subr.bf16.mxu0 0
        %1772 = vmatpush1.bf16.xpose.msra.mxu0 0
        %1773 = vmatprep.subr.bf16.mxu0 0
        %1774 = vmatpush1.bf16.xpose.msra.mxu0 0
        %1775 = vmatprep.subr.bf16.mxu0 0
        %1776 = vmatpush1.bf16.xpose.msra.mxu0 0
        %1777 = vmatprep.subr.bf16.mxu0 0
        %1778 = vmatpush1.bf16.xpose.msra.mxu0 0
        %1779 = vmatprep.subr.bf16.mxu0 0
        %1780 = vmatpush1.bf16.xpose.msra.mxu0 0
        %1781 = vmatprep.subr.bf16.mxu0 0
        %1782 = vmatpush1.bf16.xpose.msra.mxu0 0
        %1783 = vmatprep.subr.bf16.mxu0 0
        %1784 = vmatpush1.bf16.xpose.msra.mxu0 0
        %1785 = vmatprep.subr.bf16.mxu0 0
        %1786 = vmatpush1.bf16.xpose.msra.mxu0 0
        %1787 = vmatprep.subr.bf16.mxu0 0
        %1788 = vmatpush1.bf16.xpose.msra.mxu0 0
        %1789 = vmatprep.subr.bf16.mxu0 0
        %1790 = vmatpush1.bf16.xpose.msra.mxu0 0
        %1791 = vmatprep.mubr.bf16.mxu0 0
        %1792 = vmatmul.mubr.bf16.gmra.mrb[0].mxu0 %v1754
        %v1793 = vpop.f32.mrb[0].mxu0
        %v1794 = vadd.f32 0.0, %v1793
        %v1795 = vpop.f32.mrb[0].mxu0
        %v1796 = vpop.f32.mrb[0].mxu0
        %v1797 = vpop.f32.mrb[0].mxu0
        %1798 = vdwg.mxu0
        %1799 = vrot.lane.b32.xlu0 %v1745, 96
        %v1800 = vpop.permute.xlu0 %1799
        %v1802 = vsel %vm1752, %v1745, 0
        %v1805 = vsel %vm1752, %v1800, 0
        %1807 = vmatprep.subr.bf16.mxu0 0
        %1808 = vmatpush1.bf16.xpose.msra.mxu0 %v1805
        %1809 = vmatprep.subr.bf16.mxu0 0
        %1810 = vmatpush1.bf16.xpose.msra.mxu0 0
        %1811 = vmatprep.subr.bf16.mxu0 0
        %1812 = vmatpush1.bf16.xpose.msra.mxu0 0
        %1813 = vmatprep.subr.bf16.mxu0 0
        %1814 = vmatpush1.bf16.xpose.msra.mxu0 0
        %1815 = vmatprep.subr.bf16.mxu0 0
        %1816 = vmatpush1.bf16.xpose.msra.mxu0 0
        %1817 = vmatprep.subr.bf16.mxu0 0
        %1818 = vmatpush1.bf16.xpose.msra.mxu0 0
        %1819 = vmatprep.subr.bf16.mxu0 0
        %1820 = vmatpush1.bf16.xpose.msra.mxu0 0
        %1821 = vmatprep.subr.bf16.mxu0 0
        %1822 = vmatpush1.bf16.xpose.msra.mxu0 0
        %1823 = vmatprep.subr.bf16.mxu0 0
        %1824 = vmatpush1.bf16.xpose.msra.mxu0 0
        %1825 = vmatprep.subr.bf16.mxu0 0
        %1826 = vmatpush1.bf16.xpose.msra.mxu0 0
        %1827 = vmatprep.subr.bf16.mxu0 0
        %1828 = vmatpush1.bf16.xpose.msra.mxu0 0
        %1829 = vmatprep.subr.bf16.mxu0 0
        %1830 = vmatpush1.bf16.xpose.msra.mxu0 0
        %1831 = vmatprep.subr.bf16.mxu0 0
        %1832 = vmatpush1.bf16.xpose.msra.mxu0 0
        %1833 = vmatprep.subr.bf16.mxu0 0
        %1834 = vmatpush1.bf16.xpose.msra.mxu0 0
        %1835 = vmatprep.subr.bf16.mxu0 0
        %1836 = vmatpush1.bf16.xpose.msra.mxu0 0
        %1837 = vmatprep.subr.bf16.mxu0 0
        %1838 = vmatpush1.bf16.xpose.msra.mxu0 0
        %1839 = vmatprep.mubr.bf16.mxu0 0
        %1840 = vmatmul.mubr.bf16.gmra.mrb[0].mxu0 %v1802
        %v1841 = vpop.f32.mrb[0].mxu0
        %v1842 = vadd.f32 0.0, %v1841
        %v1843 = vpop.f32.mrb[0].mxu0
        %v1844 = vpop.f32.mrb[0].mxu0
        %v1845 = vpop.f32.mrb[0].mxu0
        %1846 = vdwg.mxu0
        %1847 = vrot.lane.b32.xlu0 %v1747, 96
        %v1848 = vpop.permute.xlu0 %1847
        %v1850 = vsel %vm1752, %v1747, 0
        %v1853 = vsel %vm1752, %v1848, 0
        %1855 = vmatprep.subr.bf16.mxu0 0
        %1856 = vmatpush1.bf16.xpose.msra.mxu0 %v1853
        %1857 = vmatprep.subr.bf16.mxu0 0
        %1858 = vmatpush1.bf16.xpose.msra.mxu0 0
        %1859 = vmatprep.subr.bf16.mxu0 0
        %1860 = vmatpush1.bf16.xpose.msra.mxu0 0
        %1861 = vmatprep.subr.bf16.mxu0 0
        %1862 = vmatpush1.bf16.xpose.msra.mxu0 0
        %1863 = vmatprep.subr.bf16.mxu0 0
        %1864 = vmatpush1.bf16.xpose.msra.mxu0 0
        %1865 = vmatprep.subr.bf16.mxu0 0
        %1866 = vmatpush1.bf16.xpose.msra.mxu0 0
        %1867 = vmatprep.subr.bf16.mxu0 0
        %1868 = vmatpush1.bf16.xpose.msra.mxu0 0
        %1869 = vmatprep.subr.bf16.mxu0 0
        %1870 = vmatpush1.bf16.xpose.msra.mxu0 0
        %1871 = vmatprep.subr.bf16.mxu0 0
        %1872 = vmatpush1.bf16.xpose.msra.mxu0 0
        %1873 = vmatprep.subr.bf16.mxu0 0
        %1874 = vmatpush1.bf16.xpose.msra.mxu0 0
        %1875 = vmatprep.subr.bf16.mxu0 0
        %1876 = vmatpush1.bf16.xpose.msra.mxu0 0
        %1877 = vmatprep.subr.bf16.mxu0 0
        %1878 = vmatpush1.bf16.xpose.msra.mxu0 0
        %1879 = vmatprep.subr.bf16.mxu0 0
        %1880 = vmatpush1.bf16.xpose.msra.mxu0 0
        %1881 = vmatprep.subr.bf16.mxu0 0
        %1882 = vmatpush1.bf16.xpose.msra.mxu0 0
        %1883 = vmatprep.subr.bf16.mxu0 0
        %1884 = vmatpush1.bf16.xpose.msra.mxu0 0
        %1885 = vmatprep.subr.bf16.mxu0 0
        %1886 = vmatpush1.bf16.xpose.msra.mxu0 0
        %1887 = vmatprep.mubr.bf16.mxu0 0
        %1888 = vmatmul.mubr.bf16.gmra.mrb[0].mxu0 %v1850
        %v1889 = vpop.f32.mrb[0].mxu0
        %v1890 = vadd.f32 0.0, %v1889
        %v1891 = vpop.f32.mrb[0].mxu0
        %v1892 = vpop.f32.mrb[0].mxu0
        %v1893 = vpop.f32.mrb[0].mxu0
        %1894 = vdwg.mxu0
        %1895 = vrot.lane.b32.xlu0 %v1749, 96
        %v1896 = vpop.permute.xlu0 %1895
        %v1898 = vsel %vm1752, %v1749, 0
        %v1901 = vsel %vm1752, %v1896, 0
        %1903 = vmatprep.subr.bf16.mxu0 0
        %1904 = vmatpush1.bf16.xpose.msra.mxu0 %v1901
        %1905 = vmatprep.subr.bf16.mxu0 0
        %1906 = vmatpush1.bf16.xpose.msra.mxu0 0
        %1907 = vmatprep.subr.bf16.mxu0 0
        %1908 = vmatpush1.bf16.xpose.msra.mxu0 0
        %1909 = vmatprep.subr.bf16.mxu0 0
        %1910 = vmatpush1.bf16.xpose.msra.mxu0 0
        %1911 = vmatprep.subr.bf16.mxu0 0
        %1912 = vmatpush1.bf16.xpose.msra.mxu0 0
        %1913 = vmatprep.subr.bf16.mxu0 0
        %1914 = vmatpush1.bf16.xpose.msra.mxu0 0
        %1915 = vmatprep.subr.bf16.mxu0 0
        %1916 = vmatpush1.bf16.xpose.msra.mxu0 0
        %1917 = vmatprep.subr.bf16.mxu0 0
        %1918 = vmatpush1.bf16.xpose.msra.mxu0 0
        %1919 = vmatprep.subr.bf16.mxu0 0
        %1920 = vmatpush1.bf16.xpose.msra.mxu0 0
        %1921 = vmatprep.subr.bf16.mxu0 0
        %1922 = vmatpush1.bf16.xpose.msra.mxu0 0
        %1923 = vmatprep.subr.bf16.mxu0 0
        %1924 = vmatpush1.bf16.xpose.msra.mxu0 0
        %1925 = vmatprep.subr.bf16.mxu0 0
        %1926 = vmatpush1.bf16.xpose.msra.mxu0 0
        %1927 = vmatprep.subr.bf16.mxu0 0
        %1928 = vmatpush1.bf16.xpose.msra.mxu0 0
        %1929 = vmatprep.subr.bf16.mxu0 0
        %1930 = vmatpush1.bf16.xpose.msra.mxu0 0
        %1931 = vmatprep.subr.bf16.mxu0 0
        %1932 = vmatpush1.bf16.xpose.msra.mxu0 0
        %1933 = vmatprep.subr.bf16.mxu0 0
        %1934 = vmatpush1.bf16.xpose.msra.mxu0 0
        %1935 = vmatprep.mubr.bf16.mxu0 0
        %1936 = vmatmul.mubr.bf16.gmra.mrb[0].mxu0 %v1898
        %v1937 = vpop.f32.mrb[0].mxu0
        %v1938 = vadd.f32 0.0, %v1937
        %v1939 = vpop.f32.mrb[0].mxu0
        %v1940 = vpop.f32.mrb[0].mxu0
        %v1941 = vpop.f32.mrb[0].mxu0
        %1942 = vdwg.mxu0
        %v1943 = vmul.f32 %v1794, 0.35355338
        %v1944 = vmul.f32 %v1842, 0.35355338
        %v1945 = vmul.f32 %v1890, 0.35355338
        %v1946 = vmul.f32 %v1938, 0.35355338
        %v1948 = vlaneseq
        %v1949 = vshrl.u32 %v1948, 7
        %v1950 = vsub.s32 0, %v1949
        %v1951 = vrot.slane %v1665, %v1950
        %v1953 = vadd.f32 %v1943, %v1951
        %v1954 = vadd.f32 %v1944, %v1951
        %v1955 = vadd.f32 %v1945, %v1951
        %v1956 = vadd.f32 %v1946, %v1951
        %v1957 = vsel %vm1752, %v1953, -inf
        %1958 = vmax.xlane.f32.xlu0 %v1957
        %v1959 = vpop.xlane.xlu0 %1958
        %v1960 = vsel %vm1752, %v1954, -inf
        %1961 = vmax.xlane.f32.xlu0 %v1960
        %v1962 = vpop.xlane.xlu0 %1961
        %v1963 = vsel %vm1752, %v1955, -inf
        %1964 = vmax.xlane.f32.xlu0 %v1963
        %v1965 = vpop.xlane.xlu0 %1964
        %v1966 = vsel %vm1752, %v1956, -inf
        %1967 = vmax.xlane.f32.xlu0 %v1966
        %v1968 = vpop.xlane.xlu0 %1967
        %v1969 = vsub.f32 %v1953, %v1959
        %v1970 = vsub.f32 %v1954, %v1962
        %v1971 = vsub.f32 %v1955, %v1965
        %v1972 = vsub.f32 %v1956, %v1968
        %v1973 = vmul.f32 %v1969, 1.442695
        %v1974 = vpow.pop %v1973
        %v1975 = vmul.f32 %v1970, 1.442695
        %v1976 = vpow.pop %v1975
        %v1977 = vmul.f32 %v1971, 1.442695
        %v1978 = vpow.pop %v1977
        %v1979 = vmul.f32 %v1972, 1.442695
        %v1980 = vpow.pop %v1979
        %v1981 = vsel %vm1752, %v1974, 0.0
        %1982 = vadd.xlane.f32.xlu0 %v1981
        %v1983 = vpop.xlane.xlu0 %1982
        %v1984 = vsel %vm1752, %v1976, 0.0
        %1985 = vadd.xlane.f32.xlu0 %v1984
        %v1986 = vpop.xlane.xlu0 %1985
        %v1987 = vsel %vm1752, %v1978, 0.0
        %1988 = vadd.xlane.f32.xlu0 %v1987
        %v1989 = vpop.xlane.xlu0 %1988
        %v1990 = vsel %vm1752, %v1980, 0.0
        %1991 = vadd.xlane.f32.xlu0 %v1990
        %v1992 = vpop.xlane.xlu0 %1991
        %v1993 = vrcp.pop %v1983
        %v1994 = vrcp.pop %v1986
        %v1995 = vrcp.pop %v1989
        %v1996 = vrcp.pop %v1992
        %v1997 = vmul.f32 %v1974, %v1993
        %v1998 = vmul.f32 %v1976, %v1994
        %v1999 = vmul.f32 %v1978, %v1995
        %v2000 = vmul.f32 %v1980, %v1996
        %v2001 = vpack.c.bf16 %v1997, %v1997
        %v2002 = vpack.c.bf16 %v1998, %v1998
        %v2003 = vpack.c.bf16 %v1999, %v1999
        %v2004 = vpack.c.bf16 %v2000, %v2000
        %2005 = vrot.lane.b32.xlu0 %v1742, 64
        %v2006 = vpop.permute.xlu0 %2005
        %v2008 = vsel %vm1752, %v2001, 0
        %vm2010 = vcmask 1043456
        %v2012 = vsel %vm2010, %v2006, 0
        %2014 = vmatprep.subr.bf16.mxu0 0
        %2015 = vmatpush1.bf16.msra.mxu0 %v2012
        %2016 = vmatprep.subr.bf16.mxu0 0
        %2017 = vmatpush1.bf16.msra.mxu0 0
        %2018 = vmatprep.subr.bf16.mxu0 0
        %2019 = vmatpush1.bf16.msra.mxu0 0
        %2020 = vmatprep.subr.bf16.mxu0 0
        %2021 = vmatpush1.bf16.msra.mxu0 0
        %2022 = vmatprep.subr.bf16.mxu0 0
        %2023 = vmatpush1.bf16.msra.mxu0 0
        %2024 = vmatprep.subr.bf16.mxu0 0
        %2025 = vmatpush1.bf16.msra.mxu0 0
        %2026 = vmatprep.subr.bf16.mxu0 0
        %2027 = vmatpush1.bf16.msra.mxu0 0
        %2028 = vmatprep.subr.bf16.mxu0 0
        %2029 = vmatpush1.bf16.msra.mxu0 0
        %2030 = vmatprep.subr.bf16.mxu0 0
        %2031 = vmatpush1.bf16.msra.mxu0 0
        %2032 = vmatprep.subr.bf16.mxu0 0
        %2033 = vmatpush1.bf16.msra.mxu0 0
        %2034 = vmatprep.subr.bf16.mxu0 0
        %2035 = vmatpush1.bf16.msra.mxu0 0
        %2036 = vmatprep.subr.bf16.mxu0 0
        %2037 = vmatpush1.bf16.msra.mxu0 0
        %2038 = vmatprep.subr.bf16.mxu0 0
        %2039 = vmatpush1.bf16.msra.mxu0 0
        %2040 = vmatprep.subr.bf16.mxu0 0
        %2041 = vmatpush1.bf16.msra.mxu0 0
        %2042 = vmatprep.subr.bf16.mxu0 0
        %2043 = vmatpush1.bf16.msra.mxu0 0
        %2044 = vmatprep.subr.bf16.mxu0 0
        %2045 = vmatpush1.bf16.msra.mxu0 0
        %2046 = vmatprep.mubr.bf16.mxu0 0
        %2047 = vmatmul.mubr.bf16.gmra.mrb[0].mxu0 %v2008
        %v2048 = vpop.f32.mrb[0].mxu0
        %v2049 = vadd.f32 0.0, %v2048
        %v2050 = vpop.f32.mrb[0].mxu0
        %v2051 = vpop.f32.mrb[0].mxu0
        %v2052 = vpop.f32.mrb[0].mxu0
        %2053 = vdwg.mxu0
        %2054 = vrot.lane.b32.xlu0 %v1745, 64
        %v2055 = vpop.permute.xlu0 %2054
        %v2057 = vsel %vm1752, %v2002, 0
        %v2060 = vsel %vm2010, %v2055, 0
        %2062 = vmatprep.subr.bf16.mxu0 0
        %2063 = vmatpush1.bf16.msra.mxu0 %v2060
        %2064 = vmatprep.subr.bf16.mxu0 0
        %2065 = vmatpush1.bf16.msra.mxu0 0
        %2066 = vmatprep.subr.bf16.mxu0 0
        %2067 = vmatpush1.bf16.msra.mxu0 0
        %2068 = vmatprep.subr.bf16.mxu0 0
        %2069 = vmatpush1.bf16.msra.mxu0 0
        %2070 = vmatprep.subr.bf16.mxu0 0
        %2071 = vmatpush1.bf16.msra.mxu0 0
        %2072 = vmatprep.subr.bf16.mxu0 0
        %2073 = vmatpush1.bf16.msra.mxu0 0
        %2074 = vmatprep.subr.bf16.mxu0 0
        %2075 = vmatpush1.bf16.msra.mxu0 0
        %2076 = vmatprep.subr.bf16.mxu0 0
        %2077 = vmatpush1.bf16.msra.mxu0 0
        %2078 = vmatprep.subr.bf16.mxu0 0
        %2079 = vmatpush1.bf16.msra.mxu0 0
        %2080 = vmatprep.subr.bf16.mxu0 0
        %2081 = vmatpush1.bf16.msra.mxu0 0
        %2082 = vmatprep.subr.bf16.mxu0 0
        %2083 = vmatpush1.bf16.msra.mxu0 0
        %2084 = vmatprep.subr.bf16.mxu0 0
        %2085 = vmatpush1.bf16.msra.mxu0 0
        %2086 = vmatprep.subr.bf16.mxu0 0
        %2087 = vmatpush1.bf16.msra.mxu0 0
        %2088 = vmatprep.subr.bf16.mxu0 0
        %2089 = vmatpush1.bf16.msra.mxu0 0
        %2090 = vmatprep.subr.bf16.mxu0 0
        %2091 = vmatpush1.bf16.msra.mxu0 0
        %2092 = vmatprep.subr.bf16.mxu0 0
        %2093 = vmatpush1.bf16.msra.mxu0 0
        %2094 = vmatprep.mubr.bf16.mxu0 0
        %2095 = vmatmul.mubr.bf16.gmra.mrb[0].mxu0 %v2057
        %v2096 = vpop.f32.mrb[0].mxu0
        %v2097 = vadd.f32 0.0, %v2096
        %v2098 = vpop.f32.mrb[0].mxu0
        %v2099 = vpop.f32.mrb[0].mxu0
        %v2100 = vpop.f32.mrb[0].mxu0
        %2101 = vdwg.mxu0
        %2102 = vrot.lane.b32.xlu0 %v1747, 64
        %v2103 = vpop.permute.xlu0 %2102
        %v2105 = vsel %vm1752, %v2003, 0
        %v2108 = vsel %vm2010, %v2103, 0
        %2110 = vmatprep.subr.bf16.mxu0 0
        %2111 = vmatpush1.bf16.msra.mxu0 %v2108
        %2112 = vmatprep.subr.bf16.mxu0 0
        %2113 = vmatpush1.bf16.msra.mxu0 0
        %2114 = vmatprep.subr.bf16.mxu0 0
        %2115 = vmatpush1.bf16.msra.mxu0 0
        %2116 = vmatprep.subr.bf16.mxu0 0
        %2117 = vmatpush1.bf16.msra.mxu0 0
        %2118 = vmatprep.subr.bf16.mxu0 0
        %2119 = vmatpush1.bf16.msra.mxu0 0
        %2120 = vmatprep.subr.bf16.mxu0 0
        %2121 = vmatpush1.bf16.msra.mxu0 0
        %2122 = vmatprep.subr.bf16.mxu0 0
        %2123 = vmatpush1.bf16.msra.mxu0 0
        %2124 = vmatprep.subr.bf16.mxu0 0
        %2125 = vmatpush1.bf16.msra.mxu0 0
        %2126 = vmatprep.subr.bf16.mxu0 0
        %2127 = vmatpush1.bf16.msra.mxu0 0
        %2128 = vmatprep.subr.bf16.mxu0 0
        %2129 = vmatpush1.bf16.msra.mxu0 0
        %2130 = vmatprep.subr.bf16.mxu0 0
        %2131 = vmatpush1.bf16.msra.mxu0 0
        %2132 = vmatprep.subr.bf16.mxu0 0
        %2133 = vmatpush1.bf16.msra.mxu0 0
        %2134 = vmatprep.subr.bf16.mxu0 0
        %2135 = vmatpush1.bf16.msra.mxu0 0
        %2136 = vmatprep.subr.bf16.mxu0 0
        %2137 = vmatpush1.bf16.msra.mxu0 0
        %2138 = vmatprep.subr.bf16.mxu0 0
        %2139 = vmatpush1.bf16.msra.mxu0 0
        %2140 = vmatprep.subr.bf16.mxu0 0
        %2141 = vmatpush1.bf16.msra.mxu0 0
        %2142 = vmatprep.mubr.bf16.mxu0 0
        %2143 = vmatmul.mubr.bf16.gmra.mrb[0].mxu0 %v2105
        %v2144 = vpop.f32.mrb[0].mxu0
        %v2145 = vadd.f32 0.0, %v2144
        %v2146 = vpop.f32.mrb[0].mxu0
        %v2147 = vpop.f32.mrb[0].mxu0
        %v2148 = vpop.f32.mrb[0].mxu0
        %2149 = vdwg.mxu0
        %2150 = vrot.lane.b32.xlu0 %v1749, 64
        %v2151 = vpop.permute.xlu0 %2150
        %v2153 = vsel %vm1752, %v2004, 0
        %v2156 = vsel %vm2010, %v2151, 0
        %2158 = vmatprep.subr.bf16.mxu0 0
        %2159 = vmatpush1.bf16.msra.mxu0 %v2156
        %2160 = vmatprep.subr.bf16.mxu0 0
        %2161 = vmatpush1.bf16.msra.mxu0 0
        %2162 = vmatprep.subr.bf16.mxu0 0
        %2163 = vmatpush1.bf16.msra.mxu0 0
        %2164 = vmatprep.subr.bf16.mxu0 0
        %2165 = vmatpush1.bf16.msra.mxu0 0
        %2166 = vmatprep.subr.bf16.mxu0 0
        %2167 = vmatpush1.bf16.msra.mxu0 0
        %2168 = vmatprep.subr.bf16.mxu0 0
        %2169 = vmatpush1.bf16.msra.mxu0 0
        %2170 = vmatprep.subr.bf16.mxu0 0
        %2171 = vmatpush1.bf16.msra.mxu0 0
        %2172 = vmatprep.subr.bf16.mxu0 0
        %2173 = vmatpush1.bf16.msra.mxu0 0
        %2174 = vmatprep.subr.bf16.mxu0 0
        %2175 = vmatpush1.bf16.msra.mxu0 0
        %2176 = vmatprep.subr.bf16.mxu0 0
        %2177 = vmatpush1.bf16.msra.mxu0 0
        %2178 = vmatprep.subr.bf16.mxu0 0
        %2179 = vmatpush1.bf16.msra.mxu0 0
        %2180 = vmatprep.subr.bf16.mxu0 0
        %2181 = vmatpush1.bf16.msra.mxu0 0
        %2182 = vmatprep.subr.bf16.mxu0 0
        %2183 = vmatpush1.bf16.msra.mxu0 0
        %2184 = vmatprep.subr.bf16.mxu0 0
        %2185 = vmatpush1.bf16.msra.mxu0 0
        %2186 = vmatprep.subr.bf16.mxu0 0
        %2187 = vmatpush1.bf16.msra.mxu0 0
        %2188 = vmatprep.subr.bf16.mxu0 0
        %2189 = vmatpush1.bf16.msra.mxu0 0
        %2190 = vmatprep.mubr.bf16.mxu0 0
        %2191 = vmatmul.mubr.bf16.gmra.mrb[0].mxu0 %v2153
        %v2192 = vpop.f32.mrb[0].mxu0
        %v2193 = vadd.f32 0.0, %v2192
        %v2194 = vpop.f32.mrb[0].mxu0
        %v2195 = vpop.f32.mrb[0].mxu0
        %v2196 = vpop.f32.mrb[0].mxu0
        %2197 = vdwg.mxu0
        %2199 = vrot.lane.b32.xlu0 %v2097, 8
        %v2200 = vpop.permute.xlu0 %2199
        %2203 = vrot.lane.b32.xlu0 %v2145, 16
        %v2204 = vpop.permute.xlu0 %2203
        %2207 = vrot.lane.b32.xlu0 %v2193, 24
        %v2208 = vpop.permute.xlu0 %2207
        %v2210 = vsel %vm1752, %v2049, %v2200
        %vm2211 = vcmask 130048
        %v2212 = vsel %vm2211, %v2210, %v2204
        %vm2213 = vcmask 195584
        %v2214 = vsel %vm2213, %v2212, %v2208
        %v2215 = vpack.c.bf16 %v2214, %v2214
        %v2217 = vlaneseq
        %v2218 = vshrl.u32 %v2217, 7
        %v2219 = vsub.s32 0, %v2218
        %v2220 = vrot.slane %v1676, %v2219
        %v2226 = vunpack.c.l.b16 %v1672
        %v2227 = vunpack.c.l.b16 %v1673
        %v2228 = vunpack.c.l.b16 %v1674
        %v2229 = vunpack.c.l.b16 %v1675
        %v2230 = vpack.c.b16 %v2227, %v2226
        %v2231 = vpack.c.b16 %v2229, %v2228
        %v2235 = vsel %vm1698, %v2215, 0
        %2237 = vmatprep.subr.bf16.mxu0 0
        %2238 = vmatpush1.bf16.msra.mxu0 %v2230
        %2239 = vmatprep.subr.bf16.mxu0 0
        %2240 = vmatpush1.bf16.msra.mxu0 %v2231
        %2241 = vmatprep.subr.bf16.mxu0 0
        %2242 = vmatpush1.bf16.msra.mxu0 0
        %2243 = vmatprep.subr.bf16.mxu0 0
        %2244 = vmatpush1.bf16.msra.mxu0 0
        %2245 = vmatprep.subr.bf16.mxu0 0
        %2246 = vmatpush1.bf16.msra.mxu0 0
        %2247 = vmatprep.subr.bf16.mxu0 0
        %2248 = vmatpush1.bf16.msra.mxu0 0
        %2249 = vmatprep.subr.bf16.mxu0 0
        %2250 = vmatpush1.bf16.msra.mxu0 0
        %2251 = vmatprep.subr.bf16.mxu0 0
        %2252 = vmatpush1.bf16.msra.mxu0 0
        %2253 = vmatprep.subr.bf16.mxu0 0
        %2254 = vmatpush1.bf16.msra.mxu0 0
        %2255 = vmatprep.subr.bf16.mxu0 0
        %2256 = vmatpush1.bf16.msra.mxu0 0
        %2257 = vmatprep.subr.bf16.mxu0 0
        %2258 = vmatpush1.bf16.msra.mxu0 0
        %2259 = vmatprep.subr.bf16.mxu0 0
        %2260 = vmatpush1.bf16.msra.mxu0 0
        %2261 = vmatprep.subr.bf16.mxu0 0
        %2262 = vmatpush1.bf16.msra.mxu0 0
        %2263 = vmatprep.subr.bf16.mxu0 0
        %2264 = vmatpush1.bf16.msra.mxu0 0
        %2265 = vmatprep.subr.bf16.mxu0 0
        %2266 = vmatpush1.bf16.msra.mxu0 0
        %2267 = vmatprep.subr.bf16.mxu0 0
        %2268 = vmatpush1.bf16.msra.mxu0 0
        %2269 = vmatprep.mubr.bf16.mxu0 0
        %2270 = vmatmul.mubr.bf16.gmra.mrb[0].mxu0 %v2235
        %v2271 = vpop.f32.mrb[0].mxu0
        %v2272 = vadd.f32 %v2220, %v2271
        %v2273 = vpop.f32.mrb[0].mxu0
        %v2274 = vpop.f32.mrb[0].mxu0
        %v2275 = vpop.f32.mrb[0].mxu0
        %2276 = vdwg.mxu0
        %v2277 = vadd.f32 %v1663, %v2272
        %v2278 = vsel %vm1698, %v2277, 0.0
        %2279 = vadd.xlane.f32.xlu0 %v2278
        %v2280 = vpop.xlane.xlu0 %2279
        %v2281 = vrcp.pop 32.0
        %v2282 = vmul.f32 %v2280, %v2281
        %v2283 = vsub.f32 %v2277, %v2282
        %v2284 = vmul.f32 %v2283, %v2283
        %v2285 = vsel %vm1698, %v2284, 0.0
        %2286 = vadd.xlane.f32.xlu0 %v2285
        %v2287 = vpop.xlane.xlu0 %2286
        %v2288 = vmul.f32 %v2287, %v2281
        %v2289 = vadd.f32 %v2288, 1e-05
        %v2290 = vrsqrt.pop %v2289
        %v2291 = vmul.f32 %v2283, %v2290
        %v2293 = vlaneseq
        %v2294 = vshrl.u32 %v2293, 7
        %v2295 = vsub.s32 0, %v2294
        %v2296 = vrot.slane %v1677, %v2295
        %v2298 = vmul.f32 %v2291, %v2296
        %v2300 = vlaneseq
        %v2301 = vshrl.u32 %v2300, 7
        %v2302 = vsub.s32 0, %v2301
        %v2303 = vrot.slane %v1678, %v2302
        %v2305 = vadd.f32 %v2298, %v2303
        %v2306 = vld [vmem:[%s21] sm:$0xf]
        %v2307 = vld [vmem:[%s21 + $0x4] sm:$0xf]
        %v2308 = vld [vmem:[%s21 + $0x8] sm:$0xf]
        %v2309 = vld [vmem:[%s21 + $0xc] sm:$0xf]
        %v2310 = vld [vmem:[#allocation16] sm:$0x1]
        %v2311 = vld [vmem:[%s25] sm:$0xf]
        %v2312 = vld [vmem:[%s25 + $0x4] sm:$0xf]
        %v2313 = vld [vmem:[%s25 + $0x8] sm:$0xf]
        %v2314 = vld [vmem:[%s25 + $0xc] sm:$0xf]
        %v2315 = vld [vmem:[%s25 + $0x10] sm:$0xf]
        %v2316 = vld [vmem:[%s25 + $0x14] sm:$0xf]
        %v2317 = vld [vmem:[%s25 + $0x18] sm:$0xf]
        %v2318 = vld [vmem:[%s25 + $0x1c] sm:$0xf]
        %v2319 = vld [vmem:[#allocation17] sm:$0x1]
        %v2320 = vld [vmem:[#allocation19] sm:$0x1]
        %v2321 = vld [vmem:[#allocation20] sm:$0x1]
        %v2322 = vpack.c.bf16 %v2305, %v2305
        %v2324 = vlaneseq
        %v2325 = vshrl.u32 %v2324, 7
        %v2326 = vsub.s32 0, %v2325
        %v2327 = vrot.slane %v2310, %v2326
        %v2333 = vunpack.c.l.b16 %v2306
        %v2334 = vunpack.c.l.b16 %v2307
        %v2335 = vunpack.c.l.b16 %v2308
        %v2336 = vunpack.c.l.b16 %v2309
        %v2337 = vpack.c.b16 %v2334, %v2333
        %v2338 = vpack.c.b16 %v2336, %v2335
        %v2342 = vsel %vm1698, %v2322, 0
        %2344 = vmatprep.subr.bf16.mxu0 0
        %2345 = vmatpush1.bf16.msra.mxu0 %v2337
        %2346 = vmatprep.subr.bf16.mxu0 0
        %2347 = vmatpush1.bf16.msra.mxu0 %v2338
        %2348 = vmatprep.subr.bf16.mxu0 0
        %2349 = vmatpush1.bf16.msra.mxu0 0
        %2350 = vmatprep.subr.bf16.mxu0 0
        %2351 = vmatpush1.bf16.msra.mxu0 0
        %2352 = vmatprep.subr.bf16.mxu0 0
        %2353 = vmatpush1.bf16.msra.mxu0 0
        %2354 = vmatprep.subr.bf16.mxu0 0
        %2355 = vmatpush1.bf16.msra.mxu0 0
        %2356 = vmatprep.subr.bf16.mxu0 0
        %2357 = vmatpush1.bf16.msra.mxu0 0
        %2358 = vmatprep.subr.bf16.mxu0 0
        %2359 = vmatpush1.bf16.msra.mxu0 0
        %2360 = vmatprep.subr.bf16.mxu0 0
        %2361 = vmatpush1.bf16.msra.mxu0 0
        %2362 = vmatprep.subr.bf16.mxu0 0
        %2363 = vmatpush1.bf16.msra.mxu0 0
        %2364 = vmatprep.subr.bf16.mxu0 0
        %2365 = vmatpush1.bf16.msra.mxu0 0
        %2366 = vmatprep.subr.bf16.mxu0 0
        %2367 = vmatpush1.bf16.msra.mxu0 0
        %2368 = vmatprep.subr.bf16.mxu0 0
        %2369 = vmatpush1.bf16.msra.mxu0 0
        %2370 = vmatprep.subr.bf16.mxu0 0
        %2371 = vmatpush1.bf16.msra.mxu0 0
        %2372 = vmatprep.subr.bf16.mxu0 0
        %2373 = vmatpush1.bf16.msra.mxu0 0
        %2374 = vmatprep.subr.bf16.mxu0 0
        %2375 = vmatpush1.bf16.msra.mxu0 0
        %2376 = vmatprep.mubr.bf16.mxu0 0
        %2377 = vmatmul.mubr.bf16.gmra.mrb[0].mxu0 %v2342
        %v2378 = vpop.f32.mrb[0].mxu0
        %v2379 = vadd.f32 %v2327, %v2378
        %v2380 = vpop.f32.mrb[0].mxu0
        %v2381 = vpop.f32.mrb[0].mxu0
        %v2382 = vpop.f32.mrb[0].mxu0
        %2383 = vdwg.mxu0
        %v2384 = vmax.f32 %v2379, 0.0
        %v2385 = vpack.c.bf16 %v2384, %v2384
        %v2387 = vlaneseq
        %v2388 = vshrl.u32 %v2387, 7
        %v2389 = vsub.s32 0, %v2388
        %v2390 = vrot.slane %v2319, %v2389
        %v2400 = vunpack.c.l.b16 %v2311
        %v2401 = vunpack.c.l.b16 %v2312
        %v2402 = vunpack.c.l.b16 %v2313
        %v2403 = vunpack.c.l.b16 %v2314
        %v2404 = vunpack.c.l.b16 %v2315
        %v2405 = vunpack.c.l.b16 %v2316
        %v2406 = vunpack.c.l.b16 %v2317
        %v2407 = vunpack.c.l.b16 %v2318
        %v2408 = vpack.c.b16 %v2401, %v2400
        %v2409 = vpack.c.b16 %v2403, %v2402
        %v2410 = vpack.c.b16 %v2405, %v2404
        %v2411 = vpack.c.b16 %v2407, %v2406
        %vm2416 = vcmask 523264
        %v2418 = vsel %vm2416, %v2385, 0
        %2420 = vmatprep.subr.bf16.mxu0 0
        %2421 = vmatpush1.bf16.msra.mxu0 %v2408
        %2422 = vmatprep.subr.bf16.mxu0 0
        %2423 = vmatpush1.bf16.msra.mxu0 %v2409
        %2424 = vmatprep.subr.bf16.mxu0 0
        %2425 = vmatpush1.bf16.msra.mxu0 %v2410
        %2426 = vmatprep.subr.bf16.mxu0 0
        %2427 = vmatpush1.bf16.msra.mxu0 %v2411
        %2428 = vmatprep.subr.bf16.mxu0 0
        %2429 = vmatpush1.bf16.msra.mxu0 0
        %2430 = vmatprep.subr.bf16.mxu0 0
        %2431 = vmatpush1.bf16.msra.mxu0 0
        %2432 = vmatprep.subr.bf16.mxu0 0
        %2433 = vmatpush1.bf16.msra.mxu0 0
        %2434 = vmatprep.subr.bf16.mxu0 0
        %2435 = vmatpush1.bf16.msra.mxu0 0
        %2436 = vmatprep.subr.bf16.mxu0 0
        %2437 = vmatpush1.bf16.msra.mxu0 0
        %2438 = vmatprep.subr.bf16.mxu0 0
        %2439 = vmatpush1.bf16.msra.mxu0 0
        %2440 = vmatprep.subr.bf16.mxu0 0
        %2441 = vmatpush1.bf16.msra.mxu0 0
        %2442 = vmatprep.subr.bf16.mxu0 0
        %2443 = vmatpush1.bf16.msra.mxu0 0
        %2444 = vmatprep.subr.bf16.mxu0 0
        %2445 = vmatpush1.bf16.msra.mxu0 0
        %2446 = vmatprep.subr.bf16.mxu0 0
        %2447 = vmatpush1.bf16.msra.mxu0 0
        %2448 = vmatprep.subr.bf16.mxu0 0
        %2449 = vmatpush1.bf16.msra.mxu0 0
        %2450 = vmatprep.subr.bf16.mxu0 0
        %2451 = vmatpush1.bf16.msra.mxu0 0
        %2452 = vmatprep.mubr.bf16.mxu0 0
        %2453 = vmatmul.mubr.bf16.gmra.mrb[0].mxu0 %v2418
        %v2454 = vpop.f32.mrb[0].mxu0
        %v2455 = vadd.f32 %v2390, %v2454
        %v2456 = vpop.f32.mrb[0].mxu0
        %v2457 = vpop.f32.mrb[0].mxu0
        %v2458 = vpop.f32.mrb[0].mxu0
        %2459 = vdwg.mxu0
        %v2460 = vadd.f32 %v2305, %v2455
        %v2461 = vsel %vm1698, %v2460, 0.0
        %2462 = vadd.xlane.f32.xlu0 %v2461
        %v2463 = vpop.xlane.xlu0 %2462
        %v2464 = vmul.f32 %v2463, %v2281
        %v2465 = vsub.f32 %v2460, %v2464
        %v2466 = vmul.f32 %v2465, %v2465
        %v2467 = vsel %vm1698, %v2466, 0.0
        %2468 = vadd.xlane.f32.xlu0 %v2467
        %v2469 = vpop.xlane.xlu0 %2468
        %v2470 = vmul.f32 %v2469, %v2281
        %v2471 = vadd.f32 %v2470, 1e-05
        %v2472 = vrsqrt.pop %v2471
        %v2473 = vmul.f32 %v2465, %v2472
        %v2475 = vlaneseq
        %v2476 = vshrl.u32 %v2475, 7
        %v2477 = vsub.s32 0, %v2476
        %v2478 = vrot.slane %v2320, %v2477
        %v2480 = vmul.f32 %v2473, %v2478
        %v2482 = vlaneseq
        %v2483 = vshrl.u32 %v2482, 7
        %v2484 = vsub.s32 0, %v2483
        %v2485 = vrot.slane %v2321, %v2484
        %v2487 = vadd.f32 %v2480, %v2485
        %s2488 = scalar_lea.vmem %s9, 16
        %v2489 = vld [vmem:[%s2488] sm:$0xf]
        %v2490 = vld [vmem:[%s2488 + $0x4] sm:$0xf]
        %v2491 = vld [vmem:[%s2488 + $0x8] sm:$0xf]
        %v2492 = vld [vmem:[%s2488 + $0xc] sm:$0xf]
        %s2493 = scalar_lea.vmem [#allocation10], 1
        %v2494 = vld [vmem:[%s2493] sm:$0x1]
        %s2495 = scalar_lea.vmem %s13, 16
        %v2496 = vld [vmem:[%s2495] sm:$0xf]
        %v2497 = vld [vmem:[%s2495 + $0x4] sm:$0xf]
        %v2498 = vld [vmem:[%s2495 + $0x8] sm:$0xf]
        %v2499 = vld [vmem:[%s2495 + $0xc] sm:$0xf]
        %s2500 = scalar_lea.vmem [#allocation11], 1
        %v2501 = vld [vmem:[%s2500] sm:$0x1]
        %s2502 = scalar_lea.vmem [#allocation13], 1
        %v2503 = vld [vmem:[%s2502] sm:$0x1]
        %s2504 = scalar_lea.vmem [#allocation14], 1
        %v2505 = vld [vmem:[%s2504] sm:$0x1]
        %v2506 = vpack.c.bf16 %v2487, %v2487
        %v2508 = vlaneseq
        %v2509 = vshrl.u32 %v2508, 7
        %v2510 = vsub.s32 0, %v2509
        %v2511 = vrot.slane %v2494, %v2510
        %v2517 = vunpack.c.l.b16 %v2489
        %v2518 = vunpack.c.l.b16 %v2490
        %v2519 = vunpack.c.l.b16 %v2491
        %v2520 = vunpack.c.l.b16 %v2492
        %v2521 = vpack.c.b16 %v2518, %v2517
        %v2522 = vpack.c.b16 %v2520, %v2519
        %v2526 = vsel %vm1698, %v2506, 0
        %2528 = vmatprep.subr.bf16.mxu0 0
        %2529 = vmatpush1.bf16.msra.mxu0 %v2521
        %2530 = vmatprep.subr.bf16.mxu0 0
        %2531 = vmatpush1.bf16.msra.mxu0 %v2522
        %2532 = vmatprep.subr.bf16.mxu0 0
        %2533 = vmatpush1.bf16.msra.mxu0 0
        %2534 = vmatprep.subr.bf16.mxu0 0
        %2535 = vmatpush1.bf16.msra.mxu0 0
        %2536 = vmatprep.subr.bf16.mxu0 0
        %2537 = vmatpush1.bf16.msra.mxu0 0
        %2538 = vmatprep.subr.bf16.mxu0 0
        %2539 = vmatpush1.bf16.msra.mxu0 0
        %2540 = vmatprep.subr.bf16.mxu0 0
        %2541 = vmatpush1.bf16.msra.mxu0 0
        %2542 = vmatprep.subr.bf16.mxu0 0
        %2543 = vmatpush1.bf16.msra.mxu0 0
        %2544 = vmatprep.subr.bf16.mxu0 0
        %2545 = vmatpush1.bf16.msra.mxu0 0
        %2546 = vmatprep.subr.bf16.mxu0 0
        %2547 = vmatpush1.bf16.msra.mxu0 0
        %2548 = vmatprep.subr.bf16.mxu0 0
        %2549 = vmatpush1.bf16.msra.mxu0 0
        %2550 = vmatprep.subr.bf16.mxu0 0
        %2551 = vmatpush1.bf16.msra.mxu0 0
        %2552 = vmatprep.subr.bf16.mxu0 0
        %2553 = vmatpush1.bf16.msra.mxu0 0
        %2554 = vmatprep.subr.bf16.mxu0 0
        %2555 = vmatpush1.bf16.msra.mxu0 0
        %2556 = vmatprep.subr.bf16.mxu0 0
        %2557 = vmatpush1.bf16.msra.mxu0 0
        %2558 = vmatprep.subr.bf16.mxu0 0
        %2559 = vmatpush1.bf16.msra.mxu0 0
        %2560 = vmatprep.mubr.bf16.mxu0 0
        %2561 = vmatmul.mubr.bf16.gmra.mrb[0].mxu0 %v2526
        %v2562 = vpop.f32.mrb[0].mxu0
        %v2563 = vadd.f32 %v2511, %v2562
        %v2564 = vpop.f32.mrb[0].mxu0
        %v2565 = vpop.f32.mrb[0].mxu0
        %v2566 = vpop.f32.mrb[0].mxu0
        %2567 = vdwg.mxu0
        %v2568 = vpack.c.bf16 %v2563, %v2563
        %2570 = vrot.lane.b32.xlu0 %v2568, 120
        %v2571 = vpop.permute.xlu0 %2570
        %2572 = vrot.lane.b32.xlu0 %v2568, 112
        %v2573 = vpop.permute.xlu0 %2572
        %2574 = vrot.lane.b32.xlu0 %v2568, 104
        %v2575 = vpop.permute.xlu0 %2574
        %2576 = vrot.lane.b32.xlu0 %v2568, 96
        %v2577 = vpop.permute.xlu0 %2576
        %v2579 = vsel %vm1752, %v2568, 0
        %v2582 = vsel %vm1752, %v2577, 0
        %2584 = vmatprep.subr.bf16.mxu0 0
        %2585 = vmatpush1.bf16.xpose.msra.mxu0 %v2582
        %2586 = vmatprep.subr.bf16.mxu0 0
        %2587 = vmatpush1.bf16.xpose.msra.mxu0 0
        %2588 = vmatprep.subr.bf16.mxu0 0
        %2589 = vmatpush1.bf16.xpose.msra.mxu0 0
        %2590 = vmatprep.subr.bf16.mxu0 0
        %2591 = vmatpush1.bf16.xpose.msra.mxu0 0
        %2592 = vmatprep.subr.bf16.mxu0 0
        %2593 = vmatpush1.bf16.xpose.msra.mxu0 0
        %2594 = vmatprep.subr.bf16.mxu0 0
        %2595 = vmatpush1.bf16.xpose.msra.mxu0 0
        %2596 = vmatprep.subr.bf16.mxu0 0
        %2597 = vmatpush1.bf16.xpose.msra.mxu0 0
        %2598 = vmatprep.subr.bf16.mxu0 0
        %2599 = vmatpush1.bf16.xpose.msra.mxu0 0
        %2600 = vmatprep.subr.bf16.mxu0 0
        %2601 = vmatpush1.bf16.xpose.msra.mxu0 0
        %2602 = vmatprep.subr.bf16.mxu0 0
        %2603 = vmatpush1.bf16.xpose.msra.mxu0 0
        %2604 = vmatprep.subr.bf16.mxu0 0
        %2605 = vmatpush1.bf16.xpose.msra.mxu0 0
        %2606 = vmatprep.subr.bf16.mxu0 0
        %2607 = vmatpush1.bf16.xpose.msra.mxu0 0
        %2608 = vmatprep.subr.bf16.mxu0 0
        %2609 = vmatpush1.bf16.xpose.msra.mxu0 0
        %2610 = vmatprep.subr.bf16.mxu0 0
        %2611 = vmatpush1.bf16.xpose.msra.mxu0 0
        %2612 = vmatprep.subr.bf16.mxu0 0
        %2613 = vmatpush1.bf16.xpose.msra.mxu0 0
        %2614 = vmatprep.subr.bf16.mxu0 0
        %2615 = vmatpush1.bf16.xpose.msra.mxu0 0
        %2616 = vmatprep.mubr.bf16.mxu0 0
        %2617 = vmatmul.mubr.bf16.gmra.mrb[0].mxu0 %v2579
        %v2618 = vpop.f32.mrb[0].mxu0
        %v2619 = vadd.f32 0.0, %v2618
        %v2620 = vpop.f32.mrb[0].mxu0
        %v2621 = vpop.f32.mrb[0].mxu0
        %v2622 = vpop.f32.mrb[0].mxu0
        %2623 = vdwg.mxu0
        %2624 = vrot.lane.b32.xlu0 %v2571, 96
        %v2625 = vpop.permute.xlu0 %2624
        %v2627 = vsel %vm1752, %v2571, 0
        %v2630 = vsel %vm1752, %v2625, 0
        %2632 = vmatprep.subr.bf16.mxu0 0
        %2633 = vmatpush1.bf16.xpose.msra.mxu0 %v2630
        %2634 = vmatprep.subr.bf16.mxu0 0
        %2635 = vmatpush1.bf16.xpose.msra.mxu0 0
        %2636 = vmatprep.subr.bf16.mxu0 0
        %2637 = vmatpush1.bf16.xpose.msra.mxu0 0
        %2638 = vmatprep.subr.bf16.mxu0 0
        %2639 = vmatpush1.bf16.xpose.msra.mxu0 0
        %2640 = vmatprep.subr.bf16.mxu0 0
        %2641 = vmatpush1.bf16.xpose.msra.mxu0 0
        %2642 = vmatprep.subr.bf16.mxu0 0
        %2643 = vmatpush1.bf16.xpose.msra.mxu0 0
        %2644 = vmatprep.subr.bf16.mxu0 0
        %2645 = vmatpush1.bf16.xpose.msra.mxu0 0
        %2646 = vmatprep.subr.bf16.mxu0 0
        %2647 = vmatpush1.bf16.xpose.msra.mxu0 0
        %2648 = vmatprep.subr.bf16.mxu0 0
        %2649 = vmatpush1.bf16.xpose.msra.mxu0 0
        %2650 = vmatprep.subr.bf16.mxu0 0
        %2651 = vmatpush1.bf16.xpose.msra.mxu0 0
        %2652 = vmatprep.subr.bf16.mxu0 0
        %2653 = vmatpush1.bf16.xpose.msra.mxu0 0
        %2654 = vmatprep.subr.bf16.mxu0 0
        %2655 = vmatpush1.bf16.xpose.msra.mxu0 0
        %2656 = vmatprep.subr.bf16.mxu0 0
        %2657 = vmatpush1.bf16.xpose.msra.mxu0 0
        %2658 = vmatprep.subr.bf16.mxu0 0
        %2659 = vmatpush1.bf16.xpose.msra.mxu0 0
        %2660 = vmatprep.subr.bf16.mxu0 0
        %2661 = vmatpush1.bf16.xpose.msra.mxu0 0
        %2662 = vmatprep.subr.bf16.mxu0 0
        %2663 = vmatpush1.bf16.xpose.msra.mxu0 0
        %2664 = vmatprep.mubr.bf16.mxu0 0
        %2665 = vmatmul.mubr.bf16.gmra.mrb[0].mxu0 %v2627
        %v2666 = vpop.f32.mrb[0].mxu0
        %v2667 = vadd.f32 0.0, %v2666
        %v2668 = vpop.f32.mrb[0].mxu0
        %v2669 = vpop.f32.mrb[0].mxu0
        %v2670 = vpop.f32.mrb[0].mxu0
        %2671 = vdwg.mxu0
        %2672 = vrot.lane.b32.xlu0 %v2573, 96
        %v2673 = vpop.permute.xlu0 %2672
        %v2675 = vsel %vm1752, %v2573, 0
        %v2678 = vsel %vm1752, %v2673, 0
        %2680 = vmatprep.subr.bf16.mxu0 0
        %2681 = vmatpush1.bf16.xpose.msra.mxu0 %v2678
        %2682 = vmatprep.subr.bf16.mxu0 0
        %2683 = vmatpush1.bf16.xpose.msra.mxu0 0
        %2684 = vmatprep.subr.bf16.mxu0 0
        %2685 = vmatpush1.bf16.xpose.msra.mxu0 0
        %2686 = vmatprep.subr.bf16.mxu0 0
        %2687 = vmatpush1.bf16.xpose.msra.mxu0 0
        %2688 = vmatprep.subr.bf16.mxu0 0
        %2689 = vmatpush1.bf16.xpose.msra.mxu0 0
        %2690 = vmatprep.subr.bf16.mxu0 0
        %2691 = vmatpush1.bf16.xpose.msra.mxu0 0
        %2692 = vmatprep.subr.bf16.mxu0 0
        %2693 = vmatpush1.bf16.xpose.msra.mxu0 0
        %2694 = vmatprep.subr.bf16.mxu0 0
        %2695 = vmatpush1.bf16.xpose.msra.mxu0 0
        %2696 = vmatprep.subr.bf16.mxu0 0
        %2697 = vmatpush1.bf16.xpose.msra.mxu0 0
        %2698 = vmatprep.subr.bf16.mxu0 0
        %2699 = vmatpush1.bf16.xpose.msra.mxu0 0
        %2700 = vmatprep.subr.bf16.mxu0 0
        %2701 = vmatpush1.bf16.xpose.msra.mxu0 0
        %2702 = vmatprep.subr.bf16.mxu0 0
        %2703 = vmatpush1.bf16.xpose.msra.mxu0 0
        %2704 = vmatprep.subr.bf16.mxu0 0
        %2705 = vmatpush1.bf16.xpose.msra.mxu0 0
        %2706 = vmatprep.subr.bf16.mxu0 0
        %2707 = vmatpush1.bf16.xpose.msra.mxu0 0
        %2708 = vmatprep.subr.bf16.mxu0 0
        %2709 = vmatpush1.bf16.xpose.msra.mxu0 0
        %2710 = vmatprep.subr.bf16.mxu0 0
        %2711 = vmatpush1.bf16.xpose.msra.mxu0 0
        %2712 = vmatprep.mubr.bf16.mxu0 0
        %2713 = vmatmul.mubr.bf16.gmra.mrb[0].mxu0 %v2675
        %v2714 = vpop.f32.mrb[0].mxu0
        %v2715 = vadd.f32 0.0, %v2714
        %v2716 = vpop.f32.mrb[0].mxu0
        %v2717 = vpop.f32.mrb[0].mxu0
        %v2718 = vpop.f32.mrb[0].mxu0
        %2719 = vdwg.mxu0
        %2720 = vrot.lane.b32.xlu0 %v2575, 96
        %v2721 = vpop.permute.xlu0 %2720
        %v2723 = vsel %vm1752, %v2575, 0
        %v2726 = vsel %vm1752, %v2721, 0
        %2728 = vmatprep.subr.bf16.mxu0 0
        %2729 = vmatpush1.bf16.xpose.msra.mxu0 %v2726
        %2730 = vmatprep.subr.bf16.mxu0 0
        %2731 = vmatpush1.bf16.xpose.msra.mxu0 0
        %2732 = vmatprep.subr.bf16.mxu0 0
        %2733 = vmatpush1.bf16.xpose.msra.mxu0 0
        %2734 = vmatprep.subr.bf16.mxu0 0
        %2735 = vmatpush1.bf16.xpose.msra.mxu0 0
        %2736 = vmatprep.subr.bf16.mxu0 0
        %2737 = vmatpush1.bf16.xpose.msra.mxu0 0
        %2738 = vmatprep.subr.bf16.mxu0 0
        %2739 = vmatpush1.bf16.xpose.msra.mxu0 0
        %2740 = vmatprep.subr.bf16.mxu0 0
        %2741 = vmatpush1.bf16.xpose.msra.mxu0 0
        %2742 = vmatprep.subr.bf16.mxu0 0
        %2743 = vmatpush1.bf16.xpose.msra.mxu0 0
        %2744 = vmatprep.subr.bf16.mxu0 0
        %2745 = vmatpush1.bf16.xpose.msra.mxu0 0
        %2746 = vmatprep.subr.bf16.mxu0 0
        %2747 = vmatpush1.bf16.xpose.msra.mxu0 0
        %2748 = vmatprep.subr.bf16.mxu0 0
        %2749 = vmatpush1.bf16.xpose.msra.mxu0 0
        %2750 = vmatprep.subr.bf16.mxu0 0
        %2751 = vmatpush1.bf16.xpose.msra.mxu0 0
        %2752 = vmatprep.subr.bf16.mxu0 0
        %2753 = vmatpush1.bf16.xpose.msra.mxu0 0
        %2754 = vmatprep.subr.bf16.mxu0 0
        %2755 = vmatpush1.bf16.xpose.msra.mxu0 0
        %2756 = vmatprep.subr.bf16.mxu0 0
        %2757 = vmatpush1.bf16.xpose.msra.mxu0 0
        %2758 = vmatprep.subr.bf16.mxu0 0
        %2759 = vmatpush1.bf16.xpose.msra.mxu0 0
        %2760 = vmatprep.mubr.bf16.mxu0 0
        %2761 = vmatmul.mubr.bf16.gmra.mrb[0].mxu0 %v2723
        %v2762 = vpop.f32.mrb[0].mxu0
        %v2763 = vadd.f32 0.0, %v2762
        %v2764 = vpop.f32.mrb[0].mxu0
        %v2765 = vpop.f32.mrb[0].mxu0
        %v2766 = vpop.f32.mrb[0].mxu0
        %2767 = vdwg.mxu0
        %v2768 = vmul.f32 %v2619, 0.35355338
        %v2769 = vmul.f32 %v2667, 0.35355338
        %v2770 = vmul.f32 %v2715, 0.35355338
        %v2771 = vmul.f32 %v2763, 0.35355338
        %v2772 = vadd.f32 %v2768, %v1951
        %v2773 = vadd.f32 %v2769, %v1951
        %v2774 = vadd.f32 %v2770, %v1951
        %v2775 = vadd.f32 %v2771, %v1951
        %v2776 = vsel %vm1752, %v2772, -inf
        %2777 = vmax.xlane.f32.xlu0 %v2776
        %v2778 = vpop.xlane.xlu0 %2777
        %v2779 = vsel %vm1752, %v2773, -inf
        %2780 = vmax.xlane.f32.xlu0 %v2779
        %v2781 = vpop.xlane.xlu0 %2780
        %v2782 = vsel %vm1752, %v2774, -inf
        %2783 = vmax.xlane.f32.xlu0 %v2782
        %v2784 = vpop.xlane.xlu0 %2783
        %v2785 = vsel %vm1752, %v2775, -inf
        %2786 = vmax.xlane.f32.xlu0 %v2785
        %v2787 = vpop.xlane.xlu0 %2786
        %v2788 = vsub.f32 %v2772, %v2778
        %v2789 = vsub.f32 %v2773, %v2781
        %v2790 = vsub.f32 %v2774, %v2784
        %v2791 = vsub.f32 %v2775, %v2787
        %v2792 = vmul.f32 %v2788, 1.442695
        %v2793 = vpow.pop %v2792
        %v2794 = vmul.f32 %v2789, 1.442695
        %v2795 = vpow.pop %v2794
        %v2796 = vmul.f32 %v2790, 1.442695
        %v2797 = vpow.pop %v2796
        %v2798 = vmul.f32 %v2791, 1.442695
        %v2799 = vpow.pop %v2798
        %v2800 = vsel %vm1752, %v2793, 0.0
        %2801 = vadd.xlane.f32.xlu0 %v2800
        %v2802 = vpop.xlane.xlu0 %2801
        %v2803 = vsel %vm1752, %v2795, 0.0
        %2804 = vadd.xlane.f32.xlu0 %v2803
        %v2805 = vpop.xlane.xlu0 %2804
        %v2806 = vsel %vm1752, %v2797, 0.0
        %2807 = vadd.xlane.f32.xlu0 %v2806
        %v2808 = vpop.xlane.xlu0 %2807
        %v2809 = vsel %vm1752, %v2799, 0.0
        %2810 = vadd.xlane.f32.xlu0 %v2809
        %v2811 = vpop.xlane.xlu0 %2810
        %v2812 = vrcp.pop %v2802
        %v2813 = vrcp.pop %v2805
        %v2814 = vrcp.pop %v2808
        %v2815 = vrcp.pop %v2811
        %v2816 = vmul.f32 %v2793, %v2812
        %v2817 = vmul.f32 %v2795, %v2813
        %v2818 = vmul.f32 %v2797, %v2814
        %v2819 = vmul.f32 %v2799, %v2815
        %v2820 = vpack.c.bf16 %v2816, %v2816
        %v2821 = vpack.c.bf16 %v2817, %v2817
        %v2822 = vpack.c.bf16 %v2818, %v2818
        %v2823 = vpack.c.bf16 %v2819, %v2819
        %2824 = vrot.lane.b32.xlu0 %v2568, 64
        %v2825 = vpop.permute.xlu0 %2824
        %v2827 = vsel %vm1752, %v2820, 0
        %v2830 = vsel %vm2010, %v2825, 0
        %2832 = vmatprep.subr.bf16.mxu0 0
        %2833 = vmatpush1.bf16.msra.mxu0 %v2830
        %2834 = vmatprep.subr.bf16.mxu0 0
        %2835 = vmatpush1.bf16.msra.mxu0 0
        %2836 = vmatprep.subr.bf16.mxu0 0
        %2837 = vmatpush1.bf16.msra.mxu0 0
        %2838 = vmatprep.subr.bf16.mxu0 0
        %2839 = vmatpush1.bf16.msra.mxu0 0
        %2840 = vmatprep.subr.bf16.mxu0 0
        %2841 = vmatpush1.bf16.msra.mxu0 0
        %2842 = vmatprep.subr.bf16.mxu0 0
        %2843 = vmatpush1.bf16.msra.mxu0 0
        %2844 = vmatprep.subr.bf16.mxu0 0
        %2845 = vmatpush1.bf16.msra.mxu0 0
        %2846 = vmatprep.subr.bf16.mxu0 0
        %2847 = vmatpush1.bf16.msra.mxu0 0
        %2848 = vmatprep.subr.bf16.mxu0 0
        %2849 = vmatpush1.bf16.msra.mxu0 0
        %2850 = vmatprep.subr.bf16.mxu0 0
        %2851 = vmatpush1.bf16.msra.mxu0 0
        %2852 = vmatprep.subr.bf16.mxu0 0
        %2853 = vmatpush1.bf16.msra.mxu0 0
        %2854 = vmatprep.subr.bf16.mxu0 0
        %2855 = vmatpush1.bf16.msra.mxu0 0
        %2856 = vmatprep.subr.bf16.mxu0 0
        %2857 = vmatpush1.bf16.msra.mxu0 0
        %2858 = vmatprep.subr.bf16.mxu0 0
        %2859 = vmatpush1.bf16.msra.mxu0 0
        %2860 = vmatprep.subr.bf16.mxu0 0
        %2861 = vmatpush1.bf16.msra.mxu0 0
        %2862 = vmatprep.subr.bf16.mxu0 0
        %2863 = vmatpush1.bf16.msra.mxu0 0
        %2864 = vmatprep.mubr.bf16.mxu0 0
        %2865 = vmatmul.mubr.bf16.gmra.mrb[0].mxu0 %v2827
        %v2866 = vpop.f32.mrb[0].mxu0
        %v2867 = vadd.f32 0.0, %v2866
        %v2868 = vpop.f32.mrb[0].mxu0
        %v2869 = vpop.f32.mrb[0].mxu0
        %v2870 = vpop.f32.mrb[0].mxu0
        %2871 = vdwg.mxu0
        %2872 = vrot.lane.b32.xlu0 %v2571, 64
        %v2873 = vpop.permute.xlu0 %2872
        %v2875 = vsel %vm1752, %v2821, 0
        %v2878 = vsel %vm2010, %v2873, 0
        %2880 = vmatprep.subr.bf16.mxu0 0
        %2881 = vmatpush1.bf16.msra.mxu0 %v2878
        %2882 = vmatprep.subr.bf16.mxu0 0
        %2883 = vmatpush1.bf16.msra.mxu0 0
        %2884 = vmatprep.subr.bf16.mxu0 0
        %2885 = vmatpush1.bf16.msra.mxu0 0
        %2886 = vmatprep.subr.bf16.mxu0 0
        %2887 = vmatpush1.bf16.msra.mxu0 0
        %2888 = vmatprep.subr.bf16.mxu0 0
        %2889 = vmatpush1.bf16.msra.mxu0 0
        %2890 = vmatprep.subr.bf16.mxu0 0
        %2891 = vmatpush1.bf16.msra.mxu0 0
        %2892 = vmatprep.subr.bf16.mxu0 0
        %2893 = vmatpush1.bf16.msra.mxu0 0
        %2894 = vmatprep.subr.bf16.mxu0 0
        %2895 = vmatpush1.bf16.msra.mxu0 0
        %2896 = vmatprep.subr.bf16.mxu0 0
        %2897 = vmatpush1.bf16.msra.mxu0 0
        %2898 = vmatprep.subr.bf16.mxu0 0
        %2899 = vmatpush1.bf16.msra.mxu0 0
        %2900 = vmatprep.subr.bf16.mxu0 0
        %2901 = vmatpush1.bf16.msra.mxu0 0
        %2902 = vmatprep.subr.bf16.mxu0 0
        %2903 = vmatpush1.bf16.msra.mxu0 0
        %2904 = vmatprep.subr.bf16.mxu0 0
        %2905 = vmatpush1.bf16.msra.mxu0 0
        %2906 = vmatprep.subr.bf16.mxu0 0
        %2907 = vmatpush1.bf16.msra.mxu0 0
        %2908 = vmatprep.subr.bf16.mxu0 0
        %2909 = vmatpush1.bf16.msra.mxu0 0
        %2910 = vmatprep.subr.bf16.mxu0 0
        %2911 = vmatpush1.bf16.msra.mxu0 0
        %2912 = vmatprep.mubr.bf16.mxu0 0
        %2913 = vmatmul.mubr.bf16.gmra.mrb[0].mxu0 %v2875
        %v2914 = vpop.f32.mrb[0].mxu0
        %v2915 = vadd.f32 0.0, %v2914
        %v2916 = vpop.f32.mrb[0].mxu0
        %v2917 = vpop.f32.mrb[0].mxu0
        %v2918 = vpop.f32.mrb[0].mxu0
        %2919 = vdwg.mxu0
        %2920 = vrot.lane.b32.xlu0 %v2573, 64
        %v2921 = vpop.permute.xlu0 %2920
        %v2923 = vsel %vm1752, %v2822, 0
        %v2926 = vsel %vm2010, %v2921, 0
        %2928 = vmatprep.subr.bf16.mxu0 0
        %2929 = vmatpush1.bf16.msra.mxu0 %v2926
        %2930 = vmatprep.subr.bf16.mxu0 0
        %2931 = vmatpush1.bf16.msra.mxu0 0
        %2932 = vmatprep.subr.bf16.mxu0 0
        %2933 = vmatpush1.bf16.msra.mxu0 0
        %2934 = vmatprep.subr.bf16.mxu0 0
        %2935 = vmatpush1.bf16.msra.mxu0 0
        %2936 = vmatprep.subr.bf16.mxu0 0
        %2937 = vmatpush1.bf16.msra.mxu0 0
        %2938 = vmatprep.subr.bf16.mxu0 0
        %2939 = vmatpush1.bf16.msra.mxu0 0
        %2940 = vmatprep.subr.bf16.mxu0 0
        %2941 = vmatpush1.bf16.msra.mxu0 0
        %2942 = vmatprep.subr.bf16.mxu0 0
        %2943 = vmatpush1.bf16.msra.mxu0 0
        %2944 = vmatprep.subr.bf16.mxu0 0
        %2945 = vmatpush1.bf16.msra.mxu0 0
        %2946 = vmatprep.subr.bf16.mxu0 0
        %2947 = vmatpush1.bf16.msra.mxu0 0
        %2948 = vmatprep.subr.bf16.mxu0 0
        %2949 = vmatpush1.bf16.msra.mxu0 0
        %2950 = vmatprep.subr.bf16.mxu0 0
        %2951 = vmatpush1.bf16.msra.mxu0 0
        %2952 = vmatprep.subr.bf16.mxu0 0
        %2953 = vmatpush1.bf16.msra.mxu0 0
        %2954 = vmatprep.subr.bf16.mxu0 0
        %2955 = vmatpush1.bf16.msra.mxu0 0
        %2956 = vmatprep.subr.bf16.mxu0 0
        %2957 = vmatpush1.bf16.msra.mxu0 0
        %2958 = vmatprep.subr.bf16.mxu0 0
        %2959 = vmatpush1.bf16.msra.mxu0 0
        %2960 = vmatprep.mubr.bf16.mxu0 0
        %2961 = vmatmul.mubr.bf16.gmra.mrb[0].mxu0 %v2923
        %v2962 = vpop.f32.mrb[0].mxu0
        %v2963 = vadd.f32 0.0, %v2962
        %v2964 = vpop.f32.mrb[0].mxu0
        %v2965 = vpop.f32.mrb[0].mxu0
        %v2966 = vpop.f32.mrb[0].mxu0
        %2967 = vdwg.mxu0
        %2968 = vrot.lane.b32.xlu0 %v2575, 64
        %v2969 = vpop.permute.xlu0 %2968
        %v2971 = vsel %vm1752, %v2823, 0
        %v2974 = vsel %vm2010, %v2969, 0
        %2976 = vmatprep.subr.bf16.mxu0 0
        %2977 = vmatpush1.bf16.msra.mxu0 %v2974
        %2978 = vmatprep.subr.bf16.mxu0 0
        %2979 = vmatpush1.bf16.msra.mxu0 0
        %2980 = vmatprep.subr.bf16.mxu0 0
        %2981 = vmatpush1.bf16.msra.mxu0 0
        %2982 = vmatprep.subr.bf16.mxu0 0
        %2983 = vmatpush1.bf16.msra.mxu0 0
        %2984 = vmatprep.subr.bf16.mxu0 0
        %2985 = vmatpush1.bf16.msra.mxu0 0
        %2986 = vmatprep.subr.bf16.mxu0 0
        %2987 = vmatpush1.bf16.msra.mxu0 0
        %2988 = vmatprep.subr.bf16.mxu0 0
        %2989 = vmatpush1.bf16.msra.mxu0 0
        %2990 = vmatprep.subr.bf16.mxu0 0
        %2991 = vmatpush1.bf16.msra.mxu0 0
        %2992 = vmatprep.subr.bf16.mxu0 0
        %2993 = vmatpush1.bf16.msra.mxu0 0
        %2994 = vmatprep.subr.bf16.mxu0 0
        %2995 = vmatpush1.bf16.msra.mxu0 0
        %2996 = vmatprep.subr.bf16.mxu0 0
        %2997 = vmatpush1.bf16.msra.mxu0 0
        %2998 = vmatprep.subr.bf16.mxu0 0
        %2999 = vmatpush1.bf16.msra.mxu0 0
        %3000 = vmatprep.subr.bf16.mxu0 0
        %3001 = vmatpush1.bf16.msra.mxu0 0
        %3002 = vmatprep.subr.bf16.mxu0 0
        %3003 = vmatpush1.bf16.msra.mxu0 0
        %3004 = vmatprep.subr.bf16.mxu0 0
        %3005 = vmatpush1.bf16.msra.mxu0 0
        %3006 = vmatprep.subr.bf16.mxu0 0
        %3007 = vmatpush1.bf16.msra.mxu0 0
        %3008 = vmatprep.mubr.bf16.mxu0 0
        %3009 = vmatmul.mubr.bf16.gmra.mrb[0].mxu0 %v2971
        %v3010 = vpop.f32.mrb[0].mxu0
        %v3011 = vadd.f32 0.0, %v3010
        %v3012 = vpop.f32.mrb[0].mxu0
        %v3013 = vpop.f32.mrb[0].mxu0
        %v3014 = vpop.f32.mrb[0].mxu0
        %3015 = vdwg.mxu0
        %3017 = vrot.lane.b32.xlu0 %v2915, 8
        %v3018 = vpop.permute.xlu0 %3017
        %3021 = vrot.lane.b32.xlu0 %v2963, 16
        %v3022 = vpop.permute.xlu0 %3021
        %3025 = vrot.lane.b32.xlu0 %v3011, 24
        %v3026 = vpop.permute.xlu0 %3025
        %v3028 = vsel %vm1752, %v2867, %v3018
        %v3029 = vsel %vm2211, %v3028, %v3022
        %v3030 = vsel %vm2213, %v3029, %v3026
        %v3031 = vpack.c.bf16 %v3030, %v3030
        %v3033 = vlaneseq
        %v3034 = vshrl.u32 %v3033, 7
        %v3035 = vsub.s32 0, %v3034
        %v3036 = vrot.slane %v2501, %v3035
        %v3042 = vunpack.c.l.b16 %v2496
        %v3043 = vunpack.c.l.b16 %v2497
        %v3044 = vunpack.c.l.b16 %v2498
        %v3045 = vunpack.c.l.b16 %v2499
        %v3046 = vpack.c.b16 %v3043, %v3042
        %v3047 = vpack.c.b16 %v3045, %v3044
        %v3051 = vsel %vm1698, %v3031, 0
        %3053 = vmatprep.subr.bf16.mxu0 0
        %3054 = vmatpush1.bf16.msra.mxu0 %v3046
        %3055 = vmatprep.subr.bf16.mxu0 0
        %3056 = vmatpush1.bf16.msra.mxu0 %v3047
        %3057 = vmatprep.subr.bf16.mxu0 0
        %3058 = vmatpush1.bf16.msra.mxu0 0
        %3059 = vmatprep.subr.bf16.mxu0 0
        %3060 = vmatpush1.bf16.msra.mxu0 0
        %3061 = vmatprep.subr.bf16.mxu0 0
        %3062 = vmatpush1.bf16.msra.mxu0 0
        %3063 = vmatprep.subr.bf16.mxu0 0
        %3064 = vmatpush1.bf16.msra.mxu0 0
        %3065 = vmatprep.subr.bf16.mxu0 0
        %3066 = vmatpush1.bf16.msra.mxu0 0
        %3067 = vmatprep.subr.bf16.mxu0 0
        %3068 = vmatpush1.bf16.msra.mxu0 0
        %3069 = vmatprep.subr.bf16.mxu0 0
        %3070 = vmatpush1.bf16.msra.mxu0 0
        %3071 = vmatprep.subr.bf16.mxu0 0
        %3072 = vmatpush1.bf16.msra.mxu0 0
        %3073 = vmatprep.subr.bf16.mxu0 0
        %3074 = vmatpush1.bf16.msra.mxu0 0
        %3075 = vmatprep.subr.bf16.mxu0 0
        %3076 = vmatpush1.bf16.msra.mxu0 0
        %3077 = vmatprep.subr.bf16.mxu0 0
        %3078 = vmatpush1.bf16.msra.mxu0 0
        %3079 = vmatprep.subr.bf16.mxu0 0
        %3080 = vmatpush1.bf16.msra.mxu0 0
        %3081 = vmatprep.subr.bf16.mxu0 0
        %3082 = vmatpush1.bf16.msra.mxu0 0
        %3083 = vmatprep.subr.bf16.mxu0 0
        %3084 = vmatpush1.bf16.msra.mxu0 0
        %3085 = vmatprep.mubr.bf16.mxu0 0
        %3086 = vmatmul.mubr.bf16.gmra.mrb[0].mxu0 %v3051
        %v3087 = vpop.f32.mrb[0].mxu0
        %v3088 = vadd.f32 %v3036, %v3087
        %v3089 = vpop.f32.mrb[0].mxu0
        %v3090 = vpop.f32.mrb[0].mxu0
        %v3091 = vpop.f32.mrb[0].mxu0
        %3092 = vdwg.mxu0
        %v3093 = vadd.f32 %v2487, %v3088
        %v3094 = vsel %vm1698, %v3093, 0.0
        %3095 = vadd.xlane.f32.xlu0 %v3094
        %v3096 = vpop.xlane.xlu0 %3095
        %v3097 = vmul.f32 %v3096, %v2281
        %v3098 = vsub.f32 %v3093, %v3097
        %v3099 = vmul.f32 %v3098, %v3098
        %v3100 = vsel %vm1698, %v3099, 0.0
        %3101 = vadd.xlane.f32.xlu0 %v3100
        %v3102 = vpop.xlane.xlu0 %3101
        %v3103 = vmul.f32 %v3102, %v2281
        %v3104 = vadd.f32 %v3103, 1e-05
        %v3105 = vrsqrt.pop %v3104
        %v3106 = vmul.f32 %v3098, %v3105
        %v3108 = vlaneseq
        %v3109 = vshrl.u32 %v3108, 7
        %v3110 = vsub.s32 0, %v3109
        %v3111 = vrot.slane %v2503, %v3110
        %v3113 = vmul.f32 %v3106, %v3111
        %v3115 = vlaneseq
        %v3116 = vshrl.u32 %v3115, 7
        %v3117 = vsub.s32 0, %v3116
        %v3118 = vrot.slane %v2505, %v3117
        %v3120 = vadd.f32 %v3113, %v3118
        %s3121 = scalar_lea.vmem %s21, 16
        %v3122 = vld [vmem:[%s3121] sm:$0xf]
        %v3123 = vld [vmem:[%s3121 + $0x4] sm:$0xf]
        %v3124 = vld [vmem:[%s3121 + $0x8] sm:$0xf]
        %v3125 = vld [vmem:[%s3121 + $0xc] sm:$0xf]
        %s3126 = scalar_lea.vmem [#allocation16], 1
        %v3127 = vld [vmem:[%s3126] sm:$0x1]
        %s3128 = scalar_lea.vmem %s25, 32
        %v3129 = vld [vmem:[%s3128] sm:$0xf]
        %v3130 = vld [vmem:[%s3128 + $0x4] sm:$0xf]
        %v3131 = vld [vmem:[%s3128 + $0x8] sm:$0xf]
        %v3132 = vld [vmem:[%s3128 + $0xc] sm:$0xf]
        %v3133 = vld [vmem:[%s3128 + $0x10] sm:$0xf]
        %v3134 = vld [vmem:[%s3128 + $0x14] sm:$0xf]
        %v3135 = vld [vmem:[%s3128 + $0x18] sm:$0xf]
        %v3136 = vld [vmem:[%s3128 + $0x1c] sm:$0xf]
        %s3137 = scalar_lea.vmem [#allocation17], 1
        %v3138 = vld [vmem:[%s3137] sm:$0x1]
        %s3139 = scalar_lea.vmem [#allocation19], 1
        %v3140 = vld [vmem:[%s3139] sm:$0x1]
        %s3141 = scalar_lea.vmem [#allocation20], 1
        %v3142 = vld [vmem:[%s3141] sm:$0x1]
        %v3143 = vpack.c.bf16 %v3120, %v3120
        %v3145 = vlaneseq
        %v3146 = vshrl.u32 %v3145, 7
        %v3147 = vsub.s32 0, %v3146
        %v3148 = vrot.slane %v3127, %v3147
        %v3154 = vunpack.c.l.b16 %v3122
        %v3155 = vunpack.c.l.b16 %v3123
        %v3156 = vunpack.c.l.b16 %v3124
        %v3157 = vunpack.c.l.b16 %v3125
        %v3158 = vpack.c.b16 %v3155, %v3154
        %v3159 = vpack.c.b16 %v3157, %v3156
        %v3163 = vsel %vm1698, %v3143, 0
        %3165 = vmatprep.subr.bf16.mxu0 0
        %3166 = vmatpush1.bf16.msra.mxu0 %v3158
        %3167 = vmatprep.subr.bf16.mxu0 0
        %3168 = vmatpush1.bf16.msra.mxu0 %v3159
        %3169 = vmatprep.subr.bf16.mxu0 0
        %3170 = vmatpush1.bf16.msra.mxu0 0
        %3171 = vmatprep.subr.bf16.mxu0 0
        %3172 = vmatpush1.bf16.msra.mxu0 0
        %3173 = vmatprep.subr.bf16.mxu0 0
        %3174 = vmatpush1.bf16.msra.mxu0 0
        %3175 = vmatprep.subr.bf16.mxu0 0
        %3176 = vmatpush1.bf16.msra.mxu0 0
        %3177 = vmatprep.subr.bf16.mxu0 0
        %3178 = vmatpush1.bf16.msra.mxu0 0
        %3179 = vmatprep.subr.bf16.mxu0 0
        %3180 = vmatpush1.bf16.msra.mxu0 0
        %3181 = vmatprep.subr.bf16.mxu0 0
        %3182 = vmatpush1.bf16.msra.mxu0 0
        %3183 = vmatprep.subr.bf16.mxu0 0
        %3184 = vmatpush1.bf16.msra.mxu0 0
        %3185 = vmatprep.subr.bf16.mxu0 0
        %3186 = vmatpush1.bf16.msra.mxu0 0
        %3187 = vmatprep.subr.bf16.mxu0 0
        %3188 = vmatpush1.bf16.msra.mxu0 0
        %3189 = vmatprep.subr.bf16.mxu0 0
        %3190 = vmatpush1.bf16.msra.mxu0 0
        %3191 = vmatprep.subr.bf16.mxu0 0
        %3192 = vmatpush1.bf16.msra.mxu0 0
        %3193 = vmatprep.subr.bf16.mxu0 0
        %3194 = vmatpush1.bf16.msra.mxu0 0
        %3195 = vmatprep.subr.bf16.mxu0 0
        %3196 = vmatpush1.bf16.msra.mxu0 0
        %3197 = vmatprep.mubr.bf16.mxu0 0
        %3198 = vmatmul.mubr.bf16.gmra.mrb[0].mxu0 %v3163
        %v3199 = vpop.f32.mrb[0].mxu0
        %v3200 = vadd.f32 %v3148, %v3199
        %v3201 = vpop.f32.mrb[0].mxu0
        %v3202 = vpop.f32.mrb[0].mxu0
        %v3203 = vpop.f32.mrb[0].mxu0
        %3204 = vdwg.mxu0
        %v3205 = vmax.f32 %v3200, 0.0
        %v3206 = vpack.c.bf16 %v3205, %v3205
        %v3208 = vlaneseq
        %v3209 = vshrl.u32 %v3208, 7
        %v3210 = vsub.s32 0, %v3209
        %v3211 = vrot.slane %v3138, %v3210
        %v3221 = vunpack.c.l.b16 %v3129
        %v3222 = vunpack.c.l.b16 %v3130
        %v3223 = vunpack.c.l.b16 %v3131
        %v3224 = vunpack.c.l.b16 %v3132
        %v3225 = vunpack.c.l.b16 %v3133
        %v3226 = vunpack.c.l.b16 %v3134
        %v3227 = vunpack.c.l.b16 %v3135
        %v3228 = vunpack.c.l.b16 %v3136
        %v3229 = vpack.c.b16 %v3222, %v3221
        %v3230 = vpack.c.b16 %v3224, %v3223
        %v3231 = vpack.c.b16 %v3226, %v3225
        %v3232 = vpack.c.b16 %v3228, %v3227
        %v3238 = vsel %vm2416, %v3206, 0
        %3240 = vmatprep.subr.bf16.mxu0 0
        %3241 = vmatpush1.bf16.msra.mxu0 %v3229
        %3242 = vmatprep.subr.bf16.mxu0 0
        %3243 = vmatpush1.bf16.msra.mxu0 %v3230
        %3244 = vmatprep.subr.bf16.mxu0 0
        %3245 = vmatpush1.bf16.msra.mxu0 %v3231
        %3246 = vmatprep.subr.bf16.mxu0 0
        %3247 = vmatpush1.bf16.msra.mxu0 %v3232
        %3248 = vmatprep.subr.bf16.mxu0 0
        %3249 = vmatpush1.bf16.msra.mxu0 0
        %3250 = vmatprep.subr.bf16.mxu0 0
        %3251 = vmatpush1.bf16.msra.mxu0 0
        %3252 = vmatprep.subr.bf16.mxu0 0
        %3253 = vmatpush1.bf16.msra.mxu0 0
        %3254 = vmatprep.subr.bf16.mxu0 0
        %3255 = vmatpush1.bf16.msra.mxu0 0
        %3256 = vmatprep.subr.bf16.mxu0 0
        %3257 = vmatpush1.bf16.msra.mxu0 0
        %3258 = vmatprep.subr.bf16.mxu0 0
        %3259 = vmatpush1.bf16.msra.mxu0 0
        %3260 = vmatprep.subr.bf16.mxu0 0
        %3261 = vmatpush1.bf16.msra.mxu0 0
        %3262 = vmatprep.subr.bf16.mxu0 0
        %3263 = vmatpush1.bf16.msra.mxu0 0
        %3264 = vmatprep.subr.bf16.mxu0 0
        %3265 = vmatpush1.bf16.msra.mxu0 0
        %3266 = vmatprep.subr.bf16.mxu0 0
        %3267 = vmatpush1.bf16.msra.mxu0 0
        %3268 = vmatprep.subr.bf16.mxu0 0
        %3269 = vmatpush1.bf16.msra.mxu0 0
        %3270 = vmatprep.subr.bf16.mxu0 0
        %3271 = vmatpush1.bf16.msra.mxu0 0
        %3272 = vmatprep.mubr.bf16.mxu0 0
        %3273 = vmatmul.mubr.bf16.gmra.mrb[0].mxu0 %v3238
        %v3274 = vpop.f32.mrb[0].mxu0
        %v3275 = vadd.f32 %v3211, %v3274
        %v3276 = vpop.f32.mrb[0].mxu0
        %v3277 = vpop.f32.mrb[0].mxu0
        %v3278 = vpop.f32.mrb[0].mxu0
        %3279 = vdwg.mxu0
        %v3280 = vadd.f32 %v3120, %v3275
        %v3281 = vsel %vm1698, %v3280, 0.0
        %3282 = vadd.xlane.f32.xlu0 %v3281
        %v3283 = vpop.xlane.xlu0 %3282
        %v3284 = vmul.f32 %v3283, %v2281
        %v3285 = vsub.f32 %v3280, %v3284
        %v3286 = vmul.f32 %v3285, %v3285
        %v3287 = vsel %vm1698, %v3286, 0.0
        %3288 = vadd.xlane.f32.xlu0 %v3287
        %v3289 = vpop.xlane.xlu0 %3288
        %v3290 = vmul.f32 %v3289, %v2281
        %v3291 = vadd.f32 %v3290, 1e-05
        %v3292 = vrsqrt.pop %v3291
        %v3293 = vmul.f32 %v3285, %v3292
        %v3295 = vlaneseq
        %v3296 = vshrl.u32 %v3295, 7
        %v3297 = vsub.s32 0, %v3296
        %v3298 = vrot.slane %v3140, %v3297
        %v3300 = vmul.f32 %v3293, %v3298
        %v3302 = vlaneseq
        %v3303 = vshrl.u32 %v3302, 7
        %v3304 = vsub.s32 0, %v3303
        %v3305 = vrot.slane %v3142, %v3304
        %v3307 = vadd.f32 %v3300, %v3305
        %v3308 = vld [vmem:[%s73] sm:$0x1]
        %v3309 = vld [vmem:[%s75] sm:$0x1]
        %v3310 = vsel %vm1698, %v3307, 0.0
        %3311 = vadd.xlane.f32.xlu0 %v3310
        %v3312 = vpop.xlane.xlu0 %3311
        %v3313 = vmul.f32 %v3312, %v2281
        %v3314 = vsub.f32 %v3307, %v3313
        %v3315 = vmul.f32 %v3314, %v3314
        %v3316 = vsel %vm1698, %v3315, 0.0
        %3317 = vadd.xlane.f32.xlu0 %v3316
        %v3318 = vpop.xlane.xlu0 %3317
        %v3319 = vmul.f32 %v3318, %v2281
        %v3320 = vadd.f32 %v3319, 1e-05
        %v3321 = vrsqrt.pop %v3320
        %v3322 = vmul.f32 %v3314, %v3321
        %v3324 = vlaneseq
        %v3325 = vshrl.u32 %v3324, 7
        %v3326 = vsub.s32 0, %v3325
        %v3327 = vrot.slane %v3308, %v3326
        %v3329 = vmul.f32 %v3322, %v3327
        %v3331 = vlaneseq
        %v3332 = vshrl.u32 %v3331, 7
        %v3333 = vsub.s32 0, %v3332
        %v3334 = vrot.slane %v3309, %v3333
        %v3336 = vadd.f32 %v3329, %v3334
        %v3337 = vpack.c.bf16 %v3336, %v3336
        %v3338 = vld [vmem:[%s33] sm:$0xf]
        %v3339 = vld [vmem:[%s33 + $0x4] sm:$0xf]
        %v3340 = vld [vmem:[%s33 + $0x8] sm:$0xf]
        %v3341 = vld [vmem:[%s33 + $0xc] sm:$0xf]
        %v3342 = vld [vmem:[#allocation22] sm:$0x1]
        %v3343 = vld [vmem:[%s37] sm:$0xf]
        %v3344 = vld [vmem:[%s37 + $0x4] sm:$0xf]
        %v3345 = vld [vmem:[%s37 + $0x8] sm:$0xf]
        %v3346 = vld [vmem:[%s37 + $0xc] sm:$0xf]
        %v3347 = vld [vmem:[#allocation23] sm:$0x1]
        %v3348 = vld [vmem:[#allocation25] sm:$0x1]
        %v3349 = vld [vmem:[#allocation26] sm:$0x1]
        %v3350 = vpack.c.bf16 %v1664, %v1664
        %v3352 = vlaneseq
        %v3353 = vshrl.u32 %v3352, 7
        %v3354 = vsub.s32 0, %v3353
        %v3355 = vrot.slane %v3342, %v3354
        %v3361 = vunpack.c.l.b16 %v3338
        %v3362 = vunpack.c.l.b16 %v3339
        %v3363 = vunpack.c.l.b16 %v3340
        %v3364 = vunpack.c.l.b16 %v3341
        %v3365 = vpack.c.b16 %v3362, %v3361
        %v3366 = vpack.c.b16 %v3364, %v3363
        %v3370 = vsel %vm1698, %v3350, 0
        %3372 = vmatprep.subr.bf16.mxu0 0
        %3373 = vmatpush1.bf16.msra.mxu0 %v3365
        %3374 = vmatprep.subr.bf16.mxu0 0
        %3375 = vmatpush1.bf16.msra.mxu0 %v3366
        %3376 = vmatprep.subr.bf16.mxu0 0
        %3377 = vmatpush1.bf16.msra.mxu0 0
        %3378 = vmatprep.subr.bf16.mxu0 0
        %3379 = vmatpush1.bf16.msra.mxu0 0
        %3380 = vmatprep.subr.bf16.mxu0 0
        %3381 = vmatpush1.bf16.msra.mxu0 0
        %3382 = vmatprep.subr.bf16.mxu0 0
        %3383 = vmatpush1.bf16.msra.mxu0 0
        %3384 = vmatprep.subr.bf16.mxu0 0
        %3385 = vmatpush1.bf16.msra.mxu0 0
        %3386 = vmatprep.subr.bf16.mxu0 0
        %3387 = vmatpush1.bf16.msra.mxu0 0
        %3388 = vmatprep.subr.bf16.mxu0 0
        %3389 = vmatpush1.bf16.msra.mxu0 0
        %3390 = vmatprep.subr.bf16.mxu0 0
        %3391 = vmatpush1.bf16.msra.mxu0 0
        %3392 = vmatprep.subr.bf16.mxu0 0
        %3393 = vmatpush1.bf16.msra.mxu0 0
        %3394 = vmatprep.subr.bf16.mxu0 0
        %3395 = vmatpush1.bf16.msra.mxu0 0
        %3396 = vmatprep.subr.bf16.mxu0 0
        %3397 = vmatpush1.bf16.msra.mxu0 0
        %3398 = vmatprep.subr.bf16.mxu0 0
        %3399 = vmatpush1.bf16.msra.mxu0 0
        %3400 = vmatprep.subr.bf16.mxu0 0
        %3401 = vmatpush1.bf16.msra.mxu0 0
        %3402 = vmatprep.subr.bf16.mxu0 0
        %3403 = vmatpush1.bf16.msra.mxu0 0
        %3404 = vmatprep.mubr.bf16.mxu0 0
        %3405 = vmatmul.mubr.bf16.gmra.mrb[0].mxu0 %v3370
        %v3406 = vpop.f32.mrb[0].mxu0
        %v3407 = vadd.f32 %v3355, %v3406
        %v3408 = vpop.f32.mrb[0].mxu0
        %v3409 = vpop.f32.mrb[0].mxu0
        %v3410 = vpop.f32.mrb[0].mxu0
        %3411 = vdwg.mxu0
        %v3412 = vpack.c.bf16 %v3407, %v3407
        %3414 = vrot.lane.b32.xlu0 %v3412, 120
        %v3415 = vpop.permute.xlu0 %3414
        %3416 = vrot.lane.b32.xlu0 %v3412, 112
        %v3417 = vpop.permute.xlu0 %3416
        %3418 = vrot.lane.b32.xlu0 %v3412, 104
        %v3419 = vpop.permute.xlu0 %3418
        %3420 = vrot.lane.b32.xlu0 %v3412, 96
        %v3421 = vpop.permute.xlu0 %3420
        %v3423 = vsel %vm1752, %v3412, 0
        %v3426 = vsel %vm1752, %v3421, 0
        %3428 = vmatprep.subr.bf16.mxu0 0
        %3429 = vmatpush1.bf16.xpose.msra.mxu0 %v3426
        %3430 = vmatprep.subr.bf16.mxu0 0
        %3431 = vmatpush1.bf16.xpose.msra.mxu0 0
        %3432 = vmatprep.subr.bf16.mxu0 0
        %3433 = vmatpush1.bf16.xpose.msra.mxu0 0
        %3434 = vmatprep.subr.bf16.mxu0 0
        %3435 = vmatpush1.bf16.xpose.msra.mxu0 0
        %3436 = vmatprep.subr.bf16.mxu0 0
        %3437 = vmatpush1.bf16.xpose.msra.mxu0 0
        %3438 = vmatprep.subr.bf16.mxu0 0
        %3439 = vmatpush1.bf16.xpose.msra.mxu0 0
        %3440 = vmatprep.subr.bf16.mxu0 0
        %3441 = vmatpush1.bf16.xpose.msra.mxu0 0
        %3442 = vmatprep.subr.bf16.mxu0 0
        %3443 = vmatpush1.bf16.xpose.msra.mxu0 0
        %3444 = vmatprep.subr.bf16.mxu0 0
        %3445 = vmatpush1.bf16.xpose.msra.mxu0 0
        %3446 = vmatprep.subr.bf16.mxu0 0
        %3447 = vmatpush1.bf16.xpose.msra.mxu0 0
        %3448 = vmatprep.subr.bf16.mxu0 0
        %3449 = vmatpush1.bf16.xpose.msra.mxu0 0
        %3450 = vmatprep.subr.bf16.mxu0 0
        %3451 = vmatpush1.bf16.xpose.msra.mxu0 0
        %3452 = vmatprep.subr.bf16.mxu0 0
        %3453 = vmatpush1.bf16.xpose.msra.mxu0 0
        %3454 = vmatprep.subr.bf16.mxu0 0
        %3455 = vmatpush1.bf16.xpose.msra.mxu0 0
        %3456 = vmatprep.subr.bf16.mxu0 0
        %3457 = vmatpush1.bf16.xpose.msra.mxu0 0
        %3458 = vmatprep.subr.bf16.mxu0 0
        %3459 = vmatpush1.bf16.xpose.msra.mxu0 0
        %3460 = vmatprep.mubr.bf16.mxu0 0
        %3461 = vmatmul.mubr.bf16.gmra.mrb[0].mxu0 %v3423
        %v3462 = vpop.f32.mrb[0].mxu0
        %v3463 = vadd.f32 0.0, %v3462
        %v3464 = vpop.f32.mrb[0].mxu0
        %v3465 = vpop.f32.mrb[0].mxu0
        %v3466 = vpop.f32.mrb[0].mxu0
        %3467 = vdwg.mxu0
        %3468 = vrot.lane.b32.xlu0 %v3415, 96
        %v3469 = vpop.permute.xlu0 %3468
        %v3471 = vsel %vm1752, %v3415, 0
        %v3474 = vsel %vm1752, %v3469, 0
        %3476 = vmatprep.subr.bf16.mxu0 0
        %3477 = vmatpush1.bf16.xpose.msra.mxu0 %v3474
        %3478 = vmatprep.subr.bf16.mxu0 0
        %3479 = vmatpush1.bf16.xpose.msra.mxu0 0
        %3480 = vmatprep.subr.bf16.mxu0 0
        %3481 = vmatpush1.bf16.xpose.msra.mxu0 0
        %3482 = vmatprep.subr.bf16.mxu0 0
        %3483 = vmatpush1.bf16.xpose.msra.mxu0 0
        %3484 = vmatprep.subr.bf16.mxu0 0
        %3485 = vmatpush1.bf16.xpose.msra.mxu0 0
        %3486 = vmatprep.subr.bf16.mxu0 0
        %3487 = vmatpush1.bf16.xpose.msra.mxu0 0
        %3488 = vmatprep.subr.bf16.mxu0 0
        %3489 = vmatpush1.bf16.xpose.msra.mxu0 0
        %3490 = vmatprep.subr.bf16.mxu0 0
        %3491 = vmatpush1.bf16.xpose.msra.mxu0 0
        %3492 = vmatprep.subr.bf16.mxu0 0
        %3493 = vmatpush1.bf16.xpose.msra.mxu0 0
        %3494 = vmatprep.subr.bf16.mxu0 0
        %3495 = vmatpush1.bf16.xpose.msra.mxu0 0
        %3496 = vmatprep.subr.bf16.mxu0 0
        %3497 = vmatpush1.bf16.xpose.msra.mxu0 0
        %3498 = vmatprep.subr.bf16.mxu0 0
        %3499 = vmatpush1.bf16.xpose.msra.mxu0 0
        %3500 = vmatprep.subr.bf16.mxu0 0
        %3501 = vmatpush1.bf16.xpose.msra.mxu0 0
        %3502 = vmatprep.subr.bf16.mxu0 0
        %3503 = vmatpush1.bf16.xpose.msra.mxu0 0
        %3504 = vmatprep.subr.bf16.mxu0 0
        %3505 = vmatpush1.bf16.xpose.msra.mxu0 0
        %3506 = vmatprep.subr.bf16.mxu0 0
        %3507 = vmatpush1.bf16.xpose.msra.mxu0 0
        %3508 = vmatprep.mubr.bf16.mxu0 0
        %3509 = vmatmul.mubr.bf16.gmra.mrb[0].mxu0 %v3471
        %v3510 = vpop.f32.mrb[0].mxu0
        %v3511 = vadd.f32 0.0, %v3510
        %v3512 = vpop.f32.mrb[0].mxu0
        %v3513 = vpop.f32.mrb[0].mxu0
        %v3514 = vpop.f32.mrb[0].mxu0
        %3515 = vdwg.mxu0
        %3516 = vrot.lane.b32.xlu0 %v3417, 96
        %v3517 = vpop.permute.xlu0 %3516
        %v3519 = vsel %vm1752, %v3417, 0
        %v3522 = vsel %vm1752, %v3517, 0
        %3524 = vmatprep.subr.bf16.mxu0 0
        %3525 = vmatpush1.bf16.xpose.msra.mxu0 %v3522
        %3526 = vmatprep.subr.bf16.mxu0 0
        %3527 = vmatpush1.bf16.xpose.msra.mxu0 0
        %3528 = vmatprep.subr.bf16.mxu0 0
        %3529 = vmatpush1.bf16.xpose.msra.mxu0 0
        %3530 = vmatprep.subr.bf16.mxu0 0
        %3531 = vmatpush1.bf16.xpose.msra.mxu0 0
        %3532 = vmatprep.subr.bf16.mxu0 0
        %3533 = vmatpush1.bf16.xpose.msra.mxu0 0
        %3534 = vmatprep.subr.bf16.mxu0 0
        %3535 = vmatpush1.bf16.xpose.msra.mxu0 0
        %3536 = vmatprep.subr.bf16.mxu0 0
        %3537 = vmatpush1.bf16.xpose.msra.mxu0 0
        %3538 = vmatprep.subr.bf16.mxu0 0
        %3539 = vmatpush1.bf16.xpose.msra.mxu0 0
        %3540 = vmatprep.subr.bf16.mxu0 0
        %3541 = vmatpush1.bf16.xpose.msra.mxu0 0
        %3542 = vmatprep.subr.bf16.mxu0 0
        %3543 = vmatpush1.bf16.xpose.msra.mxu0 0
        %3544 = vmatprep.subr.bf16.mxu0 0
        %3545 = vmatpush1.bf16.xpose.msra.mxu0 0
        %3546 = vmatprep.subr.bf16.mxu0 0
        %3547 = vmatpush1.bf16.xpose.msra.mxu0 0
        %3548 = vmatprep.subr.bf16.mxu0 0
        %3549 = vmatpush1.bf16.xpose.msra.mxu0 0
        %3550 = vmatprep.subr.bf16.mxu0 0
        %3551 = vmatpush1.bf16.xpose.msra.mxu0 0
        %3552 = vmatprep.subr.bf16.mxu0 0
        %3553 = vmatpush1.bf16.xpose.msra.mxu0 0
        %3554 = vmatprep.subr.bf16.mxu0 0
        %3555 = vmatpush1.bf16.xpose.msra.mxu0 0
        %3556 = vmatprep.mubr.bf16.mxu0 0
        %3557 = vmatmul.mubr.bf16.gmra.mrb[0].mxu0 %v3519
        %v3558 = vpop.f32.mrb[0].mxu0
        %v3559 = vadd.f32 0.0, %v3558
        %v3560 = vpop.f32.mrb[0].mxu0
        %v3561 = vpop.f32.mrb[0].mxu0
        %v3562 = vpop.f32.mrb[0].mxu0
        %3563 = vdwg.mxu0
        %3564 = vrot.lane.b32.xlu0 %v3419, 96
        %v3565 = vpop.permute.xlu0 %3564
        %v3567 = vsel %vm1752, %v3419, 0
        %v3570 = vsel %vm1752, %v3565, 0
        %3572 = vmatprep.subr.bf16.mxu0 0
        %3573 = vmatpush1.bf16.xpose.msra.mxu0 %v3570
        %3574 = vmatprep.subr.bf16.mxu0 0
        %3575 = vmatpush1.bf16.xpose.msra.mxu0 0
        %3576 = vmatprep.subr.bf16.mxu0 0
        %3577 = vmatpush1.bf16.xpose.msra.mxu0 0
        %3578 = vmatprep.subr.bf16.mxu0 0
        %3579 = vmatpush1.bf16.xpose.msra.mxu0 0
        %3580 = vmatprep.subr.bf16.mxu0 0
        %3581 = vmatpush1.bf16.xpose.msra.mxu0 0
        %3582 = vmatprep.subr.bf16.mxu0 0
        %3583 = vmatpush1.bf16.xpose.msra.mxu0 0
        %3584 = vmatprep.subr.bf16.mxu0 0
        %3585 = vmatpush1.bf16.xpose.msra.mxu0 0
        %3586 = vmatprep.subr.bf16.mxu0 0
        %3587 = vmatpush1.bf16.xpose.msra.mxu0 0
        %3588 = vmatprep.subr.bf16.mxu0 0
        %3589 = vmatpush1.bf16.xpose.msra.mxu0 0
        %3590 = vmatprep.subr.bf16.mxu0 0
        %3591 = vmatpush1.bf16.xpose.msra.mxu0 0
        %3592 = vmatprep.subr.bf16.mxu0 0
        %3593 = vmatpush1.bf16.xpose.msra.mxu0 0
        %3594 = vmatprep.subr.bf16.mxu0 0
        %3595 = vmatpush1.bf16.xpose.msra.mxu0 0
        %3596 = vmatprep.subr.bf16.mxu0 0
        %3597 = vmatpush1.bf16.xpose.msra.mxu0 0
        %3598 = vmatprep.subr.bf16.mxu0 0
        %3599 = vmatpush1.bf16.xpose.msra.mxu0 0
        %3600 = vmatprep.subr.bf16.mxu0 0
        %3601 = vmatpush1.bf16.xpose.msra.mxu0 0
        %3602 = vmatprep.subr.bf16.mxu0 0
        %3603 = vmatpush1.bf16.xpose.msra.mxu0 0
        %3604 = vmatprep.mubr.bf16.mxu0 0
        %3605 = vmatmul.mubr.bf16.gmra.mrb[0].mxu0 %v3567
        %v3606 = vpop.f32.mrb[0].mxu0
        %v3607 = vadd.f32 0.0, %v3606
        %v3608 = vpop.f32.mrb[0].mxu0
        %v3609 = vpop.f32.mrb[0].mxu0
        %v3610 = vpop.f32.mrb[0].mxu0
        %3611 = vdwg.mxu0
        %v3612 = vmul.f32 %v3463, 0.35355338
        %v3613 = vmul.f32 %v3511, 0.35355338
        %v3614 = vmul.f32 %v3559, 0.35355338
        %v3615 = vmul.f32 %v3607, 0.35355338
        %v3616 = vadd.f32 %v3612, %v1666
        %v3617 = vadd.f32 %v3613, %v1666
        %v3618 = vadd.f32 %v3614, %v1666
        %v3619 = vadd.f32 %v3615, %v1666
        %v3620 = vsel %vm1752, %v3616, -inf
        %3621 = vmax.xlane.f32.xlu0 %v3620
        %v3622 = vpop.xlane.xlu0 %3621
        %v3623 = vsel %vm1752, %v3617, -inf
        %3624 = vmax.xlane.f32.xlu0 %v3623
        %v3625 = vpop.xlane.xlu0 %3624
        %v3626 = vsel %vm1752, %v3618, -inf
        %3627 = vmax.xlane.f32.xlu0 %v3626
        %v3628 = vpop.xlane.xlu0 %3627
        %v3629 = vsel %vm1752, %v3619, -inf
        %3630 = vmax.xlane.f32.xlu0 %v3629
        %v3631 = vpop.xlane.xlu0 %3630
        %v3632 = vsub.f32 %v3616, %v3622
        %v3633 = vsub.f32 %v3617, %v3625
        %v3634 = vsub.f32 %v3618, %v3628
        %v3635 = vsub.f32 %v3619, %v3631
        %v3636 = vmul.f32 %v3632, 1.442695
        %v3637 = vpow.pop %v3636
        %v3638 = vmul.f32 %v3633, 1.442695
        %v3639 = vpow.pop %v3638
        %v3640 = vmul.f32 %v3634, 1.442695
        %v3641 = vpow.pop %v3640
        %v3642 = vmul.f32 %v3635, 1.442695
        %v3643 = vpow.pop %v3642
        %v3644 = vsel %vm1752, %v3637, 0.0
        %3645 = vadd.xlane.f32.xlu0 %v3644
        %v3646 = vpop.xlane.xlu0 %3645
        %v3647 = vsel %vm1752, %v3639, 0.0
        %3648 = vadd.xlane.f32.xlu0 %v3647
        %v3649 = vpop.xlane.xlu0 %3648
        %v3650 = vsel %vm1752, %v3641, 0.0
        %3651 = vadd.xlane.f32.xlu0 %v3650
        %v3652 = vpop.xlane.xlu0 %3651
        %v3653 = vsel %vm1752, %v3643, 0.0
        %3654 = vadd.xlane.f32.xlu0 %v3653
        %v3655 = vpop.xlane.xlu0 %3654
        %v3656 = vrcp.pop %v3646
        %v3657 = vrcp.pop %v3649
        %v3658 = vrcp.pop %v3652
        %v3659 = vrcp.pop %v3655
        %v3660 = vmul.f32 %v3637, %v3656
        %v3661 = vmul.f32 %v3639, %v3657
        %v3662 = vmul.f32 %v3641, %v3658
        %v3663 = vmul.f32 %v3643, %v3659
        %v3664 = vpack.c.bf16 %v3660, %v3660
        %v3665 = vpack.c.bf16 %v3661, %v3661
        %v3666 = vpack.c.bf16 %v3662, %v3662
        %v3667 = vpack.c.bf16 %v3663, %v3663
        %3668 = vrot.lane.b32.xlu0 %v3412, 64
        %v3669 = vpop.permute.xlu0 %3668
        %v3671 = vsel %vm1752, %v3664, 0
        %v3674 = vsel %vm2010, %v3669, 0
        %3676 = vmatprep.subr.bf16.mxu0 0
        %3677 = vmatpush1.bf16.msra.mxu0 %v3674
        %3678 = vmatprep.subr.bf16.mxu0 0
        %3679 = vmatpush1.bf16.msra.mxu0 0
        %3680 = vmatprep.subr.bf16.mxu0 0
        %3681 = vmatpush1.bf16.msra.mxu0 0
        %3682 = vmatprep.subr.bf16.mxu0 0
        %3683 = vmatpush1.bf16.msra.mxu0 0
        %3684 = vmatprep.subr.bf16.mxu0 0
        %3685 = vmatpush1.bf16.msra.mxu0 0
        %3686 = vmatprep.subr.bf16.mxu0 0
        %3687 = vmatpush1.bf16.msra.mxu0 0
        %3688 = vmatprep.subr.bf16.mxu0 0
        %3689 = vmatpush1.bf16.msra.mxu0 0
        %3690 = vmatprep.subr.bf16.mxu0 0
        %3691 = vmatpush1.bf16.msra.mxu0 0
        %3692 = vmatprep.subr.bf16.mxu0 0
        %3693 = vmatpush1.bf16.msra.mxu0 0
        %3694 = vmatprep.subr.bf16.mxu0 0
        %3695 = vmatpush1.bf16.msra.mxu0 0
        %3696 = vmatprep.subr.bf16.mxu0 0
        %3697 = vmatpush1.bf16.msra.mxu0 0
        %3698 = vmatprep.subr.bf16.mxu0 0
        %3699 = vmatpush1.bf16.msra.mxu0 0
        %3700 = vmatprep.subr.bf16.mxu0 0
        %3701 = vmatpush1.bf16.msra.mxu0 0
        %3702 = vmatprep.subr.bf16.mxu0 0
        %3703 = vmatpush1.bf16.msra.mxu0 0
        %3704 = vmatprep.subr.bf16.mxu0 0
        %3705 = vmatpush1.bf16.msra.mxu0 0
        %3706 = vmatprep.subr.bf16.mxu0 0
        %3707 = vmatpush1.bf16.msra.mxu0 0
        %3708 = vmatprep.mubr.bf16.mxu0 0
        %3709 = vmatmul.mubr.bf16.gmra.mrb[0].mxu0 %v3671
        %v3710 = vpop.f32.mrb[0].mxu0
        %v3711 = vadd.f32 0.0, %v3710
        %v3712 = vpop.f32.mrb[0].mxu0
        %v3713 = vpop.f32.mrb[0].mxu0
        %v3714 = vpop.f32.mrb[0].mxu0
        %3715 = vdwg.mxu0
        %3716 = vrot.lane.b32.xlu0 %v3415, 64
        %v3717 = vpop.permute.xlu0 %3716
        %v3719 = vsel %vm1752, %v3665, 0
        %v3722 = vsel %vm2010, %v3717, 0
        %3724 = vmatprep.subr.bf16.mxu0 0
        %3725 = vmatpush1.bf16.msra.mxu0 %v3722
        %3726 = vmatprep.subr.bf16.mxu0 0
        %3727 = vmatpush1.bf16.msra.mxu0 0
        %3728 = vmatprep.subr.bf16.mxu0 0
        %3729 = vmatpush1.bf16.msra.mxu0 0
        %3730 = vmatprep.subr.bf16.mxu0 0
        %3731 = vmatpush1.bf16.msra.mxu0 0
        %3732 = vmatprep.subr.bf16.mxu0 0
        %3733 = vmatpush1.bf16.msra.mxu0 0
        %3734 = vmatprep.subr.bf16.mxu0 0
        %3735 = vmatpush1.bf16.msra.mxu0 0
        %3736 = vmatprep.subr.bf16.mxu0 0
        %3737 = vmatpush1.bf16.msra.mxu0 0
        %3738 = vmatprep.subr.bf16.mxu0 0
        %3739 = vmatpush1.bf16.msra.mxu0 0
        %3740 = vmatprep.subr.bf16.mxu0 0
        %3741 = vmatpush1.bf16.msra.mxu0 0
        %3742 = vmatprep.subr.bf16.mxu0 0
        %3743 = vmatpush1.bf16.msra.mxu0 0
        %3744 = vmatprep.subr.bf16.mxu0 0
        %3745 = vmatpush1.bf16.msra.mxu0 0
        %3746 = vmatprep.subr.bf16.mxu0 0
        %3747 = vmatpush1.bf16.msra.mxu0 0
        %3748 = vmatprep.subr.bf16.mxu0 0
        %3749 = vmatpush1.bf16.msra.mxu0 0
        %3750 = vmatprep.subr.bf16.mxu0 0
        %3751 = vmatpush1.bf16.msra.mxu0 0
        %3752 = vmatprep.subr.bf16.mxu0 0
        %3753 = vmatpush1.bf16.msra.mxu0 0
        %3754 = vmatprep.subr.bf16.mxu0 0
        %3755 = vmatpush1.bf16.msra.mxu0 0
        %3756 = vmatprep.mubr.bf16.mxu0 0
        %3757 = vmatmul.mubr.bf16.gmra.mrb[0].mxu0 %v3719
        %v3758 = vpop.f32.mrb[0].mxu0
        %v3759 = vadd.f32 0.0, %v3758
        %v3760 = vpop.f32.mrb[0].mxu0
        %v3761 = vpop.f32.mrb[0].mxu0
        %v3762 = vpop.f32.mrb[0].mxu0
        %3763 = vdwg.mxu0
        %3764 = vrot.lane.b32.xlu0 %v3417, 64
        %v3765 = vpop.permute.xlu0 %3764
        %v3767 = vsel %vm1752, %v3666, 0
        %v3770 = vsel %vm2010, %v3765, 0
        %3772 = vmatprep.subr.bf16.mxu0 0
        %3773 = vmatpush1.bf16.msra.mxu0 %v3770
        %3774 = vmatprep.subr.bf16.mxu0 0
        %3775 = vmatpush1.bf16.msra.mxu0 0
        %3776 = vmatprep.subr.bf16.mxu0 0
        %3777 = vmatpush1.bf16.msra.mxu0 0
        %3778 = vmatprep.subr.bf16.mxu0 0
        %3779 = vmatpush1.bf16.msra.mxu0 0
        %3780 = vmatprep.subr.bf16.mxu0 0
        %3781 = vmatpush1.bf16.msra.mxu0 0
        %3782 = vmatprep.subr.bf16.mxu0 0
        %3783 = vmatpush1.bf16.msra.mxu0 0
        %3784 = vmatprep.subr.bf16.mxu0 0
        %3785 = vmatpush1.bf16.msra.mxu0 0
        %3786 = vmatprep.subr.bf16.mxu0 0
        %3787 = vmatpush1.bf16.msra.mxu0 0
        %3788 = vmatprep.subr.bf16.mxu0 0
        %3789 = vmatpush1.bf16.msra.mxu0 0
        %3790 = vmatprep.subr.bf16.mxu0 0
        %3791 = vmatpush1.bf16.msra.mxu0 0
        %3792 = vmatprep.subr.bf16.mxu0 0
        %3793 = vmatpush1.bf16.msra.mxu0 0
        %3794 = vmatprep.subr.bf16.mxu0 0
        %3795 = vmatpush1.bf16.msra.mxu0 0
        %3796 = vmatprep.subr.bf16.mxu0 0
        %3797 = vmatpush1.bf16.msra.mxu0 0
        %3798 = vmatprep.subr.bf16.mxu0 0
        %3799 = vmatpush1.bf16.msra.mxu0 0
        %3800 = vmatprep.subr.bf16.mxu0 0
        %3801 = vmatpush1.bf16.msra.mxu0 0
        %3802 = vmatprep.subr.bf16.mxu0 0
        %3803 = vmatpush1.bf16.msra.mxu0 0
        %3804 = vmatprep.mubr.bf16.mxu0 0
        %3805 = vmatmul.mubr.bf16.gmra.mrb[0].mxu0 %v3767
        %v3806 = vpop.f32.mrb[0].mxu0
        %v3807 = vadd.f32 0.0, %v3806
        %v3808 = vpop.f32.mrb[0].mxu0
        %v3809 = vpop.f32.mrb[0].mxu0
        %v3810 = vpop.f32.mrb[0].mxu0
        %3811 = vdwg.mxu0
        %3812 = vrot.lane.b32.xlu0 %v3419, 64
        %v3813 = vpop.permute.xlu0 %3812
        %v3815 = vsel %vm1752, %v3667, 0
        %v3818 = vsel %vm2010, %v3813, 0
        %3820 = vmatprep.subr.bf16.mxu0 0
        %3821 = vmatpush1.bf16.msra.mxu0 %v3818
        %3822 = vmatprep.subr.bf16.mxu0 0
        %3823 = vmatpush1.bf16.msra.mxu0 0
        %3824 = vmatprep.subr.bf16.mxu0 0
        %3825 = vmatpush1.bf16.msra.mxu0 0
        %3826 = vmatprep.subr.bf16.mxu0 0
        %3827 = vmatpush1.bf16.msra.mxu0 0
        %3828 = vmatprep.subr.bf16.mxu0 0
        %3829 = vmatpush1.bf16.msra.mxu0 0
        %3830 = vmatprep.subr.bf16.mxu0 0
        %3831 = vmatpush1.bf16.msra.mxu0 0
        %3832 = vmatprep.subr.bf16.mxu0 0
        %3833 = vmatpush1.bf16.msra.mxu0 0
        %3834 = vmatprep.subr.bf16.mxu0 0
        %3835 = vmatpush1.bf16.msra.mxu0 0
        %3836 = vmatprep.subr.bf16.mxu0 0
        %3837 = vmatpush1.bf16.msra.mxu0 0
        %3838 = vmatprep.subr.bf16.mxu0 0
        %3839 = vmatpush1.bf16.msra.mxu0 0
        %3840 = vmatprep.subr.bf16.mxu0 0
        %3841 = vmatpush1.bf16.msra.mxu0 0
        %3842 = vmatprep.subr.bf16.mxu0 0
        %3843 = vmatpush1.bf16.msra.mxu0 0
        %3844 = vmatprep.subr.bf16.mxu0 0
        %3845 = vmatpush1.bf16.msra.mxu0 0
        %3846 = vmatprep.subr.bf16.mxu0 0
        %3847 = vmatpush1.bf16.msra.mxu0 0
        %3848 = vmatprep.subr.bf16.mxu0 0
        %3849 = vmatpush1.bf16.msra.mxu0 0
        %3850 = vmatprep.subr.bf16.mxu0 0
        %3851 = vmatpush1.bf16.msra.mxu0 0
        %3852 = vmatprep.mubr.bf16.mxu0 0
        %3853 = vmatmul.mubr.bf16.gmra.mrb[0].mxu0 %v3815
        %v3854 = vpop.f32.mrb[0].mxu0
        %v3855 = vadd.f32 0.0, %v3854
        %v3856 = vpop.f32.mrb[0].mxu0
        %v3857 = vpop.f32.mrb[0].mxu0
        %v3858 = vpop.f32.mrb[0].mxu0
        %3859 = vdwg.mxu0
        %3861 = vrot.lane.b32.xlu0 %v3759, 8
        %v3862 = vpop.permute.xlu0 %3861
        %3865 = vrot.lane.b32.xlu0 %v3807, 16
        %v3866 = vpop.permute.xlu0 %3865
        %3869 = vrot.lane.b32.xlu0 %v3855, 24
        %v3870 = vpop.permute.xlu0 %3869
        %v3872 = vsel %vm1752, %v3711, %v3862
        %v3873 = vsel %vm2211, %v3872, %v3866
        %v3874 = vsel %vm2213, %v3873, %v3870
        %v3875 = vpack.c.bf16 %v3874, %v3874
        %v3877 = vlaneseq
        %v3878 = vshrl.u32 %v3877, 7
        %v3879 = vsub.s32 0, %v3878
        %v3880 = vrot.slane %v3347, %v3879
        %v3886 = vunpack.c.l.b16 %v3343
        %v3887 = vunpack.c.l.b16 %v3344
        %v3888 = vunpack.c.l.b16 %v3345
        %v3889 = vunpack.c.l.b16 %v3346
        %v3890 = vpack.c.b16 %v3887, %v3886
        %v3891 = vpack.c.b16 %v3889, %v3888
        %v3895 = vsel %vm1698, %v3875, 0
        %3897 = vmatprep.subr.bf16.mxu0 0
        %3898 = vmatpush1.bf16.msra.mxu0 %v3890
        %3899 = vmatprep.subr.bf16.mxu0 0
        %3900 = vmatpush1.bf16.msra.mxu0 %v3891
        %3901 = vmatprep.subr.bf16.mxu0 0
        %3902 = vmatpush1.bf16.msra.mxu0 0
        %3903 = vmatprep.subr.bf16.mxu0 0
        %3904 = vmatpush1.bf16.msra.mxu0 0
        %3905 = vmatprep.subr.bf16.mxu0 0
        %3906 = vmatpush1.bf16.msra.mxu0 0
        %3907 = vmatprep.subr.bf16.mxu0 0
        %3908 = vmatpush1.bf16.msra.mxu0 0
        %3909 = vmatprep.subr.bf16.mxu0 0
        %3910 = vmatpush1.bf16.msra.mxu0 0
        %3911 = vmatprep.subr.bf16.mxu0 0
        %3912 = vmatpush1.bf16.msra.mxu0 0
        %3913 = vmatprep.subr.bf16.mxu0 0
        %3914 = vmatpush1.bf16.msra.mxu0 0
        %3915 = vmatprep.subr.bf16.mxu0 0
        %3916 = vmatpush1.bf16.msra.mxu0 0
        %3917 = vmatprep.subr.bf16.mxu0 0
        %3918 = vmatpush1.bf16.msra.mxu0 0
        %3919 = vmatprep.subr.bf16.mxu0 0
        %3920 = vmatpush1.bf16.msra.mxu0 0
        %3921 = vmatprep.subr.bf16.mxu0 0
        %3922 = vmatpush1.bf16.msra.mxu0 0
        %3923 = vmatprep.subr.bf16.mxu0 0
        %3924 = vmatpush1.bf16.msra.mxu0 0
        %3925 = vmatprep.subr.bf16.mxu0 0
        %3926 = vmatpush1.bf16.msra.mxu0 0
        %3927 = vmatprep.subr.bf16.mxu0 0
        %3928 = vmatpush1.bf16.msra.mxu0 0
        %3929 = vmatprep.mubr.bf16.mxu0 0
        %3930 = vmatmul.mubr.bf16.gmra.mrb[0].mxu0 %v3895
        %v3931 = vpop.f32.mrb[0].mxu0
        %v3932 = vadd.f32 %v3880, %v3931
        %v3933 = vpop.f32.mrb[0].mxu0
        %v3934 = vpop.f32.mrb[0].mxu0
        %v3935 = vpop.f32.mrb[0].mxu0
        %3936 = vdwg.mxu0
        %v3937 = vadd.f32 %v1664, %v3932
        %v3938 = vsel %vm1698, %v3937, 0.0
        %3939 = vadd.xlane.f32.xlu0 %v3938
        %v3940 = vpop.xlane.xlu0 %3939
        %v3941 = vmul.f32 %v3940, %v2281
        %v3942 = vsub.f32 %v3937, %v3941
        %v3943 = vmul.f32 %v3942, %v3942
        %v3944 = vsel %vm1698, %v3943, 0.0
        %3945 = vadd.xlane.f32.xlu0 %v3944
        %v3946 = vpop.xlane.xlu0 %3945
        %v3947 = vmul.f32 %v3946, %v2281
        %v3948 = vadd.f32 %v3947, 1e-05
        %v3949 = vrsqrt.pop %v3948
        %v3950 = vmul.f32 %v3942, %v3949
        %v3952 = vlaneseq
        %v3953 = vshrl.u32 %v3952, 7
        %v3954 = vsub.s32 0, %v3953
        %v3955 = vrot.slane %v3348, %v3954
        %v3957 = vmul.f32 %v3950, %v3955
        %v3959 = vlaneseq
        %v3960 = vshrl.u32 %v3959, 7
        %v3961 = vsub.s32 0, %v3960
        %v3962 = vrot.slane %v3349, %v3961
        %v3964 = vadd.f32 %v3957, %v3962
        %v3965 = vld [vmem:[%s45] sm:$0xf]
        %v3966 = vld [vmem:[%s45 + $0x4] sm:$0xf]
        %v3967 = vld [vmem:[%s45 + $0x8] sm:$0xf]
        %v3968 = vld [vmem:[%s45 + $0xc] sm:$0xf]
        %v3969 = vld [vmem:[#allocation28] sm:$0x1]
        %v3970 = vld [vmem:[#allocation29] sm:$0xf]
        %v3971 = vld [vmem:[#allocation29 + $0x4] sm:$0xf]
        %v3972 = vld [vmem:[#allocation29 + $0x8] sm:$0xf]
        %v3973 = vld [vmem:[#allocation29 + $0xc] sm:$0xf]
        %v3974 = vld [vmem:[#allocation31] sm:$0x1]
        %v3975 = vld [vmem:[%s53] sm:$0xf]
        %v3976 = vld [vmem:[%s53 + $0x4] sm:$0xf]
        %v3977 = vld [vmem:[%s53 + $0x8] sm:$0xf]
        %v3978 = vld [vmem:[%s53 + $0xc] sm:$0xf]
        %v3979 = vld [vmem:[#allocation32] sm:$0x1]
        %v3980 = vld [vmem:[#allocation34] sm:$0x1]
        %v3981 = vld [vmem:[#allocation35] sm:$0x1]
        %v3982 = vpack.c.bf16 %v3964, %v3964
        %v3984 = vlaneseq
        %v3985 = vshrl.u32 %v3984, 7
        %v3986 = vsub.s32 0, %v3985
        %v3987 = vrot.slane %v3969, %v3986
        %v3993 = vunpack.c.l.b16 %v3965
        %v3994 = vunpack.c.l.b16 %v3966
        %v3995 = vunpack.c.l.b16 %v3967
        %v3996 = vunpack.c.l.b16 %v3968
        %v3997 = vpack.c.b16 %v3994, %v3993
        %v3998 = vpack.c.b16 %v3996, %v3995
        %v4002 = vsel %vm1698, %v3982, 0
        %4004 = vmatprep.subr.bf16.mxu0 0
        %4005 = vmatpush1.bf16.msra.mxu0 %v3997
        %4006 = vmatprep.subr.bf16.mxu0 0
        %4007 = vmatpush1.bf16.msra.mxu0 %v3998
        %4008 = vmatprep.subr.bf16.mxu0 0
        %4009 = vmatpush1.bf16.msra.mxu0 0
        %4010 = vmatprep.subr.bf16.mxu0 0
        %4011 = vmatpush1.bf16.msra.mxu0 0
        %4012 = vmatprep.subr.bf16.mxu0 0
        %4013 = vmatpush1.bf16.msra.mxu0 0
        %4014 = vmatprep.subr.bf16.mxu0 0
        %4015 = vmatpush1.bf16.msra.mxu0 0
        %4016 = vmatprep.subr.bf16.mxu0 0
        %4017 = vmatpush1.bf16.msra.mxu0 0
        %4018 = vmatprep.subr.bf16.mxu0 0
        %4019 = vmatpush1.bf16.msra.mxu0 0
        %4020 = vmatprep.subr.bf16.mxu0 0
        %4021 = vmatpush1.bf16.msra.mxu0 0
        %4022 = vmatprep.subr.bf16.mxu0 0
        %4023 = vmatpush1.bf16.msra.mxu0 0
        %4024 = vmatprep.subr.bf16.mxu0 0
        %4025 = vmatpush1.bf16.msra.mxu0 0
        %4026 = vmatprep.subr.bf16.mxu0 0
        %4027 = vmatpush1.bf16.msra.mxu0 0
        %4028 = vmatprep.subr.bf16.mxu0 0
        %4029 = vmatpush1.bf16.msra.mxu0 0
        %4030 = vmatprep.subr.bf16.mxu0 0
        %4031 = vmatpush1.bf16.msra.mxu0 0
        %4032 = vmatprep.subr.bf16.mxu0 0
        %4033 = vmatpush1.bf16.msra.mxu0 0
        %4034 = vmatprep.subr.bf16.mxu0 0
        %4035 = vmatpush1.bf16.msra.mxu0 0
        %4036 = vmatprep.mubr.bf16.mxu0 0
        %4037 = vmatmul.mubr.bf16.gmra.mrb[0].mxu0 %v4002
        %v4038 = vpop.f32.mrb[0].mxu0
        %v4039 = vadd.f32 %v3987, %v4038
        %v4040 = vpop.f32.mrb[0].mxu0
        %v4041 = vpop.f32.mrb[0].mxu0
        %v4042 = vpop.f32.mrb[0].mxu0
        %4043 = vdwg.mxu0
        %v4044 = vpack.c.bf16 %v4039, %v4039
        %v4046 = vlaneseq
        %v4047 = vshrl.u32 %v4046, 7
        %v4048 = vsub.s32 0, %v4047
        %v4049 = vrot.slane %v3974, %v4048
        %v4055 = vunpack.c.l.b16 %v3970
        %v4056 = vunpack.c.l.b16 %v3971
        %v4057 = vunpack.c.l.b16 %v3972
        %v4058 = vunpack.c.l.b16 %v3973
        %v4059 = vpack.c.b16 %v4056, %v4055
        %v4060 = vpack.c.b16 %v4058, %v4057
        %v4064 = vsel %vm1698, %v3337, 0
        %4066 = vmatprep.subr.bf16.mxu0 0
        %4067 = vmatpush1.bf16.msra.mxu0 %v4059
        %4068 = vmatprep.subr.bf16.mxu0 0
        %4069 = vmatpush1.bf16.msra.mxu0 %v4060
        %4070 = vmatprep.subr.bf16.mxu0 0
        %4071 = vmatpush1.bf16.msra.mxu0 0
        %4072 = vmatprep.subr.bf16.mxu0 0
        %4073 = vmatpush1.bf16.msra.mxu0 0
        %4074 = vmatprep.subr.bf16.mxu0 0
        %4075 = vmatpush1.bf16.msra.mxu0 0
        %4076 = vmatprep.subr.bf16.mxu0 0
        %4077 = vmatpush1.bf16.msra.mxu0 0
        %4078 = vmatprep.subr.bf16.mxu0 0
        %4079 = vmatpush1.bf16.msra.mxu0 0
        %4080 = vmatprep.subr.bf16.mxu0 0
        %4081 = vmatpush1.bf16.msra.mxu0 0
        %4082 = vmatprep.subr.bf16.mxu0 0
        %4083 = vmatpush1.bf16.msra.mxu0 0
        %4084 = vmatprep.subr.bf16.mxu0 0
        %4085 = vmatpush1.bf16.msra.mxu0 0
        %4086 = vmatprep.subr.bf16.mxu0 0
        %4087 = vmatpush1.bf16.msra.mxu0 0
        %4088 = vmatprep.subr.bf16.mxu0 0
        %4089 = vmatpush1.bf16.msra.mxu0 0
        %4090 = vmatprep.subr.bf16.mxu0 0
        %4091 = vmatpush1.bf16.msra.mxu0 0
        %4092 = vmatprep.subr.bf16.mxu0 0
        %4093 = vmatpush1.bf16.msra.mxu0 0
        %4094 = vmatprep.subr.bf16.mxu0 0
        %4095 = vmatpush1.bf16.msra.mxu0 0
        %4096 = vmatprep.subr.bf16.mxu0 0
        %4097 = vmatpush1.bf16.msra.mxu0 0
        %4098 = vmatprep.mubr.bf16.mxu0 0
        %4099 = vmatmul.mubr.bf16.gmra.mrb[0].mxu0 %v4064
        %v4100 = vpop.f32.mrb[0].mxu0
        %v4101 = vadd.f32 %v4049, %v4100
        %v4102 = vpop.f32.mrb[0].mxu0
        %v4103 = vpop.f32.mrb[0].mxu0
        %v4104 = vpop.f32.mrb[0].mxu0
        %4105 = vdwg.mxu0
        %v4106 = vpack.c.bf16 %v4101, %v4101
        %4108 = vrot.lane.b32.xlu0 %v4044, 120
        %v4109 = vpop.permute.xlu0 %4108
        %4110 = vrot.lane.b32.xlu0 %v4044, 112
        %v4111 = vpop.permute.xlu0 %4110
        %4112 = vrot.lane.b32.xlu0 %v4044, 104
        %v4113 = vpop.permute.xlu0 %4112
        %4115 = vrot.lane.b32.xlu0 %v4106, 120
        %v4116 = vpop.permute.xlu0 %4115
        %4117 = vrot.lane.b32.xlu0 %v4106, 112
        %v4118 = vpop.permute.xlu0 %4117
        %4119 = vrot.lane.b32.xlu0 %v4106, 104
        %v4120 = vpop.permute.xlu0 %4119
        %v4122 = vsel %vm1752, %v4044, 0
        %v4125 = vsel %vm1752, %v4106, 0
        %4127 = vmatprep.subr.bf16.mxu0 0
        %4128 = vmatpush1.bf16.xpose.msra.mxu0 %v4125
        %4129 = vmatprep.subr.bf16.mxu0 0
        %4130 = vmatpush1.bf16.xpose.msra.mxu0 0
        %4131 = vmatprep.subr.bf16.mxu0 0
        %4132 = vmatpush1.bf16.xpose.msra.mxu0 0
        %4133 = vmatprep.subr.bf16.mxu0 0
        %4134 = vmatpush1.bf16.xpose.msra.mxu0 0
        %4135 = vmatprep.subr.bf16.mxu0 0
        %4136 = vmatpush1.bf16.xpose.msra.mxu0 0
        %4137 = vmatprep.subr.bf16.mxu0 0
        %4138 = vmatpush1.bf16.xpose.msra.mxu0 0
        %4139 = vmatprep.subr.bf16.mxu0 0
        %4140 = vmatpush1.bf16.xpose.msra.mxu0 0
        %4141 = vmatprep.subr.bf16.mxu0 0
        %4142 = vmatpush1.bf16.xpose.msra.mxu0 0
        %4143 = vmatprep.subr.bf16.mxu0 0
        %4144 = vmatpush1.bf16.xpose.msra.mxu0 0
        %4145 = vmatprep.subr.bf16.mxu0 0
        %4146 = vmatpush1.bf16.xpose.msra.mxu0 0
        %4147 = vmatprep.subr.bf16.mxu0 0
        %4148 = vmatpush1.bf16.xpose.msra.mxu0 0
        %4149 = vmatprep.subr.bf16.mxu0 0
        %4150 = vmatpush1.bf16.xpose.msra.mxu0 0
        %4151 = vmatprep.subr.bf16.mxu0 0
        %4152 = vmatpush1.bf16.xpose.msra.mxu0 0
        %4153 = vmatprep.subr.bf16.mxu0 0
        %4154 = vmatpush1.bf16.xpose.msra.mxu0 0
        %4155 = vmatprep.subr.bf16.mxu0 0
        %4156 = vmatpush1.bf16.xpose.msra.mxu0 0
        %4157 = vmatprep.subr.bf16.mxu0 0
        %4158 = vmatpush1.bf16.xpose.msra.mxu0 0
        %4159 = vmatprep.mubr.bf16.mxu0 0
        %4160 = vmatmul.mubr.bf16.gmra.mrb[0].mxu0 %v4122
        %v4161 = vpop.f32.mrb[0].mxu0
        %v4162 = vadd.f32 0.0, %v4161
        %v4163 = vpop.f32.mrb[0].mxu0
        %v4164 = vpop.f32.mrb[0].mxu0
        %v4165 = vpop.f32.mrb[0].mxu0
        %4166 = vdwg.mxu0
        %v4168 = vsel %vm1752, %v4109, 0
        %v4171 = vsel %vm1752, %v4116, 0
        %4173 = vmatprep.subr.bf16.mxu0 0
        %4174 = vmatpush1.bf16.xpose.msra.mxu0 %v4171
        %4175 = vmatprep.subr.bf16.mxu0 0
        %4176 = vmatpush1.bf16.xpose.msra.mxu0 0
        %4177 = vmatprep.subr.bf16.mxu0 0
        %4178 = vmatpush1.bf16.xpose.msra.mxu0 0
        %4179 = vmatprep.subr.bf16.mxu0 0
        %4180 = vmatpush1.bf16.xpose.msra.mxu0 0
        %4181 = vmatprep.subr.bf16.mxu0 0
        %4182 = vmatpush1.bf16.xpose.msra.mxu0 0
        %4183 = vmatprep.subr.bf16.mxu0 0
        %4184 = vmatpush1.bf16.xpose.msra.mxu0 0
        %4185 = vmatprep.subr.bf16.mxu0 0
        %4186 = vmatpush1.bf16.xpose.msra.mxu0 0
        %4187 = vmatprep.subr.bf16.mxu0 0
        %4188 = vmatpush1.bf16.xpose.msra.mxu0 0
        %4189 = vmatprep.subr.bf16.mxu0 0
        %4190 = vmatpush1.bf16.xpose.msra.mxu0 0
        %4191 = vmatprep.subr.bf16.mxu0 0
        %4192 = vmatpush1.bf16.xpose.msra.mxu0 0
        %4193 = vmatprep.subr.bf16.mxu0 0
        %4194 = vmatpush1.bf16.xpose.msra.mxu0 0
        %4195 = vmatprep.subr.bf16.mxu0 0
        %4196 = vmatpush1.bf16.xpose.msra.mxu0 0
        %4197 = vmatprep.subr.bf16.mxu0 0
        %4198 = vmatpush1.bf16.xpose.msra.mxu0 0
        %4199 = vmatprep.subr.bf16.mxu0 0
        %4200 = vmatpush1.bf16.xpose.msra.mxu0 0
        %4201 = vmatprep.subr.bf16.mxu0 0
        %4202 = vmatpush1.bf16.xpose.msra.mxu0 0
        %4203 = vmatprep.subr.bf16.mxu0 0
        %4204 = vmatpush1.bf16.xpose.msra.mxu0 0
        %4205 = vmatprep.mubr.bf16.mxu0 0
        %4206 = vmatmul.mubr.bf16.gmra.mrb[0].mxu0 %v4168
        %v4207 = vpop.f32.mrb[0].mxu0
        %v4208 = vadd.f32 0.0, %v4207
        %v4209 = vpop.f32.mrb[0].mxu0
        %v4210 = vpop.f32.mrb[0].mxu0
        %v4211 = vpop.f32.mrb[0].mxu0
        %4212 = vdwg.mxu0
        %v4214 = vsel %vm1752, %v4111, 0
        %v4217 = vsel %vm1752, %v4118, 0
        %4219 = vmatprep.subr.bf16.mxu0 0
        %4220 = vmatpush1.bf16.xpose.msra.mxu0 %v4217
        %4221 = vmatprep.subr.bf16.mxu0 0
        %4222 = vmatpush1.bf16.xpose.msra.mxu0 0
        %4223 = vmatprep.subr.bf16.mxu0 0
        %4224 = vmatpush1.bf16.xpose.msra.mxu0 0
        %4225 = vmatprep.subr.bf16.mxu0 0
        %4226 = vmatpush1.bf16.xpose.msra.mxu0 0
        %4227 = vmatprep.subr.bf16.mxu0 0
        %4228 = vmatpush1.bf16.xpose.msra.mxu0 0
        %4229 = vmatprep.subr.bf16.mxu0 0
        %4230 = vmatpush1.bf16.xpose.msra.mxu0 0
        %4231 = vmatprep.subr.bf16.mxu0 0
        %4232 = vmatpush1.bf16.xpose.msra.mxu0 0
        %4233 = vmatprep.subr.bf16.mxu0 0
        %4234 = vmatpush1.bf16.xpose.msra.mxu0 0
        %4235 = vmatprep.subr.bf16.mxu0 0
        %4236 = vmatpush1.bf16.xpose.msra.mxu0 0
        %4237 = vmatprep.subr.bf16.mxu0 0
        %4238 = vmatpush1.bf16.xpose.msra.mxu0 0
        %4239 = vmatprep.subr.bf16.mxu0 0
        %4240 = vmatpush1.bf16.xpose.msra.mxu0 0
        %4241 = vmatprep.subr.bf16.mxu0 0
        %4242 = vmatpush1.bf16.xpose.msra.mxu0 0
        %4243 = vmatprep.subr.bf16.mxu0 0
        %4244 = vmatpush1.bf16.xpose.msra.mxu0 0
        %4245 = vmatprep.subr.bf16.mxu0 0
        %4246 = vmatpush1.bf16.xpose.msra.mxu0 0
        %4247 = vmatprep.subr.bf16.mxu0 0
        %4248 = vmatpush1.bf16.xpose.msra.mxu0 0
        %4249 = vmatprep.subr.bf16.mxu0 0
        %4250 = vmatpush1.bf16.xpose.msra.mxu0 0
        %4251 = vmatprep.mubr.bf16.mxu0 0
        %4252 = vmatmul.mubr.bf16.gmra.mrb[0].mxu0 %v4214
        %v4253 = vpop.f32.mrb[0].mxu0
        %v4254 = vadd.f32 0.0, %v4253
        %v4255 = vpop.f32.mrb[0].mxu0
        %v4256 = vpop.f32.mrb[0].mxu0
        %v4257 = vpop.f32.mrb[0].mxu0
        %4258 = vdwg.mxu0
        %v4260 = vsel %vm1752, %v4113, 0
        %v4263 = vsel %vm1752, %v4120, 0
        %4265 = vmatprep.subr.bf16.mxu0 0
        %4266 = vmatpush1.bf16.xpose.msra.mxu0 %v4263
        %4267 = vmatprep.subr.bf16.mxu0 0
        %4268 = vmatpush1.bf16.xpose.msra.mxu0 0
        %4269 = vmatprep.subr.bf16.mxu0 0
        %4270 = vmatpush1.bf16.xpose.msra.mxu0 0
        %4271 = vmatprep.subr.bf16.mxu0 0
        %4272 = vmatpush1.bf16.xpose.msra.mxu0 0
        %4273 = vmatprep.subr.bf16.mxu0 0
        %4274 = vmatpush1.bf16.xpose.msra.mxu0 0
        %4275 = vmatprep.subr.bf16.mxu0 0
        %4276 = vmatpush1.bf16.xpose.msra.mxu0 0
        %4277 = vmatprep.subr.bf16.mxu0 0
        %4278 = vmatpush1.bf16.xpose.msra.mxu0 0
        %4279 = vmatprep.subr.bf16.mxu0 0
        %4280 = vmatpush1.bf16.xpose.msra.mxu0 0
        %4281 = vmatprep.subr.bf16.mxu0 0
        %4282 = vmatpush1.bf16.xpose.msra.mxu0 0
        %4283 = vmatprep.subr.bf16.mxu0 0
        %4284 = vmatpush1.bf16.xpose.msra.mxu0 0
        %4285 = vmatprep.subr.bf16.mxu0 0
        %4286 = vmatpush1.bf16.xpose.msra.mxu0 0
        %4287 = vmatprep.subr.bf16.mxu0 0
        %4288 = vmatpush1.bf16.xpose.msra.mxu0 0
        %4289 = vmatprep.subr.bf16.mxu0 0
        %4290 = vmatpush1.bf16.xpose.msra.mxu0 0
        %4291 = vmatprep.subr.bf16.mxu0 0
        %4292 = vmatpush1.bf16.xpose.msra.mxu0 0
        %4293 = vmatprep.subr.bf16.mxu0 0
        %4294 = vmatpush1.bf16.xpose.msra.mxu0 0
        %4295 = vmatprep.subr.bf16.mxu0 0
        %4296 = vmatpush1.bf16.xpose.msra.mxu0 0
        %4297 = vmatprep.mubr.bf16.mxu0 0
        %4298 = vmatmul.mubr.bf16.gmra.mrb[0].mxu0 %v4260
        %v4299 = vpop.f32.mrb[0].mxu0
        %v4300 = vadd.f32 0.0, %v4299
        %v4301 = vpop.f32.mrb[0].mxu0
        %v4302 = vpop.f32.mrb[0].mxu0
        %v4303 = vpop.f32.mrb[0].mxu0
        %4304 = vdwg.mxu0
        %v4305 = vmul.f32 %v4162, 0.35355338
        %v4306 = vmul.f32 %v4208, 0.35355338
        %v4307 = vmul.f32 %v4254, 0.35355338
        %v4308 = vmul.f32 %v4300, 0.35355338
        %v4309 = vsel %vm1752, %v4305, -inf
        %4310 = vmax.xlane.f32.xlu0 %v4309
        %v4311 = vpop.xlane.xlu0 %4310
        %v4312 = vsel %vm1752, %v4306, -inf
        %4313 = vmax.xlane.f32.xlu0 %v4312
        %v4314 = vpop.xlane.xlu0 %4313
        %v4315 = vsel %vm1752, %v4307, -inf
        %4316 = vmax.xlane.f32.xlu0 %v4315
        %v4317 = vpop.xlane.xlu0 %4316
        %v4318 = vsel %vm1752, %v4308, -inf
        %4319 = vmax.xlane.f32.xlu0 %v4318
        %v4320 = vpop.xlane.xlu0 %4319
        %v4321 = vsub.f32 %v4305, %v4311
        %v4322 = vsub.f32 %v4306, %v4314
        %v4323 = vsub.f32 %v4307, %v4317
        %v4324 = vsub.f32 %v4308, %v4320
        %v4325 = vmul.f32 %v4321, 1.442695
        %v4326 = vpow.pop %v4325
        %v4327 = vmul.f32 %v4322, 1.442695
        %v4328 = vpow.pop %v4327
        %v4329 = vmul.f32 %v4323, 1.442695
        %v4330 = vpow.pop %v4329
        %v4331 = vmul.f32 %v4324, 1.442695
        %v4332 = vpow.pop %v4331
        %v4333 = vsel %vm1752, %v4326, 0.0
        %4334 = vadd.xlane.f32.xlu0 %v4333
        %v4335 = vpop.xlane.xlu0 %4334
        %v4336 = vsel %vm1752, %v4328, 0.0
        %4337 = vadd.xlane.f32.xlu0 %v4336
        %v4338 = vpop.xlane.xlu0 %4337
        %v4339 = vsel %vm1752, %v4330, 0.0
        %4340 = vadd.xlane.f32.xlu0 %v4339
        %v4341 = vpop.xlane.xlu0 %4340
        %v4342 = vsel %vm1752, %v4332, 0.0
        %4343 = vadd.xlane.f32.xlu0 %v4342
        %v4344 = vpop.xlane.xlu0 %4343
        %v4345 = vrcp.pop %v4335
        %v4346 = vrcp.pop %v4338
        %v4347 = vrcp.pop %v4341
        %v4348 = vrcp.pop %v4344
        %v4349 = vmul.f32 %v4326, %v4345
        %v4350 = vmul.f32 %v4328, %v4346
        %v4351 = vmul.f32 %v4330, %v4347
        %v4352 = vmul.f32 %v4332, %v4348
        %v4353 = vpack.c.bf16 %v4349, %v4349
        %v4354 = vpack.c.bf16 %v4350, %v4350
        %v4355 = vpack.c.bf16 %v4351, %v4351
        %v4356 = vpack.c.bf16 %v4352, %v4352
        %4357 = vrot.lane.b32.xlu0 %v4106, 96
        %v4358 = vpop.permute.xlu0 %4357
        %v4360 = vsel %vm1752, %v4353, 0
        %v4363 = vsel %vm2010, %v4358, 0
        %4365 = vmatprep.subr.bf16.mxu0 0
        %4366 = vmatpush1.bf16.msra.mxu0 %v4363
        %4367 = vmatprep.subr.bf16.mxu0 0
        %4368 = vmatpush1.bf16.msra.mxu0 0
        %4369 = vmatprep.subr.bf16.mxu0 0
        %4370 = vmatpush1.bf16.msra.mxu0 0
        %4371 = vmatprep.subr.bf16.mxu0 0
        %4372 = vmatpush1.bf16.msra.mxu0 0
        %4373 = vmatprep.subr.bf16.mxu0 0
        %4374 = vmatpush1.bf16.msra.mxu0 0
        %4375 = vmatprep.subr.bf16.mxu0 0
        %4376 = vmatpush1.bf16.msra.mxu0 0
        %4377 = vmatprep.subr.bf16.mxu0 0
        %4378 = vmatpush1.bf16.msra.mxu0 0
        %4379 = vmatprep.subr.bf16.mxu0 0
        %4380 = vmatpush1.bf16.msra.mxu0 0
        %4381 = vmatprep.subr.bf16.mxu0 0
        %4382 = vmatpush1.bf16.msra.mxu0 0
        %4383 = vmatprep.subr.bf16.mxu0 0
        %4384 = vmatpush1.bf16.msra.mxu0 0
        %4385 = vmatprep.subr.bf16.mxu0 0
        %4386 = vmatpush1.bf16.msra.mxu0 0
        %4387 = vmatprep.subr.bf16.mxu0 0
        %4388 = vmatpush1.bf16.msra.mxu0 0
        %4389 = vmatprep.subr.bf16.mxu0 0
        %4390 = vmatpush1.bf16.msra.mxu0 0
        %4391 = vmatprep.subr.bf16.mxu0 0
        %4392 = vmatpush1.bf16.msra.mxu0 0
        %4393 = vmatprep.subr.bf16.mxu0 0
        %4394 = vmatpush1.bf16.msra.mxu0 0
        %4395 = vmatprep.subr.bf16.mxu0 0
        %4396 = vmatpush1.bf16.msra.mxu0 0
        %4397 = vmatprep.mubr.bf16.mxu0 0
        %4398 = vmatmul.mubr.bf16.gmra.mrb[0].mxu0 %v4360
        %v4399 = vpop.f32.mrb[0].mxu0
        %v4400 = vadd.f32 0.0, %v4399
        %v4401 = vpop.f32.mrb[0].mxu0
        %v4402 = vpop.f32.mrb[0].mxu0
        %v4403 = vpop.f32.mrb[0].mxu0
        %4404 = vdwg.mxu0
        %4405 = vrot.lane.b32.xlu0 %v4116, 96
        %v4406 = vpop.permute.xlu0 %4405
        %v4408 = vsel %vm1752, %v4354, 0
        %v4411 = vsel %vm2010, %v4406, 0
        %4413 = vmatprep.subr.bf16.mxu0 0
        %4414 = vmatpush1.bf16.msra.mxu0 %v4411
        %4415 = vmatprep.subr.bf16.mxu0 0
        %4416 = vmatpush1.bf16.msra.mxu0 0
        %4417 = vmatprep.subr.bf16.mxu0 0
        %4418 = vmatpush1.bf16.msra.mxu0 0
        %4419 = vmatprep.subr.bf16.mxu0 0
        %4420 = vmatpush1.bf16.msra.mxu0 0
        %4421 = vmatprep.subr.bf16.mxu0 0
        %4422 = vmatpush1.bf16.msra.mxu0 0
        %4423 = vmatprep.subr.bf16.mxu0 0
        %4424 = vmatpush1.bf16.msra.mxu0 0
        %4425 = vmatprep.subr.bf16.mxu0 0
        %4426 = vmatpush1.bf16.msra.mxu0 0
        %4427 = vmatprep.subr.bf16.mxu0 0
        %4428 = vmatpush1.bf16.msra.mxu0 0
        %4429 = vmatprep.subr.bf16.mxu0 0
        %4430 = vmatpush1.bf16.msra.mxu0 0
        %4431 = vmatprep.subr.bf16.mxu0 0
        %4432 = vmatpush1.bf16.msra.mxu0 0
        %4433 = vmatprep.subr.bf16.mxu0 0
        %4434 = vmatpush1.bf16.msra.mxu0 0
        %4435 = vmatprep.subr.bf16.mxu0 0
        %4436 = vmatpush1.bf16.msra.mxu0 0
        %4437 = vmatprep.subr.bf16.mxu0 0
        %4438 = vmatpush1.bf16.msra.mxu0 0
        %4439 = vmatprep.subr.bf16.mxu0 0
        %4440 = vmatpush1.bf16.msra.mxu0 0
        %4441 = vmatprep.subr.bf16.mxu0 0
        %4442 = vmatpush1.bf16.msra.mxu0 0
        %4443 = vmatprep.subr.bf16.mxu0 0
        %4444 = vmatpush1.bf16.msra.mxu0 0
        %4445 = vmatprep.mubr.bf16.mxu0 0
        %4446 = vmatmul.mubr.bf16.gmra.mrb[0].mxu0 %v4408
        %v4447 = vpop.f32.mrb[0].mxu0
        %v4448 = vadd.f32 0.0, %v4447
        %v4449 = vpop.f32.mrb[0].mxu0
        %v4450 = vpop.f32.mrb[0].mxu0
        %v4451 = vpop.f32.mrb[0].mxu0
        %4452 = vdwg.mxu0
        %4453 = vrot.lane.b32.xlu0 %v4118, 96
        %v4454 = vpop.permute.xlu0 %4453
        %v4456 = vsel %vm1752, %v4355, 0
        %v4459 = vsel %vm2010, %v4454, 0
        %4461 = vmatprep.subr.bf16.mxu0 0
        %4462 = vmatpush1.bf16.msra.mxu0 %v4459
        %4463 = vmatprep.subr.bf16.mxu0 0
        %4464 = vmatpush1.bf16.msra.mxu0 0
        %4465 = vmatprep.subr.bf16.mxu0 0
        %4466 = vmatpush1.bf16.msra.mxu0 0
        %4467 = vmatprep.subr.bf16.mxu0 0
        %4468 = vmatpush1.bf16.msra.mxu0 0
        %4469 = vmatprep.subr.bf16.mxu0 0
        %4470 = vmatpush1.bf16.msra.mxu0 0
        %4471 = vmatprep.subr.bf16.mxu0 0
        %4472 = vmatpush1.bf16.msra.mxu0 0
        %4473 = vmatprep.subr.bf16.mxu0 0
        %4474 = vmatpush1.bf16.msra.mxu0 0
        %4475 = vmatprep.subr.bf16.mxu0 0
        %4476 = vmatpush1.bf16.msra.mxu0 0
        %4477 = vmatprep.subr.bf16.mxu0 0
        %4478 = vmatpush1.bf16.msra.mxu0 0
        %4479 = vmatprep.subr.bf16.mxu0 0
        %4480 = vmatpush1.bf16.msra.mxu0 0
        %4481 = vmatprep.subr.bf16.mxu0 0
        %4482 = vmatpush1.bf16.msra.mxu0 0
        %4483 = vmatprep.subr.bf16.mxu0 0
        %4484 = vmatpush1.bf16.msra.mxu0 0
        %4485 = vmatprep.subr.bf16.mxu0 0
        %4486 = vmatpush1.bf16.msra.mxu0 0
        %4487 = vmatprep.subr.bf16.mxu0 0
        %4488 = vmatpush1.bf16.msra.mxu0 0
        %4489 = vmatprep.subr.bf16.mxu0 0
        %4490 = vmatpush1.bf16.msra.mxu0 0
        %4491 = vmatprep.subr.bf16.mxu0 0
        %4492 = vmatpush1.bf16.msra.mxu0 0
        %4493 = vmatprep.mubr.bf16.mxu0 0
        %4494 = vmatmul.mubr.bf16.gmra.mrb[0].mxu0 %v4456
        %v4495 = vpop.f32.mrb[0].mxu0
        %v4496 = vadd.f32 0.0, %v4495
        %v4497 = vpop.f32.mrb[0].mxu0
        %v4498 = vpop.f32.mrb[0].mxu0
        %v4499 = vpop.f32.mrb[0].mxu0
        %4500 = vdwg.mxu0
        %4501 = vrot.lane.b32.xlu0 %v4120, 96
        %v4502 = vpop.permute.xlu0 %4501
        %v4504 = vsel %vm1752, %v4356, 0
        %v4507 = vsel %vm2010, %v4502, 0
        %4509 = vmatprep.subr.bf16.mxu0 0
        %4510 = vmatpush1.bf16.msra.mxu0 %v4507
        %4511 = vmatprep.subr.bf16.mxu0 0
        %4512 = vmatpush1.bf16.msra.mxu0 0
        %4513 = vmatprep.subr.bf16.mxu0 0
        %4514 = vmatpush1.bf16.msra.mxu0 0
        %4515 = vmatprep.subr.bf16.mxu0 0
        %4516 = vmatpush1.bf16.msra.mxu0 0
        %4517 = vmatprep.subr.bf16.mxu0 0
        %4518 = vmatpush1.bf16.msra.mxu0 0
        %4519 = vmatprep.subr.bf16.mxu0 0
        %4520 = vmatpush1.bf16.msra.mxu0 0
        %4521 = vmatprep.subr.bf16.mxu0 0
        %4522 = vmatpush1.bf16.msra.mxu0 0
        %4523 = vmatprep.subr.bf16.mxu0 0
        %4524 = vmatpush1.bf16.msra.mxu0 0
        %4525 = vmatprep.subr.bf16.mxu0 0
        %4526 = vmatpush1.bf16.msra.mxu0 0
        %4527 = vmatprep.subr.bf16.mxu0 0
        %4528 = vmatpush1.bf16.msra.mxu0 0
        %4529 = vmatprep.subr.bf16.mxu0 0
        %4530 = vmatpush1.bf16.msra.mxu0 0
        %4531 = vmatprep.subr.bf16.mxu0 0
        %4532 = vmatpush1.bf16.msra.mxu0 0
        %4533 = vmatprep.subr.bf16.mxu0 0
        %4534 = vmatpush1.bf16.msra.mxu0 0
        %4535 = vmatprep.subr.bf16.mxu0 0
        %4536 = vmatpush1.bf16.msra.mxu0 0
        %4537 = vmatprep.subr.bf16.mxu0 0
        %4538 = vmatpush1.bf16.msra.mxu0 0
        %4539 = vmatprep.subr.bf16.mxu0 0
        %4540 = vmatpush1.bf16.msra.mxu0 0
        %4541 = vmatprep.mubr.bf16.mxu0 0
        %4542 = vmatmul.mubr.bf16.gmra.mrb[0].mxu0 %v4504
        %v4543 = vpop.f32.mrb[0].mxu0
        %v4544 = vadd.f32 0.0, %v4543
        %v4545 = vpop.f32.mrb[0].mxu0
        %v4546 = vpop.f32.mrb[0].mxu0
        %v4547 = vpop.f32.mrb[0].mxu0
        %4548 = vdwg.mxu0
        %4550 = vrot.lane.b32.xlu0 %v4448, 8
        %v4551 = vpop.permute.xlu0 %4550
        %4554 = vrot.lane.b32.xlu0 %v4496, 16
        %v4555 = vpop.permute.xlu0 %4554
        %4558 = vrot.lane.b32.xlu0 %v4544, 24
        %v4559 = vpop.permute.xlu0 %4558
        %v4561 = vsel %vm1752, %v4400, %v4551
        %v4562 = vsel %vm2211, %v4561, %v4555
        %v4563 = vsel %vm2213, %v4562, %v4559
        %v4564 = vpack.c.bf16 %v4563, %v4563
        %v4566 = vlaneseq
        %v4567 = vshrl.u32 %v4566, 7
        %v4568 = vsub.s32 0, %v4567
        %v4569 = vrot.slane %v3979, %v4568
        %v4575 = vunpack.c.l.b16 %v3975
        %v4576 = vunpack.c.l.b16 %v3976
        %v4577 = vunpack.c.l.b16 %v3977
        %v4578 = vunpack.c.l.b16 %v3978
        %v4579 = vpack.c.b16 %v4576, %v4575
        %v4580 = vpack.c.b16 %v4578, %v4577
        %v4584 = vsel %vm1698, %v4564, 0
        %4586 = vmatprep.subr.bf16.mxu0 0
        %4587 = vmatpush1.bf16.msra.mxu0 %v4579
        %4588 = vmatprep.subr.bf16.mxu0 0
        %4589 = vmatpush1.bf16.msra.mxu0 %v4580
        %4590 = vmatprep.subr.bf16.mxu0 0
        %4591 = vmatpush1.bf16.msra.mxu0 0
        %4592 = vmatprep.subr.bf16.mxu0 0
        %4593 = vmatpush1.bf16.msra.mxu0 0
        %4594 = vmatprep.subr.bf16.mxu0 0
        %4595 = vmatpush1.bf16.msra.mxu0 0
        %4596 = vmatprep.subr.bf16.mxu0 0
        %4597 = vmatpush1.bf16.msra.mxu0 0
        %4598 = vmatprep.subr.bf16.mxu0 0
        %4599 = vmatpush1.bf16.msra.mxu0 0
        %4600 = vmatprep.subr.bf16.mxu0 0
        %4601 = vmatpush1.bf16.msra.mxu0 0
        %4602 = vmatprep.subr.bf16.mxu0 0
        %4603 = vmatpush1.bf16.msra.mxu0 0
        %4604 = vmatprep.subr.bf16.mxu0 0
        %4605 = vmatpush1.bf16.msra.mxu0 0
        %4606 = vmatprep.subr.bf16.mxu0 0
        %4607 = vmatpush1.bf16.msra.mxu0 0
        %4608 = vmatprep.subr.bf16.mxu0 0
        %4609 = vmatpush1.bf16.msra.mxu0 0
        %4610 = vmatprep.subr.bf16.mxu0 0
        %4611 = vmatpush1.bf16.msra.mxu0 0
        %4612 = vmatprep.subr.bf16.mxu0 0
        %4613 = vmatpush1.bf16.msra.mxu0 0
        %4614 = vmatprep.subr.bf16.mxu0 0
        %4615 = vmatpush1.bf16.msra.mxu0 0
        %4616 = vmatprep.subr.bf16.mxu0 0
        %4617 = vmatpush1.bf16.msra.mxu0 0
        %4618 = vmatprep.mubr.bf16.mxu0 0
        %4619 = vmatmul.mubr.bf16.gmra.mrb[0].mxu0 %v4584
        %v4620 = vpop.f32.mrb[0].mxu0
        %v4621 = vadd.f32 %v4569, %v4620
        %v4622 = vpop.f32.mrb[0].mxu0
        %v4623 = vpop.f32.mrb[0].mxu0
        %v4624 = vpop.f32.mrb[0].mxu0
        %4625 = vdwg.mxu0
        %v4626 = vadd.f32 %v3964, %v4621
        %v4627 = vsel %vm1698, %v4626, 0.0
        %4628 = vadd.xlane.f32.xlu0 %v4627
        %v4629 = vpop.xlane.xlu0 %4628
        %v4630 = vmul.f32 %v4629, %v2281
        %v4631 = vsub.f32 %v4626, %v4630
        %v4632 = vmul.f32 %v4631, %v4631
        %v4633 = vsel %vm1698, %v4632, 0.0
        %4634 = vadd.xlane.f32.xlu0 %v4633
        %v4635 = vpop.xlane.xlu0 %4634
        %v4636 = vmul.f32 %v4635, %v2281
        %v4637 = vadd.f32 %v4636, 1e-05
        %v4638 = vrsqrt.pop %v4637
        %v4639 = vmul.f32 %v4631, %v4638
        %v4641 = vlaneseq
        %v4642 = vshrl.u32 %v4641, 7
        %v4643 = vsub.s32 0, %v4642
        %v4644 = vrot.slane %v3980, %v4643
        %v4646 = vmul.f32 %v4639, %v4644
        %v4648 = vlaneseq
        %v4649 = vshrl.u32 %v4648, 7
        %v4650 = vsub.s32 0, %v4649
        %v4651 = vrot.slane %v3981, %v4650
        %v4653 = vadd.f32 %v4646, %v4651
        %v4654 = vld [vmem:[#allocation37] sm:$0xf]
        %v4655 = vld [vmem:[#allocation37 + $0x4] sm:$0xf]
        %v4656 = vld [vmem:[#allocation37 + $0x8] sm:$0xf]
        %v4657 = vld [vmem:[#allocation37 + $0xc] sm:$0xf]
        %v4658 = vld [vmem:[%s63] sm:$0x1]
        %v4659 = vld [vmem:[%s65] sm:$0xf]
        %v4660 = vld [vmem:[%s65 + $0x4] sm:$0xf]
        %v4661 = vld [vmem:[%s65 + $0x8] sm:$0xf]
        %v4662 = vld [vmem:[%s65 + $0xc] sm:$0xf]
        %v4663 = vld [vmem:[%s65 + $0x10] sm:$0xf]
        %v4664 = vld [vmem:[%s65 + $0x14] sm:$0xf]
        %v4665 = vld [vmem:[%s65 + $0x18] sm:$0xf]
        %v4666 = vld [vmem:[%s65 + $0x1c] sm:$0xf]
        %v4667 = vld [vmem:[%s67] sm:$0x1]
        %v4668 = vld [vmem:[%s69] sm:$0x1]
        %v4669 = vld [vmem:[%s71] sm:$0x1]
        %v4670 = vpack.c.bf16 %v4653, %v4653
        %v4672 = vlaneseq
        %v4673 = vshrl.u32 %v4672, 7
        %v4674 = vsub.s32 0, %v4673
        %v4675 = vrot.slane %v4658, %v4674
        %v4681 = vunpack.c.l.b16 %v4654
        %v4682 = vunpack.c.l.b16 %v4655
        %v4683 = vunpack.c.l.b16 %v4656
        %v4684 = vunpack.c.l.b16 %v4657
        %v4685 = vpack.c.b16 %v4682, %v4681
        %v4686 = vpack.c.b16 %v4684, %v4683
        %v4690 = vsel %vm1698, %v4670, 0
        %4692 = vmatprep.subr.bf16.mxu0 0
        %4693 = vmatpush1.bf16.msra.mxu0 %v4685
        %4694 = vmatprep.subr.bf16.mxu0 0
        %4695 = vmatpush1.bf16.msra.mxu0 %v4686
        %4696 = vmatprep.subr.bf16.mxu0 0
        %4697 = vmatpush1.bf16.msra.mxu0 0
        %4698 = vmatprep.subr.bf16.mxu0 0
        %4699 = vmatpush1.bf16.msra.mxu0 0
        %4700 = vmatprep.subr.bf16.mxu0 0
        %4701 = vmatpush1.bf16.msra.mxu0 0
        %4702 = vmatprep.subr.bf16.mxu0 0
        %4703 = vmatpush1.bf16.msra.mxu0 0
        %4704 = vmatprep.subr.bf16.mxu0 0
        %4705 = vmatpush1.bf16.msra.mxu0 0
        %4706 = vmatprep.subr.bf16.mxu0 0
        %4707 = vmatpush1.bf16.msra.mxu0 0
        %4708 = vmatprep.subr.bf16.mxu0 0
        %4709 = vmatpush1.bf16.msra.mxu0 0
        %4710 = vmatprep.subr.bf16.mxu0 0
        %4711 = vmatpush1.bf16.msra.mxu0 0
        %4712 = vmatprep.subr.bf16.mxu0 0
        %4713 = vmatpush1.bf16.msra.mxu0 0
        %4714 = vmatprep.subr.bf16.mxu0 0
        %4715 = vmatpush1.bf16.msra.mxu0 0
        %4716 = vmatprep.subr.bf16.mxu0 0
        %4717 = vmatpush1.bf16.msra.mxu0 0
        %4718 = vmatprep.subr.bf16.mxu0 0
        %4719 = vmatpush1.bf16.msra.mxu0 0
        %4720 = vmatprep.subr.bf16.mxu0 0
        %4721 = vmatpush1.bf16.msra.mxu0 0
        %4722 = vmatprep.subr.bf16.mxu0 0
        %4723 = vmatpush1.bf16.msra.mxu0 0
        %4724 = vmatprep.mubr.bf16.mxu0 0
        %4725 = vmatmul.mubr.bf16.gmra.mrb[0].mxu0 %v4690
        %v4726 = vpop.f32.mrb[0].mxu0
        %v4727 = vadd.f32 %v4675, %v4726
        %v4728 = vpop.f32.mrb[0].mxu0
        %v4729 = vpop.f32.mrb[0].mxu0
        %v4730 = vpop.f32.mrb[0].mxu0
        %4731 = vdwg.mxu0
        %v4732 = vmax.f32 %v4727, 0.0
        %v4733 = vpack.c.bf16 %v4732, %v4732
        %v4735 = vlaneseq
        %v4736 = vshrl.u32 %v4735, 7
        %v4737 = vsub.s32 0, %v4736
        %v4738 = vrot.slane %v4667, %v4737
        %v4748 = vunpack.c.l.b16 %v4659
        %v4749 = vunpack.c.l.b16 %v4660
        %v4750 = vunpack.c.l.b16 %v4661
        %v4751 = vunpack.c.l.b16 %v4662
        %v4752 = vunpack.c.l.b16 %v4663
        %v4753 = vunpack.c.l.b16 %v4664
        %v4754 = vunpack.c.l.b16 %v4665
        %v4755 = vunpack.c.l.b16 %v4666
        %v4756 = vpack.c.b16 %v4749, %v4748
        %v4757 = vpack.c.b16 %v4751, %v4750
        %v4758 = vpack.c.b16 %v4753, %v4752
        %v4759 = vpack.c.b16 %v4755, %v4754
        %v4765 = vsel %vm2416, %v4733, 0
        %4767 = vmatprep.subr.bf16.mxu0 0
        %4768 = vmatpush1.bf16.msra.mxu0 %v4756
        %4769 = vmatprep.subr.bf16.mxu0 0
        %4770 = vmatpush1.bf16.msra.mxu0 %v4757
        %4771 = vmatprep.subr.bf16.mxu0 0
        %4772 = vmatpush1.bf16.msra.mxu0 %v4758
        %4773 = vmatprep.subr.bf16.mxu0 0
        %4774 = vmatpush1.bf16.msra.mxu0 %v4759
        %4775 = vmatprep.subr.bf16.mxu0 0
        %4776 = vmatpush1.bf16.msra.mxu0 0
        %4777 = vmatprep.subr.bf16.mxu0 0
        %4778 = vmatpush1.bf16.msra.mxu0 0
        %4779 = vmatprep.subr.bf16.mxu0 0
        %4780 = vmatpush1.bf16.msra.mxu0 0
        %4781 = vmatprep.subr.bf16.mxu0 0
        %4782 = vmatpush1.bf16.msra.mxu0 0
        %4783 = vmatprep.subr.bf16.mxu0 0
        %4784 = vmatpush1.bf16.msra.mxu0 0
        %4785 = vmatprep.subr.bf16.mxu0 0
        %4786 = vmatpush1.bf16.msra.mxu0 0
        %4787 = vmatprep.subr.bf16.mxu0 0
        %4788 = vmatpush1.bf16.msra.mxu0 0
        %4789 = vmatprep.subr.bf16.mxu0 0
        %4790 = vmatpush1.bf16.msra.mxu0 0
        %4791 = vmatprep.subr.bf16.mxu0 0
        %4792 = vmatpush1.bf16.msra.mxu0 0
        %4793 = vmatprep.subr.bf16.mxu0 0
        %4794 = vmatpush1.bf16.msra.mxu0 0
        %4795 = vmatprep.subr.bf16.mxu0 0
        %4796 = vmatpush1.bf16.msra.mxu0 0
        %4797 = vmatprep.subr.bf16.mxu0 0
        %4798 = vmatpush1.bf16.msra.mxu0 0
        %4799 = vmatprep.mubr.bf16.mxu0 0
        %4800 = vmatmul.mubr.bf16.gmra.mrb[0].mxu0 %v4765
        %v4801 = vpop.f32.mrb[0].mxu0
        %v4802 = vadd.f32 %v4738, %v4801
        %v4803 = vpop.f32.mrb[0].mxu0
        %v4804 = vpop.f32.mrb[0].mxu0
        %v4805 = vpop.f32.mrb[0].mxu0
        %4806 = vdwg.mxu0
        %v4807 = vadd.f32 %v4653, %v4802
        %v4808 = vsel %vm1698, %v4807, 0.0
        %4809 = vadd.xlane.f32.xlu0 %v4808
        %v4810 = vpop.xlane.xlu0 %4809
        %v4811 = vmul.f32 %v4810, %v2281
        %v4812 = vsub.f32 %v4807, %v4811
        %v4813 = vmul.f32 %v4812, %v4812
        %v4814 = vsel %vm1698, %v4813, 0.0
        %4815 = vadd.xlane.f32.xlu0 %v4814
        %v4816 = vpop.xlane.xlu0 %4815
        %v4817 = vmul.f32 %v4816, %v2281
        %v4818 = vadd.f32 %v4817, 1e-05
        %v4819 = vrsqrt.pop %v4818
        %v4820 = vmul.f32 %v4812, %v4819
        %v4822 = vlaneseq
        %v4823 = vshrl.u32 %v4822, 7
        %v4824 = vsub.s32 0, %v4823
        %v4825 = vrot.slane %v4668, %v4824
        %v4827 = vmul.f32 %v4820, %v4825
        %v4829 = vlaneseq
        %v4830 = vshrl.u32 %v4829, 7
        %v4831 = vsub.s32 0, %v4830
        %v4832 = vrot.slane %v4669, %v4831
        %v4834 = vadd.f32 %v4827, %v4832
        %s4835 = scalar_lea.vmem %s33, 16
        %v4836 = vld [vmem:[%s4835] sm:$0xf]
        %v4837 = vld [vmem:[%s4835 + $0x4] sm:$0xf]
        %v4838 = vld [vmem:[%s4835 + $0x8] sm:$0xf]
        %v4839 = vld [vmem:[%s4835 + $0xc] sm:$0xf]
        %s4840 = scalar_lea.vmem [#allocation22], 1
        %v4841 = vld [vmem:[%s4840] sm:$0x1]
        %s4842 = scalar_lea.vmem %s37, 16
        %v4843 = vld [vmem:[%s4842] sm:$0xf]
        %v4844 = vld [vmem:[%s4842 + $0x4] sm:$0xf]
        %v4845 = vld [vmem:[%s4842 + $0x8] sm:$0xf]
        %v4846 = vld [vmem:[%s4842 + $0xc] sm:$0xf]
        %s4847 = scalar_lea.vmem [#allocation23], 1
        %v4848 = vld [vmem:[%s4847] sm:$0x1]
        %s4849 = scalar_lea.vmem [#allocation25], 1
        %v4850 = vld [vmem:[%s4849] sm:$0x1]
        %s4851 = scalar_lea.vmem [#allocation26], 1
        %v4852 = vld [vmem:[%s4851] sm:$0x1]
        %v4853 = vpack.c.bf16 %v4834, %v4834
        %v4855 = vlaneseq
        %v4856 = vshrl.u32 %v4855, 7
        %v4857 = vsub.s32 0, %v4856
        %v4858 = vrot.slane %v4841, %v4857
        %v4864 = vunpack.c.l.b16 %v4836
        %v4865 = vunpack.c.l.b16 %v4837
        %v4866 = vunpack.c.l.b16 %v4838
        %v4867 = vunpack.c.l.b16 %v4839
        %v4868 = vpack.c.b16 %v4865, %v4864
        %v4869 = vpack.c.b16 %v4867, %v4866
        %v4873 = vsel %vm1698, %v4853, 0
        %4875 = vmatprep.subr.bf16.mxu0 0
        %4876 = vmatpush1.bf16.msra.mxu0 %v4868
        %4877 = vmatprep.subr.bf16.mxu0 0
        %4878 = vmatpush1.bf16.msra.mxu0 %v4869
        %4879 = vmatprep.subr.bf16.mxu0 0
        %4880 = vmatpush1.bf16.msra.mxu0 0
        %4881 = vmatprep.subr.bf16.mxu0 0
        %4882 = vmatpush1.bf16.msra.mxu0 0
        %4883 = vmatprep.subr.bf16.mxu0 0
        %4884 = vmatpush1.bf16.msra.mxu0 0
        %4885 = vmatprep.subr.bf16.mxu0 0
        %4886 = vmatpush1.bf16.msra.mxu0 0
        %4887 = vmatprep.subr.bf16.mxu0 0
        %4888 = vmatpush1.bf16.msra.mxu0 0
        %4889 = vmatprep.subr.bf16.mxu0 0
        %4890 = vmatpush1.bf16.msra.mxu0 0
        %4891 = vmatprep.subr.bf16.mxu0 0
        %4892 = vmatpush1.bf16.msra.mxu0 0
        %4893 = vmatprep.subr.bf16.mxu0 0
        %4894 = vmatpush1.bf16.msra.mxu0 0
        %4895 = vmatprep.subr.bf16.mxu0 0
        %4896 = vmatpush1.bf16.msra.mxu0 0
        %4897 = vmatprep.subr.bf16.mxu0 0
        %4898 = vmatpush1.bf16.msra.mxu0 0
        %4899 = vmatprep.subr.bf16.mxu0 0
        %4900 = vmatpush1.bf16.msra.mxu0 0
        %4901 = vmatprep.subr.bf16.mxu0 0
        %4902 = vmatpush1.bf16.msra.mxu0 0
        %4903 = vmatprep.subr.bf16.mxu0 0
        %4904 = vmatpush1.bf16.msra.mxu0 0
        %4905 = vmatprep.subr.bf16.mxu0 0
        %4906 = vmatpush1.bf16.msra.mxu0 0
        %4907 = vmatprep.mubr.bf16.mxu0 0
        %4908 = vmatmul.mubr.bf16.gmra.mrb[0].mxu0 %v4873
        %v4909 = vpop.f32.mrb[0].mxu0
        %v4910 = vadd.f32 %v4858, %v4909
        %v4911 = vpop.f32.mrb[0].mxu0
        %v4912 = vpop.f32.mrb[0].mxu0
        %v4913 = vpop.f32.mrb[0].mxu0
        %4914 = vdwg.mxu0
        %v4915 = vpack.c.bf16 %v4910, %v4910
        %4917 = vrot.lane.b32.xlu0 %v4915, 120
        %v4918 = vpop.permute.xlu0 %4917
        %4919 = vrot.lane.b32.xlu0 %v4915, 112
        %v4920 = vpop.permute.xlu0 %4919
        %4921 = vrot.lane.b32.xlu0 %v4915, 104
        %v4922 = vpop.permute.xlu0 %4921
        %4923 = vrot.lane.b32.xlu0 %v4915, 96
        %v4924 = vpop.permute.xlu0 %4923
        %v4926 = vsel %vm1752, %v4915, 0
        %v4929 = vsel %vm1752, %v4924, 0
        %4931 = vmatprep.subr.bf16.mxu0 0
        %4932 = vmatpush1.bf16.xpose.msra.mxu0 %v4929
        %4933 = vmatprep.subr.bf16.mxu0 0
        %4934 = vmatpush1.bf16.xpose.msra.mxu0 0
        %4935 = vmatprep.subr.bf16.mxu0 0
        %4936 = vmatpush1.bf16.xpose.msra.mxu0 0
        %4937 = vmatprep.subr.bf16.mxu0 0
        %4938 = vmatpush1.bf16.xpose.msra.mxu0 0
        %4939 = vmatprep.subr.bf16.mxu0 0
        %4940 = vmatpush1.bf16.xpose.msra.mxu0 0
        %4941 = vmatprep.subr.bf16.mxu0 0
        %4942 = vmatpush1.bf16.xpose.msra.mxu0 0
        %4943 = vmatprep.subr.bf16.mxu0 0
        %4944 = vmatpush1.bf16.xpose.msra.mxu0 0
        %4945 = vmatprep.subr.bf16.mxu0 0
        %4946 = vmatpush1.bf16.xpose.msra.mxu0 0
        %4947 = vmatprep.subr.bf16.mxu0 0
        %4948 = vmatpush1.bf16.xpose.msra.mxu0 0
        %4949 = vmatprep.subr.bf16.mxu0 0
        %4950 = vmatpush1.bf16.xpose.msra.mxu0 0
        %4951 = vmatprep.subr.bf16.mxu0 0
        %4952 = vmatpush1.bf16.xpose.msra.mxu0 0
        %4953 = vmatprep.subr.bf16.mxu0 0
        %4954 = vmatpush1.bf16.xpose.msra.mxu0 0
        %4955 = vmatprep.subr.bf16.mxu0 0
        %4956 = vmatpush1.bf16.xpose.msra.mxu0 0
        %4957 = vmatprep.subr.bf16.mxu0 0
        %4958 = vmatpush1.bf16.xpose.msra.mxu0 0
        %4959 = vmatprep.subr.bf16.mxu0 0
        %4960 = vmatpush1.bf16.xpose.msra.mxu0 0
        %4961 = vmatprep.subr.bf16.mxu0 0
        %4962 = vmatpush1.bf16.xpose.msra.mxu0 0
        %4963 = vmatprep.mubr.bf16.mxu0 0
        %4964 = vmatmul.mubr.bf16.gmra.mrb[0].mxu0 %v4926
        %v4965 = vpop.f32.mrb[0].mxu0
        %v4966 = vadd.f32 0.0, %v4965
        %v4967 = vpop.f32.mrb[0].mxu0
        %v4968 = vpop.f32.mrb[0].mxu0
        %v4969 = vpop.f32.mrb[0].mxu0
        %4970 = vdwg.mxu0
        %4971 = vrot.lane.b32.xlu0 %v4918, 96
        %v4972 = vpop.permute.xlu0 %4971
        %v4974 = vsel %vm1752, %v4918, 0
        %v4977 = vsel %vm1752, %v4972, 0
        %4979 = vmatprep.subr.bf16.mxu0 0
        %4980 = vmatpush1.bf16.xpose.msra.mxu0 %v4977
        %4981 = vmatprep.subr.bf16.mxu0 0
        %4982 = vmatpush1.bf16.xpose.msra.mxu0 0
        %4983 = vmatprep.subr.bf16.mxu0 0
        %4984 = vmatpush1.bf16.xpose.msra.mxu0 0
        %4985 = vmatprep.subr.bf16.mxu0 0
        %4986 = vmatpush1.bf16.xpose.msra.mxu0 0
        %4987 = vmatprep.subr.bf16.mxu0 0
        %4988 = vmatpush1.bf16.xpose.msra.mxu0 0
        %4989 = vmatprep.subr.bf16.mxu0 0
        %4990 = vmatpush1.bf16.xpose.msra.mxu0 0
        %4991 = vmatprep.subr.bf16.mxu0 0
        %4992 = vmatpush1.bf16.xpose.msra.mxu0 0
        %4993 = vmatprep.subr.bf16.mxu0 0
        %4994 = vmatpush1.bf16.xpose.msra.mxu0 0
        %4995 = vmatprep.subr.bf16.mxu0 0
        %4996 = vmatpush1.bf16.xpose.msra.mxu0 0
        %4997 = vmatprep.subr.bf16.mxu0 0
        %4998 = vmatpush1.bf16.xpose.msra.mxu0 0
        %4999 = vmatprep.subr.bf16.mxu0 0
        %5000 = vmatpush1.bf16.xpose.msra.mxu0 0
        %5001 = vmatprep.subr.bf16.mxu0 0
        %5002 = vmatpush1.bf16.xpose.msra.mxu0 0
        %5003 = vmatprep.subr.bf16.mxu0 0
        %5004 = vmatpush1.bf16.xpose.msra.mxu0 0
        %5005 = vmatprep.subr.bf16.mxu0 0
        %5006 = vmatpush1.bf16.xpose.msra.mxu0 0
        %5007 = vmatprep.subr.bf16.mxu0 0
        %5008 = vmatpush1.bf16.xpose.msra.mxu0 0
        %5009 = vmatprep.subr.bf16.mxu0 0
        %5010 = vmatpush1.bf16.xpose.msra.mxu0 0
        %5011 = vmatprep.mubr.bf16.mxu0 0
        %5012 = vmatmul.mubr.bf16.gmra.mrb[0].mxu0 %v4974
        %v5013 = vpop.f32.mrb[0].mxu0
        %v5014 = vadd.f32 0.0, %v5013
        %v5015 = vpop.f32.mrb[0].mxu0
        %v5016 = vpop.f32.mrb[0].mxu0
        %v5017 = vpop.f32.mrb[0].mxu0
        %5018 = vdwg.mxu0
        %5019 = vrot.lane.b32.xlu0 %v4920, 96
        %v5020 = vpop.permute.xlu0 %5019
        %v5022 = vsel %vm1752, %v4920, 0
        %v5025 = vsel %vm1752, %v5020, 0
        %5027 = vmatprep.subr.bf16.mxu0 0
        %5028 = vmatpush1.bf16.xpose.msra.mxu0 %v5025
        %5029 = vmatprep.subr.bf16.mxu0 0
        %5030 = vmatpush1.bf16.xpose.msra.mxu0 0
        %5031 = vmatprep.subr.bf16.mxu0 0
        %5032 = vmatpush1.bf16.xpose.msra.mxu0 0
        %5033 = vmatprep.subr.bf16.mxu0 0
        %5034 = vmatpush1.bf16.xpose.msra.mxu0 0
        %5035 = vmatprep.subr.bf16.mxu0 0
        %5036 = vmatpush1.bf16.xpose.msra.mxu0 0
        %5037 = vmatprep.subr.bf16.mxu0 0
        %5038 = vmatpush1.bf16.xpose.msra.mxu0 0
        %5039 = vmatprep.subr.bf16.mxu0 0
        %5040 = vmatpush1.bf16.xpose.msra.mxu0 0
        %5041 = vmatprep.subr.bf16.mxu0 0
        %5042 = vmatpush1.bf16.xpose.msra.mxu0 0
        %5043 = vmatprep.subr.bf16.mxu0 0
        %5044 = vmatpush1.bf16.xpose.msra.mxu0 0
        %5045 = vmatprep.subr.bf16.mxu0 0
        %5046 = vmatpush1.bf16.xpose.msra.mxu0 0
        %5047 = vmatprep.subr.bf16.mxu0 0
        %5048 = vmatpush1.bf16.xpose.msra.mxu0 0
        %5049 = vmatprep.subr.bf16.mxu0 0
        %5050 = vmatpush1.bf16.xpose.msra.mxu0 0
        %5051 = vmatprep.subr.bf16.mxu0 0
        %5052 = vmatpush1.bf16.xpose.msra.mxu0 0
        %5053 = vmatprep.subr.bf16.mxu0 0
        %5054 = vmatpush1.bf16.xpose.msra.mxu0 0
        %5055 = vmatprep.subr.bf16.mxu0 0
        %5056 = vmatpush1.bf16.xpose.msra.mxu0 0
        %5057 = vmatprep.subr.bf16.mxu0 0
        %5058 = vmatpush1.bf16.xpose.msra.mxu0 0
        %5059 = vmatprep.mubr.bf16.mxu0 0
        %5060 = vmatmul.mubr.bf16.gmra.mrb[0].mxu0 %v5022
        %v5061 = vpop.f32.mrb[0].mxu0
        %v5062 = vadd.f32 0.0, %v5061
        %v5063 = vpop.f32.mrb[0].mxu0
        %v5064 = vpop.f32.mrb[0].mxu0
        %v5065 = vpop.f32.mrb[0].mxu0
        %5066 = vdwg.mxu0
        %5067 = vrot.lane.b32.xlu0 %v4922, 96
        %v5068 = vpop.permute.xlu0 %5067
        %v5070 = vsel %vm1752, %v4922, 0
        %v5073 = vsel %vm1752, %v5068, 0
        %5075 = vmatprep.subr.bf16.mxu0 0
        %5076 = vmatpush1.bf16.xpose.msra.mxu0 %v5073
        %5077 = vmatprep.subr.bf16.mxu0 0
        %5078 = vmatpush1.bf16.xpose.msra.mxu0 0
        %5079 = vmatprep.subr.bf16.mxu0 0
        %5080 = vmatpush1.bf16.xpose.msra.mxu0 0
        %5081 = vmatprep.subr.bf16.mxu0 0
        %5082 = vmatpush1.bf16.xpose.msra.mxu0 0
        %5083 = vmatprep.subr.bf16.mxu0 0
        %5084 = vmatpush1.bf16.xpose.msra.mxu0 0
        %5085 = vmatprep.subr.bf16.mxu0 0
        %5086 = vmatpush1.bf16.xpose.msra.mxu0 0
        %5087 = vmatprep.subr.bf16.mxu0 0
        %5088 = vmatpush1.bf16.xpose.msra.mxu0 0
        %5089 = vmatprep.subr.bf16.mxu0 0
        %5090 = vmatpush1.bf16.xpose.msra.mxu0 0
        %5091 = vmatprep.subr.bf16.mxu0 0
        %5092 = vmatpush1.bf16.xpose.msra.mxu0 0
        %5093 = vmatprep.subr.bf16.mxu0 0
        %5094 = vmatpush1.bf16.xpose.msra.mxu0 0
        %5095 = vmatprep.subr.bf16.mxu0 0
        %5096 = vmatpush1.bf16.xpose.msra.mxu0 0
        %5097 = vmatprep.subr.bf16.mxu0 0
        %5098 = vmatpush1.bf16.xpose.msra.mxu0 0
        %5099 = vmatprep.subr.bf16.mxu0 0
        %5100 = vmatpush1.bf16.xpose.msra.mxu0 0
        %5101 = vmatprep.subr.bf16.mxu0 0
        %5102 = vmatpush1.bf16.xpose.msra.mxu0 0
        %5103 = vmatprep.subr.bf16.mxu0 0
        %5104 = vmatpush1.bf16.xpose.msra.mxu0 0
        %5105 = vmatprep.subr.bf16.mxu0 0
        %5106 = vmatpush1.bf16.xpose.msra.mxu0 0
        %5107 = vmatprep.mubr.bf16.mxu0 0
        %5108 = vmatmul.mubr.bf16.gmra.mrb[0].mxu0 %v5070
        %v5109 = vpop.f32.mrb[0].mxu0
        %v5110 = vadd.f32 0.0, %v5109
        %v5111 = vpop.f32.mrb[0].mxu0
        %v5112 = vpop.f32.mrb[0].mxu0
        %v5113 = vpop.f32.mrb[0].mxu0
        %5114 = vdwg.mxu0
        %v5115 = vmul.f32 %v4966, 0.35355338
        %v5116 = vmul.f32 %v5014, 0.35355338
        %v5117 = vmul.f32 %v5062, 0.35355338
        %v5118 = vmul.f32 %v5110, 0.35355338
        %v5119 = vadd.f32 %v5115, %v1666
        %v5120 = vadd.f32 %v5116, %v1666
        %v5121 = vadd.f32 %v5117, %v1666
        %v5122 = vadd.f32 %v5118, %v1666
        %v5123 = vsel %vm1752, %v5119, -inf
        %5124 = vmax.xlane.f32.xlu0 %v5123
        %v5125 = vpop.xlane.xlu0 %5124
        %v5126 = vsel %vm1752, %v5120, -inf
        %5127 = vmax.xlane.f32.xlu0 %v5126
        %v5128 = vpop.xlane.xlu0 %5127
        %v5129 = vsel %vm1752, %v5121, -inf
        %5130 = vmax.xlane.f32.xlu0 %v5129
        %v5131 = vpop.xlane.xlu0 %5130
        %v5132 = vsel %vm1752, %v5122, -inf
        %5133 = vmax.xlane.f32.xlu0 %v5132
        %v5134 = vpop.xlane.xlu0 %5133
        %v5135 = vsub.f32 %v5119, %v5125
        %v5136 = vsub.f32 %v5120, %v5128
        %v5137 = vsub.f32 %v5121, %v5131
        %v5138 = vsub.f32 %v5122, %v5134
        %v5139 = vmul.f32 %v5135, 1.442695
        %v5140 = vpow.pop %v5139
        %v5141 = vmul.f32 %v5136, 1.442695
        %v5142 = vpow.pop %v5141
        %v5143 = vmul.f32 %v5137, 1.442695
        %v5144 = vpow.pop %v5143
        %v5145 = vmul.f32 %v5138, 1.442695
        %v5146 = vpow.pop %v5145
        %v5147 = vsel %vm1752, %v5140, 0.0
        %5148 = vadd.xlane.f32.xlu0 %v5147
        %v5149 = vpop.xlane.xlu0 %5148
        %v5150 = vsel %vm1752, %v5142, 0.0
        %5151 = vadd.xlane.f32.xlu0 %v5150
        %v5152 = vpop.xlane.xlu0 %5151
        %v5153 = vsel %vm1752, %v5144, 0.0
        %5154 = vadd.xlane.f32.xlu0 %v5153
        %v5155 = vpop.xlane.xlu0 %5154
        %v5156 = vsel %vm1752, %v5146, 0.0
        %5157 = vadd.xlane.f32.xlu0 %v5156
        %v5158 = vpop.xlane.xlu0 %5157
        %v5159 = vrcp.pop %v5149
        %v5160 = vrcp.pop %v5152
        %v5161 = vrcp.pop %v5155
        %v5162 = vrcp.pop %v5158
        %v5163 = vmul.f32 %v5140, %v5159
        %v5164 = vmul.f32 %v5142, %v5160
        %v5165 = vmul.f32 %v5144, %v5161
        %v5166 = vmul.f32 %v5146, %v5162
        %v5167 = vpack.c.bf16 %v5163, %v5163
        %v5168 = vpack.c.bf16 %v5164, %v5164
        %v5169 = vpack.c.bf16 %v5165, %v5165
        %v5170 = vpack.c.bf16 %v5166, %v5166
        %5171 = vrot.lane.b32.xlu0 %v4915, 64
        %v5172 = vpop.permute.xlu0 %5171
        %v5174 = vsel %vm1752, %v5167, 0
        %v5177 = vsel %vm2010, %v5172, 0
        %5179 = vmatprep.subr.bf16.mxu0 0
        %5180 = vmatpush1.bf16.msra.mxu0 %v5177
        %5181 = vmatprep.subr.bf16.mxu0 0
        %5182 = vmatpush1.bf16.msra.mxu0 0
        %5183 = vmatprep.subr.bf16.mxu0 0
        %5184 = vmatpush1.bf16.msra.mxu0 0
        %5185 = vmatprep.subr.bf16.mxu0 0
        %5186 = vmatpush1.bf16.msra.mxu0 0
        %5187 = vmatprep.subr.bf16.mxu0 0
        %5188 = vmatpush1.bf16.msra.mxu0 0
        %5189 = vmatprep.subr.bf16.mxu0 0
        %5190 = vmatpush1.bf16.msra.mxu0 0
        %5191 = vmatprep.subr.bf16.mxu0 0
        %5192 = vmatpush1.bf16.msra.mxu0 0
        %5193 = vmatprep.subr.bf16.mxu0 0
        %5194 = vmatpush1.bf16.msra.mxu0 0
        %5195 = vmatprep.subr.bf16.mxu0 0
        %5196 = vmatpush1.bf16.msra.mxu0 0
        %5197 = vmatprep.subr.bf16.mxu0 0
        %5198 = vmatpush1.bf16.msra.mxu0 0
        %5199 = vmatprep.subr.bf16.mxu0 0
        %5200 = vmatpush1.bf16.msra.mxu0 0
        %5201 = vmatprep.subr.bf16.mxu0 0
        %5202 = vmatpush1.bf16.msra.mxu0 0
        %5203 = vmatprep.subr.bf16.mxu0 0
        %5204 = vmatpush1.bf16.msra.mxu0 0
        %5205 = vmatprep.subr.bf16.mxu0 0
        %5206 = vmatpush1.bf16.msra.mxu0 0
        %5207 = vmatprep.subr.bf16.mxu0 0
        %5208 = vmatpush1.bf16.msra.mxu0 0
        %5209 = vmatprep.subr.bf16.mxu0 0
        %5210 = vmatpush1.bf16.msra.mxu0 0
        %5211 = vmatprep.mubr.bf16.mxu0 0
        %5212 = vmatmul.mubr.bf16.gmra.mrb[0].mxu0 %v5174
        %v5213 = vpop.f32.mrb[0].mxu0
        %v5214 = vadd.f32 0.0, %v5213
        %v5215 = vpop.f32.mrb[0].mxu0
        %v5216 = vpop.f32.mrb[0].mxu0
        %v5217 = vpop.f32.mrb[0].mxu0
        %5218 = vdwg.mxu0
        %5219 = vrot.lane.b32.xlu0 %v4918, 64
        %v5220 = vpop.permute.xlu0 %5219
        %v5222 = vsel %vm1752, %v5168, 0
        %v5225 = vsel %vm2010, %v5220, 0
        %5227 = vmatprep.subr.bf16.mxu0 0
        %5228 = vmatpush1.bf16.msra.mxu0 %v5225
        %5229 = vmatprep.subr.bf16.mxu0 0
        %5230 = vmatpush1.bf16.msra.mxu0 0
        %5231 = vmatprep.subr.bf16.mxu0 0
        %5232 = vmatpush1.bf16.msra.mxu0 0
        %5233 = vmatprep.subr.bf16.mxu0 0
        %5234 = vmatpush1.bf16.msra.mxu0 0
        %5235 = vmatprep.subr.bf16.mxu0 0
        %5236 = vmatpush1.bf16.msra.mxu0 0
        %5237 = vmatprep.subr.bf16.mxu0 0
        %5238 = vmatpush1.bf16.msra.mxu0 0
        %5239 = vmatprep.subr.bf16.mxu0 0
        %5240 = vmatpush1.bf16.msra.mxu0 0
        %5241 = vmatprep.subr.bf16.mxu0 0
        %5242 = vmatpush1.bf16.msra.mxu0 0
        %5243 = vmatprep.subr.bf16.mxu0 0
        %5244 = vmatpush1.bf16.msra.mxu0 0
        %5245 = vmatprep.subr.bf16.mxu0 0
        %5246 = vmatpush1.bf16.msra.mxu0 0
        %5247 = vmatprep.subr.bf16.mxu0 0
        %5248 = vmatpush1.bf16.msra.mxu0 0
        %5249 = vmatprep.subr.bf16.mxu0 0
        %5250 = vmatpush1.bf16.msra.mxu0 0
        %5251 = vmatprep.subr.bf16.mxu0 0
        %5252 = vmatpush1.bf16.msra.mxu0 0
        %5253 = vmatprep.subr.bf16.mxu0 0
        %5254 = vmatpush1.bf16.msra.mxu0 0
        %5255 = vmatprep.subr.bf16.mxu0 0
        %5256 = vmatpush1.bf16.msra.mxu0 0
        %5257 = vmatprep.subr.bf16.mxu0 0
        %5258 = vmatpush1.bf16.msra.mxu0 0
        %5259 = vmatprep.mubr.bf16.mxu0 0
        %5260 = vmatmul.mubr.bf16.gmra.mrb[0].mxu0 %v5222
        %v5261 = vpop.f32.mrb[0].mxu0
        %v5262 = vadd.f32 0.0, %v5261
        %v5263 = vpop.f32.mrb[0].mxu0
        %v5264 = vpop.f32.mrb[0].mxu0
        %v5265 = vpop.f32.mrb[0].mxu0
        %5266 = vdwg.mxu0
        %5267 = vrot.lane.b32.xlu0 %v4920, 64
        %v5268 = vpop.permute.xlu0 %5267
        %v5270 = vsel %vm1752, %v5169, 0
        %v5273 = vsel %vm2010, %v5268, 0
        %5275 = vmatprep.subr.bf16.mxu0 0
        %5276 = vmatpush1.bf16.msra.mxu0 %v5273
        %5277 = vmatprep.subr.bf16.mxu0 0
        %5278 = vmatpush1.bf16.msra.mxu0 0
        %5279 = vmatprep.subr.bf16.mxu0 0
        %5280 = vmatpush1.bf16.msra.mxu0 0
        %5281 = vmatprep.subr.bf16.mxu0 0
        %5282 = vmatpush1.bf16.msra.mxu0 0
        %5283 = vmatprep.subr.bf16.mxu0 0
        %5284 = vmatpush1.bf16.msra.mxu0 0
        %5285 = vmatprep.subr.bf16.mxu0 0
        %5286 = vmatpush1.bf16.msra.mxu0 0
        %5287 = vmatprep.subr.bf16.mxu0 0
        %5288 = vmatpush1.bf16.msra.mxu0 0
        %5289 = vmatprep.subr.bf16.mxu0 0
        %5290 = vmatpush1.bf16.msra.mxu0 0
        %5291 = vmatprep.subr.bf16.mxu0 0
        %5292 = vmatpush1.bf16.msra.mxu0 0
        %5293 = vmatprep.subr.bf16.mxu0 0
        %5294 = vmatpush1.bf16.msra.mxu0 0
        %5295 = vmatprep.subr.bf16.mxu0 0
        %5296 = vmatpush1.bf16.msra.mxu0 0
        %5297 = vmatprep.subr.bf16.mxu0 0
        %5298 = vmatpush1.bf16.msra.mxu0 0
        %5299 = vmatprep.subr.bf16.mxu0 0
        %5300 = vmatpush1.bf16.msra.mxu0 0
        %5301 = vmatprep.subr.bf16.mxu0 0
        %5302 = vmatpush1.bf16.msra.mxu0 0
        %5303 = vmatprep.subr.bf16.mxu0 0
        %5304 = vmatpush1.bf16.msra.mxu0 0
        %5305 = vmatprep.subr.bf16.mxu0 0
        %5306 = vmatpush1.bf16.msra.mxu0 0
        %5307 = vmatprep.mubr.bf16.mxu0 0
        %5308 = vmatmul.mubr.bf16.gmra.mrb[0].mxu0 %v5270
        %v5309 = vpop.f32.mrb[0].mxu0
        %v5310 = vadd.f32 0.0, %v5309
        %v5311 = vpop.f32.mrb[0].mxu0
        %v5312 = vpop.f32.mrb[0].mxu0
        %v5313 = vpop.f32.mrb[0].mxu0
        %5314 = vdwg.mxu0
        %5315 = vrot.lane.b32.xlu0 %v4922, 64
        %v5316 = vpop.permute.xlu0 %5315
        %v5318 = vsel %vm1752, %v5170, 0
        %v5321 = vsel %vm2010, %v5316, 0
        %5323 = vmatprep.subr.bf16.mxu0 0
        %5324 = vmatpush1.bf16.msra.mxu0 %v5321
        %5325 = vmatprep.subr.bf16.mxu0 0
        %5326 = vmatpush1.bf16.msra.mxu0 0
        %5327 = vmatprep.subr.bf16.mxu0 0
        %5328 = vmatpush1.bf16.msra.mxu0 0
        %5329 = vmatprep.subr.bf16.mxu0 0
        %5330 = vmatpush1.bf16.msra.mxu0 0
        %5331 = vmatprep.subr.bf16.mxu0 0
        %5332 = vmatpush1.bf16.msra.mxu0 0
        %5333 = vmatprep.subr.bf16.mxu0 0
        %5334 = vmatpush1.bf16.msra.mxu0 0
        %5335 = vmatprep.subr.bf16.mxu0 0
        %5336 = vmatpush1.bf16.msra.mxu0 0
        %5337 = vmatprep.subr.bf16.mxu0 0
        %5338 = vmatpush1.bf16.msra.mxu0 0
        %5339 = vmatprep.subr.bf16.mxu0 0
        %5340 = vmatpush1.bf16.msra.mxu0 0
        %5341 = vmatprep.subr.bf16.mxu0 0
        %5342 = vmatpush1.bf16.msra.mxu0 0
        %5343 = vmatprep.subr.bf16.mxu0 0
        %5344 = vmatpush1.bf16.msra.mxu0 0
        %5345 = vmatprep.subr.bf16.mxu0 0
        %5346 = vmatpush1.bf16.msra.mxu0 0
        %5347 = vmatprep.subr.bf16.mxu0 0
        %5348 = vmatpush1.bf16.msra.mxu0 0
        %5349 = vmatprep.subr.bf16.mxu0 0
        %5350 = vmatpush1.bf16.msra.mxu0 0
        %5351 = vmatprep.subr.bf16.mxu0 0
        %5352 = vmatpush1.bf16.msra.mxu0 0
        %5353 = vmatprep.subr.bf16.mxu0 0
        %5354 = vmatpush1.bf16.msra.mxu0 0
        %5355 = vmatprep.mubr.bf16.mxu0 0
        %5356 = vmatmul.mubr.bf16.gmra.mrb[0].mxu0 %v5318
        %v5357 = vpop.f32.mrb[0].mxu0
        %v5358 = vadd.f32 0.0, %v5357
        %v5359 = vpop.f32.mrb[0].mxu0
        %v5360 = vpop.f32.mrb[0].mxu0
        %v5361 = vpop.f32.mrb[0].mxu0
        %5362 = vdwg.mxu0
        %5364 = vrot.lane.b32.xlu0 %v5262, 8
        %v5365 = vpop.permute.xlu0 %5364
        %5368 = vrot.lane.b32.xlu0 %v5310, 16
        %v5369 = vpop.permute.xlu0 %5368
        %5372 = vrot.lane.b32.xlu0 %v5358, 24
        %v5373 = vpop.permute.xlu0 %5372
        %v5375 = vsel %vm1752, %v5214, %v5365
        %v5376 = vsel %vm2211, %v5375, %v5369
        %v5377 = vsel %vm2213, %v5376, %v5373
        %v5378 = vpack.c.bf16 %v5377, %v5377
        %v5380 = vlaneseq
        %v5381 = vshrl.u32 %v5380, 7
        %v5382 = vsub.s32 0, %v5381
        %v5383 = vrot.slane %v4848, %v5382
        %v5389 = vunpack.c.l.b16 %v4843
        %v5390 = vunpack.c.l.b16 %v4844
        %v5391 = vunpack.c.l.b16 %v4845
        %v5392 = vunpack.c.l.b16 %v4846
        %v5393 = vpack.c.b16 %v5390, %v5389
        %v5394 = vpack.c.b16 %v5392, %v5391
        %v5398 = vsel %vm1698, %v5378, 0
        %5400 = vmatprep.subr.bf16.mxu0 0
        %5401 = vmatpush1.bf16.msra.mxu0 %v5393
        %5402 = vmatprep.subr.bf16.mxu0 0
        %5403 = vmatpush1.bf16.msra.mxu0 %v5394
        %5404 = vmatprep.subr.bf16.mxu0 0
        %5405 = vmatpush1.bf16.msra.mxu0 0
        %5406 = vmatprep.subr.bf16.mxu0 0
        %5407 = vmatpush1.bf16.msra.mxu0 0
        %5408 = vmatprep.subr.bf16.mxu0 0
        %5409 = vmatpush1.bf16.msra.mxu0 0
        %5410 = vmatprep.subr.bf16.mxu0 0
        %5411 = vmatpush1.bf16.msra.mxu0 0
        %5412 = vmatprep.subr.bf16.mxu0 0
        %5413 = vmatpush1.bf16.msra.mxu0 0
        %5414 = vmatprep.subr.bf16.mxu0 0
        %5415 = vmatpush1.bf16.msra.mxu0 0
        %5416 = vmatprep.subr.bf16.mxu0 0
        %5417 = vmatpush1.bf16.msra.mxu0 0
        %5418 = vmatprep.subr.bf16.mxu0 0
        %5419 = vmatpush1.bf16.msra.mxu0 0
        %5420 = vmatprep.subr.bf16.mxu0 0
        %5421 = vmatpush1.bf16.msra.mxu0 0
        %5422 = vmatprep.subr.bf16.mxu0 0
        %5423 = vmatpush1.bf16.msra.mxu0 0
        %5424 = vmatprep.subr.bf16.mxu0 0
        %5425 = vmatpush1.bf16.msra.mxu0 0
        %5426 = vmatprep.subr.bf16.mxu0 0
        %5427 = vmatpush1.bf16.msra.mxu0 0
        %5428 = vmatprep.subr.bf16.mxu0 0
        %5429 = vmatpush1.bf16.msra.mxu0 0
        %5430 = vmatprep.subr.bf16.mxu0 0
        %5431 = vmatpush1.bf16.msra.mxu0 0
        %5432 = vmatprep.mubr.bf16.mxu0 0
        %5433 = vmatmul.mubr.bf16.gmra.mrb[0].mxu0 %v5398
        %v5434 = vpop.f32.mrb[0].mxu0
        %v5435 = vadd.f32 %v5383, %v5434
        %v5436 = vpop.f32.mrb[0].mxu0
        %v5437 = vpop.f32.mrb[0].mxu0
        %v5438 = vpop.f32.mrb[0].mxu0
        %5439 = vdwg.mxu0
        %v5440 = vadd.f32 %v4834, %v5435
        %v5441 = vsel %vm1698, %v5440, 0.0
        %5442 = vadd.xlane.f32.xlu0 %v5441
        %v5443 = vpop.xlane.xlu0 %5442
        %v5444 = vmul.f32 %v5443, %v2281
        %v5445 = vsub.f32 %v5440, %v5444
        %v5446 = vmul.f32 %v5445, %v5445
        %v5447 = vsel %vm1698, %v5446, 0.0
        %5448 = vadd.xlane.f32.xlu0 %v5447
        %v5449 = vpop.xlane.xlu0 %5448
        %v5450 = vmul.f32 %v5449, %v2281
        %v5451 = vadd.f32 %v5450, 1e-05
        %v5452 = vrsqrt.pop %v5451
        %v5453 = vmul.f32 %v5445, %v5452
        %v5455 = vlaneseq
        %v5456 = vshrl.u32 %v5455, 7
        %v5457 = vsub.s32 0, %v5456
        %v5458 = vrot.slane %v4850, %v5457
        %v5460 = vmul.f32 %v5453, %v5458
        %v5462 = vlaneseq
        %v5463 = vshrl.u32 %v5462, 7
        %v5464 = vsub.s32 0, %v5463
        %v5465 = vrot.slane %v4852, %v5464
        %v5467 = vadd.f32 %v5460, %v5465
        %s5468 = scalar_lea.vmem %s45, 16
        %v5469 = vld [vmem:[%s5468] sm:$0xf]
        %v5470 = vld [vmem:[%s5468 + $0x4] sm:$0xf]
        %v5471 = vld [vmem:[%s5468 + $0x8] sm:$0xf]
        %v5472 = vld [vmem:[%s5468 + $0xc] sm:$0xf]
        %s5473 = scalar_lea.vmem [#allocation28], 1
        %v5474 = vld [vmem:[%s5473] sm:$0x1]
        %s5475 = scalar_lea.vmem [#allocation29], 16
        %v5476 = vld [vmem:[%s5475] sm:$0xf]
        %v5477 = vld [vmem:[%s5475 + $0x4] sm:$0xf]
        %v5478 = vld [vmem:[%s5475 + $0x8] sm:$0xf]
        %v5479 = vld [vmem:[%s5475 + $0xc] sm:$0xf]
        %s5480 = scalar_lea.vmem [#allocation31], 1
        %v5481 = vld [vmem:[%s5480] sm:$0x1]
        %s5482 = scalar_lea.vmem %s53, 16
        %v5483 = vld [vmem:[%s5482] sm:$0xf]
        %v5484 = vld [vmem:[%s5482 + $0x4] sm:$0xf]
        %v5485 = vld [vmem:[%s5482 + $0x8] sm:$0xf]
        %v5486 = vld [vmem:[%s5482 + $0xc] sm:$0xf]
        %s5487 = scalar_lea.vmem [#allocation32], 1
        %v5488 = vld [vmem:[%s5487] sm:$0x1]
        %s5489 = scalar_lea.vmem [#allocation34], 1
        %v5490 = vld [vmem:[%s5489] sm:$0x1]
        %s5491 = scalar_lea.vmem [#allocation35], 1
        %v5492 = vld [vmem:[%s5491] sm:$0x1]
        %v5493 = vpack.c.bf16 %v5467, %v5467
        %v5495 = vlaneseq
        %v5496 = vshrl.u32 %v5495, 7
        %v5497 = vsub.s32 0, %v5496
        %v5498 = vrot.slane %v5474, %v5497
        %v5504 = vunpack.c.l.b16 %v5469
        %v5505 = vunpack.c.l.b16 %v5470
        %v5506 = vunpack.c.l.b16 %v5471
        %v5507 = vunpack.c.l.b16 %v5472
        %v5508 = vpack.c.b16 %v5505, %v5504
        %v5509 = vpack.c.b16 %v5507, %v5506
        %v5513 = vsel %vm1698, %v5493, 0
        %5515 = vmatprep.subr.bf16.mxu0 0
        %5516 = vmatpush1.bf16.msra.mxu0 %v5508
        %5517 = vmatprep.subr.bf16.mxu0 0
        %5518 = vmatpush1.bf16.msra.mxu0 %v5509
        %5519 = vmatprep.subr.bf16.mxu0 0
        %5520 = vmatpush1.bf16.msra.mxu0 0
        %5521 = vmatprep.subr.bf16.mxu0 0
        %5522 = vmatpush1.bf16.msra.mxu0 0
        %5523 = vmatprep.subr.bf16.mxu0 0
        %5524 = vmatpush1.bf16.msra.mxu0 0
        %5525 = vmatprep.subr.bf16.mxu0 0
        %5526 = vmatpush1.bf16.msra.mxu0 0
        %5527 = vmatprep.subr.bf16.mxu0 0
        %5528 = vmatpush1.bf16.msra.mxu0 0
        %5529 = vmatprep.subr.bf16.mxu0 0
        %5530 = vmatpush1.bf16.msra.mxu0 0
        %5531 = vmatprep.subr.bf16.mxu0 0
        %5532 = vmatpush1.bf16.msra.mxu0 0
        %5533 = vmatprep.subr.bf16.mxu0 0
        %5534 = vmatpush1.bf16.msra.mxu0 0
        %5535 = vmatprep.subr.bf16.mxu0 0
        %5536 = vmatpush1.bf16.msra.mxu0 0
        %5537 = vmatprep.subr.bf16.mxu0 0
        %5538 = vmatpush1.bf16.msra.mxu0 0
        %5539 = vmatprep.subr.bf16.mxu0 0
        %5540 = vmatpush1.bf16.msra.mxu0 0
        %5541 = vmatprep.subr.bf16.mxu0 0
        %5542 = vmatpush1.bf16.msra.mxu0 0
        %5543 = vmatprep.subr.bf16.mxu0 0
        %5544 = vmatpush1.bf16.msra.mxu0 0
        %5545 = vmatprep.subr.bf16.mxu0 0
        %5546 = vmatpush1.bf16.msra.mxu0 0
        %5547 = vmatprep.mubr.bf16.mxu0 0
        %5548 = vmatmul.mubr.bf16.gmra.mrb[0].mxu0 %v5513
        %v5549 = vpop.f32.mrb[0].mxu0
        %v5550 = vadd.f32 %v5498, %v5549
        %v5551 = vpop.f32.mrb[0].mxu0
        %v5552 = vpop.f32.mrb[0].mxu0
        %v5553 = vpop.f32.mrb[0].mxu0
        %5554 = vdwg.mxu0
        %v5555 = vpack.c.bf16 %v5550, %v5550
        %v5557 = vlaneseq
        %v5558 = vshrl.u32 %v5557, 7
        %v5559 = vsub.s32 0, %v5558
        %v5560 = vrot.slane %v5481, %v5559
        %v5566 = vunpack.c.l.b16 %v5476
        %v5567 = vunpack.c.l.b16 %v5477
        %v5568 = vunpack.c.l.b16 %v5478
        %v5569 = vunpack.c.l.b16 %v5479
        %v5570 = vpack.c.b16 %v5567, %v5566
        %v5571 = vpack.c.b16 %v5569, %v5568
        %5574 = vmatprep.subr.bf16.mxu0 0
        %5575 = vmatpush1.bf16.msra.mxu0 %v5570
        %5576 = vmatprep.subr.bf16.mxu0 0
        %5577 = vmatpush1.bf16.msra.mxu0 %v5571
        %5578 = vmatprep.subr.bf16.mxu0 0
        %5579 = vmatpush1.bf16.msra.mxu0 0
        %5580 = vmatprep.subr.bf16.mxu0 0
        %5581 = vmatpush1.bf16.msra.mxu0 0
        %5582 = vmatprep.subr.bf16.mxu0 0
        %5583 = vmatpush1.bf16.msra.mxu0 0
        %5584 = vmatprep.subr.bf16.mxu0 0
        %5585 = vmatpush1.bf16.msra.mxu0 0
        %5586 = vmatprep.subr.bf16.mxu0 0
        %5587 = vmatpush1.bf16.msra.mxu0 0
        %5588 = vmatprep.subr.bf16.mxu0 0
        %5589 = vmatpush1.bf16.msra.mxu0 0
        %5590 = vmatprep.subr.bf16.mxu0 0
        %5591 = vmatpush1.bf16.msra.mxu0 0
        %5592 = vmatprep.subr.bf16.mxu0 0
        %5593 = vmatpush1.bf16.msra.mxu0 0
        %5594 = vmatprep.subr.bf16.mxu0 0
        %5595 = vmatpush1.bf16.msra.mxu0 0
        %5596 = vmatprep.subr.bf16.mxu0 0
        %5597 = vmatpush1.bf16.msra.mxu0 0
        %5598 = vmatprep.subr.bf16.mxu0 0
        %5599 = vmatpush1.bf16.msra.mxu0 0
        %5600 = vmatprep.subr.bf16.mxu0 0
        %5601 = vmatpush1.bf16.msra.mxu0 0
        %5602 = vmatprep.subr.bf16.mxu0 0
        %5603 = vmatpush1.bf16.msra.mxu0 0
        %5604 = vmatprep.subr.bf16.mxu0 0
        %5605 = vmatpush1.bf16.msra.mxu0 0
        %5606 = vmatprep.mubr.bf16.mxu0 0
        %5607 = vmatmul.mubr.bf16.gmra.mrb[0].mxu0 %v4064
        %v5608 = vpop.f32.mrb[0].mxu0
        %v5609 = vadd.f32 %v5560, %v5608
        %v5610 = vpop.f32.mrb[0].mxu0
        %v5611 = vpop.f32.mrb[0].mxu0
        %v5612 = vpop.f32.mrb[0].mxu0
        %5613 = vdwg.mxu0
        %v5614 = vpack.c.bf16 %v5609, %v5609
        %5616 = vrot.lane.b32.xlu0 %v5555, 120
        %v5617 = vpop.permute.xlu0 %5616
        %5618 = vrot.lane.b32.xlu0 %v5555, 112
        %v5619 = vpop.permute.xlu0 %5618
        %5620 = vrot.lane.b32.xlu0 %v5555, 104
        %v5621 = vpop.permute.xlu0 %5620
        %5623 = vrot.lane.b32.xlu0 %v5614, 120
        %v5624 = vpop.permute.xlu0 %5623
        %5625 = vrot.lane.b32.xlu0 %v5614, 112
        %v5626 = vpop.permute.xlu0 %5625
        %5627 = vrot.lane.b32.xlu0 %v5614, 104
        %v5628 = vpop.permute.xlu0 %5627
        %v5630 = vsel %vm1752, %v5555, 0
        %v5633 = vsel %vm1752, %v5614, 0
        %5635 = vmatprep.subr.bf16.mxu0 0
        %5636 = vmatpush1.bf16.xpose.msra.mxu0 %v5633
        %5637 = vmatprep.subr.bf16.mxu0 0
        %5638 = vmatpush1.bf16.xpose.msra.mxu0 0
        %5639 = vmatprep.subr.bf16.mxu0 0
        %5640 = vmatpush1.bf16.xpose.msra.mxu0 0
        %5641 = vmatprep.subr.bf16.mxu0 0
        %5642 = vmatpush1.bf16.xpose.msra.mxu0 0
        %5643 = vmatprep.subr.bf16.mxu0 0
        %5644 = vmatpush1.bf16.xpose.msra.mxu0 0
        %5645 = vmatprep.subr.bf16.mxu0 0
        %5646 = vmatpush1.bf16.xpose.msra.mxu0 0
        %5647 = vmatprep.subr.bf16.mxu0 0
        %5648 = vmatpush1.bf16.xpose.msra.mxu0 0
        %5649 = vmatprep.subr.bf16.mxu0 0
        %5650 = vmatpush1.bf16.xpose.msra.mxu0 0
        %5651 = vmatprep.subr.bf16.mxu0 0
        %5652 = vmatpush1.bf16.xpose.msra.mxu0 0
        %5653 = vmatprep.subr.bf16.mxu0 0
        %5654 = vmatpush1.bf16.xpose.msra.mxu0 0
        %5655 = vmatprep.subr.bf16.mxu0 0
        %5656 = vmatpush1.bf16.xpose.msra.mxu0 0
        %5657 = vmatprep.subr.bf16.mxu0 0
        %5658 = vmatpush1.bf16.xpose.msra.mxu0 0
        %5659 = vmatprep.subr.bf16.mxu0 0
        %5660 = vmatpush1.bf16.xpose.msra.mxu0 0
        %5661 = vmatprep.subr.bf16.mxu0 0
        %5662 = vmatpush1.bf16.xpose.msra.mxu0 0
        %5663 = vmatprep.subr.bf16.mxu0 0
        %5664 = vmatpush1.bf16.xpose.msra.mxu0 0
        %5665 = vmatprep.subr.bf16.mxu0 0
        %5666 = vmatpush1.bf16.xpose.msra.mxu0 0
        %5667 = vmatprep.mubr.bf16.mxu0 0
        %5668 = vmatmul.mubr.bf16.gmra.mrb[0].mxu0 %v5630
        %v5669 = vpop.f32.mrb[0].mxu0
        %v5670 = vadd.f32 0.0, %v5669
        %v5671 = vpop.f32.mrb[0].mxu0
        %v5672 = vpop.f32.mrb[0].mxu0
        %v5673 = vpop.f32.mrb[0].mxu0
        %5674 = vdwg.mxu0
        %v5676 = vsel %vm1752, %v5617, 0
        %v5679 = vsel %vm1752, %v5624, 0
        %5681 = vmatprep.subr.bf16.mxu0 0
        %5682 = vmatpush1.bf16.xpose.msra.mxu0 %v5679
        %5683 = vmatprep.subr.bf16.mxu0 0
        %5684 = vmatpush1.bf16.xpose.msra.mxu0 0
        %5685 = vmatprep.subr.bf16.mxu0 0
        %5686 = vmatpush1.bf16.xpose.msra.mxu0 0
        %5687 = vmatprep.subr.bf16.mxu0 0
        %5688 = vmatpush1.bf16.xpose.msra.mxu0 0
        %5689 = vmatprep.subr.bf16.mxu0 0
        %5690 = vmatpush1.bf16.xpose.msra.mxu0 0
        %5691 = vmatprep.subr.bf16.mxu0 0
        %5692 = vmatpush1.bf16.xpose.msra.mxu0 0
        %5693 = vmatprep.subr.bf16.mxu0 0
        %5694 = vmatpush1.bf16.xpose.msra.mxu0 0
        %5695 = vmatprep.subr.bf16.mxu0 0
        %5696 = vmatpush1.bf16.xpose.msra.mxu0 0
        %5697 = vmatprep.subr.bf16.mxu0 0
        %5698 = vmatpush1.bf16.xpose.msra.mxu0 0
        %5699 = vmatprep.subr.bf16.mxu0 0
        %5700 = vmatpush1.bf16.xpose.msra.mxu0 0
        %5701 = vmatprep.subr.bf16.mxu0 0
        %5702 = vmatpush1.bf16.xpose.msra.mxu0 0
        %5703 = vmatprep.subr.bf16.mxu0 0
        %5704 = vmatpush1.bf16.xpose.msra.mxu0 0
        %5705 = vmatprep.subr.bf16.mxu0 0
        %5706 = vmatpush1.bf16.xpose.msra.mxu0 0
        %5707 = vmatprep.subr.bf16.mxu0 0
        %5708 = vmatpush1.bf16.xpose.msra.mxu0 0
        %5709 = vmatprep.subr.bf16.mxu0 0
        %5710 = vmatpush1.bf16.xpose.msra.mxu0 0
        %5711 = vmatprep.subr.bf16.mxu0 0
        %5712 = vmatpush1.bf16.xpose.msra.mxu0 0
        %5713 = vmatprep.mubr.bf16.mxu0 0
        %5714 = vmatmul.mubr.bf16.gmra.mrb[0].mxu0 %v5676
        %v5715 = vpop.f32.mrb[0].mxu0
        %v5716 = vadd.f32 0.0, %v5715
        %v5717 = vpop.f32.mrb[0].mxu0
        %v5718 = vpop.f32.mrb[0].mxu0
        %v5719 = vpop.f32.mrb[0].mxu0
        %5720 = vdwg.mxu0
        %v5722 = vsel %vm1752, %v5619, 0
        %v5725 = vsel %vm1752, %v5626, 0
        %5727 = vmatprep.subr.bf16.mxu0 0
        %5728 = vmatpush1.bf16.xpose.msra.mxu0 %v5725
        %5729 = vmatprep.subr.bf16.mxu0 0
        %5730 = vmatpush1.bf16.xpose.msra.mxu0 0
        %5731 = vmatprep.subr.bf16.mxu0 0
        %5732 = vmatpush1.bf16.xpose.msra.mxu0 0
        %5733 = vmatprep.subr.bf16.mxu0 0
        %5734 = vmatpush1.bf16.xpose.msra.mxu0 0
        %5735 = vmatprep.subr.bf16.mxu0 0
        %5736 = vmatpush1.bf16.xpose.msra.mxu0 0
        %5737 = vmatprep.subr.bf16.mxu0 0
        %5738 = vmatpush1.bf16.xpose.msra.mxu0 0
        %5739 = vmatprep.subr.bf16.mxu0 0
        %5740 = vmatpush1.bf16.xpose.msra.mxu0 0
        %5741 = vmatprep.subr.bf16.mxu0 0
        %5742 = vmatpush1.bf16.xpose.msra.mxu0 0
        %5743 = vmatprep.subr.bf16.mxu0 0
        %5744 = vmatpush1.bf16.xpose.msra.mxu0 0
        %5745 = vmatprep.subr.bf16.mxu0 0
        %5746 = vmatpush1.bf16.xpose.msra.mxu0 0
        %5747 = vmatprep.subr.bf16.mxu0 0
        %5748 = vmatpush1.bf16.xpose.msra.mxu0 0
        %5749 = vmatprep.subr.bf16.mxu0 0
        %5750 = vmatpush1.bf16.xpose.msra.mxu0 0
        %5751 = vmatprep.subr.bf16.mxu0 0
        %5752 = vmatpush1.bf16.xpose.msra.mxu0 0
        %5753 = vmatprep.subr.bf16.mxu0 0
        %5754 = vmatpush1.bf16.xpose.msra.mxu0 0
        %5755 = vmatprep.subr.bf16.mxu0 0
        %5756 = vmatpush1.bf16.xpose.msra.mxu0 0
        %5757 = vmatprep.subr.bf16.mxu0 0
        %5758 = vmatpush1.bf16.xpose.msra.mxu0 0
        %5759 = vmatprep.mubr.bf16.mxu0 0
        %5760 = vmatmul.mubr.bf16.gmra.mrb[0].mxu0 %v5722
        %v5761 = vpop.f32.mrb[0].mxu0
        %v5762 = vadd.f32 0.0, %v5761
        %v5763 = vpop.f32.mrb[0].mxu0
        %v5764 = vpop.f32.mrb[0].mxu0
        %v5765 = vpop.f32.mrb[0].mxu0
        %5766 = vdwg.mxu0
        %v5768 = vsel %vm1752, %v5621, 0
        %v5771 = vsel %vm1752, %v5628, 0
        %5773 = vmatprep.subr.bf16.mxu0 0
        %5774 = vmatpush1.bf16.xpose.msra.mxu0 %v5771
        %5775 = vmatprep.subr.bf16.mxu0 0
        %5776 = vmatpush1.bf16.xpose.msra.mxu0 0
        %5777 = vmatprep.subr.bf16.mxu0 0
        %5778 = vmatpush1.bf16.xpose.msra.mxu0 0
        %5779 = vmatprep.subr.bf16.mxu0 0
        %5780 = vmatpush1.bf16.xpose.msra.mxu0 0
        %5781 = vmatprep.subr.bf16.mxu0 0
        %5782 = vmatpush1.bf16.xpose.msra.mxu0 0
        %5783 = vmatprep.subr.bf16.mxu0 0
        %5784 = vmatpush1.bf16.xpose.msra.mxu0 0
        %5785 = vmatprep.subr.bf16.mxu0 0
        %5786 = vmatpush1.bf16.xpose.msra.mxu0 0
        %5787 = vmatprep.subr.bf16.mxu0 0
        %5788 = vmatpush1.bf16.xpose.msra.mxu0 0
        %5789 = vmatprep.subr.bf16.mxu0 0
        %5790 = vmatpush1.bf16.xpose.msra.mxu0 0
        %5791 = vmatprep.subr.bf16.mxu0 0
        %5792 = vmatpush1.bf16.xpose.msra.mxu0 0
        %5793 = vmatprep.subr.bf16.mxu0 0
        %5794 = vmatpush1.bf16.xpose.msra.mxu0 0
        %5795 = vmatprep.subr.bf16.mxu0 0
        %5796 = vmatpush1.bf16.xpose.msra.mxu0 0
        %5797 = vmatprep.subr.bf16.mxu0 0
        %5798 = vmatpush1.bf16.xpose.msra.mxu0 0
        %5799 = vmatprep.subr.bf16.mxu0 0
        %5800 = vmatpush1.bf16.xpose.msra.mxu0 0
        %5801 = vmatprep.subr.bf16.mxu0 0
        %5802 = vmatpush1.bf16.xpose.msra.mxu0 0
        %5803 = vmatprep.subr.bf16.mxu0 0
        %5804 = vmatpush1.bf16.xpose.msra.mxu0 0
        %5805 = vmatprep.mubr.bf16.mxu0 0
        %5806 = vmatmul.mubr.bf16.gmra.mrb[0].mxu0 %v5768
        %v5807 = vpop.f32.mrb[0].mxu0
        %v5808 = vadd.f32 0.0, %v5807
        %v5809 = vpop.f32.mrb[0].mxu0
        %v5810 = vpop.f32.mrb[0].mxu0
        %v5811 = vpop.f32.mrb[0].mxu0
        %5812 = vdwg.mxu0
        %v5813 = vmul.f32 %v5670, 0.35355338
        %v5814 = vmul.f32 %v5716, 0.35355338
        %v5815 = vmul.f32 %v5762, 0.35355338
        %v5816 = vmul.f32 %v5808, 0.35355338
        %v5817 = vsel %vm1752, %v5813, -inf
        %5818 = vmax.xlane.f32.xlu0 %v5817
        %v5819 = vpop.xlane.xlu0 %5818
        %v5820 = vsel %vm1752, %v5814, -inf
        %5821 = vmax.xlane.f32.xlu0 %v5820
        %v5822 = vpop.xlane.xlu0 %5821
        %v5823 = vsel %vm1752, %v5815, -inf
        %5824 = vmax.xlane.f32.xlu0 %v5823
        %v5825 = vpop.xlane.xlu0 %5824
        %v5826 = vsel %vm1752, %v5816, -inf
        %5827 = vmax.xlane.f32.xlu0 %v5826
        %v5828 = vpop.xlane.xlu0 %5827
        %v5829 = vsub.f32 %v5813, %v5819
        %v5830 = vsub.f32 %v5814, %v5822
        %v5831 = vsub.f32 %v5815, %v5825
        %v5832 = vsub.f32 %v5816, %v5828
        %v5833 = vmul.f32 %v5829, 1.442695
        %v5834 = vpow.pop %v5833
        %v5835 = vmul.f32 %v5830, 1.442695
        %v5836 = vpow.pop %v5835
        %v5837 = vmul.f32 %v5831, 1.442695
        %v5838 = vpow.pop %v5837
        %v5839 = vmul.f32 %v5832, 1.442695
        %v5840 = vpow.pop %v5839
        %v5841 = vsel %vm1752, %v5834, 0.0
        %5842 = vadd.xlane.f32.xlu0 %v5841
        %v5843 = vpop.xlane.xlu0 %5842
        %v5844 = vsel %vm1752, %v5836, 0.0
        %5845 = vadd.xlane.f32.xlu0 %v5844
        %v5846 = vpop.xlane.xlu0 %5845
        %v5847 = vsel %vm1752, %v5838, 0.0
        %5848 = vadd.xlane.f32.xlu0 %v5847
        %v5849 = vpop.xlane.xlu0 %5848
        %v5850 = vsel %vm1752, %v5840, 0.0
        %5851 = vadd.xlane.f32.xlu0 %v5850
        %v5852 = vpop.xlane.xlu0 %5851
        %v5853 = vrcp.pop %v5843
        %v5854 = vrcp.pop %v5846
        %v5855 = vrcp.pop %v5849
        %v5856 = vrcp.pop %v5852
        %v5857 = vmul.f32 %v5834, %v5853
        %v5858 = vmul.f32 %v5836, %v5854
        %v5859 = vmul.f32 %v5838, %v5855
        %v5860 = vmul.f32 %v5840, %v5856
        %v5861 = vpack.c.bf16 %v5857, %v5857
        %v5862 = vpack.c.bf16 %v5858, %v5858
        %v5863 = vpack.c.bf16 %v5859, %v5859
        %v5864 = vpack.c.bf16 %v5860, %v5860
        %5865 = vrot.lane.b32.xlu0 %v5614, 96
        %v5866 = vpop.permute.xlu0 %5865
        %v5868 = vsel %vm1752, %v5861, 0
        %v5871 = vsel %vm2010, %v5866, 0
        %5873 = vmatprep.subr.bf16.mxu0 0
        %5874 = vmatpush1.bf16.msra.mxu0 %v5871
        %5875 = vmatprep.subr.bf16.mxu0 0
        %5876 = vmatpush1.bf16.msra.mxu0 0
        %5877 = vmatprep.subr.bf16.mxu0 0
        %5878 = vmatpush1.bf16.msra.mxu0 0
        %5879 = vmatprep.subr.bf16.mxu0 0
        %5880 = vmatpush1.bf16.msra.mxu0 0
        %5881 = vmatprep.subr.bf16.mxu0 0
        %5882 = vmatpush1.bf16.msra.mxu0 0
        %5883 = vmatprep.subr.bf16.mxu0 0
        %5884 = vmatpush1.bf16.msra.mxu0 0
        %5885 = vmatprep.subr.bf16.mxu0 0
        %5886 = vmatpush1.bf16.msra.mxu0 0
        %5887 = vmatprep.subr.bf16.mxu0 0
        %5888 = vmatpush1.bf16.msra.mxu0 0
        %5889 = vmatprep.subr.bf16.mxu0 0
        %5890 = vmatpush1.bf16.msra.mxu0 0
        %5891 = vmatprep.subr.bf16.mxu0 0
        %5892 = vmatpush1.bf16.msra.mxu0 0
        %5893 = vmatprep.subr.bf16.mxu0 0
        %5894 = vmatpush1.bf16.msra.mxu0 0
        %5895 = vmatprep.subr.bf16.mxu0 0
        %5896 = vmatpush1.bf16.msra.mxu0 0
        %5897 = vmatprep.subr.bf16.mxu0 0
        %5898 = vmatpush1.bf16.msra.mxu0 0
        %5899 = vmatprep.subr.bf16.mxu0 0
        %5900 = vmatpush1.bf16.msra.mxu0 0
        %5901 = vmatprep.subr.bf16.mxu0 0
        %5902 = vmatpush1.bf16.msra.mxu0 0
        %5903 = vmatprep.subr.bf16.mxu0 0
        %5904 = vmatpush1.bf16.msra.mxu0 0
        %5905 = vmatprep.mubr.bf16.mxu0 0
        %5906 = vmatmul.mubr.bf16.gmra.mrb[0].mxu0 %v5868
        %v5907 = vpop.f32.mrb[0].mxu0
        %v5908 = vadd.f32 0.0, %v5907
        %v5909 = vpop.f32.mrb[0].mxu0
        %v5910 = vpop.f32.mrb[0].mxu0
        %v5911 = vpop.f32.mrb[0].mxu0
        %5912 = vdwg.mxu0
        %5913 = vrot.lane.b32.xlu0 %v5624, 96
        %v5914 = vpop.permute.xlu0 %5913
        %v5916 = vsel %vm1752, %v5862, 0
        %v5919 = vsel %vm2010, %v5914, 0
        %5921 = vmatprep.subr.bf16.mxu0 0
        %5922 = vmatpush1.bf16.msra.mxu0 %v5919
        %5923 = vmatprep.subr.bf16.mxu0 0
        %5924 = vmatpush1.bf16.msra.mxu0 0
        %5925 = vmatprep.subr.bf16.mxu0 0
        %5926 = vmatpush1.bf16.msra.mxu0 0
        %5927 = vmatprep.subr.bf16.mxu0 0
        %5928 = vmatpush1.bf16.msra.mxu0 0
        %5929 = vmatprep.subr.bf16.mxu0 0
        %5930 = vmatpush1.bf16.msra.mxu0 0
        %5931 = vmatprep.subr.bf16.mxu0 0
        %5932 = vmatpush1.bf16.msra.mxu0 0
        %5933 = vmatprep.subr.bf16.mxu0 0
        %5934 = vmatpush1.bf16.msra.mxu0 0
        %5935 = vmatprep.subr.bf16.mxu0 0
        %5936 = vmatpush1.bf16.msra.mxu0 0
        %5937 = vmatprep.subr.bf16.mxu0 0
        %5938 = vmatpush1.bf16.msra.mxu0 0
        %5939 = vmatprep.subr.bf16.mxu0 0
        %5940 = vmatpush1.bf16.msra.mxu0 0
        %5941 = vmatprep.subr.bf16.mxu0 0
        %5942 = vmatpush1.bf16.msra.mxu0 0
        %5943 = vmatprep.subr.bf16.mxu0 0
        %5944 = vmatpush1.bf16.msra.mxu0 0
        %5945 = vmatprep.subr.bf16.mxu0 0
        %5946 = vmatpush1.bf16.msra.mxu0 0
        %5947 = vmatprep.subr.bf16.mxu0 0
        %5948 = vmatpush1.bf16.msra.mxu0 0
        %5949 = vmatprep.subr.bf16.mxu0 0
        %5950 = vmatpush1.bf16.msra.mxu0 0
        %5951 = vmatprep.subr.bf16.mxu0 0
        %5952 = vmatpush1.bf16.msra.mxu0 0
        %5953 = vmatprep.mubr.bf16.mxu0 0
        %5954 = vmatmul.mubr.bf16.gmra.mrb[0].mxu0 %v5916
        %v5955 = vpop.f32.mrb[0].mxu0
        %v5956 = vadd.f32 0.0, %v5955
        %v5957 = vpop.f32.mrb[0].mxu0
        %v5958 = vpop.f32.mrb[0].mxu0
        %v5959 = vpop.f32.mrb[0].mxu0
        %5960 = vdwg.mxu0
        %5961 = vrot.lane.b32.xlu0 %v5626, 96
        %v5962 = vpop.permute.xlu0 %5961
        %v5964 = vsel %vm1752, %v5863, 0
        %v5967 = vsel %vm2010, %v5962, 0
        %5969 = vmatprep.subr.bf16.mxu0 0
        %5970 = vmatpush1.bf16.msra.mxu0 %v5967
        %5971 = vmatprep.subr.bf16.mxu0 0
        %5972 = vmatpush1.bf16.msra.mxu0 0
        %5973 = vmatprep.subr.bf16.mxu0 0
        %5974 = vmatpush1.bf16.msra.mxu0 0
        %5975 = vmatprep.subr.bf16.mxu0 0
        %5976 = vmatpush1.bf16.msra.mxu0 0
        %5977 = vmatprep.subr.bf16.mxu0 0
        %5978 = vmatpush1.bf16.msra.mxu0 0
        %5979 = vmatprep.subr.bf16.mxu0 0
        %5980 = vmatpush1.bf16.msra.mxu0 0
        %5981 = vmatprep.subr.bf16.mxu0 0
        %5982 = vmatpush1.bf16.msra.mxu0 0
        %5983 = vmatprep.subr.bf16.mxu0 0
        %5984 = vmatpush1.bf16.msra.mxu0 0
        %5985 = vmatprep.subr.bf16.mxu0 0
        %5986 = vmatpush1.bf16.msra.mxu0 0
        %5987 = vmatprep.subr.bf16.mxu0 0
        %5988 = vmatpush1.bf16.msra.mxu0 0
        %5989 = vmatprep.subr.bf16.mxu0 0
        %5990 = vmatpush1.bf16.msra.mxu0 0
        %5991 = vmatprep.subr.bf16.mxu0 0
        %5992 = vmatpush1.bf16.msra.mxu0 0
        %5993 = vmatprep.subr.bf16.mxu0 0
        %5994 = vmatpush1.bf16.msra.mxu0 0
        %5995 = vmatprep.subr.bf16.mxu0 0
        %5996 = vmatpush1.bf16.msra.mxu0 0
        %5997 = vmatprep.subr.bf16.mxu0 0
        %5998 = vmatpush1.bf16.msra.mxu0 0
        %5999 = vmatprep.subr.bf16.mxu0 0
        %6000 = vmatpush1.bf16.msra.mxu0 0
        %6001 = vmatprep.mubr.bf16.mxu0 0
        %6002 = vmatmul.mubr.bf16.gmra.mrb[0].mxu0 %v5964
        %v6003 = vpop.f32.mrb[0].mxu0
        %v6004 = vadd.f32 0.0, %v6003
        %v6005 = vpop.f32.mrb[0].mxu0
        %v6006 = vpop.f32.mrb[0].mxu0
        %v6007 = vpop.f32.mrb[0].mxu0
        %6008 = vdwg.mxu0
        %6009 = vrot.lane.b32.xlu0 %v5628, 96
        %v6010 = vpop.permute.xlu0 %6009
        %v6012 = vsel %vm1752, %v5864, 0
        %v6015 = vsel %vm2010, %v6010, 0
        %6017 = vmatprep.subr.bf16.mxu0 0
        %6018 = vmatpush1.bf16.msra.mxu0 %v6015
        %6019 = vmatprep.subr.bf16.mxu0 0
        %6020 = vmatpush1.bf16.msra.mxu0 0
        %6021 = vmatprep.subr.bf16.mxu0 0
        %6022 = vmatpush1.bf16.msra.mxu0 0
        %6023 = vmatprep.subr.bf16.mxu0 0
        %6024 = vmatpush1.bf16.msra.mxu0 0
        %6025 = vmatprep.subr.bf16.mxu0 0
        %6026 = vmatpush1.bf16.msra.mxu0 0
        %6027 = vmatprep.subr.bf16.mxu0 0
        %6028 = vmatpush1.bf16.msra.mxu0 0
        %6029 = vmatprep.subr.bf16.mxu0 0
        %6030 = vmatpush1.bf16.msra.mxu0 0
        %6031 = vmatprep.subr.bf16.mxu0 0
        %6032 = vmatpush1.bf16.msra.mxu0 0
        %6033 = vmatprep.subr.bf16.mxu0 0
        %6034 = vmatpush1.bf16.msra.mxu0 0
        %6035 = vmatprep.subr.bf16.mxu0 0
        %6036 = vmatpush1.bf16.msra.mxu0 0
        %6037 = vmatprep.subr.bf16.mxu0 0
        %6038 = vmatpush1.bf16.msra.mxu0 0
        %6039 = vmatprep.subr.bf16.mxu0 0
        %6040 = vmatpush1.bf16.msra.mxu0 0
        %6041 = vmatprep.subr.bf16.mxu0 0
        %6042 = vmatpush1.bf16.msra.mxu0 0
        %6043 = vmatprep.subr.bf16.mxu0 0
        %6044 = vmatpush1.bf16.msra.mxu0 0
        %6045 = vmatprep.subr.bf16.mxu0 0
        %6046 = vmatpush1.bf16.msra.mxu0 0
        %6047 = vmatprep.subr.bf16.mxu0 0
        %6048 = vmatpush1.bf16.msra.mxu0 0
        %6049 = vmatprep.mubr.bf16.mxu0 0
        %6050 = vmatmul.mubr.bf16.gmra.mrb[0].mxu0 %v6012
        %v6051 = vpop.f32.mrb[0].mxu0
        %v6052 = vadd.f32 0.0, %v6051
        %v6053 = vpop.f32.mrb[0].mxu0
        %v6054 = vpop.f32.mrb[0].mxu0
        %v6055 = vpop.f32.mrb[0].mxu0
        %6056 = vdwg.mxu0
        %6058 = vrot.lane.b32.xlu0 %v5956, 8
        %v6059 = vpop.permute.xlu0 %6058
        %6062 = vrot.lane.b32.xlu0 %v6004, 16
        %v6063 = vpop.permute.xlu0 %6062
        %6066 = vrot.lane.b32.xlu0 %v6052, 24
        %v6067 = vpop.permute.xlu0 %6066
        %v6069 = vsel %vm1752, %v5908, %v6059
        %v6070 = vsel %vm2211, %v6069, %v6063
        %v6071 = vsel %vm2213, %v6070, %v6067
        %v6072 = vpack.c.bf16 %v6071, %v6071
        %v6074 = vlaneseq
        %v6075 = vshrl.u32 %v6074, 7
        %v6076 = vsub.s32 0, %v6075
        %v6077 = vrot.slane %v5488, %v6076
        %v6083 = vunpack.c.l.b16 %v5483
        %v6084 = vunpack.c.l.b16 %v5484
        %v6085 = vunpack.c.l.b16 %v5485
        %v6086 = vunpack.c.l.b16 %v5486
        %v6087 = vpack.c.b16 %v6084, %v6083
        %v6088 = vpack.c.b16 %v6086, %v6085
        %v6092 = vsel %vm1698, %v6072, 0
        %6094 = vmatprep.subr.bf16.mxu0 0
        %6095 = vmatpush1.bf16.msra.mxu0 %v6087
        %6096 = vmatprep.subr.bf16.mxu0 0
        %6097 = vmatpush1.bf16.msra.mxu0 %v6088
        %6098 = vmatprep.subr.bf16.mxu0 0
        %6099 = vmatpush1.bf16.msra.mxu0 0
        %6100 = vmatprep.subr.bf16.mxu0 0
        %6101 = vmatpush1.bf16.msra.mxu0 0
        %6102 = vmatprep.subr.bf16.mxu0 0
        %6103 = vmatpush1.bf16.msra.mxu0 0
        %6104 = vmatprep.subr.bf16.mxu0 0
        %6105 = vmatpush1.bf16.msra.mxu0 0
        %6106 = vmatprep.subr.bf16.mxu0 0
        %6107 = vmatpush1.bf16.msra.mxu0 0
        %6108 = vmatprep.subr.bf16.mxu0 0
        %6109 = vmatpush1.bf16.msra.mxu0 0
        %6110 = vmatprep.subr.bf16.mxu0 0
        %6111 = vmatpush1.bf16.msra.mxu0 0
        %6112 = vmatprep.subr.bf16.mxu0 0
        %6113 = vmatpush1.bf16.msra.mxu0 0
        %6114 = vmatprep.subr.bf16.mxu0 0
        %6115 = vmatpush1.bf16.msra.mxu0 0
        %6116 = vmatprep.subr.bf16.mxu0 0
        %6117 = vmatpush1.bf16.msra.mxu0 0
        %6118 = vmatprep.subr.bf16.mxu0 0
        %6119 = vmatpush1.bf16.msra.mxu0 0
        %6120 = vmatprep.subr.bf16.mxu0 0
        %6121 = vmatpush1.bf16.msra.mxu0 0
        %6122 = vmatprep.subr.bf16.mxu0 0
        %6123 = vmatpush1.bf16.msra.mxu0 0
        %6124 = vmatprep.subr.bf16.mxu0 0
        %6125 = vmatpush1.bf16.msra.mxu0 0
        %6126 = vmatprep.mubr.bf16.mxu0 0
        %6127 = vmatmul.mubr.bf16.gmra.mrb[0].mxu0 %v6092
        %v6128 = vpop.f32.mrb[0].mxu0
        %v6129 = vadd.f32 %v6077, %v6128
        %v6130 = vpop.f32.mrb[0].mxu0
        %v6131 = vpop.f32.mrb[0].mxu0
        %v6132 = vpop.f32.mrb[0].mxu0
        %6133 = vdwg.mxu0
        %v6134 = vadd.f32 %v5467, %v6129
        %v6135 = vsel %vm1698, %v6134, 0.0
        %6136 = vadd.xlane.f32.xlu0 %v6135
        %v6137 = vpop.xlane.xlu0 %6136
        %v6138 = vmul.f32 %v6137, %v2281
        %v6139 = vsub.f32 %v6134, %v6138
        %v6140 = vmul.f32 %v6139, %v6139
        %v6141 = vsel %vm1698, %v6140, 0.0
        %6142 = vadd.xlane.f32.xlu0 %v6141
        %v6143 = vpop.xlane.xlu0 %6142
        %v6144 = vmul.f32 %v6143, %v2281
        %v6145 = vadd.f32 %v6144, 1e-05
        %v6146 = vrsqrt.pop %v6145
        %v6147 = vmul.f32 %v6139, %v6146
        %v6149 = vlaneseq
        %v6150 = vshrl.u32 %v6149, 7
        %v6151 = vsub.s32 0, %v6150
        %v6152 = vrot.slane %v5490, %v6151
        %v6154 = vmul.f32 %v6147, %v6152
        %v6156 = vlaneseq
        %v6157 = vshrl.u32 %v6156, 7
        %v6158 = vsub.s32 0, %v6157
        %v6159 = vrot.slane %v5492, %v6158
        %v6161 = vadd.f32 %v6154, %v6159
        %s6162 = scalar_lea.vmem [#allocation37], 16
        %v6163 = vld [vmem:[%s6162] sm:$0xf]
        %v6164 = vld [vmem:[%s6162 + $0x4] sm:$0xf]
        %v6165 = vld [vmem:[%s6162 + $0x8] sm:$0xf]
        %v6166 = vld [vmem:[%s6162 + $0xc] sm:$0xf]
        %s6167 = scalar_lea.vmem %s63, 1
        %v6168 = vld [vmem:[%s6167] sm:$0x1]
        %s6169 = scalar_lea.vmem %s65, 32
        %v6170 = vld [vmem:[%s6169] sm:$0xf]
        %v6171 = vld [vmem:[%s6169 + $0x4] sm:$0xf]
        %v6172 = vld [vmem:[%s6169 + $0x8] sm:$0xf]
        %v6173 = vld [vmem:[%s6169 + $0xc] sm:$0xf]
        %v6174 = vld [vmem:[%s6169 + $0x10] sm:$0xf]
        %v6175 = vld [vmem:[%s6169 + $0x14] sm:$0xf]
        %v6176 = vld [vmem:[%s6169 + $0x18] sm:$0xf]
        %v6177 = vld [vmem:[%s6169 + $0x1c] sm:$0xf]
        %s6178 = scalar_lea.vmem %s67, 1
        %v6179 = vld [vmem:[%s6178] sm:$0x1]
        %s6180 = scalar_lea.vmem %s69, 1
        %v6181 = vld [vmem:[%s6180] sm:$0x1]
        %s6182 = scalar_lea.vmem %s71, 1
        %v6183 = vld [vmem:[%s6182] sm:$0x1]
        %v6184 = vpack.c.bf16 %v6161, %v6161
        %v6186 = vlaneseq
        %v6187 = vshrl.u32 %v6186, 7
        %v6188 = vsub.s32 0, %v6187
        %v6189 = vrot.slane %v6168, %v6188
        %v6195 = vunpack.c.l.b16 %v6163
        %v6196 = vunpack.c.l.b16 %v6164
        %v6197 = vunpack.c.l.b16 %v6165
        %v6198 = vunpack.c.l.b16 %v6166
        %v6199 = vpack.c.b16 %v6196, %v6195
        %v6200 = vpack.c.b16 %v6198, %v6197
        %v6204 = vsel %vm1698, %v6184, 0
        %6206 = vmatprep.subr.bf16.mxu0 0
        %6207 = vmatpush1.bf16.msra.mxu0 %v6199
        %6208 = vmatprep.subr.bf16.mxu0 0
        %6209 = vmatpush1.bf16.msra.mxu0 %v6200
        %6210 = vmatprep.subr.bf16.mxu0 0
        %6211 = vmatpush1.bf16.msra.mxu0 0
        %6212 = vmatprep.subr.bf16.mxu0 0
        %6213 = vmatpush1.bf16.msra.mxu0 0
        %6214 = vmatprep.subr.bf16.mxu0 0
        %6215 = vmatpush1.bf16.msra.mxu0 0
        %6216 = vmatprep.subr.bf16.mxu0 0
        %6217 = vmatpush1.bf16.msra.mxu0 0
        %6218 = vmatprep.subr.bf16.mxu0 0
        %6219 = vmatpush1.bf16.msra.mxu0 0
        %6220 = vmatprep.subr.bf16.mxu0 0
        %6221 = vmatpush1.bf16.msra.mxu0 0
        %6222 = vmatprep.subr.bf16.mxu0 0
        %6223 = vmatpush1.bf16.msra.mxu0 0
        %6224 = vmatprep.subr.bf16.mxu0 0
        %6225 = vmatpush1.bf16.msra.mxu0 0
        %6226 = vmatprep.subr.bf16.mxu0 0
        %6227 = vmatpush1.bf16.msra.mxu0 0
        %6228 = vmatprep.subr.bf16.mxu0 0
        %6229 = vmatpush1.bf16.msra.mxu0 0
        %6230 = vmatprep.subr.bf16.mxu0 0
        %6231 = vmatpush1.bf16.msra.mxu0 0
        %6232 = vmatprep.subr.bf16.mxu0 0
        %6233 = vmatpush1.bf16.msra.mxu0 0
        %6234 = vmatprep.subr.bf16.mxu0 0
        %6235 = vmatpush1.bf16.msra.mxu0 0
        %6236 = vmatprep.subr.bf16.mxu0 0
        %6237 = vmatpush1.bf16.msra.mxu0 0
        %6238 = vmatprep.mubr.bf16.mxu0 0
        %6239 = vmatmul.mubr.bf16.gmra.mrb[0].mxu0 %v6204
        %v6240 = vpop.f32.mrb[0].mxu0
        %v6241 = vadd.f32 %v6189, %v6240
        %v6242 = vpop.f32.mrb[0].mxu0
        %v6243 = vpop.f32.mrb[0].mxu0
        %v6244 = vpop.f32.mrb[0].mxu0
        %6245 = vdwg.mxu0
        %v6246 = vmax.f32 %v6241, 0.0
        %v6247 = vpack.c.bf16 %v6246, %v6246
        %v6249 = vlaneseq
        %v6250 = vshrl.u32 %v6249, 7
        %v6251 = vsub.s32 0, %v6250
        %v6252 = vrot.slane %v6179, %v6251
        %v6262 = vunpack.c.l.b16 %v6170
        %v6263 = vunpack.c.l.b16 %v6171
        %v6264 = vunpack.c.l.b16 %v6172
        %v6265 = vunpack.c.l.b16 %v6173
        %v6266 = vunpack.c.l.b16 %v6174
        %v6267 = vunpack.c.l.b16 %v6175
        %v6268 = vunpack.c.l.b16 %v6176
        %v6269 = vunpack.c.l.b16 %v6177
        %v6270 = vpack.c.b16 %v6263, %v6262
        %v6271 = vpack.c.b16 %v6265, %v6264
        %v6272 = vpack.c.b16 %v6267, %v6266
        %v6273 = vpack.c.b16 %v6269, %v6268
        %v6279 = vsel %vm2416, %v6247, 0
        %6281 = vmatprep.subr.bf16.mxu0 0
        %6282 = vmatpush1.bf16.msra.mxu0 %v6270
        %6283 = vmatprep.subr.bf16.mxu0 0
        %6284 = vmatpush1.bf16.msra.mxu0 %v6271
        %6285 = vmatprep.subr.bf16.mxu0 0
        %6286 = vmatpush1.bf16.msra.mxu0 %v6272
        %6287 = vmatprep.subr.bf16.mxu0 0
        %6288 = vmatpush1.bf16.msra.mxu0 %v6273
        %6289 = vmatprep.subr.bf16.mxu0 0
        %6290 = vmatpush1.bf16.msra.mxu0 0
        %6291 = vmatprep.subr.bf16.mxu0 0
        %6292 = vmatpush1.bf16.msra.mxu0 0
        %6293 = vmatprep.subr.bf16.mxu0 0
        %6294 = vmatpush1.bf16.msra.mxu0 0
        %6295 = vmatprep.subr.bf16.mxu0 0
        %6296 = vmatpush1.bf16.msra.mxu0 0
        %6297 = vmatprep.subr.bf16.mxu0 0
        %6298 = vmatpush1.bf16.msra.mxu0 0
        %6299 = vmatprep.subr.bf16.mxu0 0
        %6300 = vmatpush1.bf16.msra.mxu0 0
        %6301 = vmatprep.subr.bf16.mxu0 0
        %6302 = vmatpush1.bf16.msra.mxu0 0
        %6303 = vmatprep.subr.bf16.mxu0 0
        %6304 = vmatpush1.bf16.msra.mxu0 0
        %6305 = vmatprep.subr.bf16.mxu0 0
        %6306 = vmatpush1.bf16.msra.mxu0 0
        %6307 = vmatprep.subr.bf16.mxu0 0
        %6308 = vmatpush1.bf16.msra.mxu0 0
        %6309 = vmatprep.subr.bf16.mxu0 0
        %6310 = vmatpush1.bf16.msra.mxu0 0
        %6311 = vmatprep.subr.bf16.mxu0 0
        %6312 = vmatpush1.bf16.msra.mxu0 0
        %6313 = vmatprep.mubr.bf16.mxu0 0
        %6314 = vmatmul.mubr.bf16.gmra.mrb[0].mxu0 %v6279
        %v6315 = vpop.f32.mrb[0].mxu0
        %v6316 = vadd.f32 %v6252, %v6315
        %v6317 = vpop.f32.mrb[0].mxu0
        %v6318 = vpop.f32.mrb[0].mxu0
        %v6319 = vpop.f32.mrb[0].mxu0
        %6320 = vdwg.mxu0
        %v6321 = vadd.f32 %v6161, %v6316
        %v6322 = vsel %vm1698, %v6321, 0.0
        %6323 = vadd.xlane.f32.xlu0 %v6322
        %v6324 = vpop.xlane.xlu0 %6323
        %v6325 = vmul.f32 %v6324, %v2281
        %v6326 = vsub.f32 %v6321, %v6325
        %v6327 = vmul.f32 %v6326, %v6326
        %v6328 = vsel %vm1698, %v6327, 0.0
        %6329 = vadd.xlane.f32.xlu0 %v6328
        %v6330 = vpop.xlane.xlu0 %6329
        %v6331 = vmul.f32 %v6330, %v2281
        %v6332 = vadd.f32 %v6331, 1e-05
        %v6333 = vrsqrt.pop %v6332
        %v6334 = vmul.f32 %v6326, %v6333
        %v6336 = vlaneseq
        %v6337 = vshrl.u32 %v6336, 7
        %v6338 = vsub.s32 0, %v6337
        %v6339 = vrot.slane %v6181, %v6338
        %v6341 = vmul.f32 %v6334, %v6339
        %v6343 = vlaneseq
        %v6344 = vshrl.u32 %v6343, 7
        %v6345 = vsub.s32 0, %v6344
        %v6346 = vrot.slane %v6183, %v6345
        %v6348 = vadd.f32 %v6341, %v6346
        %v6349 = vld [vmem:[%s77] sm:$0x1]
        %v6350 = vld [vmem:[%s79] sm:$0x1]
        %v6351 = vsel %vm1698, %v6348, 0.0
        %6352 = vadd.xlane.f32.xlu0 %v6351
        %v6353 = vpop.xlane.xlu0 %6352
        %v6354 = vmul.f32 %v6353, %v2281
        %v6355 = vsub.f32 %v6348, %v6354
        %v6356 = vmul.f32 %v6355, %v6355
        %v6357 = vsel %vm1698, %v6356, 0.0
        %6358 = vadd.xlane.f32.xlu0 %v6357
        %v6359 = vpop.xlane.xlu0 %6358
        %v6360 = vmul.f32 %v6359, %v2281
        %v6361 = vadd.f32 %v6360, 1e-05
        %v6362 = vrsqrt.pop %v6361
        %v6363 = vmul.f32 %v6355, %v6362
        %v6365 = vlaneseq
        %v6366 = vshrl.u32 %v6365, 7
        %v6367 = vsub.s32 0, %v6366
        %v6368 = vrot.slane %v6349, %v6367
        %v6370 = vmul.f32 %v6363, %v6368
        %v6372 = vlaneseq
        %v6373 = vshrl.u32 %v6372, 7
        %v6374 = vsub.s32 0, %v6373
        %v6375 = vrot.slane %v6350, %v6374
        %v6377 = vadd.f32 %v6370, %v6375
        %v6378 = vpack.c.bf16 %v6377, %v6377
        %v6379 = vld [vmem:[%s81] sm:$0xf]
        %v6380 = vld [vmem:[%s81 + $0x4] sm:$0xf]
        %v6381 = vld [vmem:[%s81 + $0x8] sm:$0xf]
        %v6382 = vld [vmem:[%s81 + $0xc] sm:$0xf]
        %v6383 = vld [vmem:[%s83] sm:$0x1]
        %v6385 = vlaneseq
        %v6386 = vshrl.u32 %v6385, 7
        %v6387 = vsub.s32 0, %v6386
        %v6388 = vrot.slane %v6383, %v6387
        %v6394 = vunpack.c.l.b16 %v6379
        %v6395 = vunpack.c.l.b16 %v6380
        %v6396 = vunpack.c.l.b16 %v6381
        %v6397 = vunpack.c.l.b16 %v6382
        %v6398 = vpack.c.b16 %v6395, %v6394
        %v6399 = vpack.c.b16 %v6397, %v6396
        %v6403 = vsel %vm1698, %v6378, 0
        %6405 = vmatprep.subr.bf16.mxu0 0
        %6406 = vmatpush1.bf16.msra.mxu0 %v6398
        %6407 = vmatprep.subr.bf16.mxu0 0
        %6408 = vmatpush1.bf16.msra.mxu0 %v6399
        %6409 = vmatprep.subr.bf16.mxu0 0
        %6410 = vmatpush1.bf16.msra.mxu0 0
        %6411 = vmatprep.subr.bf16.mxu0 0
        %6412 = vmatpush1.bf16.msra.mxu0 0
        %6413 = vmatprep.subr.bf16.mxu0 0
        %6414 = vmatpush1.bf16.msra.mxu0 0
        %6415 = vmatprep.subr.bf16.mxu0 0
        %6416 = vmatpush1.bf16.msra.mxu0 0
        %6417 = vmatprep.subr.bf16.mxu0 0
        %6418 = vmatpush1.bf16.msra.mxu0 0
        %6419 = vmatprep.subr.bf16.mxu0 0
        %6420 = vmatpush1.bf16.msra.mxu0 0
        %6421 = vmatprep.subr.bf16.mxu0 0
        %6422 = vmatpush1.bf16.msra.mxu0 0
        %6423 = vmatprep.subr.bf16.mxu0 0
        %6424 = vmatpush1.bf16.msra.mxu0 0
        %6425 = vmatprep.subr.bf16.mxu0 0
        %6426 = vmatpush1.bf16.msra.mxu0 0
        %6427 = vmatprep.subr.bf16.mxu0 0
        %6428 = vmatpush1.bf16.msra.mxu0 0
        %6429 = vmatprep.subr.bf16.mxu0 0
        %6430 = vmatpush1.bf16.msra.mxu0 0
        %6431 = vmatprep.subr.bf16.mxu0 0
        %6432 = vmatpush1.bf16.msra.mxu0 0
        %6433 = vmatprep.subr.bf16.mxu0 0
        %6434 = vmatpush1.bf16.msra.mxu0 0
        %6435 = vmatprep.subr.bf16.mxu0 0
        %6436 = vmatpush1.bf16.msra.mxu0 0
        %6437 = vmatprep.mubr.bf16.mxu0 0
        %6438 = vmatmul.mubr.bf16.gmra.mrb[0].mxu0 %v6403
        %v6439 = vpop.f32.mrb[0].mxu0
        %v6440 = vadd.f32 %v6388, %v6439
        %v6441 = vpop.f32.mrb[0].mxu0
        %v6442 = vpop.f32.mrb[0].mxu0
        %v6443 = vpop.f32.mrb[0].mxu0
        %6444 = vdwg.mxu0
        %6445 = vst [vmem:[%s1661] sm:$0xff] %v6440
        %s6446 = sand.u32 %s1027, 1
        %s6447 = scalar_lea.sflag [#allocation4], %s6446
        %s6448 = sand.u32 %s1027, 1
        %s6449 = smul.addr %s6448, 8
        %s6450 = scalar_lea.vmem [#allocation38], %s6449
        // Predicated region
        $region281: #{tpu_custom_call.1} parent=187 // pred_check
          %p6451 = pneg %p1037
        $region282: #{tpu_custom_call.1} parent=187 // pred_check_branch
          %6453 = sbr.rel (%p6451) target = $region284
        $region283: #{tpu_custom_call.1} parent=187 // pred_region
          %s6455 = ssub.s32 128, 128
          %6456 = vsyncadd %s6447, %s6455
          %s6457 = smul.addr %s117, 128
          %s6458 = scalar_lea.hbm %s85, %s6457
          %s6460 = sshll.u32 %s6450, 4
          %s6461 = int_to_ptr.vmem [resolvable:$true] %s6460
          %6463 = dma.vmem_to_hbm [thread:$0]  %s6461, 128, %s6458, %s6447
        $region284: #{tpu_custom_call.1} parent=187 // pred_fallthru
          _
      $region188: #{tpu_custom_call.1} parent=5 // pred_fallthru
        _
      %p6464 = scmp.le.s32.totalorder 2, %s112
      // Predicated region
      $region285: #{tpu_custom_call.1} parent=5 // pred_check
        %p6465 = pneg %p6464
      $region286: #{tpu_custom_call.1} parent=5 // pred_check_branch
        %6467 = sbr.rel (%p6465) target = $region288
      $region287: #{tpu_custom_call.1} parent=5 // pred_region
        %s6468 = ssub.s32 %s112, 2
        // Predicated region
        $region289: #{tpu_custom_call.1} parent=287 // pred_check
          %p6469 = pneg %p1043
        $region290: #{tpu_custom_call.1} parent=287 // pred_check_branch
          %6471 = sbr.rel (%p6469) target = $region292
        $region291: #{tpu_custom_call.1} parent=287 // pred_region
          %s6472 = sand.u32 %s1028, 1
          %s6473 = scalar_lea.sflag [#allocation4], %s6472
          %s6474 = sand.u32 %s1028, 1
          %s6475 = smul.addr %s6474, 8
          %s6476 = scalar_lea.vmem [#allocation38], %s6475
          %6477 = dma.done %s6473, 128
        $region292: #{tpu_custom_call.1} parent=287 // pred_fallthru
          _
      $region288: #{tpu_custom_call.1} parent=5 // pred_fallthru
        _
    $region6: #{tpu_custom_call.1} parent=1 // loop_footer
      %s116 = sadd.s32 1, %s112
    $region7: #{tpu_custom_call.1} parent=1 // loop_footer_branch
      %111 = sbr.rel target = $region3
    $region8: #{tpu_custom_call.1} parent=1 // loop_exit
      _
    %6478 = vsyncpa [#allocation3], 1
    %s6479 = scalar_lea.sflag [#allocation3], 1
    %6480 = vsyncpa %s6479, 1
    %6481 = vsyncpa [#allocation6], 1
    %s6482 = scalar_lea.sflag [#allocation6], 1
    %6483 = vsyncpa %s6482, 1
    %6484 = vsyncpa [#allocation9], 1
    %s6485 = scalar_lea.sflag [#allocation9], 1
    %6486 = vsyncpa %s6485, 1
    %6487 = vsyncpa [#allocation12], 1
    %6488 = vsyncpa [#allocation15], 1
    %6489 = vsyncpa [#allocation18], 1
    %6490 = vsyncpa [#allocation21], 1
    %6491 = vsyncpa [#allocation24], 1
    %6492 = vsyncpa [#allocation27], 1
    %6493 = vsyncpa [#allocation30], 1
    %6494 = vsyncpa [#allocation33], 1
    %6495 = vsyncpa [#allocation36], 1
    %6496 = vsyncpa [#allocation4], 1
    %s6497 = scalar_lea.sflag [#allocation4], 1
    %6498 = vsyncpa %s6497, 1

</llo_original>
